<compile_context>
chip_gen: v5e
topology: v5e:2x2
jax: 0.10.0
libtpu: 0.0.40
codegen_flags: <defaults>
</compile_context>

<pallas_src>
import numpy as np
import jax
import jax.numpy as jnp
from jax.experimental import pallas as pl
from jax.experimental.pallas import tpu as pltpu

HS = WS = 4          # PosteriorZ works on fixed 4x4 feature maps
P = HS * WS          # pixels per channel
BN_EPS = 1e-5
_MAX_ROWS_PER_TILE = 512


def _round_up(x, m):
    return (x + m - 1) // m * m


# ---------------------------------------------------------------------------
# Weight-only preprocessing (glue): turn convs on the fixed 4x4 grid into
# dense (Cin*16, Cout*16) operators so the data path is pure lane-dense matmul.
# ---------------------------------------------------------------------------
def _conv3x3_spatial_coupling(pad=1, kh=3, kw=3):
    # S[a, b, p_out, q_in] = 1 iff input pixel q feeds output pixel p via tap (a, b)
    S = np.zeros((kh, kw, P, P), np.float32)
    for py in range(HS):
        for px in range(WS):
            p = py * WS + px
            for a in range(kh):
                for b in range(kw):
                    qy, qx = py + a - pad, px + b - pad
                    if 0 <= qy < HS and 0 <= qx < WS:
                        S[a, b, p, qy * WS + qx] = 1.0
    return jnp.asarray(S)


def conv1x1_operator(w, b):
    # w: (Cout, Cin), b: (Cout,)  ->  M: (Cin*P, Cout*P), bias: (1, Cout*P)
    cout, _ = w.shape
    M = jnp.kron(w.T, jnp.eye(P, dtype=w.dtype))
    return M, jnp.repeat(b, P).reshape(1, cout * P)


def conv3x3_operator(w, b):
    # w: (Cout, Cin, 3, 3), b: (Cout,)  ->  M: (Cin*P, Cout*P), bias: (1, Cout*P)
    cout, cin = w.shape[:2]
    S = _conv3x3_spatial_coupling()
    M = jnp.einsum('oikl,klpq->iqop', w, S,
                   precision=jax.lax.Precision.HIGHEST)
    return M.reshape(cin * P, cout * P), jnp.repeat(b, P).reshape(1, cout * P)


def fold_batchnorm(M, bias, gamma, beta, mean, var, eps=BN_EPS):
    # conv followed by eval-mode BatchNorm2d -> folded into (M, bias)
    # TODO(synk): training-mode BN (batch statistics) is not implemented in-kernel.
    s = gamma / jnp.sqrt(var + eps)
    t = beta - mean * s
    cout_p = M.shape[1]
    sf = jnp.repeat(s, P).reshape(1, cout_p)
    tf = jnp.repeat(t, P).reshape(1, cout_p)
    return M * sf, bias * sf + tf


def build_operators(params, num_layers):
    """Fold all conv / BN weights into dense operators on the flattened 4x4
    feature space.  Big matmul operands are bf16; biases stay f32."""
    assert num_layers >= 1
    wh, bh = params['linear_h']
    Wh, _ = conv1x1_operator(wh[:, :, 0, 0], bh)
    wz, bz = params['linear_z']
    Wz, _ = conv1x1_operator(wz[:, :, 0, 0], bz)
    wc, bc = params['linear_c']
    Wc, _ = conv1x1_operator(wc[:, :, 0, 0], bc)

    hid_f = Wh.shape[1]
    ops = {
        # linear_h + linear_z fused along K for one MXU contraction.
        'Whz': jnp.concatenate([Wh, Wz], axis=0).astype(jnp.bfloat16),
        # c-path stays f32 and is applied wrapper-side (hoisted out of kernel).
        'Wc': Wc,
        # all three 1x1 conv biases folded into the per-dataset e0 term.
        'b0': (jnp.repeat(bh, P) + jnp.repeat(bz, P) + jnp.repeat(bc, P)),
    }

    Wr, br = [], []
    for (w3, b3), (g, be, mu, var) in params['res']:
        M, bias = conv3x3_operator(w3, b3)
        M, bias = fold_batchnorm(M, bias, g, be, mu, var)
        Wr.append(M)
        br.append(bias[0])
    ops['Wres'] = jnp.stack(Wr).astype(jnp.bfloat16)       # (L, hid_f, hid_f)

    wp, bp = params['linear_params']
    Mp, biasp = conv1x1_operator(wp[:, :, 0, 0], bp)
    g, be, mu, var = params['bn_params']
    Mp, biasp = fold_batchnorm(Mp, biasp, g, be, mu, var)
    ops['Wp'] = Mp.astype(jnp.bfloat16)                     # (hid_f, out_f)
    out_f = Mp.shape[1]

    # Pack the per-layer f32 biases into one small table: rows 0..L-1 are the
    # residual-layer (BN-folded) biases, row L is the linear_params+bn bias.
    max_f = max(hid_f, out_f)
    bias_pack = jnp.zeros((num_layers + 1, max_f), jnp.float32)
    for l in range(num_layers):
        bias_pack = bias_pack.at[l, :hid_f].set(br[l])
    bias_pack = bias_pack.at[num_layers, :out_f].set(biasp[0])
    ops['bias_pack'] = bias_pack
    return ops


# ---------------------------------------------------------------------------
# Fused PosteriorZ kernel: one grid step = one tile of (bs*ns) rows; weights
# stay VMEM-resident across the grid.
# ---------------------------------------------------------------------------
def _make_posterior_z_kernel(num_layers, hid_f, out_f,
                             activation=lambda x: jnp.maximum(x, 0.0)):
    def kernel(hz_ref, e0_ref, whz_ref, wres_ref, wp_ref, bias_ref, out_ref):
        f32 = jnp.float32
        bf16 = jnp.bfloat16
        biases = bias_ref[...]                       # (L+1, max_f) f32

        # linear_h + linear_z fused; ec and the 1x1 biases are pre-folded in e0.
        e = jnp.dot(hz_ref[...], whz_ref[...], preferred_element_type=f32)
        e = activation(e + e0_ref[...].astype(f32))  # (tr, hid_f) f32

        # ConvResBlock: conv3x3 + folded eval-mode BatchNorm per layer.
        x_res = e
        for l in range(num_layers):
            e = jnp.dot(e.astype(bf16), wres_ref[l], preferred_element_type=f32)
            e = e + biases[l:l + 1, :hid_f]
            if l < num_layers - 1:
                e = activation(e)
        e = activation(e + x_res)

        # linear_params + folded bn_params -> one fused lane-dense output.
        out = jnp.dot(e.astype(bf16), wp_ref[...], preferred_element_type=f32)
        out = out + biases[num_layers:num_layers + 1, :out_f]
        out_ref[...] = out.astype(out_ref.dtype)

    return kernel


def posterior_z_forward(h, z, c, ops, num_layers):
    """h: (bs, ns, hid_dim, 4, 4); z: (bs, ns, z_dim, 4, 4); c: (bs, c_dim, 4, 4).

    Returns (mean, logvar), each (bs*ns, z_dim, 4, 4).
    """
    # TODO(synk): the z-is-None / c-is-None branches of PosteriorZ.forward are
    # not handled in-kernel; pass zero tensors to reproduce them.
    bs, ns = h.shape[:2]
    hid_f = h.shape[2] * P
    z_f = z.shape[2] * P
    c_f = c.shape[1] * P
    in_f = hid_f + z_f
    out_f = ops['Wp'].shape[1]
    rows = bs * ns

    # ---- wrapper-side glue (tiny; layout + hoisted c-path only) ----
    c2 = c.reshape(bs, c_f).astype(jnp.float32)
    ec = jnp.dot(c2, ops['Wc'],
                 precision=jax.lax.Precision.HIGHEST) + ops['b0'][None, :]
    e0 = jnp.broadcast_to(ec[:, None, :], (bs, ns, hid_f)).reshape(rows, hid_f)
    e0 = e0.astype(jnp.bfloat16)

    # [h | z] fused LHS for the first contraction; contiguous reshapes only.
    hz = jnp.concatenate(
        [h.reshape(bs, ns, hid_f), z.reshape(bs, ns, z_f)], axis=-1)
    hz = hz.reshape(rows, in_f).astype(jnp.bfloat16)

    # Row tiling: one big-M tile when it fits, otherwise tile rows; pad rows to
    # a sublane multiple so block shapes are (8,128)-legal.
    tr = min(_MAX_ROWS_PER_TILE, _round_up(rows, 8))
    rows_pad = _round_up(rows, tr)
    if rows_pad != rows:
        pad = ((0, rows_pad - rows), (0, 0))
        hz = jnp.pad(hz, pad)
        e0 = jnp.pad(e0, pad)
    num_tiles = rows_pad // tr

    weights = [ops['Whz'], ops['Wres'], ops['Wp'], ops['bias_pack']]

    flops = 2 * rows_pad * (in_f * hid_f + num_layers * hid_f * hid_f
                            + hid_f * out_f)
    bytes_accessed = (hz.size * hz.dtype.itemsize + e0.size * e0.dtype.itemsize
                      + rows_pad * out_f * 4
                      + sum(int(np.prod(w.shape)) * w.dtype.itemsize
                            for w in weights))

    def data_spec(nf):
        return pl.BlockSpec((tr, nf), lambda r: (r, 0))

    def run(single_buffer_weights):
        def weight_spec(shape):
            kwargs = {}
            if single_buffer_weights:
                # Constant index_map -> never re-fetched across the grid; a
                # single VMEM buffer suffices (halves weight VMEM residency).
                kwargs['pipeline_mode'] = pl.Buffered(buffer_count=1)
            return pl.BlockSpec(shape, lambda r, _n=len(shape): (0,) * _n,
                                **kwargs)

        return pl.pallas_call(
            _make_posterior_z_kernel(num_layers, hid_f, out_f),
            out_shape=jax.ShapeDtypeStruct((rows_pad, out_f), jnp.float32),
            grid_spec=pltpu.PrefetchScalarGridSpec(
                num_scalar_prefetch=0,
                grid=(num_tiles,),
                in_specs=[data_spec(in_f), data_spec(hid_f)]
                         + [weight_spec(w.shape) for w in weights],
                out_specs=data_spec(out_f),
            ),
            compiler_params=pltpu.CompilerParams(
                # For tiny grids keep the row axis on one core: a weight-bound
                # kernel gains nothing from duplicating the resident weight
                # set into the second core's VMEM (v7x: 2 TCs, 64 MiB each).
                dimension_semantics=(("parallel",) if num_tiles >= 4
                                     else ("arbitrary",)),
                vmem_limit_bytes=32 * 1024 * 1024,
            ),
            cost_estimate=pl.CostEstimate(flops=int(flops), transcendentals=0,
                                          bytes_accessed=int(bytes_accessed)),
        )(hz, e0, *weights)

    try:
        out = run(True)
    except Exception:
        # pl.Buffered(1) unsupported on this JAX build -> default buffering.
        out = run(False)

    out = out[:rows]
    z_dim = out_f // (2 * P)
    zf = z_dim * P
    mean = out[:, :zf].reshape(rows, z_dim, HS, WS)
    logvar = out[:, zf:].reshape(rows, z_dim, HS, WS)
    return mean, logvar


# ---------------------------------------------------------------------------
# Parameter init (PyTorch-style) and pure-JAX references.
# ---------------------------------------------------------------------------
def init_params(key, num_layers, hid_dim, c_dim, z_dim):
    keys = iter(jax.random.split(key, 8 + 4 * num_layers))

    def conv_init(k, cout, cin, kh, kw):
        fan_in = cin * kh * kw
        bound = 1.0 / float(np.sqrt(fan_in))
        kw_, kb_ = jax.random.split(k)
        w = jax.random.uniform(kw_, (cout, cin, kh, kw), minval=-bound,
                               maxval=bound, dtype=jnp.float32)
        b = jax.random.uniform(kb_, (cout,), minval=-bound, maxval=bound,
                               dtype=jnp.float32)
        return w, b

    def bn_init(k, ch):
        k1, k2, k3, k4 = jax.random.split(k, 4)
        gamma = jax.random.uniform(k1, (ch,), minval=0.5, maxval=1.5)
        beta = 0.1 * jax.random.normal(k2, (ch,))
        mean = 0.1 * jax.random.normal(k3, (ch,))
        var = jax.random.uniform(k4, (ch,), minval=0.5, maxval=1.5)
        return gamma, beta, mean, var

    params = {
        'linear_h': conv_init(next(keys), hid_dim, hid_dim, 1, 1),
        'linear_z': conv_init(next(keys), hid_dim, z_dim, 1, 1),
        'linear_c': conv_init(next(keys), hid_dim, c_dim, 1, 1),
        'res': [],
        'linear_params': conv_init(next(keys), 2 * z_dim, hid_dim, 1, 1),
        'bn_params': bn_init(next(keys), 2 * z_dim),
    }
    for _ in range(num_layers):
        params['res'].append((conv_init(next(keys), hid_dim, hid_dim, 3, 3),
                              bn_init(next(keys), hid_dim)))
    return params


def posterior_z_matmul_reference(h, z, c, ops, num_layers):
    """Same math as the kernel (bf16 operators, f32 accumulation), plain XLA."""
    bs, ns = h.shape[:2]
    hid_f = h.shape[2] * P
    z_f = z.shape[2] * P
    c_f = c.shape[1] * P
    out_f = ops['Wp'].shape[1]
    rows = bs * ns
    f32, bf16 = jnp.float32, jnp.bfloat16

    c2 = c.reshape(bs, c_f).astype(f32)
    ec = jnp.dot(c2, ops['Wc'],
                 precision=jax.lax.Precision.HIGHEST) + ops['b0'][None, :]
    e0 = jnp.broadcast_to(ec[:, None, :], (bs, ns, hid_f)).reshape(rows, hid_f)
    e0 = e0.astype(bf16)
    hz = jnp.concatenate([h.reshape(bs, ns, hid_f), z.reshape(bs, ns, z_f)],
                         axis=-1).reshape(rows, hid_f + z_f).astype(bf16)
    biases = ops['bias_pack']

    e = jnp.dot(hz, ops['Whz'], preferred_element_type=f32) + e0.astype(f32)
    e = jnp.maximum(e, 0.0)
    x_res = e
    for l in range(num_layers):
        e = jnp.dot(e.astype(bf16), ops['Wres'][l], preferred_element_type=f32)
        e = e + biases[l:l + 1, :hid_f]
        if l < num_layers - 1:
            e = jnp.maximum(e, 0.0)
    e = jnp.maximum(e + x_res, 0.0)
    out = jnp.dot(e.astype(bf16), ops['Wp'], preferred_element_type=f32)
    out = out + biases[num_layers:num_layers + 1, :out_f]
    z_dim = out_f // (2 * P)
    zf = z_dim * P
    return (out[:, :zf].reshape(rows, z_dim, HS, WS),
            out[:, zf:].reshape(rows, z_dim, HS, WS))


def _relu(x):
    return jnp.maximum(x, 0.0)


def _conv1x1_ref(x, w, b):
    y = jnp.einsum('nchw,oc->nohw', x, w[:, :, 0, 0],
                   precision=jax.lax.Precision.HIGHEST)
    return y + b[None, :, None, None]


def _conv3x3_ref(x, w, b):
    y = jax.lax.conv_general_dilated(
        x, w, window_strides=(1, 1), padding=((1, 1), (1, 1)),
        dimension_numbers=("NCHW", "OIHW", "NCHW"),
        precision=jax.lax.Precision.HIGHEST)
    return y + b[None, :, None, None]


def _bn_ref(x, gamma, beta, mean, var, eps=BN_EPS):
    inv = gamma / jnp.sqrt(var + eps)
    return ((x - mean[None, :, None, None]) * inv[None, :, None, None]
            + beta[None, :, None, None])


def posterior_z_reference(h, z, c, params, num_layers, hid_dim, z_dim, c_dim):
    """Full-precision conv/BN reference (mirrors the PyTorch module, eval mode)."""
    bs, ns = h.shape[:2]
    eh = _conv1x1_ref(h.reshape(-1, hid_dim, HS, WS), *params['linear_h'])
    eh = eh.reshape(bs, ns, hid_dim, HS, WS)
    ez = _conv1x1_ref(z.reshape(-1, z_dim, HS, WS), *params['linear_z'])
    ez = ez.reshape(bs, ns, hid_dim, HS, WS)
    ec = _conv1x1_ref(c.reshape(-1, c_dim, HS, WS), *params['linear_c'])
    ec = ec.reshape(bs, 1, hid_dim, HS, WS)
    e = (eh + ez + ec).reshape(-1, hid_dim, HS, WS)
    e = _relu(e)
    x0 = e
    for l in range(num_layers):
        (w3, b3), (g, be, mu, var) = params['res'][l]
        e = _conv3x3_ref(e, w3, b3)
        e = _bn_ref(e, g, be, mu, var)
        if l < num_layers - 1:
            e = _relu(e)
    e = _relu(e + x0)
    e = _conv1x1_ref(e, *params['linear_params'])
    e = _bn_ref(e, *params['bn_params'])
    mean, logvar = jnp.split(e, 2, axis=1)
    return mean, logvar


if __name__ == "__main__":
    key = jax.random.PRNGKey(0)
    k_h, k_z, k_c, k_p = jax.random.split(key, 4)

    # Small shapes consistent with the module (fixed 4x4 spatial maps).
    num_layers, hid_dim, c_dim, z_dim = 2, 32, 32, 16
    bs, ns = 2, 8

    h = jax.random.normal(k_h, (bs, ns, hid_dim, HS, WS), dtype=jnp.float32)
    z = jax.random.normal(k_z, (bs, ns, z_dim, HS, WS), dtype=jnp.float32)
    c = jax.random.normal(k_c, (bs, c_dim, HS, WS), dtype=jnp.float32)

    params = init_params(k_p, num_layers, hid_dim, c_dim, z_dim)
    ops = build_operators(params, num_layers)

    mean, logvar = posterior_z_forward(h, z, c, ops, num_layers)
    mean, logvar = jax.block_until_ready((mean, logvar))
    assert mean.shape == (bs * ns, z_dim, HS, WS), mean.shape
    assert logvar.shape == (bs * ns, z_dim, HS, WS), logvar.shape

    # (1) Check against the identical bf16-operator math done in plain XLA.
    mm_mean, mm_logvar = posterior_z_matmul_reference(h, z, c, ops, num_layers)
    err_exact = max(float(jnp.max(jnp.abs(mean - mm_mean))),
                    float(jnp.max(jnp.abs(logvar - mm_logvar))))
    assert err_exact < 2e-2, f"kernel vs matmul reference: {err_exact}"

    # (2) Sanity-check the operator folding against the full-precision conv/BN
    #     reference (tolerance sized for bf16 operators/activations).
    ref_mean, ref_logvar = posterior_z_reference(
        h, z, c, params, num_layers, hid_dim, z_dim, c_dim)
    scale = float(jnp.max(jnp.abs(jnp.stack([ref_mean, ref_logvar]))))
    err_fold = max(float(jnp.max(jnp.abs(mean - ref_mean))),
                   float(jnp.max(jnp.abs(logvar - ref_logvar))))
    assert err_fold < 5e-2 + 2e-2 * scale, (err_fold, scale)

    print("KERNEL_OK")
</pallas_src>

<mosaic_0001>
module attributes {stable_mosaic.version = 11 : i64} {
  func.func @kernel(%arg0: i32, %arg1: memref<16x768xbf16, #tpu.memory_space<vmem>>, %arg2: memref<16x512xbf16, #tpu.memory_space<vmem>>, %arg3: memref<768x512xbf16, #tpu.memory_space<vmem>>, %arg4: memref<2x512x512xbf16, #tpu.memory_space<vmem>>, %arg5: memref<512x512xbf16, #tpu.memory_space<vmem>>, %arg6: memref<3x512xf32, #tpu.memory_space<vmem>>, %arg7: memref<16x512xf32, #tpu.memory_space<vmem>>) attributes {dimension_semantics = [#tpu.dimension_semantics<arbitrary>], iteration_bounds = array<i64: 1>, scalar_prefetch = 0 : i64, scratch_operands = 0 : i64, tpu.core_type = #tpu.core_type<tc>, window_params = [{transform_indices = @transform_0, window_bounds = array<i64: 16, 768>}, {transform_indices = @transform_1, window_bounds = array<i64: 16, 512>}, {pipeline_mode = #tpu.pipeline_mode<synchronous>, transform_indices = @transform_2, window_bounds = array<i64: 768, 512>}, {pipeline_mode = #tpu.pipeline_mode<synchronous>, transform_indices = @transform_3, window_bounds = array<i64: 2, 512, 512>}, {pipeline_mode = #tpu.pipeline_mode<synchronous>, transform_indices = @transform_4, window_bounds = array<i64: 512, 512>}, {pipeline_mode = #tpu.pipeline_mode<synchronous>, transform_indices = @transform_5, window_bounds = array<i64: 3, 512>}, {transform_indices = @transform_6, window_bounds = array<i64: 16, 512>}]} {
    %c0 = arith.constant 0 : index
    %c0_0 = arith.constant 0 : index
    %0 = vector.load %arg6[%c0, %c0_0] : memref<3x512xf32, #tpu.memory_space<vmem>>, vector<3x512xf32>
    %c0_1 = arith.constant 0 : index
    %c0_2 = arith.constant 0 : index
    %1 = vector.load %arg1[%c0_1, %c0_2] : memref<16x768xbf16, #tpu.memory_space<vmem>>, vector<16x768xbf16>
    %c0_3 = arith.constant 0 : index
    %c0_4 = arith.constant 0 : index
    %2 = vector.load %arg3[%c0_3, %c0_4] : memref<768x512xbf16, #tpu.memory_space<vmem>>, vector<768x512xbf16>
    %cst = arith.constant dense<0.000000e+00> : vector<16x512xf32>
    %3 = tpu.matmul %1, %2, %cst {dimension_numbers = #tpu.dot_dimension_numbers<[1], [0], [0], [1], [0, 0, 1, 1], [], []>} : vector<16x768xbf16>, vector<768x512xbf16>, vector<16x512xf32> -> vector<16x512xf32>
    %c0_5 = arith.constant 0 : index
    %c0_6 = arith.constant 0 : index
    %4 = vector.load %arg2[%c0_5, %c0_6] : memref<16x512xbf16, #tpu.memory_space<vmem>>, vector<16x512xbf16>
    %5 = arith.extf %4 : vector<16x512xbf16> to vector<16x512xf32>
    %6 = arith.addf %3, %5 : vector<16x512xf32>
    %cst_7 = arith.constant 0.000000e+00 : f32
    %7 = vector.broadcast %cst_7 : f32 to vector<16x512xf32>
    %8 = arith.maximumf %6, %7 : vector<16x512xf32>
    %9 = arith.truncf %8 : vector<16x512xf32> to vector<16x512xbf16>
    %c0_8 = arith.constant 0 : index
    %c0_9 = arith.constant 0 : index
    %c0_10 = arith.constant 0 : index
    %10 = vector.load %arg4[%c0_8, %c0_9, %c0_10] : memref<2x512x512xbf16, #tpu.memory_space<vmem>>, vector<1x512x512xbf16>
    %11 = vector.shape_cast %10 : vector<1x512x512xbf16> to vector<512x512xbf16>
    %cst_11 = arith.constant dense<0.000000e+00> : vector<16x512xf32>
    %12 = tpu.matmul %9, %11, %cst_11 {dimension_numbers = #tpu.dot_dimension_numbers<[1], [0], [0], [1], [0, 0, 1, 1], [], []>} : vector<16x512xbf16>, vector<512x512xbf16>, vector<16x512xf32> -> vector<16x512xf32>
    %13 = vector.extract_strided_slice %0 {offsets = [0, 0], sizes = [1, 512], strides = [1, 1]} : vector<3x512xf32> to vector<1x512xf32>
    %14 = vector.broadcast %13 : vector<1x512xf32> to vector<16x512xf32>
    %15 = arith.addf %12, %14 : vector<16x512xf32>
    %cst_12 = arith.constant 0.000000e+00 : f32
    %16 = vector.broadcast %cst_12 : f32 to vector<16x512xf32>
    %17 = arith.maximumf %15, %16 : vector<16x512xf32>
    %18 = arith.truncf %17 : vector<16x512xf32> to vector<16x512xbf16>
    %c1 = arith.constant 1 : index
    %c0_13 = arith.constant 0 : index
    %c0_14 = arith.constant 0 : index
    %19 = vector.load %arg4[%c1, %c0_13, %c0_14] : memref<2x512x512xbf16, #tpu.memory_space<vmem>>, vector<1x512x512xbf16>
    %20 = vector.shape_cast %19 : vector<1x512x512xbf16> to vector<512x512xbf16>
    %cst_15 = arith.constant dense<0.000000e+00> : vector<16x512xf32>
    %21 = tpu.matmul %18, %20, %cst_15 {dimension_numbers = #tpu.dot_dimension_numbers<[1], [0], [0], [1], [0, 0, 1, 1], [], []>} : vector<16x512xbf16>, vector<512x512xbf16>, vector<16x512xf32> -> vector<16x512xf32>
    %22 = vector.extract_strided_slice %0 {offsets = [1, 0], sizes = [1, 512], strides = [1, 1]} : vector<3x512xf32> to vector<1x512xf32>
    %23 = vector.broadcast %22 : vector<1x512xf32> to vector<16x512xf32>
    %24 = arith.addf %21, %23 : vector<16x512xf32>
    %25 = arith.addf %24, %8 : vector<16x512xf32>
    %cst_16 = arith.constant 0.000000e+00 : f32
    %26 = vector.broadcast %cst_16 : f32 to vector<16x512xf32>
    %27 = arith.maximumf %25, %26 : vector<16x512xf32>
    %28 = arith.truncf %27 : vector<16x512xf32> to vector<16x512xbf16>
    %c0_17 = arith.constant 0 : index
    %c0_18 = arith.constant 0 : index
    %29 = vector.load %arg5[%c0_17, %c0_18] : memref<512x512xbf16, #tpu.memory_space<vmem>>, vector<512x512xbf16>
    %cst_19 = arith.constant dense<0.000000e+00> : vector<16x512xf32>
    %30 = tpu.matmul %28, %29, %cst_19 {dimension_numbers = #tpu.dot_dimension_numbers<[1], [0], [0], [1], [0, 0, 1, 1], [], []>} : vector<16x512xbf16>, vector<512x512xbf16>, vector<16x512xf32> -> vector<16x512xf32>
    %31 = vector.extract_strided_slice %0 {offsets = [2, 0], sizes = [1, 512], strides = [1, 1]} : vector<3x512xf32> to vector<1x512xf32>
    %32 = vector.broadcast %31 : vector<1x512xf32> to vector<16x512xf32>
    %33 = arith.addf %30, %32 : vector<16x512xf32>
    %c0_20 = arith.constant 0 : index
    %c0_21 = arith.constant 0 : index
    %34 = vector.load %arg7[%c0_20, %c0_21] : memref<16x512xf32, #tpu.memory_space<vmem>>, vector<16x512xf32>
    tpu.vector_store %arg7[%c0_20, %c0_21], %33 {strides = array<i32>} : memref<16x512xf32, #tpu.memory_space<vmem>>, vector<16x512xf32>,
    return
  }
  func.func @transform_0(%arg0: i32) -> (i32, i32) {
    %c0_i32 = arith.constant 0 : i32
    %c0_i32_0 = arith.constant 0 : i32
    return %arg0, %c0_i32 : i32, i32
  }
  func.func @transform_1(%arg0: i32) -> (i32, i32) {
    %c0_i32 = arith.constant 0 : i32
    %c0_i32_0 = arith.constant 0 : i32
    return %arg0, %c0_i32 : i32, i32
  }
  func.func @transform_2(%arg0: i32) -> (i32, i32) {
    %c0_i32 = arith.constant 0 : i32
    %c0_i32_0 = arith.constant 0 : i32
    %c0_i32_1 = arith.constant 0 : i32
    return %c0_i32, %c0_i32_0 : i32, i32
  }
  func.func @transform_3(%arg0: i32) -> (i32, i32, i32) {
    %c0_i32 = arith.constant 0 : i32
    %c0_i32_0 = arith.constant 0 : i32
    %c0_i32_1 = arith.constant 0 : i32
    %c0_i32_2 = arith.constant 0 : i32
    return %c0_i32, %c0_i32_0, %c0_i32_1 : i32, i32, i32
  }
  func.func @transform_4(%arg0: i32) -> (i32, i32) {
    %c0_i32 = arith.constant 0 : i32
    %c0_i32_0 = arith.constant 0 : i32
    %c0_i32_1 = arith.constant 0 : i32
    return %c0_i32, %c0_i32_0 : i32, i32
  }
  func.func @transform_5(%arg0: i32) -> (i32, i32) {
    %c0_i32 = arith.constant 0 : i32
    %c0_i32_0 = arith.constant 0 : i32
    %c0_i32_1 = arith.constant 0 : i32
    return %c0_i32, %c0_i32_0 : i32, i32
  }
  func.func @transform_6(%arg0: i32) -> (i32, i32) {
    %c0_i32 = arith.constant 0 : i32
    %c0_i32_0 = arith.constant 0 : i32
    return %arg0, %c0_i32 : i32, i32
  }
}

module attributes {stable_mosaic.version = 11 : i64} {
  func.func @kernel(%arg0: i32, %arg1: memref<16x768xbf16, #tpu.memory_space<vmem>>, %arg2: memref<16x512xbf16, #tpu.memory_space<vmem>>, %arg3: memref<768x512xbf16, #tpu.memory_space<vmem>>, %arg4: memref<2x512x512xbf16, #tpu.memory_space<vmem>>, %arg5: memref<512x512xbf16, #tpu.memory_space<vmem>>, %arg6: memref<3x512xf32, #tpu.memory_space<vmem>>, %arg7: memref<16x512xf32, #tpu.memory_space<vmem>>) attributes {dimension_semantics = [#tpu.dimension_semantics<arbitrary>], iteration_bounds = array<i64: 1>, scalar_prefetch = 0 : i64, scratch_operands = 0 : i64, tpu.core_type = #tpu.core_type<tc>, window_params = [{transform_indices = @transform_0, window_bounds = array<i64: 16, 768>}, {transform_indices = @transform_1, window_bounds = array<i64: 16, 512>}, {pipeline_mode = #tpu.pipeline_mode<synchronous>, transform_indices = @transform_2, window_bounds = array<i64: 768, 512>}, {pipeline_mode = #tpu.pipeline_mode<synchronous>, transform_indices = @transform_3, window_bounds = array<i64: 2, 512, 512>}, {pipeline_mode = #tpu.pipeline_mode<synchronous>, transform_indices = @transform_4, window_bounds = array<i64: 512, 512>}, {pipeline_mode = #tpu.pipeline_mode<synchronous>, transform_indices = @transform_5, window_bounds = array<i64: 3, 512>}, {transform_indices = @transform_6, window_bounds = array<i64: 16, 512>}]} {
    %c0 = arith.constant 0 : index
    %c0_0 = arith.constant 0 : index
    %0 = vector.load %arg6[%c0, %c0_0] : memref<3x512xf32, #tpu.memory_space<vmem>>, vector<3x512xf32>
    %c0_1 = arith.constant 0 : index
    %c0_2 = arith.constant 0 : index
    %1 = vector.load %arg1[%c0_1, %c0_2] : memref<16x768xbf16, #tpu.memory_space<vmem>>, vector<16x768xbf16>
    %c0_3 = arith.constant 0 : index
    %c0_4 = arith.constant 0 : index
    %2 = vector.load %arg3[%c0_3, %c0_4] : memref<768x512xbf16, #tpu.memory_space<vmem>>, vector<768x512xbf16>
    %cst = arith.constant dense<0.000000e+00> : vector<16x512xf32>
    %3 = tpu.matmul %1, %2, %cst {dimension_numbers = #tpu.dot_dimension_numbers<[1], [0], [0], [1], [0, 0, 1, 1], [], []>} : vector<16x768xbf16>, vector<768x512xbf16>, vector<16x512xf32> -> vector<16x512xf32>
    %c0_5 = arith.constant 0 : index
    %c0_6 = arith.constant 0 : index
    %4 = vector.load %arg2[%c0_5, %c0_6] : memref<16x512xbf16, #tpu.memory_space<vmem>>, vector<16x512xbf16>
    %5 = arith.extf %4 : vector<16x512xbf16> to vector<16x512xf32>
    %6 = arith.addf %3, %5 : vector<16x512xf32>
    %cst_7 = arith.constant 0.000000e+00 : f32
    %7 = vector.broadcast %cst_7 : f32 to vector<16x512xf32>
    %8 = arith.maximumf %6, %7 : vector<16x512xf32>
    %9 = arith.truncf %8 : vector<16x512xf32> to vector<16x512xbf16>
    %c0_8 = arith.constant 0 : index
    %c0_9 = arith.constant 0 : index
    %c0_10 = arith.constant 0 : index
    %10 = vector.load %arg4[%c0_8, %c0_9, %c0_10] : memref<2x512x512xbf16, #tpu.memory_space<vmem>>, vector<1x512x512xbf16>
    %11 = vector.shape_cast %10 : vector<1x512x512xbf16> to vector<512x512xbf16>
    %cst_11 = arith.constant dense<0.000000e+00> : vector<16x512xf32>
    %12 = tpu.matmul %9, %11, %cst_11 {dimension_numbers = #tpu.dot_dimension_numbers<[1], [0], [0], [1], [0, 0, 1, 1], [], []>} : vector<16x512xbf16>, vector<512x512xbf16>, vector<16x512xf32> -> vector<16x512xf32>
    %13 = vector.extract_strided_slice %0 {offsets = [0, 0], sizes = [1, 512], strides = [1, 1]} : vector<3x512xf32> to vector<1x512xf32>
    %14 = vector.broadcast %13 : vector<1x512xf32> to vector<16x512xf32>
    %15 = arith.addf %12, %14 : vector<16x512xf32>
    %cst_12 = arith.constant 0.000000e+00 : f32
    %16 = vector.broadcast %cst_12 : f32 to vector<16x512xf32>
    %17 = arith.maximumf %15, %16 : vector<16x512xf32>
    %18 = arith.truncf %17 : vector<16x512xf32> to vector<16x512xbf16>
    %c1 = arith.constant 1 : index
    %c0_13 = arith.constant 0 : index
    %c0_14 = arith.constant 0 : index
    %19 = vector.load %arg4[%c1, %c0_13, %c0_14] : memref<2x512x512xbf16, #tpu.memory_space<vmem>>, vector<1x512x512xbf16>
    %20 = vector.shape_cast %19 : vector<1x512x512xbf16> to vector<512x512xbf16>
    %cst_15 = arith.constant dense<0.000000e+00> : vector<16x512xf32>
    %21 = tpu.matmul %18, %20, %cst_15 {dimension_numbers = #tpu.dot_dimension_numbers<[1], [0], [0], [1], [0, 0, 1, 1], [], []>} : vector<16x512xbf16>, vector<512x512xbf16>, vector<16x512xf32> -> vector<16x512xf32>
    %22 = vector.extract_strided_slice %0 {offsets = [1, 0], sizes = [1, 512], strides = [1, 1]} : vector<3x512xf32> to vector<1x512xf32>
    %23 = vector.broadcast %22 : vector<1x512xf32> to vector<16x512xf32>
    %24 = arith.addf %21, %23 : vector<16x512xf32>
    %25 = arith.addf %24, %8 : vector<16x512xf32>
    %cst_16 = arith.constant 0.000000e+00 : f32
    %26 = vector.broadcast %cst_16 : f32 to vector<16x512xf32>
    %27 = arith.maximumf %25, %26 : vector<16x512xf32>
    %28 = arith.truncf %27 : vector<16x512xf32> to vector<16x512xbf16>
    %c0_17 = arith.constant 0 : index
    %c0_18 = arith.constant 0 : index
    %29 = vector.load %arg5[%c0_17, %c0_18] : memref<512x512xbf16, #tpu.memory_space<vmem>>, vector<512x512xbf16>
    %cst_19 = arith.constant dense<0.000000e+00> : vector<16x512xf32>
    %30 = tpu.matmul %28, %29, %cst_19 {dimension_numbers = #tpu.dot_dimension_numbers<[1], [0], [0], [1], [0, 0, 1, 1], [], []>} : vector<16x512xbf16>, vector<512x512xbf16>, vector<16x512xf32> -> vector<16x512xf32>
    %31 = vector.extract_strided_slice %0 {offsets = [2, 0], sizes = [1, 512], strides = [1, 1]} : vector<3x512xf32> to vector<1x512xf32>
    %32 = vector.broadcast %31 : vector<1x512xf32> to vector<16x512xf32>
    %33 = arith.addf %30, %32 : vector<16x512xf32>
    %c0_20 = arith.constant 0 : index
    %c0_21 = arith.constant 0 : index
    %34 = vector.load %arg7[%c0_20, %c0_21] : memref<16x512xf32, #tpu.memory_space<vmem>>, vector<16x512xf32>
    tpu.vector_store %arg7[%c0_20, %c0_21], %33 {strides = array<i32>} : memref<16x512xf32, #tpu.memory_space<vmem>>, vector<16x512xf32>,
    return
  }
  func.func @transform_0(%arg0: i32) -> (i32, i32) {
    %c0_i32 = arith.constant 0 : i32
    %c0_i32_0 = arith.constant 0 : i32
    return %arg0, %c0_i32 : i32, i32
  }
  func.func @transform_1(%arg0: i32) -> (i32, i32) {
    %c0_i32 = arith.constant 0 : i32
    %c0_i32_0 = arith.constant 0 : i32
    return %arg0, %c0_i32 : i32, i32
  }
  func.func @transform_2(%arg0: i32) -> (i32, i32) {
    %c0_i32 = arith.constant 0 : i32
    %c0_i32_0 = arith.constant 0 : i32
    %c0_i32_1 = arith.constant 0 : i32
    return %c0_i32, %c0_i32_0 : i32, i32
  }
  func.func @transform_3(%arg0: i32) -> (i32, i32, i32) {
    %c0_i32 = arith.constant 0 : i32
    %c0_i32_0 = arith.constant 0 : i32
    %c0_i32_1 = arith.constant 0 : i32
    %c0_i32_2 = arith.constant 0 : i32
    return %c0_i32, %c0_i32_0, %c0_i32_1 : i32, i32, i32
  }
  func.func @transform_4(%arg0: i32) -> (i32, i32) {
    %c0_i32 = arith.constant 0 : i32
    %c0_i32_0 = arith.constant 0 : i32
    %c0_i32_1 = arith.constant 0 : i32
    return %c0_i32, %c0_i32_0 : i32, i32
  }
  func.func @transform_5(%arg0: i32) -> (i32, i32) {
    %c0_i32 = arith.constant 0 : i32
    %c0_i32_0 = arith.constant 0 : i32
    %c0_i32_1 = arith.constant 0 : i32
    return %c0_i32, %c0_i32_0 : i32, i32
  }
  func.func @transform_6(%arg0: i32) -> (i32, i32) {
    %c0_i32 = arith.constant 0 : i32
    %c0_i32_0 = arith.constant 0 : i32
    return %arg0, %c0_i32 : i32, i32
  }
}

</mosaic_0001>

<llo_original>
// kernel: tpu_custom_call.1
$region0: #{tpu_custom_call.1}
  #allocation0 [shape = 'u32[]', space=smem, size = 0x4, offset = 0x4, fixed_abs, tag = 'smem constant byte address 0x4 - core index']
  #allocation1 [shape = 'u32[72,128]{1,0:T(1,128)}', space=vmem, size = 0x9000, scoped, tag = 'internal scratch']
  %s0 = inlined_call_operand.hbm [shape: bf16[16,768], index: 0, kind: input, shape index: {}]
  %s1 = inlined_call_operand.hbm [shape: bf16[16,512], index: 1, kind: input, shape index: {}]
  %s2 = inlined_call_operand.hbm [shape: bf16[768,512], index: 2, kind: input, shape index: {}]
  %s3 = inlined_call_operand.hbm [shape: bf16[2,512,512], index: 3, kind: input, shape index: {}]
  %s4 = inlined_call_operand.hbm [shape: bf16[512,512], index: 4, kind: input, shape index: {}]
  %s5 = inlined_call_operand.hbm [shape: f32[3,512], index: 5, kind: input, shape index: {}]
  %s6 = inlined_call_operand.hbm [shape: f32[16,512], index: 6, kind: output, shape index: {}]
  %s7 = sld [smem:[#allocation0]]
  $region58: #{tpu_custom_call.1} parent=0
    _
  %s9 = ssub.s32 1, %s7
  %s10 = scalar_select 0, %s9, %s7
  $region1: #{tpu_custom_call.1} parent=0
    #allocation2 [shape = 'u8[24576]{0}', space=vmem, size = 0x6000, scoped, tag = 'input window, operand 0, single buffered']
    #allocation3 [shape = 's32[1]{0}', space=sflag, size = 0x4, scoped, tag = 'scoped memory for tpu_custom_call.1']
    #allocation4 [shape = 's32[1]{0}', space=sflag, size = 0x4, scoped, tag = 'scoped memory for tpu_custom_call.1']
    #allocation5 [shape = 'u8[16384]{0}', space=vmem, size = 0x4000, scoped, tag = 'input window, operand 1, single buffered']
    #allocation6 [shape = 's32[1]{0}', space=sflag, size = 0x4, scoped, tag = 'scoped memory for tpu_custom_call.1']
    #allocation7 [shape = 'u8[786432]{0}', space=vmem, size = 0xc0000, scoped, tag = 'input window, operand 2, single buffered']
    #allocation8 [shape = 'u8[1048576]{0}', space=vmem, size = 0x100000, scoped, tag = 'input window, operand 3, single buffered']
    #allocation9 [shape = 's32[1]{0}', space=sflag, size = 0x4, scoped, tag = 'scoped memory for tpu_custom_call.1']
    #allocation10 [shape = 'u8[524288]{0}', space=vmem, size = 0x80000, scoped, tag = 'input window, operand 4, single buffered']
    #allocation11 [shape = 'u8[8192]{0}', space=vmem, size = 0x2000, scoped, tag = 'input window, operand 5, single buffered']
    #allocation12 [shape = 's32[1]{0}', space=sflag, size = 0x4, scoped, tag = 'scoped memory for tpu_custom_call.1']
    #allocation13 [shape = 'u8[32768]{0}', space=vmem, size = 0x8000, scoped, tag = 'output window, operand 0, single buffered']
    %11 = vsyncpa [#allocation3], 0
    %12 = vsyncpa [#allocation6], 0
    %13 = vsyncpa [#allocation9], 0
    %14 = vsyncpa [#allocation12], 0
    %15 = vsyncpa [#allocation4], 0
    // Predicated region
    $region2: #{tpu_custom_call.1} parent=1 // pred_check
      _
    $region3: #{tpu_custom_call.1} parent=1 // pred_check_branch
      %17 = sbr.rel (0) target = $region5
    $region4: #{tpu_custom_call.1} parent=1 // pred_region
      %19 = vsyncadd [#allocation3], 0
      %s20 = sshll.u32 %s0, 4
      %s21 = int_to_ptr.hbm [resolvable:$true] %s20
      %s22 = sshll.u32 [#allocation2], 4
      %s23 = int_to_ptr.vmem [resolvable:$true] %s22
      %28 = dma.hbm_to_vmem [thread:$0]  %s21, 768, %s23, [#allocation3], 384, 384, 24
    $region5: #{tpu_custom_call.1} parent=1 // pred_fallthru
      _
    // Predicated region
    $region6: #{tpu_custom_call.1} parent=1 // pred_check
      _
    $region7: #{tpu_custom_call.1} parent=1 // pred_check_branch
      %30 = sbr.rel (0) target = $region9
    $region8: #{tpu_custom_call.1} parent=1 // pred_region
      %32 = vsyncadd [#allocation6], 0
      %s33 = sshll.u32 %s1, 4
      %s34 = int_to_ptr.hbm [resolvable:$true] %s33
      %s35 = sshll.u32 [#allocation5], 4
      %s36 = int_to_ptr.vmem [resolvable:$true] %s35
      %41 = dma.hbm_to_vmem [thread:$0]  %s34, 512, %s36, [#allocation6], 256, 256, 16
    $region9: #{tpu_custom_call.1} parent=1 // pred_fallthru
      _
    // Predicated region
    $region10: #{tpu_custom_call.1} parent=1 // pred_check
      _
    $region11: #{tpu_custom_call.1} parent=1 // pred_check_branch
      %43 = sbr.rel (0) target = $region13
    $region12: #{tpu_custom_call.1} parent=1 // pred_region
      %45 = vsyncadd [#allocation6], 0
      %s46 = sshll.u32 %s2, 4
      %s47 = int_to_ptr.hbm [resolvable:$true] %s46
      %s48 = sshll.u32 [#allocation7], 4
      %s49 = int_to_ptr.vmem [resolvable:$true] %s48
      %54 = dma.hbm_to_vmem [thread:$0]  %s47, 24576, %s49, [#allocation6], 256, 256, 16
    $region13: #{tpu_custom_call.1} parent=1 // pred_fallthru
      _
    // Predicated region
    $region14: #{tpu_custom_call.1} parent=1 // pred_check
      _
    $region15: #{tpu_custom_call.1} parent=1 // pred_check_branch
      %56 = sbr.rel (0) target = $region17
    $region16: #{tpu_custom_call.1} parent=1 // pred_region
      %58 = vsyncadd [#allocation9], 0
      %s59 = sshll.u32 %s3, 4
      %s60 = int_to_ptr.hbm [resolvable:$true] %s59
      %s61 = sshll.u32 [#allocation8], 4
      %s62 = int_to_ptr.vmem [resolvable:$true] %s61
      %67 = dma.hbm_to_vmem [thread:$0]  %s60, 32768, %s62, [#allocation9], 256, 256, 16
    $region17: #{tpu_custom_call.1} parent=1 // pred_fallthru
      _
    // Predicated region
    $region18: #{tpu_custom_call.1} parent=1 // pred_check
      _
    $region19: #{tpu_custom_call.1} parent=1 // pred_check_branch
      %69 = sbr.rel (0) target = $region21
    $region20: #{tpu_custom_call.1} parent=1 // pred_region
      %71 = vsyncadd [#allocation9], 0
      %s72 = sshll.u32 %s4, 4
      %s73 = int_to_ptr.hbm [resolvable:$true] %s72
      %s74 = sshll.u32 [#allocation10], 4
      %s75 = int_to_ptr.vmem [resolvable:$true] %s74
      %80 = dma.hbm_to_vmem [thread:$0]  %s73, 16384, %s75, [#allocation9], 256, 256, 16
    $region21: #{tpu_custom_call.1} parent=1 // pred_fallthru
      _
    // Predicated region
    $region22: #{tpu_custom_call.1} parent=1 // pred_check
      _
    $region23: #{tpu_custom_call.1} parent=1 // pred_check_branch
      %82 = sbr.rel (0) target = $region25
    $region24: #{tpu_custom_call.1} parent=1 // pred_region
      %84 = vsyncadd [#allocation12], 0
      %s86 = sshll.u32 %s5, 4
      %s87 = int_to_ptr.hbm [resolvable:$true] %s86
      %s88 = sshll.u32 [#allocation11], 4
      %s89 = int_to_ptr.vmem [resolvable:$true] %s88
      %91 = dma.hbm_to_vmem [thread:$0]  %s87, 256, %s89, [#allocation12]
    $region25: #{tpu_custom_call.1} parent=1 // pred_fallthru
      _
    // Predicated region
    $region26: #{tpu_custom_call.1} parent=1 // pred_check
      _
    $region27: #{tpu_custom_call.1} parent=1 // pred_check_branch
      %93 = sbr.rel (0) target = $region29
    $region28: #{tpu_custom_call.1} parent=1 // pred_region
      %95 = dma.done [#allocation3], 768
    $region29: #{tpu_custom_call.1} parent=1 // pred_fallthru
      _
    // Predicated region
    $region30: #{tpu_custom_call.1} parent=1 // pred_check
      _
    $region31: #{tpu_custom_call.1} parent=1 // pred_check_branch
      %97 = sbr.rel (0) target = $region33
    $region32: #{tpu_custom_call.1} parent=1 // pred_region
      %99 = dma.done [#allocation6], 512
    $region33: #{tpu_custom_call.1} parent=1 // pred_fallthru
      _
    // Predicated region
    $region34: #{tpu_custom_call.1} parent=1 // pred_check
      _
    $region35: #{tpu_custom_call.1} parent=1 // pred_check_branch
      %101 = sbr.rel (0) target = $region37
    $region36: #{tpu_custom_call.1} parent=1 // pred_region
      %103 = dma.done [#allocation6], 24576
    $region37: #{tpu_custom_call.1} parent=1 // pred_fallthru
      _
    // Predicated region
    $region38: #{tpu_custom_call.1} parent=1 // pred_check
      _
    $region39: #{tpu_custom_call.1} parent=1 // pred_check_branch
      %105 = sbr.rel (0) target = $region41
    $region40: #{tpu_custom_call.1} parent=1 // pred_region
      %107 = dma.done [#allocation9], 32768
    $region41: #{tpu_custom_call.1} parent=1 // pred_fallthru
      _
    // Predicated region
    $region42: #{tpu_custom_call.1} parent=1 // pred_check
      _
    $region43: #{tpu_custom_call.1} parent=1 // pred_check_branch
      %109 = sbr.rel (0) target = $region45
    $region44: #{tpu_custom_call.1} parent=1 // pred_region
      %111 = dma.done [#allocation9], 16384
    $region45: #{tpu_custom_call.1} parent=1 // pred_fallthru
      _
    // Predicated region
    $region46: #{tpu_custom_call.1} parent=1 // pred_check
      _
    $region47: #{tpu_custom_call.1} parent=1 // pred_check_branch
      %113 = sbr.rel (0) target = $region49
    $region48: #{tpu_custom_call.1} parent=1 // pred_region
      %115 = dma.done [#allocation12], 256
    $region49: #{tpu_custom_call.1} parent=1 // pred_fallthru
      _
    %v116 = vld [vmem:[#allocation11] sm:$0x77]
    %v117 = vld [vmem:[#allocation11 + $0x8] sm:$0x77]
    %v118 = vld [vmem:[#allocation2] sm:$0xff]
    %v119 = vld [vmem:[#allocation2 + $0x8] sm:$0xff]
    %v120 = vld [vmem:[#allocation2 + $0x10] sm:$0xff]
    %v121 = vld [vmem:[#allocation2 + $0x18] sm:$0xff]
    %v122 = vld [vmem:[#allocation2 + $0x20] sm:$0xff]
    %v123 = vld [vmem:[#allocation2 + $0x28] sm:$0xff]
    %v124 = vld [vmem:[#allocation7] sm:$0xff]
    %v125 = vld [vmem:[#allocation7 + $0x8] sm:$0xff]
    %v126 = vld [vmem:[#allocation7 + $0x10] sm:$0xff]
    %v127 = vld [vmem:[#allocation7 + $0x18] sm:$0xff]
    %v128 = vld [vmem:[#allocation7 + $0x20] sm:$0xff]
    %v129 = vld [vmem:[#allocation7 + $0x28] sm:$0xff]
    %v130 = vld [vmem:[#allocation7 + $0x30] sm:$0xff]
    %v131 = vld [vmem:[#allocation7 + $0x38] sm:$0xff]
    %v132 = vld [vmem:[#allocation7 + $0x40] sm:$0xff]
    %v133 = vld [vmem:[#allocation7 + $0x48] sm:$0xff]
    %v134 = vld [vmem:[#allocation7 + $0x50] sm:$0xff]
    %v135 = vld [vmem:[#allocation7 + $0x58] sm:$0xff]
    %v136 = vld [vmem:[#allocation7 + $0x60] sm:$0xff]
    %v137 = vld [vmem:[#allocation7 + $0x68] sm:$0xff]
    %v138 = vld [vmem:[#allocation7 + $0x70] sm:$0xff]
    %v139 = vld [vmem:[#allocation7 + $0x78] sm:$0xff]
    %v140 = vld [vmem:[#allocation7 + $0x80] sm:$0xff]
    %v141 = vld [vmem:[#allocation7 + $0x88] sm:$0xff]
    %v142 = vld [vmem:[#allocation7 + $0x90] sm:$0xff]
    %v143 = vld [vmem:[#allocation7 + $0x98] sm:$0xff]
    %v144 = vld [vmem:[#allocation7 + $0xa0] sm:$0xff]
    %v145 = vld [vmem:[#allocation7 + $0xa8] sm:$0xff]
    %v146 = vld [vmem:[#allocation7 + $0xb0] sm:$0xff]
    %v147 = vld [vmem:[#allocation7 + $0xb8] sm:$0xff]
    %v148 = vld [vmem:[#allocation7 + $0xc0] sm:$0xff]
    %v149 = vld [vmem:[#allocation7 + $0xc8] sm:$0xff]
    %v150 = vld [vmem:[#allocation7 + $0xd0] sm:$0xff]
    %v151 = vld [vmem:[#allocation7 + $0xd8] sm:$0xff]
    %v152 = vld [vmem:[#allocation7 + $0xe0] sm:$0xff]
    %v153 = vld [vmem:[#allocation7 + $0xe8] sm:$0xff]
    %v154 = vld [vmem:[#allocation7 + $0xf0] sm:$0xff]
    %v155 = vld [vmem:[#allocation7 + $0xf8] sm:$0xff]
    %v156 = vld [vmem:[#allocation7 + $0x100] sm:$0xff]
    %v157 = vld [vmem:[#allocation7 + $0x108] sm:$0xff]
    %v158 = vld [vmem:[#allocation7 + $0x110] sm:$0xff]
    %v159 = vld [vmem:[#allocation7 + $0x118] sm:$0xff]
    %v160 = vld [vmem:[#allocation7 + $0x120] sm:$0xff]
    %v161 = vld [vmem:[#allocation7 + $0x128] sm:$0xff]
    %v162 = vld [vmem:[#allocation7 + $0x130] sm:$0xff]
    %v163 = vld [vmem:[#allocation7 + $0x138] sm:$0xff]
    %v164 = vld [vmem:[#allocation7 + $0x140] sm:$0xff]
    %v165 = vld [vmem:[#allocation7 + $0x148] sm:$0xff]
    %v166 = vld [vmem:[#allocation7 + $0x150] sm:$0xff]
    %v167 = vld [vmem:[#allocation7 + $0x158] sm:$0xff]
    %v168 = vld [vmem:[#allocation7 + $0x160] sm:$0xff]
    %v169 = vld [vmem:[#allocation7 + $0x168] sm:$0xff]
    %v170 = vld [vmem:[#allocation7 + $0x170] sm:$0xff]
    %v171 = vld [vmem:[#allocation7 + $0x178] sm:$0xff]
    %v172 = vld [vmem:[#allocation7 + $0x180] sm:$0xff]
    %v173 = vld [vmem:[#allocation7 + $0x188] sm:$0xff]
    %v174 = vld [vmem:[#allocation7 + $0x190] sm:$0xff]
    %v175 = vld [vmem:[#allocation7 + $0x198] sm:$0xff]
    %v176 = vld [vmem:[#allocation7 + $0x1a0] sm:$0xff]
    %v177 = vld [vmem:[#allocation7 + $0x1a8] sm:$0xff]
    %v178 = vld [vmem:[#allocation7 + $0x1b0] sm:$0xff]
    %v179 = vld [vmem:[#allocation7 + $0x1b8] sm:$0xff]
    %v180 = vld [vmem:[#allocation7 + $0x1c0] sm:$0xff]
    %v181 = vld [vmem:[#allocation7 + $0x1c8] sm:$0xff]
    %v182 = vld [vmem:[#allocation7 + $0x1d0] sm:$0xff]
    %v183 = vld [vmem:[#allocation7 + $0x1d8] sm:$0xff]
    %v184 = vld [vmem:[#allocation7 + $0x1e0] sm:$0xff]
    %v185 = vld [vmem:[#allocation7 + $0x1e8] sm:$0xff]
    %v186 = vld [vmem:[#allocation7 + $0x1f0] sm:$0xff]
    %v187 = vld [vmem:[#allocation7 + $0x1f8] sm:$0xff]
    %v188 = vld [vmem:[#allocation7 + $0x200] sm:$0xff]
    %v189 = vld [vmem:[#allocation7 + $0x208] sm:$0xff]
    %v190 = vld [vmem:[#allocation7 + $0x210] sm:$0xff]
    %v191 = vld [vmem:[#allocation7 + $0x218] sm:$0xff]
    %v192 = vld [vmem:[#allocation7 + $0x220] sm:$0xff]
    %v193 = vld [vmem:[#allocation7 + $0x228] sm:$0xff]
    %v194 = vld [vmem:[#allocation7 + $0x230] sm:$0xff]
    %v195 = vld [vmem:[#allocation7 + $0x238] sm:$0xff]
    %v196 = vld [vmem:[#allocation7 + $0x240] sm:$0xff]
    %v197 = vld [vmem:[#allocation7 + $0x248] sm:$0xff]
    %v198 = vld [vmem:[#allocation7 + $0x250] sm:$0xff]
    %v199 = vld [vmem:[#allocation7 + $0x258] sm:$0xff]
    %v200 = vld [vmem:[#allocation7 + $0x260] sm:$0xff]
    %v201 = vld [vmem:[#allocation7 + $0x268] sm:$0xff]
    %v202 = vld [vmem:[#allocation7 + $0x270] sm:$0xff]
    %v203 = vld [vmem:[#allocation7 + $0x278] sm:$0xff]
    %v204 = vld [vmem:[#allocation7 + $0x280] sm:$0xff]
    %v205 = vld [vmem:[#allocation7 + $0x288] sm:$0xff]
    %v206 = vld [vmem:[#allocation7 + $0x290] sm:$0xff]
    %v207 = vld [vmem:[#allocation7 + $0x298] sm:$0xff]
    %v208 = vld [vmem:[#allocation7 + $0x2a0] sm:$0xff]
    %v209 = vld [vmem:[#allocation7 + $0x2a8] sm:$0xff]
    %v210 = vld [vmem:[#allocation7 + $0x2b0] sm:$0xff]
    %v211 = vld [vmem:[#allocation7 + $0x2b8] sm:$0xff]
    %v212 = vld [vmem:[#allocation7 + $0x2c0] sm:$0xff]
    %v213 = vld [vmem:[#allocation7 + $0x2c8] sm:$0xff]
    %v214 = vld [vmem:[#allocation7 + $0x2d0] sm:$0xff]
    %v215 = vld [vmem:[#allocation7 + $0x2d8] sm:$0xff]
    %v216 = vld [vmem:[#allocation7 + $0x2e0] sm:$0xff]
    %v217 = vld [vmem:[#allocation7 + $0x2e8] sm:$0xff]
    %v218 = vld [vmem:[#allocation7 + $0x2f0] sm:$0xff]
    %v219 = vld [vmem:[#allocation7 + $0x2f8] sm:$0xff]
    %v220 = vld [vmem:[#allocation7 + $0x300] sm:$0xff]
    %v221 = vld [vmem:[#allocation7 + $0x308] sm:$0xff]
    %v222 = vld [vmem:[#allocation7 + $0x310] sm:$0xff]
    %v223 = vld [vmem:[#allocation7 + $0x318] sm:$0xff]
    %v224 = vld [vmem:[#allocation7 + $0x320] sm:$0xff]
    %v225 = vld [vmem:[#allocation7 + $0x328] sm:$0xff]
    %v226 = vld [vmem:[#allocation7 + $0x330] sm:$0xff]
    %v227 = vld [vmem:[#allocation7 + $0x338] sm:$0xff]
    %v228 = vld [vmem:[#allocation7 + $0x340] sm:$0xff]
    %v229 = vld [vmem:[#allocation7 + $0x348] sm:$0xff]
    %v230 = vld [vmem:[#allocation7 + $0x350] sm:$0xff]
    %v231 = vld [vmem:[#allocation7 + $0x358] sm:$0xff]
    %v232 = vld [vmem:[#allocation7 + $0x360] sm:$0xff]
    %v233 = vld [vmem:[#allocation7 + $0x368] sm:$0xff]
    %v234 = vld [vmem:[#allocation7 + $0x370] sm:$0xff]
    %v235 = vld [vmem:[#allocation7 + $0x378] sm:$0xff]
    %v236 = vld [vmem:[#allocation7 + $0x380] sm:$0xff]
    %v237 = vld [vmem:[#allocation7 + $0x388] sm:$0xff]
    %v238 = vld [vmem:[#allocation7 + $0x390] sm:$0xff]
    %v239 = vld [vmem:[#allocation7 + $0x398] sm:$0xff]
    %v240 = vld [vmem:[#allocation7 + $0x3a0] sm:$0xff]
    %v241 = vld [vmem:[#allocation7 + $0x3a8] sm:$0xff]
    %v242 = vld [vmem:[#allocation7 + $0x3b0] sm:$0xff]
    %v243 = vld [vmem:[#allocation7 + $0x3b8] sm:$0xff]
    %v244 = vld [vmem:[#allocation7 + $0x3c0] sm:$0xff]
    %v245 = vld [vmem:[#allocation7 + $0x3c8] sm:$0xff]
    %v246 = vld [vmem:[#allocation7 + $0x3d0] sm:$0xff]
    %v247 = vld [vmem:[#allocation7 + $0x3d8] sm:$0xff]
    %v248 = vld [vmem:[#allocation7 + $0x3e0] sm:$0xff]
    %v249 = vld [vmem:[#allocation7 + $0x3e8] sm:$0xff]
    %v250 = vld [vmem:[#allocation7 + $0x3f0] sm:$0xff]
    %v251 = vld [vmem:[#allocation7 + $0x3f8] sm:$0xff]
    %v252 = vld [vmem:[#allocation7 + $0x400] sm:$0xff]
    %v253 = vld [vmem:[#allocation7 + $0x408] sm:$0xff]
    %v254 = vld [vmem:[#allocation7 + $0x410] sm:$0xff]
    %v255 = vld [vmem:[#allocation7 + $0x418] sm:$0xff]
    %v256 = vld [vmem:[#allocation7 + $0x420] sm:$0xff]
    %v257 = vld [vmem:[#allocation7 + $0x428] sm:$0xff]
    %v258 = vld [vmem:[#allocation7 + $0x430] sm:$0xff]
    %v259 = vld [vmem:[#allocation7 + $0x438] sm:$0xff]
    %v260 = vld [vmem:[#allocation7 + $0x440] sm:$0xff]
    %v261 = vld [vmem:[#allocation7 + $0x448] sm:$0xff]
    %v262 = vld [vmem:[#allocation7 + $0x450] sm:$0xff]
    %v263 = vld [vmem:[#allocation7 + $0x458] sm:$0xff]
    %v264 = vld [vmem:[#allocation7 + $0x460] sm:$0xff]
    %v265 = vld [vmem:[#allocation7 + $0x468] sm:$0xff]
    %v266 = vld [vmem:[#allocation7 + $0x470] sm:$0xff]
    %v267 = vld [vmem:[#allocation7 + $0x478] sm:$0xff]
    %v268 = vld [vmem:[#allocation7 + $0x480] sm:$0xff]
    %v269 = vld [vmem:[#allocation7 + $0x488] sm:$0xff]
    %v270 = vld [vmem:[#allocation7 + $0x490] sm:$0xff]
    %v271 = vld [vmem:[#allocation7 + $0x498] sm:$0xff]
    %v272 = vld [vmem:[#allocation7 + $0x4a0] sm:$0xff]
    %v273 = vld [vmem:[#allocation7 + $0x4a8] sm:$0xff]
    %v274 = vld [vmem:[#allocation7 + $0x4b0] sm:$0xff]
    %v275 = vld [vmem:[#allocation7 + $0x4b8] sm:$0xff]
    %v276 = vld [vmem:[#allocation7 + $0x4c0] sm:$0xff]
    %v277 = vld [vmem:[#allocation7 + $0x4c8] sm:$0xff]
    %v278 = vld [vmem:[#allocation7 + $0x4d0] sm:$0xff]
    %v279 = vld [vmem:[#allocation7 + $0x4d8] sm:$0xff]
    %v280 = vld [vmem:[#allocation7 + $0x4e0] sm:$0xff]
    %v281 = vld [vmem:[#allocation7 + $0x4e8] sm:$0xff]
    %v282 = vld [vmem:[#allocation7 + $0x4f0] sm:$0xff]
    %v283 = vld [vmem:[#allocation7 + $0x4f8] sm:$0xff]
    %v284 = vld [vmem:[#allocation7 + $0x500] sm:$0xff]
    %v285 = vld [vmem:[#allocation7 + $0x508] sm:$0xff]
    %v286 = vld [vmem:[#allocation7 + $0x510] sm:$0xff]
    %v287 = vld [vmem:[#allocation7 + $0x518] sm:$0xff]
    %v288 = vld [vmem:[#allocation7 + $0x520] sm:$0xff]
    %v289 = vld [vmem:[#allocation7 + $0x528] sm:$0xff]
    %v290 = vld [vmem:[#allocation7 + $0x530] sm:$0xff]
    %v291 = vld [vmem:[#allocation7 + $0x538] sm:$0xff]
    %v292 = vld [vmem:[#allocation7 + $0x540] sm:$0xff]
    %v293 = vld [vmem:[#allocation7 + $0x548] sm:$0xff]
    %v294 = vld [vmem:[#allocation7 + $0x550] sm:$0xff]
    %v295 = vld [vmem:[#allocation7 + $0x558] sm:$0xff]
    %v296 = vld [vmem:[#allocation7 + $0x560] sm:$0xff]
    %v297 = vld [vmem:[#allocation7 + $0x568] sm:$0xff]
    %v298 = vld [vmem:[#allocation7 + $0x570] sm:$0xff]
    %v299 = vld [vmem:[#allocation7 + $0x578] sm:$0xff]
    %v300 = vld [vmem:[#allocation7 + $0x580] sm:$0xff]
    %v301 = vld [vmem:[#allocation7 + $0x588] sm:$0xff]
    %v302 = vld [vmem:[#allocation7 + $0x590] sm:$0xff]
    %v303 = vld [vmem:[#allocation7 + $0x598] sm:$0xff]
    %v304 = vld [vmem:[#allocation7 + $0x5a0] sm:$0xff]
    %v305 = vld [vmem:[#allocation7 + $0x5a8] sm:$0xff]
    %v306 = vld [vmem:[#allocation7 + $0x5b0] sm:$0xff]
    %v307 = vld [vmem:[#allocation7 + $0x5b8] sm:$0xff]
    %v308 = vld [vmem:[#allocation7 + $0x5c0] sm:$0xff]
    %v309 = vld [vmem:[#allocation7 + $0x5c8] sm:$0xff]
    %v310 = vld [vmem:[#allocation7 + $0x5d0] sm:$0xff]
    %v311 = vld [vmem:[#allocation7 + $0x5d8] sm:$0xff]
    %v312 = vld [vmem:[#allocation7 + $0x5e0] sm:$0xff]
    %v313 = vld [vmem:[#allocation7 + $0x5e8] sm:$0xff]
    %v314 = vld [vmem:[#allocation7 + $0x5f0] sm:$0xff]
    %v315 = vld [vmem:[#allocation7 + $0x5f8] sm:$0xff]
    %v316 = vld [vmem:[#allocation5] sm:$0xff]
    %v317 = vld [vmem:[#allocation5 + $0x8] sm:$0xff]
    %v318 = vld [vmem:[#allocation5 + $0x10] sm:$0xff]
    %v319 = vld [vmem:[#allocation5 + $0x18] sm:$0xff]
    %v320 = vunpack.c.l.bf16 %v316
    %v321 = vunpack.c.h.bf16 %v316
    %v322 = vunpack.c.l.bf16 %v317
    %v323 = vunpack.c.h.bf16 %v317
    %v324 = vunpack.c.l.bf16 %v318
    %v325 = vunpack.c.h.bf16 %v318
    %v326 = vunpack.c.l.bf16 %v319
    %v327 = vunpack.c.h.bf16 %v319
    %v334 = vunpack.c.l.b16 %v118
    %v335 = vunpack.c.h.b16 %v118
    %v336 = vunpack.c.l.b16 %v119
    %v337 = vunpack.c.h.b16 %v119
    %v338 = vunpack.c.l.b16 %v120
    %v339 = vunpack.c.h.b16 %v120
    %v340 = vunpack.c.l.b16 %v121
    %v341 = vunpack.c.h.b16 %v121
    %v342 = vunpack.c.l.b16 %v122
    %v343 = vunpack.c.h.b16 %v122
    %v344 = vunpack.c.l.b16 %v123
    %v345 = vunpack.c.h.b16 %v123
    %v346 = vpack.c.b16 %v340, %v334
    %v347 = vpack.c.b16 %v341, %v335
    %v348 = vpack.c.b16 %v342, %v336
    %v349 = vpack.c.b16 %v343, %v337
    %v350 = vpack.c.b16 %v344, %v338
    %v351 = vpack.c.b16 %v345, %v339
    %v550 = vunpack.c.l.b16 %v124
    %v551 = vunpack.c.h.b16 %v124
    %v552 = vunpack.c.l.b16 %v125
    %v553 = vunpack.c.h.b16 %v125
    %v554 = vunpack.c.l.b16 %v126
    %v555 = vunpack.c.h.b16 %v126
    %v556 = vunpack.c.l.b16 %v127
    %v557 = vunpack.c.h.b16 %v127
    %v558 = vunpack.c.l.b16 %v128
    %v559 = vunpack.c.h.b16 %v128
    %v560 = vunpack.c.l.b16 %v129
    %v561 = vunpack.c.h.b16 %v129
    %v562 = vunpack.c.l.b16 %v130
    %v563 = vunpack.c.h.b16 %v130
    %v564 = vunpack.c.l.b16 %v131
    %v565 = vunpack.c.h.b16 %v131
    %v566 = vunpack.c.l.b16 %v132
    %v567 = vunpack.c.h.b16 %v132
    %v568 = vunpack.c.l.b16 %v133
    %v569 = vunpack.c.h.b16 %v133
    %v570 = vunpack.c.l.b16 %v134
    %v571 = vunpack.c.h.b16 %v134
    %v572 = vunpack.c.l.b16 %v135
    %v573 = vunpack.c.h.b16 %v135
    %v574 = vunpack.c.l.b16 %v136
    %v575 = vunpack.c.h.b16 %v136
    %v576 = vunpack.c.l.b16 %v137
    %v577 = vunpack.c.h.b16 %v137
    %v578 = vunpack.c.l.b16 %v138
    %v579 = vunpack.c.h.b16 %v138
    %v580 = vunpack.c.l.b16 %v139
    %v581 = vunpack.c.h.b16 %v139
    %v582 = vunpack.c.l.b16 %v140
    %v583 = vunpack.c.h.b16 %v140
    %v584 = vunpack.c.l.b16 %v141
    %v585 = vunpack.c.h.b16 %v141
    %v586 = vunpack.c.l.b16 %v142
    %v587 = vunpack.c.h.b16 %v142
    %v588 = vunpack.c.l.b16 %v143
    %v589 = vunpack.c.h.b16 %v143
    %v590 = vunpack.c.l.b16 %v144
    %v591 = vunpack.c.h.b16 %v144
    %v592 = vunpack.c.l.b16 %v145
    %v593 = vunpack.c.h.b16 %v145
    %v594 = vunpack.c.l.b16 %v146
    %v595 = vunpack.c.h.b16 %v146
    %v596 = vunpack.c.l.b16 %v147
    %v597 = vunpack.c.h.b16 %v147
    %v598 = vunpack.c.l.b16 %v148
    %v599 = vunpack.c.h.b16 %v148
    %v600 = vunpack.c.l.b16 %v149
    %v601 = vunpack.c.h.b16 %v149
    %v602 = vunpack.c.l.b16 %v150
    %v603 = vunpack.c.h.b16 %v150
    %v604 = vunpack.c.l.b16 %v151
    %v605 = vunpack.c.h.b16 %v151
    %v606 = vunpack.c.l.b16 %v152
    %v607 = vunpack.c.h.b16 %v152
    %v608 = vunpack.c.l.b16 %v153
    %v609 = vunpack.c.h.b16 %v153
    %v610 = vunpack.c.l.b16 %v154
    %v611 = vunpack.c.h.b16 %v154
    %v612 = vunpack.c.l.b16 %v155
    %v613 = vunpack.c.h.b16 %v155
    %v614 = vunpack.c.l.b16 %v156
    %v615 = vunpack.c.h.b16 %v156
    %v616 = vunpack.c.l.b16 %v157
    %v617 = vunpack.c.h.b16 %v157
    %v618 = vunpack.c.l.b16 %v158
    %v619 = vunpack.c.h.b16 %v158
    %v620 = vunpack.c.l.b16 %v159
    %v621 = vunpack.c.h.b16 %v159
    %v622 = vunpack.c.l.b16 %v160
    %v623 = vunpack.c.h.b16 %v160
    %v624 = vunpack.c.l.b16 %v161
    %v625 = vunpack.c.h.b16 %v161
    %v626 = vunpack.c.l.b16 %v162
    %v627 = vunpack.c.h.b16 %v162
    %v628 = vunpack.c.l.b16 %v163
    %v629 = vunpack.c.h.b16 %v163
    %v630 = vunpack.c.l.b16 %v164
    %v631 = vunpack.c.h.b16 %v164
    %v632 = vunpack.c.l.b16 %v165
    %v633 = vunpack.c.h.b16 %v165
    %v634 = vunpack.c.l.b16 %v166
    %v635 = vunpack.c.h.b16 %v166
    %v636 = vunpack.c.l.b16 %v167
    %v637 = vunpack.c.h.b16 %v167
    %v638 = vunpack.c.l.b16 %v168
    %v639 = vunpack.c.h.b16 %v168
    %v640 = vunpack.c.l.b16 %v169
    %v641 = vunpack.c.h.b16 %v169
    %v642 = vunpack.c.l.b16 %v170
    %v643 = vunpack.c.h.b16 %v170
    %v644 = vunpack.c.l.b16 %v171
    %v645 = vunpack.c.h.b16 %v171
    %v646 = vunpack.c.l.b16 %v172
    %v647 = vunpack.c.h.b16 %v172
    %v648 = vunpack.c.l.b16 %v173
    %v649 = vunpack.c.h.b16 %v173
    %v650 = vunpack.c.l.b16 %v174
    %v651 = vunpack.c.h.b16 %v174
    %v652 = vunpack.c.l.b16 %v175
    %v653 = vunpack.c.h.b16 %v175
    %v654 = vunpack.c.l.b16 %v176
    %v655 = vunpack.c.h.b16 %v176
    %v656 = vunpack.c.l.b16 %v177
    %v657 = vunpack.c.h.b16 %v177
    %v658 = vunpack.c.l.b16 %v178
    %v659 = vunpack.c.h.b16 %v178
    %v660 = vunpack.c.l.b16 %v179
    %v661 = vunpack.c.h.b16 %v179
    %v662 = vunpack.c.l.b16 %v180
    %v663 = vunpack.c.h.b16 %v180
    %v664 = vunpack.c.l.b16 %v181
    %v665 = vunpack.c.h.b16 %v181
    %v666 = vunpack.c.l.b16 %v182
    %v667 = vunpack.c.h.b16 %v182
    %v668 = vunpack.c.l.b16 %v183
    %v669 = vunpack.c.h.b16 %v183
    %v670 = vunpack.c.l.b16 %v184
    %v671 = vunpack.c.h.b16 %v184
    %v672 = vunpack.c.l.b16 %v185
    %v673 = vunpack.c.h.b16 %v185
    %v674 = vunpack.c.l.b16 %v186
    %v675 = vunpack.c.h.b16 %v186
    %v676 = vunpack.c.l.b16 %v187
    %v677 = vunpack.c.h.b16 %v187
    %v678 = vunpack.c.l.b16 %v188
    %v679 = vunpack.c.h.b16 %v188
    %v680 = vunpack.c.l.b16 %v189
    %v681 = vunpack.c.h.b16 %v189
    %v682 = vunpack.c.l.b16 %v190
    %v683 = vunpack.c.h.b16 %v190
    %v684 = vunpack.c.l.b16 %v191
    %v685 = vunpack.c.h.b16 %v191
    %v686 = vunpack.c.l.b16 %v192
    %v687 = vunpack.c.h.b16 %v192
    %v688 = vunpack.c.l.b16 %v193
    %v689 = vunpack.c.h.b16 %v193
    %v690 = vunpack.c.l.b16 %v194
    %v691 = vunpack.c.h.b16 %v194
    %v692 = vunpack.c.l.b16 %v195
    %v693 = vunpack.c.h.b16 %v195
    %v694 = vunpack.c.l.b16 %v196
    %v695 = vunpack.c.h.b16 %v196
    %v696 = vunpack.c.l.b16 %v197
    %v697 = vunpack.c.h.b16 %v197
    %v698 = vunpack.c.l.b16 %v198
    %v699 = vunpack.c.h.b16 %v198
    %v700 = vunpack.c.l.b16 %v199
    %v701 = vunpack.c.h.b16 %v199
    %v702 = vunpack.c.l.b16 %v200
    %v703 = vunpack.c.h.b16 %v200
    %v704 = vunpack.c.l.b16 %v201
    %v705 = vunpack.c.h.b16 %v201
    %v706 = vunpack.c.l.b16 %v202
    %v707 = vunpack.c.h.b16 %v202
    %v708 = vunpack.c.l.b16 %v203
    %v709 = vunpack.c.h.b16 %v203
    %v710 = vunpack.c.l.b16 %v204
    %v711 = vunpack.c.h.b16 %v204
    %v712 = vunpack.c.l.b16 %v205
    %v713 = vunpack.c.h.b16 %v205
    %v714 = vunpack.c.l.b16 %v206
    %v715 = vunpack.c.h.b16 %v206
    %v716 = vunpack.c.l.b16 %v207
    %v717 = vunpack.c.h.b16 %v207
    %v718 = vunpack.c.l.b16 %v208
    %v719 = vunpack.c.h.b16 %v208
    %v720 = vunpack.c.l.b16 %v209
    %v721 = vunpack.c.h.b16 %v209
    %v722 = vunpack.c.l.b16 %v210
    %v723 = vunpack.c.h.b16 %v210
    %v724 = vunpack.c.l.b16 %v211
    %v725 = vunpack.c.h.b16 %v211
    %v726 = vunpack.c.l.b16 %v212
    %v727 = vunpack.c.h.b16 %v212
    %v728 = vunpack.c.l.b16 %v213
    %v729 = vunpack.c.h.b16 %v213
    %v730 = vunpack.c.l.b16 %v214
    %v731 = vunpack.c.h.b16 %v214
    %v732 = vunpack.c.l.b16 %v215
    %v733 = vunpack.c.h.b16 %v215
    %v734 = vunpack.c.l.b16 %v216
    %v735 = vunpack.c.h.b16 %v216
    %v736 = vunpack.c.l.b16 %v217
    %v737 = vunpack.c.h.b16 %v217
    %v738 = vunpack.c.l.b16 %v218
    %v739 = vunpack.c.h.b16 %v218
    %v740 = vunpack.c.l.b16 %v219
    %v741 = vunpack.c.h.b16 %v219
    %v742 = vunpack.c.l.b16 %v220
    %v743 = vunpack.c.h.b16 %v220
    %v744 = vunpack.c.l.b16 %v221
    %v745 = vunpack.c.h.b16 %v221
    %v746 = vunpack.c.l.b16 %v222
    %v747 = vunpack.c.h.b16 %v222
    %v748 = vunpack.c.l.b16 %v223
    %v749 = vunpack.c.h.b16 %v223
    %v750 = vunpack.c.l.b16 %v224
    %v751 = vunpack.c.h.b16 %v224
    %v752 = vunpack.c.l.b16 %v225
    %v753 = vunpack.c.h.b16 %v225
    %v754 = vunpack.c.l.b16 %v226
    %v755 = vunpack.c.h.b16 %v226
    %v756 = vunpack.c.l.b16 %v227
    %v757 = vunpack.c.h.b16 %v227
    %v758 = vunpack.c.l.b16 %v228
    %v759 = vunpack.c.h.b16 %v228
    %v760 = vunpack.c.l.b16 %v229
    %v761 = vunpack.c.h.b16 %v229
    %v762 = vunpack.c.l.b16 %v230
    %v763 = vunpack.c.h.b16 %v230
    %v764 = vunpack.c.l.b16 %v231
    %v765 = vunpack.c.h.b16 %v231
    %v766 = vunpack.c.l.b16 %v232
    %v767 = vunpack.c.h.b16 %v232
    %v768 = vunpack.c.l.b16 %v233
    %v769 = vunpack.c.h.b16 %v233
    %v770 = vunpack.c.l.b16 %v234
    %v771 = vunpack.c.h.b16 %v234
    %v772 = vunpack.c.l.b16 %v235
    %v773 = vunpack.c.h.b16 %v235
    %v774 = vunpack.c.l.b16 %v236
    %v775 = vunpack.c.h.b16 %v236
    %v776 = vunpack.c.l.b16 %v237
    %v777 = vunpack.c.h.b16 %v237
    %v778 = vunpack.c.l.b16 %v238
    %v779 = vunpack.c.h.b16 %v238
    %v780 = vunpack.c.l.b16 %v239
    %v781 = vunpack.c.h.b16 %v239
    %v782 = vunpack.c.l.b16 %v240
    %v783 = vunpack.c.h.b16 %v240
    %v784 = vunpack.c.l.b16 %v241
    %v785 = vunpack.c.h.b16 %v241
    %v786 = vunpack.c.l.b16 %v242
    %v787 = vunpack.c.h.b16 %v242
    %v788 = vunpack.c.l.b16 %v243
    %v789 = vunpack.c.h.b16 %v243
    %v790 = vunpack.c.l.b16 %v244
    %v791 = vunpack.c.h.b16 %v244
    %v792 = vunpack.c.l.b16 %v245
    %v793 = vunpack.c.h.b16 %v245
    %v794 = vunpack.c.l.b16 %v246
    %v795 = vunpack.c.h.b16 %v246
    %v796 = vunpack.c.l.b16 %v247
    %v797 = vunpack.c.h.b16 %v247
    %v798 = vunpack.c.l.b16 %v248
    %v799 = vunpack.c.h.b16 %v248
    %v800 = vunpack.c.l.b16 %v249
    %v801 = vunpack.c.h.b16 %v249
    %v802 = vunpack.c.l.b16 %v250
    %v803 = vunpack.c.h.b16 %v250
    %v804 = vunpack.c.l.b16 %v251
    %v805 = vunpack.c.h.b16 %v251
    %v806 = vunpack.c.l.b16 %v252
    %v807 = vunpack.c.h.b16 %v252
    %v808 = vunpack.c.l.b16 %v253
    %v809 = vunpack.c.h.b16 %v253
    %v810 = vunpack.c.l.b16 %v254
    %v811 = vunpack.c.h.b16 %v254
    %v812 = vunpack.c.l.b16 %v255
    %v813 = vunpack.c.h.b16 %v255
    %v814 = vunpack.c.l.b16 %v256
    %v815 = vunpack.c.h.b16 %v256
    %v816 = vunpack.c.l.b16 %v257
    %v817 = vunpack.c.h.b16 %v257
    %v818 = vunpack.c.l.b16 %v258
    %v819 = vunpack.c.h.b16 %v258
    %v820 = vunpack.c.l.b16 %v259
    %v821 = vunpack.c.h.b16 %v259
    %v822 = vunpack.c.l.b16 %v260
    %v823 = vunpack.c.h.b16 %v260
    %v824 = vunpack.c.l.b16 %v261
    %v825 = vunpack.c.h.b16 %v261
    %v826 = vunpack.c.l.b16 %v262
    %v827 = vunpack.c.h.b16 %v262
    %v828 = vunpack.c.l.b16 %v263
    %v829 = vunpack.c.h.b16 %v263
    %v830 = vunpack.c.l.b16 %v264
    %v831 = vunpack.c.h.b16 %v264
    %v832 = vunpack.c.l.b16 %v265
    %v833 = vunpack.c.h.b16 %v265
    %v834 = vunpack.c.l.b16 %v266
    %v835 = vunpack.c.h.b16 %v266
    %v836 = vunpack.c.l.b16 %v267
    %v837 = vunpack.c.h.b16 %v267
    %v838 = vunpack.c.l.b16 %v268
    %v839 = vunpack.c.h.b16 %v268
    %v840 = vunpack.c.l.b16 %v269
    %v841 = vunpack.c.h.b16 %v269
    %v842 = vunpack.c.l.b16 %v270
    %v843 = vunpack.c.h.b16 %v270
    %v844 = vunpack.c.l.b16 %v271
    %v845 = vunpack.c.h.b16 %v271
    %v846 = vunpack.c.l.b16 %v272
    %v847 = vunpack.c.h.b16 %v272
    %v848 = vunpack.c.l.b16 %v273
    %v849 = vunpack.c.h.b16 %v273
    %v850 = vunpack.c.l.b16 %v274
    %v851 = vunpack.c.h.b16 %v274
    %v852 = vunpack.c.l.b16 %v275
    %v853 = vunpack.c.h.b16 %v275
    %v854 = vunpack.c.l.b16 %v276
    %v855 = vunpack.c.h.b16 %v276
    %v856 = vunpack.c.l.b16 %v277
    %v857 = vunpack.c.h.b16 %v277
    %v858 = vunpack.c.l.b16 %v278
    %v859 = vunpack.c.h.b16 %v278
    %v860 = vunpack.c.l.b16 %v279
    %v861 = vunpack.c.h.b16 %v279
    %v862 = vunpack.c.l.b16 %v280
    %v863 = vunpack.c.h.b16 %v280
    %v864 = vunpack.c.l.b16 %v281
    %v865 = vunpack.c.h.b16 %v281
    %v866 = vunpack.c.l.b16 %v282
    %v867 = vunpack.c.h.b16 %v282
    %v868 = vunpack.c.l.b16 %v283
    %v869 = vunpack.c.h.b16 %v283
    %v870 = vunpack.c.l.b16 %v284
    %v871 = vunpack.c.h.b16 %v284
    %v872 = vunpack.c.l.b16 %v285
    %v873 = vunpack.c.h.b16 %v285
    %v874 = vunpack.c.l.b16 %v286
    %v875 = vunpack.c.h.b16 %v286
    %v876 = vunpack.c.l.b16 %v287
    %v877 = vunpack.c.h.b16 %v287
    %v878 = vunpack.c.l.b16 %v288
    %v879 = vunpack.c.h.b16 %v288
    %v880 = vunpack.c.l.b16 %v289
    %v881 = vunpack.c.h.b16 %v289
    %v882 = vunpack.c.l.b16 %v290
    %v883 = vunpack.c.h.b16 %v290
    %v884 = vunpack.c.l.b16 %v291
    %v885 = vunpack.c.h.b16 %v291
    %v886 = vunpack.c.l.b16 %v292
    %v887 = vunpack.c.h.b16 %v292
    %v888 = vunpack.c.l.b16 %v293
    %v889 = vunpack.c.h.b16 %v293
    %v890 = vunpack.c.l.b16 %v294
    %v891 = vunpack.c.h.b16 %v294
    %v892 = vunpack.c.l.b16 %v295
    %v893 = vunpack.c.h.b16 %v295
    %v894 = vunpack.c.l.b16 %v296
    %v895 = vunpack.c.h.b16 %v296
    %v896 = vunpack.c.l.b16 %v297
    %v897 = vunpack.c.h.b16 %v297
    %v898 = vunpack.c.l.b16 %v298
    %v899 = vunpack.c.h.b16 %v298
    %v900 = vunpack.c.l.b16 %v299
    %v901 = vunpack.c.h.b16 %v299
    %v902 = vunpack.c.l.b16 %v300
    %v903 = vunpack.c.h.b16 %v300
    %v904 = vunpack.c.l.b16 %v301
    %v905 = vunpack.c.h.b16 %v301
    %v906 = vunpack.c.l.b16 %v302
    %v907 = vunpack.c.h.b16 %v302
    %v908 = vunpack.c.l.b16 %v303
    %v909 = vunpack.c.h.b16 %v303
    %v910 = vunpack.c.l.b16 %v304
    %v911 = vunpack.c.h.b16 %v304
    %v912 = vunpack.c.l.b16 %v305
    %v913 = vunpack.c.h.b16 %v305
    %v914 = vunpack.c.l.b16 %v306
    %v915 = vunpack.c.h.b16 %v306
    %v916 = vunpack.c.l.b16 %v307
    %v917 = vunpack.c.h.b16 %v307
    %v918 = vunpack.c.l.b16 %v308
    %v919 = vunpack.c.h.b16 %v308
    %v920 = vunpack.c.l.b16 %v309
    %v921 = vunpack.c.h.b16 %v309
    %v922 = vunpack.c.l.b16 %v310
    %v923 = vunpack.c.h.b16 %v310
    %v924 = vunpack.c.l.b16 %v311
    %v925 = vunpack.c.h.b16 %v311
    %v926 = vunpack.c.l.b16 %v312
    %v927 = vunpack.c.h.b16 %v312
    %v928 = vunpack.c.l.b16 %v313
    %v929 = vunpack.c.h.b16 %v313
    %v930 = vunpack.c.l.b16 %v314
    %v931 = vunpack.c.h.b16 %v314
    %v932 = vunpack.c.l.b16 %v315
    %v933 = vunpack.c.h.b16 %v315
    %v934 = vpack.c.b16 %v554, %v550
    %v935 = vpack.c.b16 %v555, %v551
    %v936 = vpack.c.b16 %v556, %v552
    %v937 = vpack.c.b16 %v557, %v553
    %v938 = vpack.c.b16 %v562, %v558
    %v939 = vpack.c.b16 %v563, %v559
    %v940 = vpack.c.b16 %v564, %v560
    %v941 = vpack.c.b16 %v565, %v561
    %v942 = vpack.c.b16 %v570, %v566
    %v943 = vpack.c.b16 %v571, %v567
    %v944 = vpack.c.b16 %v572, %v568
    %v945 = vpack.c.b16 %v573, %v569
    %v946 = vpack.c.b16 %v578, %v574
    %v947 = vpack.c.b16 %v579, %v575
    %v948 = vpack.c.b16 %v580, %v576
    %v949 = vpack.c.b16 %v581, %v577
    %v950 = vpack.c.b16 %v586, %v582
    %v951 = vpack.c.b16 %v587, %v583
    %v952 = vpack.c.b16 %v588, %v584
    %v953 = vpack.c.b16 %v589, %v585
    %v954 = vpack.c.b16 %v594, %v590
    %v955 = vpack.c.b16 %v595, %v591
    %v956 = vpack.c.b16 %v596, %v592
    %v957 = vpack.c.b16 %v597, %v593
    %v958 = vpack.c.b16 %v602, %v598
    %v959 = vpack.c.b16 %v603, %v599
    %v960 = vpack.c.b16 %v604, %v600
    %v961 = vpack.c.b16 %v605, %v601
    %v962 = vpack.c.b16 %v610, %v606
    %v963 = vpack.c.b16 %v611, %v607
    %v964 = vpack.c.b16 %v612, %v608
    %v965 = vpack.c.b16 %v613, %v609
    %v966 = vpack.c.b16 %v618, %v614
    %v967 = vpack.c.b16 %v619, %v615
    %v968 = vpack.c.b16 %v620, %v616
    %v969 = vpack.c.b16 %v621, %v617
    %v970 = vpack.c.b16 %v626, %v622
    %v971 = vpack.c.b16 %v627, %v623
    %v972 = vpack.c.b16 %v628, %v624
    %v973 = vpack.c.b16 %v629, %v625
    %v974 = vpack.c.b16 %v634, %v630
    %v975 = vpack.c.b16 %v635, %v631
    %v976 = vpack.c.b16 %v636, %v632
    %v977 = vpack.c.b16 %v637, %v633
    %v978 = vpack.c.b16 %v642, %v638
    %v979 = vpack.c.b16 %v643, %v639
    %v980 = vpack.c.b16 %v644, %v640
    %v981 = vpack.c.b16 %v645, %v641
    %v982 = vpack.c.b16 %v650, %v646
    %v983 = vpack.c.b16 %v651, %v647
    %v984 = vpack.c.b16 %v652, %v648
    %v985 = vpack.c.b16 %v653, %v649
    %v986 = vpack.c.b16 %v658, %v654
    %v987 = vpack.c.b16 %v659, %v655
    %v988 = vpack.c.b16 %v660, %v656
    %v989 = vpack.c.b16 %v661, %v657
    %v990 = vpack.c.b16 %v666, %v662
    %v991 = vpack.c.b16 %v667, %v663
    %v992 = vpack.c.b16 %v668, %v664
    %v993 = vpack.c.b16 %v669, %v665
    %v994 = vpack.c.b16 %v674, %v670
    %v995 = vpack.c.b16 %v675, %v671
    %v996 = vpack.c.b16 %v676, %v672
    %v997 = vpack.c.b16 %v677, %v673
    %v998 = vpack.c.b16 %v682, %v678
    %v999 = vpack.c.b16 %v683, %v679
    %v1000 = vpack.c.b16 %v684, %v680
    %v1001 = vpack.c.b16 %v685, %v681
    %v1002 = vpack.c.b16 %v690, %v686
    %v1003 = vpack.c.b16 %v691, %v687
    %v1004 = vpack.c.b16 %v692, %v688
    %v1005 = vpack.c.b16 %v693, %v689
    %v1006 = vpack.c.b16 %v698, %v694
    %v1007 = vpack.c.b16 %v699, %v695
    %v1008 = vpack.c.b16 %v700, %v696
    %v1009 = vpack.c.b16 %v701, %v697
    %v1010 = vpack.c.b16 %v706, %v702
    %v1011 = vpack.c.b16 %v707, %v703
    %v1012 = vpack.c.b16 %v708, %v704
    %v1013 = vpack.c.b16 %v709, %v705
    %v1014 = vpack.c.b16 %v714, %v710
    %v1015 = vpack.c.b16 %v715, %v711
    %v1016 = vpack.c.b16 %v716, %v712
    %v1017 = vpack.c.b16 %v717, %v713
    %v1018 = vpack.c.b16 %v722, %v718
    %v1019 = vpack.c.b16 %v723, %v719
    %v1020 = vpack.c.b16 %v724, %v720
    %v1021 = vpack.c.b16 %v725, %v721
    %v1022 = vpack.c.b16 %v730, %v726
    %v1023 = vpack.c.b16 %v731, %v727
    %v1024 = vpack.c.b16 %v732, %v728
    %v1025 = vpack.c.b16 %v733, %v729
    %v1026 = vpack.c.b16 %v738, %v734
    %v1027 = vpack.c.b16 %v739, %v735
    %v1028 = vpack.c.b16 %v740, %v736
    %v1029 = vpack.c.b16 %v741, %v737
    %v1030 = vpack.c.b16 %v746, %v742
    %v1031 = vpack.c.b16 %v747, %v743
    %v1032 = vpack.c.b16 %v748, %v744
    %v1033 = vpack.c.b16 %v749, %v745
    %v1034 = vpack.c.b16 %v754, %v750
    %v1035 = vpack.c.b16 %v755, %v751
    %v1036 = vpack.c.b16 %v756, %v752
    %v1037 = vpack.c.b16 %v757, %v753
    %v1038 = vpack.c.b16 %v762, %v758
    %v1039 = vpack.c.b16 %v763, %v759
    %v1040 = vpack.c.b16 %v764, %v760
    %v1041 = vpack.c.b16 %v765, %v761
    %v1042 = vpack.c.b16 %v770, %v766
    %v1043 = vpack.c.b16 %v771, %v767
    %v1044 = vpack.c.b16 %v772, %v768
    %v1045 = vpack.c.b16 %v773, %v769
    %v1046 = vpack.c.b16 %v778, %v774
    %v1047 = vpack.c.b16 %v779, %v775
    %v1048 = vpack.c.b16 %v780, %v776
    %v1049 = vpack.c.b16 %v781, %v777
    %v1050 = vpack.c.b16 %v786, %v782
    %v1051 = vpack.c.b16 %v787, %v783
    %v1052 = vpack.c.b16 %v788, %v784
    %v1053 = vpack.c.b16 %v789, %v785
    %v1054 = vpack.c.b16 %v794, %v790
    %v1055 = vpack.c.b16 %v795, %v791
    %v1056 = vpack.c.b16 %v796, %v792
    %v1057 = vpack.c.b16 %v797, %v793
    %v1058 = vpack.c.b16 %v802, %v798
    %v1059 = vpack.c.b16 %v803, %v799
    %v1060 = vpack.c.b16 %v804, %v800
    %v1061 = vpack.c.b16 %v805, %v801
    %v1062 = vpack.c.b16 %v810, %v806
    %v1063 = vpack.c.b16 %v811, %v807
    %v1064 = vpack.c.b16 %v812, %v808
    %v1065 = vpack.c.b16 %v813, %v809
    %v1066 = vpack.c.b16 %v818, %v814
    %v1067 = vpack.c.b16 %v819, %v815
    %v1068 = vpack.c.b16 %v820, %v816
    %v1069 = vpack.c.b16 %v821, %v817
    %v1070 = vpack.c.b16 %v826, %v822
    %v1071 = vpack.c.b16 %v827, %v823
    %v1072 = vpack.c.b16 %v828, %v824
    %v1073 = vpack.c.b16 %v829, %v825
    %v1074 = vpack.c.b16 %v834, %v830
    %v1075 = vpack.c.b16 %v835, %v831
    %v1076 = vpack.c.b16 %v836, %v832
    %v1077 = vpack.c.b16 %v837, %v833
    %v1078 = vpack.c.b16 %v842, %v838
    %v1079 = vpack.c.b16 %v843, %v839
    %v1080 = vpack.c.b16 %v844, %v840
    %v1081 = vpack.c.b16 %v845, %v841
    %v1082 = vpack.c.b16 %v850, %v846
    %v1083 = vpack.c.b16 %v851, %v847
    %v1084 = vpack.c.b16 %v852, %v848
    %v1085 = vpack.c.b16 %v853, %v849
    %v1086 = vpack.c.b16 %v858, %v854
    %v1087 = vpack.c.b16 %v859, %v855
    %v1088 = vpack.c.b16 %v860, %v856
    %v1089 = vpack.c.b16 %v861, %v857
    %v1090 = vpack.c.b16 %v866, %v862
    %v1091 = vpack.c.b16 %v867, %v863
    %v1092 = vpack.c.b16 %v868, %v864
    %v1093 = vpack.c.b16 %v869, %v865
    %v1094 = vpack.c.b16 %v874, %v870
    %v1095 = vpack.c.b16 %v875, %v871
    %v1096 = vpack.c.b16 %v876, %v872
    %v1097 = vpack.c.b16 %v877, %v873
    %v1098 = vpack.c.b16 %v882, %v878
    %v1099 = vpack.c.b16 %v883, %v879
    %v1100 = vpack.c.b16 %v884, %v880
    %v1101 = vpack.c.b16 %v885, %v881
    %v1102 = vpack.c.b16 %v890, %v886
    %v1103 = vpack.c.b16 %v891, %v887
    %v1104 = vpack.c.b16 %v892, %v888
    %v1105 = vpack.c.b16 %v893, %v889
    %v1106 = vpack.c.b16 %v898, %v894
    %v1107 = vpack.c.b16 %v899, %v895
    %v1108 = vpack.c.b16 %v900, %v896
    %v1109 = vpack.c.b16 %v901, %v897
    %v1110 = vpack.c.b16 %v906, %v902
    %v1111 = vpack.c.b16 %v907, %v903
    %v1112 = vpack.c.b16 %v908, %v904
    %v1113 = vpack.c.b16 %v909, %v905
    %v1114 = vpack.c.b16 %v914, %v910
    %v1115 = vpack.c.b16 %v915, %v911
    %v1116 = vpack.c.b16 %v916, %v912
    %v1117 = vpack.c.b16 %v917, %v913
    %v1118 = vpack.c.b16 %v922, %v918
    %v1119 = vpack.c.b16 %v923, %v919
    %v1120 = vpack.c.b16 %v924, %v920
    %v1121 = vpack.c.b16 %v925, %v921
    %v1122 = vpack.c.b16 %v930, %v926
    %v1123 = vpack.c.b16 %v931, %v927
    %v1124 = vpack.c.b16 %v932, %v928
    %v1125 = vpack.c.b16 %v933, %v929
    %1318 = vmatpush.bf16.msra.mxu0 %v962
    %1319 = vmatpush.bf16.msra.mxu0 %v958
    %1320 = vmatpush.bf16.msra.mxu0 %v954
    %1321 = vmatpush.bf16.msra.mxu0 %v950
    %1322 = vmatpush.bf16.msra.mxu0 %v946
    %1323 = vmatpush.bf16.msra.mxu0 %v942
    %1324 = vmatpush.bf16.msra.mxu0 %v938
    %1325 = vmatpush.bf16.msra.mxu0 %v934
    %1326 = vmatmul.bf16.gmra.mxu0 %v346
    %v1327 = vpop.f32.mrf.mxu0
    %v1328 = vadd.f32 %v320, %v1327
    %v1329 = vpop.f32.mrf.mxu0
    %v1330 = vadd.f32 %v324, %v1329
    %1331 = vdwg.mxu0
    %1332 = vmatpush.bf16.msra.mxu0 %v994
    %1333 = vmatpush.bf16.msra.mxu0 %v990
    %1334 = vmatpush.bf16.msra.mxu0 %v986
    %1335 = vmatpush.bf16.msra.mxu0 %v982
    %1336 = vmatpush.bf16.msra.mxu0 %v978
    %1337 = vmatpush.bf16.msra.mxu0 %v974
    %1338 = vmatpush.bf16.msra.mxu0 %v970
    %1339 = vmatpush.bf16.msra.mxu0 %v966
    %1340 = vmatmul.bf16.gmra.mxu0 %v347
    %v1341 = vpop.f32.mrf.mxu0
    %v1342 = vadd.f32 %v1328, %v1341
    %v1343 = vpop.f32.mrf.mxu0
    %v1344 = vadd.f32 %v1330, %v1343
    %1345 = vdwg.mxu0
    %1346 = vmatpush.bf16.msra.mxu0 %v1026
    %1347 = vmatpush.bf16.msra.mxu0 %v1022
    %1348 = vmatpush.bf16.msra.mxu0 %v1018
    %1349 = vmatpush.bf16.msra.mxu0 %v1014
    %1350 = vmatpush.bf16.msra.mxu0 %v1010
    %1351 = vmatpush.bf16.msra.mxu0 %v1006
    %1352 = vmatpush.bf16.msra.mxu0 %v1002
    %1353 = vmatpush.bf16.msra.mxu0 %v998
    %1354 = vmatmul.bf16.gmra.mxu0 %v348
    %v1355 = vpop.f32.mrf.mxu0
    %v1356 = vadd.f32 %v1342, %v1355
    %v1357 = vpop.f32.mrf.mxu0
    %v1358 = vadd.f32 %v1344, %v1357
    %1359 = vdwg.mxu0
    %1360 = vmatpush.bf16.msra.mxu0 %v1058
    %1361 = vmatpush.bf16.msra.mxu0 %v1054
    %1362 = vmatpush.bf16.msra.mxu0 %v1050
    %1363 = vmatpush.bf16.msra.mxu0 %v1046
    %1364 = vmatpush.bf16.msra.mxu0 %v1042
    %1365 = vmatpush.bf16.msra.mxu0 %v1038
    %1366 = vmatpush.bf16.msra.mxu0 %v1034
    %1367 = vmatpush.bf16.msra.mxu0 %v1030
    %1368 = vmatmul.bf16.gmra.mxu0 %v349
    %v1369 = vpop.f32.mrf.mxu0
    %v1370 = vadd.f32 %v1356, %v1369
    %v1371 = vpop.f32.mrf.mxu0
    %v1372 = vadd.f32 %v1358, %v1371
    %1373 = vdwg.mxu0
    %1374 = vmatpush.bf16.msra.mxu0 %v1090
    %1375 = vmatpush.bf16.msra.mxu0 %v1086
    %1376 = vmatpush.bf16.msra.mxu0 %v1082
    %1377 = vmatpush.bf16.msra.mxu0 %v1078
    %1378 = vmatpush.bf16.msra.mxu0 %v1074
    %1379 = vmatpush.bf16.msra.mxu0 %v1070
    %1380 = vmatpush.bf16.msra.mxu0 %v1066
    %1381 = vmatpush.bf16.msra.mxu0 %v1062
    %1382 = vmatmul.bf16.gmra.mxu0 %v350
    %v1383 = vpop.f32.mrf.mxu0
    %v1384 = vadd.f32 %v1370, %v1383
    %v1385 = vpop.f32.mrf.mxu0
    %v1386 = vadd.f32 %v1372, %v1385
    %1387 = vdwg.mxu0
    %1388 = vmatpush.bf16.msra.mxu0 %v1122
    %1389 = vmatpush.bf16.msra.mxu0 %v1118
    %1390 = vmatpush.bf16.msra.mxu0 %v1114
    %1391 = vmatpush.bf16.msra.mxu0 %v1110
    %1392 = vmatpush.bf16.msra.mxu0 %v1106
    %1393 = vmatpush.bf16.msra.mxu0 %v1102
    %1394 = vmatpush.bf16.msra.mxu0 %v1098
    %1395 = vmatpush.bf16.msra.mxu0 %v1094
    %1396 = vmatmul.bf16.gmra.mxu0 %v351
    %v1397 = vpop.f32.mrf.mxu0
    %v1398 = vadd.f32 %v1384, %v1397
    %v1399 = vpop.f32.mrf.mxu0
    %v1400 = vadd.f32 %v1386, %v1399
    %1401 = vdwg.mxu0
    %1402 = vmatpush.bf16.msra.mxu0 %v963
    %1403 = vmatpush.bf16.msra.mxu0 %v959
    %1404 = vmatpush.bf16.msra.mxu0 %v955
    %1405 = vmatpush.bf16.msra.mxu0 %v951
    %1406 = vmatpush.bf16.msra.mxu0 %v947
    %1407 = vmatpush.bf16.msra.mxu0 %v943
    %1408 = vmatpush.bf16.msra.mxu0 %v939
    %1409 = vmatpush.bf16.msra.mxu0 %v935
    %1410 = vmatmul.bf16.gmra.mxu0 %v346
    %v1411 = vpop.f32.mrf.mxu0
    %v1412 = vadd.f32 %v321, %v1411
    %v1413 = vpop.f32.mrf.mxu0
    %v1414 = vadd.f32 %v325, %v1413
    %1415 = vdwg.mxu0
    %1416 = vmatpush.bf16.msra.mxu0 %v995
    %1417 = vmatpush.bf16.msra.mxu0 %v991
    %1418 = vmatpush.bf16.msra.mxu0 %v987
    %1419 = vmatpush.bf16.msra.mxu0 %v983
    %1420 = vmatpush.bf16.msra.mxu0 %v979
    %1421 = vmatpush.bf16.msra.mxu0 %v975
    %1422 = vmatpush.bf16.msra.mxu0 %v971
    %1423 = vmatpush.bf16.msra.mxu0 %v967
    %1424 = vmatmul.bf16.gmra.mxu0 %v347
    %v1425 = vpop.f32.mrf.mxu0
    %v1426 = vadd.f32 %v1412, %v1425
    %v1427 = vpop.f32.mrf.mxu0
    %v1428 = vadd.f32 %v1414, %v1427
    %1429 = vdwg.mxu0
    %1430 = vmatpush.bf16.msra.mxu0 %v1027
    %1431 = vmatpush.bf16.msra.mxu0 %v1023
    %1432 = vmatpush.bf16.msra.mxu0 %v1019
    %1433 = vmatpush.bf16.msra.mxu0 %v1015
    %1434 = vmatpush.bf16.msra.mxu0 %v1011
    %1435 = vmatpush.bf16.msra.mxu0 %v1007
    %1436 = vmatpush.bf16.msra.mxu0 %v1003
    %1437 = vmatpush.bf16.msra.mxu0 %v999
    %1438 = vmatmul.bf16.gmra.mxu0 %v348
    %v1439 = vpop.f32.mrf.mxu0
    %v1440 = vadd.f32 %v1426, %v1439
    %v1441 = vpop.f32.mrf.mxu0
    %v1442 = vadd.f32 %v1428, %v1441
    %1443 = vdwg.mxu0
    %1444 = vmatpush.bf16.msra.mxu0 %v1059
    %1445 = vmatpush.bf16.msra.mxu0 %v1055
    %1446 = vmatpush.bf16.msra.mxu0 %v1051
    %1447 = vmatpush.bf16.msra.mxu0 %v1047
    %1448 = vmatpush.bf16.msra.mxu0 %v1043
    %1449 = vmatpush.bf16.msra.mxu0 %v1039
    %1450 = vmatpush.bf16.msra.mxu0 %v1035
    %1451 = vmatpush.bf16.msra.mxu0 %v1031
    %1452 = vmatmul.bf16.gmra.mxu0 %v349
    %v1453 = vpop.f32.mrf.mxu0
    %v1454 = vadd.f32 %v1440, %v1453
    %v1455 = vpop.f32.mrf.mxu0
    %v1456 = vadd.f32 %v1442, %v1455
    %1457 = vdwg.mxu0
    %1458 = vmatpush.bf16.msra.mxu0 %v1091
    %1459 = vmatpush.bf16.msra.mxu0 %v1087
    %1460 = vmatpush.bf16.msra.mxu0 %v1083
    %1461 = vmatpush.bf16.msra.mxu0 %v1079
    %1462 = vmatpush.bf16.msra.mxu0 %v1075
    %1463 = vmatpush.bf16.msra.mxu0 %v1071
    %1464 = vmatpush.bf16.msra.mxu0 %v1067
    %1465 = vmatpush.bf16.msra.mxu0 %v1063
    %1466 = vmatmul.bf16.gmra.mxu0 %v350
    %v1467 = vpop.f32.mrf.mxu0
    %v1468 = vadd.f32 %v1454, %v1467
    %v1469 = vpop.f32.mrf.mxu0
    %v1470 = vadd.f32 %v1456, %v1469
    %1471 = vdwg.mxu0
    %1472 = vmatpush.bf16.msra.mxu0 %v1123
    %1473 = vmatpush.bf16.msra.mxu0 %v1119
    %1474 = vmatpush.bf16.msra.mxu0 %v1115
    %1475 = vmatpush.bf16.msra.mxu0 %v1111
    %1476 = vmatpush.bf16.msra.mxu0 %v1107
    %1477 = vmatpush.bf16.msra.mxu0 %v1103
    %1478 = vmatpush.bf16.msra.mxu0 %v1099
    %1479 = vmatpush.bf16.msra.mxu0 %v1095
    %1480 = vmatmul.bf16.gmra.mxu0 %v351
    %v1481 = vpop.f32.mrf.mxu0
    %v1482 = vadd.f32 %v1468, %v1481
    %v1483 = vpop.f32.mrf.mxu0
    %v1484 = vadd.f32 %v1470, %v1483
    %1485 = vdwg.mxu0
    %1486 = vmatpush.bf16.msra.mxu0 %v964
    %1487 = vmatpush.bf16.msra.mxu0 %v960
    %1488 = vmatpush.bf16.msra.mxu0 %v956
    %1489 = vmatpush.bf16.msra.mxu0 %v952
    %1490 = vmatpush.bf16.msra.mxu0 %v948
    %1491 = vmatpush.bf16.msra.mxu0 %v944
    %1492 = vmatpush.bf16.msra.mxu0 %v940
    %1493 = vmatpush.bf16.msra.mxu0 %v936
    %1494 = vmatmul.bf16.gmra.mxu0 %v346
    %v1495 = vpop.f32.mrf.mxu0
    %v1496 = vadd.f32 %v322, %v1495
    %v1497 = vpop.f32.mrf.mxu0
    %v1498 = vadd.f32 %v326, %v1497
    %1499 = vdwg.mxu0
    %1500 = vmatpush.bf16.msra.mxu0 %v996
    %1501 = vmatpush.bf16.msra.mxu0 %v992
    %1502 = vmatpush.bf16.msra.mxu0 %v988
    %1503 = vmatpush.bf16.msra.mxu0 %v984
    %1504 = vmatpush.bf16.msra.mxu0 %v980
    %1505 = vmatpush.bf16.msra.mxu0 %v976
    %1506 = vmatpush.bf16.msra.mxu0 %v972
    %1507 = vmatpush.bf16.msra.mxu0 %v968
    %1508 = vmatmul.bf16.gmra.mxu0 %v347
    %v1509 = vpop.f32.mrf.mxu0
    %v1510 = vadd.f32 %v1496, %v1509
    %v1511 = vpop.f32.mrf.mxu0
    %v1512 = vadd.f32 %v1498, %v1511
    %1513 = vdwg.mxu0
    %1514 = vmatpush.bf16.msra.mxu0 %v1028
    %1515 = vmatpush.bf16.msra.mxu0 %v1024
    %1516 = vmatpush.bf16.msra.mxu0 %v1020
    %1517 = vmatpush.bf16.msra.mxu0 %v1016
    %1518 = vmatpush.bf16.msra.mxu0 %v1012
    %1519 = vmatpush.bf16.msra.mxu0 %v1008
    %1520 = vmatpush.bf16.msra.mxu0 %v1004
    %1521 = vmatpush.bf16.msra.mxu0 %v1000
    %1522 = vmatmul.bf16.gmra.mxu0 %v348
    %v1523 = vpop.f32.mrf.mxu0
    %v1524 = vadd.f32 %v1510, %v1523
    %v1525 = vpop.f32.mrf.mxu0
    %v1526 = vadd.f32 %v1512, %v1525
    %1527 = vdwg.mxu0
    %1528 = vmatpush.bf16.msra.mxu0 %v1060
    %1529 = vmatpush.bf16.msra.mxu0 %v1056
    %1530 = vmatpush.bf16.msra.mxu0 %v1052
    %1531 = vmatpush.bf16.msra.mxu0 %v1048
    %1532 = vmatpush.bf16.msra.mxu0 %v1044
    %1533 = vmatpush.bf16.msra.mxu0 %v1040
    %1534 = vmatpush.bf16.msra.mxu0 %v1036
    %1535 = vmatpush.bf16.msra.mxu0 %v1032
    %1536 = vmatmul.bf16.gmra.mxu0 %v349
    %v1537 = vpop.f32.mrf.mxu0
    %v1538 = vadd.f32 %v1524, %v1537
    %v1539 = vpop.f32.mrf.mxu0
    %v1540 = vadd.f32 %v1526, %v1539
    %1541 = vdwg.mxu0
    %1542 = vmatpush.bf16.msra.mxu0 %v1092
    %1543 = vmatpush.bf16.msra.mxu0 %v1088
    %1544 = vmatpush.bf16.msra.mxu0 %v1084
    %1545 = vmatpush.bf16.msra.mxu0 %v1080
    %1546 = vmatpush.bf16.msra.mxu0 %v1076
    %1547 = vmatpush.bf16.msra.mxu0 %v1072
    %1548 = vmatpush.bf16.msra.mxu0 %v1068
    %1549 = vmatpush.bf16.msra.mxu0 %v1064
    %1550 = vmatmul.bf16.gmra.mxu0 %v350
    %v1551 = vpop.f32.mrf.mxu0
    %v1552 = vadd.f32 %v1538, %v1551
    %v1553 = vpop.f32.mrf.mxu0
    %v1554 = vadd.f32 %v1540, %v1553
    %1555 = vdwg.mxu0
    %1556 = vmatpush.bf16.msra.mxu0 %v1124
    %1557 = vmatpush.bf16.msra.mxu0 %v1120
    %1558 = vmatpush.bf16.msra.mxu0 %v1116
    %1559 = vmatpush.bf16.msra.mxu0 %v1112
    %1560 = vmatpush.bf16.msra.mxu0 %v1108
    %1561 = vmatpush.bf16.msra.mxu0 %v1104
    %1562 = vmatpush.bf16.msra.mxu0 %v1100
    %1563 = vmatpush.bf16.msra.mxu0 %v1096
    %1564 = vmatmul.bf16.gmra.mxu0 %v351
    %v1565 = vpop.f32.mrf.mxu0
    %v1566 = vadd.f32 %v1552, %v1565
    %v1567 = vpop.f32.mrf.mxu0
    %v1568 = vadd.f32 %v1554, %v1567
    %1569 = vdwg.mxu0
    %1570 = vmatpush.bf16.msra.mxu0 %v965
    %1571 = vmatpush.bf16.msra.mxu0 %v961
    %1572 = vmatpush.bf16.msra.mxu0 %v957
    %1573 = vmatpush.bf16.msra.mxu0 %v953
    %1574 = vmatpush.bf16.msra.mxu0 %v949
    %1575 = vmatpush.bf16.msra.mxu0 %v945
    %1576 = vmatpush.bf16.msra.mxu0 %v941
    %1577 = vmatpush.bf16.msra.mxu0 %v937
    %1578 = vmatmul.bf16.gmra.mxu0 %v346
    %v1579 = vpop.f32.mrf.mxu0
    %v1580 = vadd.f32 %v323, %v1579
    %v1581 = vpop.f32.mrf.mxu0
    %v1582 = vadd.f32 %v327, %v1581
    %1583 = vdwg.mxu0
    %1584 = vmatpush.bf16.msra.mxu0 %v997
    %1585 = vmatpush.bf16.msra.mxu0 %v993
    %1586 = vmatpush.bf16.msra.mxu0 %v989
    %1587 = vmatpush.bf16.msra.mxu0 %v985
    %1588 = vmatpush.bf16.msra.mxu0 %v981
    %1589 = vmatpush.bf16.msra.mxu0 %v977
    %1590 = vmatpush.bf16.msra.mxu0 %v973
    %1591 = vmatpush.bf16.msra.mxu0 %v969
    %1592 = vmatmul.bf16.gmra.mxu0 %v347
    %v1593 = vpop.f32.mrf.mxu0
    %v1594 = vadd.f32 %v1580, %v1593
    %v1595 = vpop.f32.mrf.mxu0
    %v1596 = vadd.f32 %v1582, %v1595
    %1597 = vdwg.mxu0
    %1598 = vmatpush.bf16.msra.mxu0 %v1029
    %1599 = vmatpush.bf16.msra.mxu0 %v1025
    %1600 = vmatpush.bf16.msra.mxu0 %v1021
    %1601 = vmatpush.bf16.msra.mxu0 %v1017
    %1602 = vmatpush.bf16.msra.mxu0 %v1013
    %1603 = vmatpush.bf16.msra.mxu0 %v1009
    %1604 = vmatpush.bf16.msra.mxu0 %v1005
    %1605 = vmatpush.bf16.msra.mxu0 %v1001
    %1606 = vmatmul.bf16.gmra.mxu0 %v348
    %v1607 = vpop.f32.mrf.mxu0
    %v1608 = vadd.f32 %v1594, %v1607
    %v1609 = vpop.f32.mrf.mxu0
    %v1610 = vadd.f32 %v1596, %v1609
    %1611 = vdwg.mxu0
    %1612 = vmatpush.bf16.msra.mxu0 %v1061
    %1613 = vmatpush.bf16.msra.mxu0 %v1057
    %1614 = vmatpush.bf16.msra.mxu0 %v1053
    %1615 = vmatpush.bf16.msra.mxu0 %v1049
    %1616 = vmatpush.bf16.msra.mxu0 %v1045
    %1617 = vmatpush.bf16.msra.mxu0 %v1041
    %1618 = vmatpush.bf16.msra.mxu0 %v1037
    %1619 = vmatpush.bf16.msra.mxu0 %v1033
    %1620 = vmatmul.bf16.gmra.mxu0 %v349
    %v1621 = vpop.f32.mrf.mxu0
    %v1622 = vadd.f32 %v1608, %v1621
    %v1623 = vpop.f32.mrf.mxu0
    %v1624 = vadd.f32 %v1610, %v1623
    %1625 = vdwg.mxu0
    %1626 = vmatpush.bf16.msra.mxu0 %v1093
    %1627 = vmatpush.bf16.msra.mxu0 %v1089
    %1628 = vmatpush.bf16.msra.mxu0 %v1085
    %1629 = vmatpush.bf16.msra.mxu0 %v1081
    %1630 = vmatpush.bf16.msra.mxu0 %v1077
    %1631 = vmatpush.bf16.msra.mxu0 %v1073
    %1632 = vmatpush.bf16.msra.mxu0 %v1069
    %1633 = vmatpush.bf16.msra.mxu0 %v1065
    %1634 = vmatmul.bf16.gmra.mxu0 %v350
    %v1635 = vpop.f32.mrf.mxu0
    %v1636 = vadd.f32 %v1622, %v1635
    %v1637 = vpop.f32.mrf.mxu0
    %v1638 = vadd.f32 %v1624, %v1637
    %1639 = vdwg.mxu0
    %1640 = vmatpush.bf16.msra.mxu0 %v1125
    %1641 = vmatpush.bf16.msra.mxu0 %v1121
    %1642 = vmatpush.bf16.msra.mxu0 %v1117
    %1643 = vmatpush.bf16.msra.mxu0 %v1113
    %1644 = vmatpush.bf16.msra.mxu0 %v1109
    %1645 = vmatpush.bf16.msra.mxu0 %v1105
    %1646 = vmatpush.bf16.msra.mxu0 %v1101
    %1647 = vmatpush.bf16.msra.mxu0 %v1097
    %1648 = vmatmul.bf16.gmra.mxu0 %v351
    %v1649 = vpop.f32.mrf.mxu0
    %v1650 = vadd.f32 %v1636, %v1649
    %v1651 = vpop.f32.mrf.mxu0
    %v1652 = vadd.f32 %v1638, %v1651
    %1653 = vdwg.mxu0
    %v1654 = vmax.f32 %v1398, 0.0
    %v1655 = vmax.f32 %v1482, 0.0
    %v1656 = vmax.f32 %v1566, 0.0
    %v1657 = vmax.f32 %v1650, 0.0
    %v1658 = vmax.f32 %v1400, 0.0
    %v1659 = vmax.f32 %v1484, 0.0
    %v1660 = vmax.f32 %v1568, 0.0
    %v1661 = vmax.f32 %v1652, 0.0
    %v1662 = vpack.c.bf16 %v1658, %v1654
    %v1663 = vpack.c.bf16 %v1659, %v1655
    %v1664 = vpack.c.bf16 %v1660, %v1656
    %v1665 = vpack.c.bf16 %v1661, %v1657
    %v1666 = vld [vmem:[#allocation8] sm:$0xff]
    %v1667 = vld [vmem:[#allocation8 + $0x8] sm:$0xff]
    %v1668 = vld [vmem:[#allocation8 + $0x10] sm:$0xff]
    %v1669 = vld [vmem:[#allocation8 + $0x18] sm:$0xff]
    %v1670 = vld [vmem:[#allocation8 + $0x20] sm:$0xff]
    %v1671 = vld [vmem:[#allocation8 + $0x28] sm:$0xff]
    %v1672 = vld [vmem:[#allocation8 + $0x30] sm:$0xff]
    %v1673 = vld [vmem:[#allocation8 + $0x38] sm:$0xff]
    %v1674 = vld [vmem:[#allocation8 + $0x40] sm:$0xff]
    %v1675 = vld [vmem:[#allocation8 + $0x48] sm:$0xff]
    %v1676 = vld [vmem:[#allocation8 + $0x50] sm:$0xff]
    %v1677 = vld [vmem:[#allocation8 + $0x58] sm:$0xff]
    %v1678 = vld [vmem:[#allocation8 + $0x60] sm:$0xff]
    %v1679 = vld [vmem:[#allocation8 + $0x68] sm:$0xff]
    %v1680 = vld [vmem:[#allocation8 + $0x70] sm:$0xff]
    %v1681 = vld [vmem:[#allocation8 + $0x78] sm:$0xff]
    %v1682 = vld [vmem:[#allocation8 + $0x80] sm:$0xff]
    %v1683 = vld [vmem:[#allocation8 + $0x88] sm:$0xff]
    %v1684 = vld [vmem:[#allocation8 + $0x90] sm:$0xff]
    %v1685 = vld [vmem:[#allocation8 + $0x98] sm:$0xff]
    %v1686 = vld [vmem:[#allocation8 + $0xa0] sm:$0xff]
    %v1687 = vld [vmem:[#allocation8 + $0xa8] sm:$0xff]
    %v1688 = vld [vmem:[#allocation8 + $0xb0] sm:$0xff]
    %v1689 = vld [vmem:[#allocation8 + $0xb8] sm:$0xff]
    %v1690 = vld [vmem:[#allocation8 + $0xc0] sm:$0xff]
    %v1691 = vld [vmem:[#allocation8 + $0xc8] sm:$0xff]
    %v1692 = vld [vmem:[#allocation8 + $0xd0] sm:$0xff]
    %v1693 = vld [vmem:[#allocation8 + $0xd8] sm:$0xff]
    %v1694 = vld [vmem:[#allocation8 + $0xe0] sm:$0xff]
    %v1695 = vld [vmem:[#allocation8 + $0xe8] sm:$0xff]
    %v1696 = vld [vmem:[#allocation8 + $0xf0] sm:$0xff]
    %v1697 = vld [vmem:[#allocation8 + $0xf8] sm:$0xff]
    %v1698 = vld [vmem:[#allocation8 + $0x100] sm:$0xff]
    %v1699 = vld [vmem:[#allocation8 + $0x108] sm:$0xff]
    %v1700 = vld [vmem:[#allocation8 + $0x110] sm:$0xff]
    %v1701 = vld [vmem:[#allocation8 + $0x118] sm:$0xff]
    %v1702 = vld [vmem:[#allocation8 + $0x120] sm:$0xff]
    %v1703 = vld [vmem:[#allocation8 + $0x128] sm:$0xff]
    %v1704 = vld [vmem:[#allocation8 + $0x130] sm:$0xff]
    %v1705 = vld [vmem:[#allocation8 + $0x138] sm:$0xff]
    %v1706 = vld [vmem:[#allocation8 + $0x140] sm:$0xff]
    %v1707 = vld [vmem:[#allocation8 + $0x148] sm:$0xff]
    %v1708 = vld [vmem:[#allocation8 + $0x150] sm:$0xff]
    %v1709 = vld [vmem:[#allocation8 + $0x158] sm:$0xff]
    %v1710 = vld [vmem:[#allocation8 + $0x160] sm:$0xff]
    %v1711 = vld [vmem:[#allocation8 + $0x168] sm:$0xff]
    %v1712 = vld [vmem:[#allocation8 + $0x170] sm:$0xff]
    %v1713 = vld [vmem:[#allocation8 + $0x178] sm:$0xff]
    %v1714 = vld [vmem:[#allocation8 + $0x180] sm:$0xff]
    %v1715 = vld [vmem:[#allocation8 + $0x188] sm:$0xff]
    %v1716 = vld [vmem:[#allocation8 + $0x190] sm:$0xff]
    %v1717 = vld [vmem:[#allocation8 + $0x198] sm:$0xff]
    %v1718 = vld [vmem:[#allocation8 + $0x1a0] sm:$0xff]
    %v1719 = vld [vmem:[#allocation8 + $0x1a8] sm:$0xff]
    %v1720 = vld [vmem:[#allocation8 + $0x1b0] sm:$0xff]
    %v1721 = vld [vmem:[#allocation8 + $0x1b8] sm:$0xff]
    %v1722 = vld [vmem:[#allocation8 + $0x1c0] sm:$0xff]
    %v1723 = vld [vmem:[#allocation8 + $0x1c8] sm:$0xff]
    %v1724 = vld [vmem:[#allocation8 + $0x1d0] sm:$0xff]
    %v1725 = vld [vmem:[#allocation8 + $0x1d8] sm:$0xff]
    %v1726 = vld [vmem:[#allocation8 + $0x1e0] sm:$0xff]
    %v1727 = vld [vmem:[#allocation8 + $0x1e8] sm:$0xff]
    %v1728 = vld [vmem:[#allocation8 + $0x1f0] sm:$0xff]
    %v1729 = vld [vmem:[#allocation8 + $0x1f8] sm:$0xff]
    %v1730 = vld [vmem:[#allocation8 + $0x200] sm:$0xff]
    %v1731 = vld [vmem:[#allocation8 + $0x208] sm:$0xff]
    %v1732 = vld [vmem:[#allocation8 + $0x210] sm:$0xff]
    %v1733 = vld [vmem:[#allocation8 + $0x218] sm:$0xff]
    %v1734 = vld [vmem:[#allocation8 + $0x220] sm:$0xff]
    %v1735 = vld [vmem:[#allocation8 + $0x228] sm:$0xff]
    %v1736 = vld [vmem:[#allocation8 + $0x230] sm:$0xff]
    %v1737 = vld [vmem:[#allocation8 + $0x238] sm:$0xff]
    %v1738 = vld [vmem:[#allocation8 + $0x240] sm:$0xff]
    %v1739 = vld [vmem:[#allocation8 + $0x248] sm:$0xff]
    %v1740 = vld [vmem:[#allocation8 + $0x250] sm:$0xff]
    %v1741 = vld [vmem:[#allocation8 + $0x258] sm:$0xff]
    %v1742 = vld [vmem:[#allocation8 + $0x260] sm:$0xff]
    %v1743 = vld [vmem:[#allocation8 + $0x268] sm:$0xff]
    %v1744 = vld [vmem:[#allocation8 + $0x270] sm:$0xff]
    %v1745 = vld [vmem:[#allocation8 + $0x278] sm:$0xff]
    %v1746 = vld [vmem:[#allocation8 + $0x280] sm:$0xff]
    %v1747 = vld [vmem:[#allocation8 + $0x288] sm:$0xff]
    %v1748 = vld [vmem:[#allocation8 + $0x290] sm:$0xff]
    %v1749 = vld [vmem:[#allocation8 + $0x298] sm:$0xff]
    %v1750 = vld [vmem:[#allocation8 + $0x2a0] sm:$0xff]
    %v1751 = vld [vmem:[#allocation8 + $0x2a8] sm:$0xff]
    %v1752 = vld [vmem:[#allocation8 + $0x2b0] sm:$0xff]
    %v1753 = vld [vmem:[#allocation8 + $0x2b8] sm:$0xff]
    %v1754 = vld [vmem:[#allocation8 + $0x2c0] sm:$0xff]
    %v1755 = vld [vmem:[#allocation8 + $0x2c8] sm:$0xff]
    %v1756 = vld [vmem:[#allocation8 + $0x2d0] sm:$0xff]
    %v1757 = vld [vmem:[#allocation8 + $0x2d8] sm:$0xff]
    %v1758 = vld [vmem:[#allocation8 + $0x2e0] sm:$0xff]
    %v1759 = vld [vmem:[#allocation8 + $0x2e8] sm:$0xff]
    %v1760 = vld [vmem:[#allocation8 + $0x2f0] sm:$0xff]
    %v1761 = vld [vmem:[#allocation8 + $0x2f8] sm:$0xff]
    %v1762 = vld [vmem:[#allocation8 + $0x300] sm:$0xff]
    %v1763 = vld [vmem:[#allocation8 + $0x308] sm:$0xff]
    %v1764 = vld [vmem:[#allocation8 + $0x310] sm:$0xff]
    %v1765 = vld [vmem:[#allocation8 + $0x318] sm:$0xff]
    %v1766 = vld [vmem:[#allocation8 + $0x320] sm:$0xff]
    %v1767 = vld [vmem:[#allocation8 + $0x328] sm:$0xff]
    %v1768 = vld [vmem:[#allocation8 + $0x330] sm:$0xff]
    %v1769 = vld [vmem:[#allocation8 + $0x338] sm:$0xff]
    %v1770 = vld [vmem:[#allocation8 + $0x340] sm:$0xff]
    %v1771 = vld [vmem:[#allocation8 + $0x348] sm:$0xff]
    %v1772 = vld [vmem:[#allocation8 + $0x350] sm:$0xff]
    %v1773 = vld [vmem:[#allocation8 + $0x358] sm:$0xff]
    %v1774 = vld [vmem:[#allocation8 + $0x360] sm:$0xff]
    %v1775 = vld [vmem:[#allocation8 + $0x368] sm:$0xff]
    %v1776 = vld [vmem:[#allocation8 + $0x370] sm:$0xff]
    %v1777 = vld [vmem:[#allocation8 + $0x378] sm:$0xff]
    %v1778 = vld [vmem:[#allocation8 + $0x380] sm:$0xff]
    %v1779 = vld [vmem:[#allocation8 + $0x388] sm:$0xff]
    %v1780 = vld [vmem:[#allocation8 + $0x390] sm:$0xff]
    %v1781 = vld [vmem:[#allocation8 + $0x398] sm:$0xff]
    %v1782 = vld [vmem:[#allocation8 + $0x3a0] sm:$0xff]
    %v1783 = vld [vmem:[#allocation8 + $0x3a8] sm:$0xff]
    %v1784 = vld [vmem:[#allocation8 + $0x3b0] sm:$0xff]
    %v1785 = vld [vmem:[#allocation8 + $0x3b8] sm:$0xff]
    %v1786 = vld [vmem:[#allocation8 + $0x3c0] sm:$0xff]
    %v1787 = vld [vmem:[#allocation8 + $0x3c8] sm:$0xff]
    %v1788 = vld [vmem:[#allocation8 + $0x3d0] sm:$0xff]
    %v1789 = vld [vmem:[#allocation8 + $0x3d8] sm:$0xff]
    %v1790 = vld [vmem:[#allocation8 + $0x3e0] sm:$0xff]
    %v1791 = vld [vmem:[#allocation8 + $0x3e8] sm:$0xff]
    %v1792 = vld [vmem:[#allocation8 + $0x3f0] sm:$0xff]
    %v1793 = vld [vmem:[#allocation8 + $0x3f8] sm:$0xff]
    %v1796 = vperm.slane %v116, 0
    %v1797 = vperm.slane %v116, 4
    %v1798 = vperm.slane %v117, 0
    %v1799 = vperm.slane %v117, 4
    %v1804 = vperm.slane %v1796, 0
    %v1805 = vperm.slane %v1797, 0
    %v1806 = vperm.slane %v1798, 0
    %v1807 = vperm.slane %v1799, 0
    %v1936 = vunpack.c.l.b16 %v1666
    %v1937 = vunpack.c.h.b16 %v1666
    %v1938 = vunpack.c.l.b16 %v1667
    %v1939 = vunpack.c.h.b16 %v1667
    %v1940 = vunpack.c.l.b16 %v1668
    %v1941 = vunpack.c.h.b16 %v1668
    %v1942 = vunpack.c.l.b16 %v1669
    %v1943 = vunpack.c.h.b16 %v1669
    %v1944 = vunpack.c.l.b16 %v1670
    %v1945 = vunpack.c.h.b16 %v1670
    %v1946 = vunpack.c.l.b16 %v1671
    %v1947 = vunpack.c.h.b16 %v1671
    %v1948 = vunpack.c.l.b16 %v1672
    %v1949 = vunpack.c.h.b16 %v1672
    %v1950 = vunpack.c.l.b16 %v1673
    %v1951 = vunpack.c.h.b16 %v1673
    %v1952 = vunpack.c.l.b16 %v1674
    %v1953 = vunpack.c.h.b16 %v1674
    %v1954 = vunpack.c.l.b16 %v1675
    %v1955 = vunpack.c.h.b16 %v1675
    %v1956 = vunpack.c.l.b16 %v1676
    %v1957 = vunpack.c.h.b16 %v1676
    %v1958 = vunpack.c.l.b16 %v1677
    %v1959 = vunpack.c.h.b16 %v1677
    %v1960 = vunpack.c.l.b16 %v1678
    %v1961 = vunpack.c.h.b16 %v1678
    %v1962 = vunpack.c.l.b16 %v1679
    %v1963 = vunpack.c.h.b16 %v1679
    %v1964 = vunpack.c.l.b16 %v1680
    %v1965 = vunpack.c.h.b16 %v1680
    %v1966 = vunpack.c.l.b16 %v1681
    %v1967 = vunpack.c.h.b16 %v1681
    %v1968 = vunpack.c.l.b16 %v1682
    %v1969 = vunpack.c.h.b16 %v1682
    %v1970 = vunpack.c.l.b16 %v1683
    %v1971 = vunpack.c.h.b16 %v1683
    %v1972 = vunpack.c.l.b16 %v1684
    %v1973 = vunpack.c.h.b16 %v1684
    %v1974 = vunpack.c.l.b16 %v1685
    %v1975 = vunpack.c.h.b16 %v1685
    %v1976 = vunpack.c.l.b16 %v1686
    %v1977 = vunpack.c.h.b16 %v1686
    %v1978 = vunpack.c.l.b16 %v1687
    %v1979 = vunpack.c.h.b16 %v1687
    %v1980 = vunpack.c.l.b16 %v1688
    %v1981 = vunpack.c.h.b16 %v1688
    %v1982 = vunpack.c.l.b16 %v1689
    %v1983 = vunpack.c.h.b16 %v1689
    %v1984 = vunpack.c.l.b16 %v1690
    %v1985 = vunpack.c.h.b16 %v1690
    %v1986 = vunpack.c.l.b16 %v1691
    %v1987 = vunpack.c.h.b16 %v1691
    %v1988 = vunpack.c.l.b16 %v1692
    %v1989 = vunpack.c.h.b16 %v1692
    %v1990 = vunpack.c.l.b16 %v1693
    %v1991 = vunpack.c.h.b16 %v1693
    %v1992 = vunpack.c.l.b16 %v1694
    %v1993 = vunpack.c.h.b16 %v1694
    %v1994 = vunpack.c.l.b16 %v1695
    %v1995 = vunpack.c.h.b16 %v1695
    %v1996 = vunpack.c.l.b16 %v1696
    %v1997 = vunpack.c.h.b16 %v1696
    %v1998 = vunpack.c.l.b16 %v1697
    %v1999 = vunpack.c.h.b16 %v1697
    %v2000 = vunpack.c.l.b16 %v1698
    %v2001 = vunpack.c.h.b16 %v1698
    %v2002 = vunpack.c.l.b16 %v1699
    %v2003 = vunpack.c.h.b16 %v1699
    %v2004 = vunpack.c.l.b16 %v1700
    %v2005 = vunpack.c.h.b16 %v1700
    %v2006 = vunpack.c.l.b16 %v1701
    %v2007 = vunpack.c.h.b16 %v1701
    %v2008 = vunpack.c.l.b16 %v1702
    %v2009 = vunpack.c.h.b16 %v1702
    %v2010 = vunpack.c.l.b16 %v1703
    %v2011 = vunpack.c.h.b16 %v1703
    %v2012 = vunpack.c.l.b16 %v1704
    %v2013 = vunpack.c.h.b16 %v1704
    %v2014 = vunpack.c.l.b16 %v1705
    %v2015 = vunpack.c.h.b16 %v1705
    %v2016 = vunpack.c.l.b16 %v1706
    %v2017 = vunpack.c.h.b16 %v1706
    %v2018 = vunpack.c.l.b16 %v1707
    %v2019 = vunpack.c.h.b16 %v1707
    %v2020 = vunpack.c.l.b16 %v1708
    %v2021 = vunpack.c.h.b16 %v1708
    %v2022 = vunpack.c.l.b16 %v1709
    %v2023 = vunpack.c.h.b16 %v1709
    %v2024 = vunpack.c.l.b16 %v1710
    %v2025 = vunpack.c.h.b16 %v1710
    %v2026 = vunpack.c.l.b16 %v1711
    %v2027 = vunpack.c.h.b16 %v1711
    %v2028 = vunpack.c.l.b16 %v1712
    %v2029 = vunpack.c.h.b16 %v1712
    %v2030 = vunpack.c.l.b16 %v1713
    %v2031 = vunpack.c.h.b16 %v1713
    %v2032 = vunpack.c.l.b16 %v1714
    %v2033 = vunpack.c.h.b16 %v1714
    %v2034 = vunpack.c.l.b16 %v1715
    %v2035 = vunpack.c.h.b16 %v1715
    %v2036 = vunpack.c.l.b16 %v1716
    %v2037 = vunpack.c.h.b16 %v1716
    %v2038 = vunpack.c.l.b16 %v1717
    %v2039 = vunpack.c.h.b16 %v1717
    %v2040 = vunpack.c.l.b16 %v1718
    %v2041 = vunpack.c.h.b16 %v1718
    %v2042 = vunpack.c.l.b16 %v1719
    %v2043 = vunpack.c.h.b16 %v1719
    %v2044 = vunpack.c.l.b16 %v1720
    %v2045 = vunpack.c.h.b16 %v1720
    %v2046 = vunpack.c.l.b16 %v1721
    %v2047 = vunpack.c.h.b16 %v1721
    %v2048 = vunpack.c.l.b16 %v1722
    %v2049 = vunpack.c.h.b16 %v1722
    %v2050 = vunpack.c.l.b16 %v1723
    %v2051 = vunpack.c.h.b16 %v1723
    %v2052 = vunpack.c.l.b16 %v1724
    %v2053 = vunpack.c.h.b16 %v1724
    %v2054 = vunpack.c.l.b16 %v1725
    %v2055 = vunpack.c.h.b16 %v1725
    %v2056 = vunpack.c.l.b16 %v1726
    %v2057 = vunpack.c.h.b16 %v1726
    %v2058 = vunpack.c.l.b16 %v1727
    %v2059 = vunpack.c.h.b16 %v1727
    %v2060 = vunpack.c.l.b16 %v1728
    %v2061 = vunpack.c.h.b16 %v1728
    %v2062 = vunpack.c.l.b16 %v1729
    %v2063 = vunpack.c.h.b16 %v1729
    %v2064 = vunpack.c.l.b16 %v1730
    %v2065 = vunpack.c.h.b16 %v1730
    %v2066 = vunpack.c.l.b16 %v1731
    %v2067 = vunpack.c.h.b16 %v1731
    %v2068 = vunpack.c.l.b16 %v1732
    %v2069 = vunpack.c.h.b16 %v1732
    %v2070 = vunpack.c.l.b16 %v1733
    %v2071 = vunpack.c.h.b16 %v1733
    %v2072 = vunpack.c.l.b16 %v1734
    %v2073 = vunpack.c.h.b16 %v1734
    %v2074 = vunpack.c.l.b16 %v1735
    %v2075 = vunpack.c.h.b16 %v1735
    %v2076 = vunpack.c.l.b16 %v1736
    %v2077 = vunpack.c.h.b16 %v1736
    %v2078 = vunpack.c.l.b16 %v1737
    %v2079 = vunpack.c.h.b16 %v1737
    %v2080 = vunpack.c.l.b16 %v1738
    %v2081 = vunpack.c.h.b16 %v1738
    %v2082 = vunpack.c.l.b16 %v1739
    %v2083 = vunpack.c.h.b16 %v1739
    %v2084 = vunpack.c.l.b16 %v1740
    %v2085 = vunpack.c.h.b16 %v1740
    %v2086 = vunpack.c.l.b16 %v1741
    %v2087 = vunpack.c.h.b16 %v1741
    %v2088 = vunpack.c.l.b16 %v1742
    %v2089 = vunpack.c.h.b16 %v1742
    %v2090 = vunpack.c.l.b16 %v1743
    %v2091 = vunpack.c.h.b16 %v1743
    %v2092 = vunpack.c.l.b16 %v1744
    %v2093 = vunpack.c.h.b16 %v1744
    %v2094 = vunpack.c.l.b16 %v1745
    %v2095 = vunpack.c.h.b16 %v1745
    %v2096 = vunpack.c.l.b16 %v1746
    %v2097 = vunpack.c.h.b16 %v1746
    %v2098 = vunpack.c.l.b16 %v1747
    %v2099 = vunpack.c.h.b16 %v1747
    %v2100 = vunpack.c.l.b16 %v1748
    %v2101 = vunpack.c.h.b16 %v1748
    %v2102 = vunpack.c.l.b16 %v1749
    %v2103 = vunpack.c.h.b16 %v1749
    %v2104 = vunpack.c.l.b16 %v1750
    %v2105 = vunpack.c.h.b16 %v1750
    %v2106 = vunpack.c.l.b16 %v1751
    %v2107 = vunpack.c.h.b16 %v1751
    %v2108 = vunpack.c.l.b16 %v1752
    %v2109 = vunpack.c.h.b16 %v1752
    %v2110 = vunpack.c.l.b16 %v1753
    %v2111 = vunpack.c.h.b16 %v1753
    %v2112 = vunpack.c.l.b16 %v1754
    %v2113 = vunpack.c.h.b16 %v1754
    %v2114 = vunpack.c.l.b16 %v1755
    %v2115 = vunpack.c.h.b16 %v1755
    %v2116 = vunpack.c.l.b16 %v1756
    %v2117 = vunpack.c.h.b16 %v1756
    %v2118 = vunpack.c.l.b16 %v1757
    %v2119 = vunpack.c.h.b16 %v1757
    %v2120 = vunpack.c.l.b16 %v1758
    %v2121 = vunpack.c.h.b16 %v1758
    %v2122 = vunpack.c.l.b16 %v1759
    %v2123 = vunpack.c.h.b16 %v1759
    %v2124 = vunpack.c.l.b16 %v1760
    %v2125 = vunpack.c.h.b16 %v1760
    %v2126 = vunpack.c.l.b16 %v1761
    %v2127 = vunpack.c.h.b16 %v1761
    %v2128 = vunpack.c.l.b16 %v1762
    %v2129 = vunpack.c.h.b16 %v1762
    %v2130 = vunpack.c.l.b16 %v1763
    %v2131 = vunpack.c.h.b16 %v1763
    %v2132 = vunpack.c.l.b16 %v1764
    %v2133 = vunpack.c.h.b16 %v1764
    %v2134 = vunpack.c.l.b16 %v1765
    %v2135 = vunpack.c.h.b16 %v1765
    %v2136 = vunpack.c.l.b16 %v1766
    %v2137 = vunpack.c.h.b16 %v1766
    %v2138 = vunpack.c.l.b16 %v1767
    %v2139 = vunpack.c.h.b16 %v1767
    %v2140 = vunpack.c.l.b16 %v1768
    %v2141 = vunpack.c.h.b16 %v1768
    %v2142 = vunpack.c.l.b16 %v1769
    %v2143 = vunpack.c.h.b16 %v1769
    %v2144 = vunpack.c.l.b16 %v1770
    %v2145 = vunpack.c.h.b16 %v1770
    %v2146 = vunpack.c.l.b16 %v1771
    %v2147 = vunpack.c.h.b16 %v1771
    %v2148 = vunpack.c.l.b16 %v1772
    %v2149 = vunpack.c.h.b16 %v1772
    %v2150 = vunpack.c.l.b16 %v1773
    %v2151 = vunpack.c.h.b16 %v1773
    %v2152 = vunpack.c.l.b16 %v1774
    %v2153 = vunpack.c.h.b16 %v1774
    %v2154 = vunpack.c.l.b16 %v1775
    %v2155 = vunpack.c.h.b16 %v1775
    %v2156 = vunpack.c.l.b16 %v1776
    %v2157 = vunpack.c.h.b16 %v1776
    %v2158 = vunpack.c.l.b16 %v1777
    %v2159 = vunpack.c.h.b16 %v1777
    %v2160 = vunpack.c.l.b16 %v1778
    %v2161 = vunpack.c.h.b16 %v1778
    %v2162 = vunpack.c.l.b16 %v1779
    %v2163 = vunpack.c.h.b16 %v1779
    %v2164 = vunpack.c.l.b16 %v1780
    %v2165 = vunpack.c.h.b16 %v1780
    %v2166 = vunpack.c.l.b16 %v1781
    %v2167 = vunpack.c.h.b16 %v1781
    %v2168 = vunpack.c.l.b16 %v1782
    %v2169 = vunpack.c.h.b16 %v1782
    %v2170 = vunpack.c.l.b16 %v1783
    %v2171 = vunpack.c.h.b16 %v1783
    %v2172 = vunpack.c.l.b16 %v1784
    %v2173 = vunpack.c.h.b16 %v1784
    %v2174 = vunpack.c.l.b16 %v1785
    %v2175 = vunpack.c.h.b16 %v1785
    %v2176 = vunpack.c.l.b16 %v1786
    %v2177 = vunpack.c.h.b16 %v1786
    %v2178 = vunpack.c.l.b16 %v1787
    %v2179 = vunpack.c.h.b16 %v1787
    %v2180 = vunpack.c.l.b16 %v1788
    %v2181 = vunpack.c.h.b16 %v1788
    %v2182 = vunpack.c.l.b16 %v1789
    %v2183 = vunpack.c.h.b16 %v1789
    %v2184 = vunpack.c.l.b16 %v1790
    %v2185 = vunpack.c.h.b16 %v1790
    %v2186 = vunpack.c.l.b16 %v1791
    %v2187 = vunpack.c.h.b16 %v1791
    %v2188 = vunpack.c.l.b16 %v1792
    %v2189 = vunpack.c.h.b16 %v1792
    %v2190 = vunpack.c.l.b16 %v1793
    %v2191 = vunpack.c.h.b16 %v1793
    %v2192 = vpack.c.b16 %v1940, %v1936
    %v2193 = vpack.c.b16 %v1941, %v1937
    %v2194 = vpack.c.b16 %v1942, %v1938
    %v2195 = vpack.c.b16 %v1943, %v1939
    %v2196 = vpack.c.b16 %v1948, %v1944
    %v2197 = vpack.c.b16 %v1949, %v1945
    %v2198 = vpack.c.b16 %v1950, %v1946
    %v2199 = vpack.c.b16 %v1951, %v1947
    %v2200 = vpack.c.b16 %v1956, %v1952
    %v2201 = vpack.c.b16 %v1957, %v1953
    %v2202 = vpack.c.b16 %v1958, %v1954
    %v2203 = vpack.c.b16 %v1959, %v1955
    %v2204 = vpack.c.b16 %v1964, %v1960
    %v2205 = vpack.c.b16 %v1965, %v1961
    %v2206 = vpack.c.b16 %v1966, %v1962
    %v2207 = vpack.c.b16 %v1967, %v1963
    %v2208 = vpack.c.b16 %v1972, %v1968
    %v2209 = vpack.c.b16 %v1973, %v1969
    %v2210 = vpack.c.b16 %v1974, %v1970
    %v2211 = vpack.c.b16 %v1975, %v1971
    %v2212 = vpack.c.b16 %v1980, %v1976
    %v2213 = vpack.c.b16 %v1981, %v1977
    %v2214 = vpack.c.b16 %v1982, %v1978
    %v2215 = vpack.c.b16 %v1983, %v1979
    %v2216 = vpack.c.b16 %v1988, %v1984
    %v2217 = vpack.c.b16 %v1989, %v1985
    %v2218 = vpack.c.b16 %v1990, %v1986
    %v2219 = vpack.c.b16 %v1991, %v1987
    %v2220 = vpack.c.b16 %v1996, %v1992
    %v2221 = vpack.c.b16 %v1997, %v1993
    %v2222 = vpack.c.b16 %v1998, %v1994
    %v2223 = vpack.c.b16 %v1999, %v1995
    %v2224 = vpack.c.b16 %v2004, %v2000
    %v2225 = vpack.c.b16 %v2005, %v2001
    %v2226 = vpack.c.b16 %v2006, %v2002
    %v2227 = vpack.c.b16 %v2007, %v2003
    %v2228 = vpack.c.b16 %v2012, %v2008
    %v2229 = vpack.c.b16 %v2013, %v2009
    %v2230 = vpack.c.b16 %v2014, %v2010
    %v2231 = vpack.c.b16 %v2015, %v2011
    %v2232 = vpack.c.b16 %v2020, %v2016
    %v2233 = vpack.c.b16 %v2021, %v2017
    %v2234 = vpack.c.b16 %v2022, %v2018
    %v2235 = vpack.c.b16 %v2023, %v2019
    %v2236 = vpack.c.b16 %v2028, %v2024
    %v2237 = vpack.c.b16 %v2029, %v2025
    %v2238 = vpack.c.b16 %v2030, %v2026
    %v2239 = vpack.c.b16 %v2031, %v2027
    %v2240 = vpack.c.b16 %v2036, %v2032
    %v2241 = vpack.c.b16 %v2037, %v2033
    %v2242 = vpack.c.b16 %v2038, %v2034
    %v2243 = vpack.c.b16 %v2039, %v2035
    %v2244 = vpack.c.b16 %v2044, %v2040
    %v2245 = vpack.c.b16 %v2045, %v2041
    %v2246 = vpack.c.b16 %v2046, %v2042
    %v2247 = vpack.c.b16 %v2047, %v2043
    %v2248 = vpack.c.b16 %v2052, %v2048
    %v2249 = vpack.c.b16 %v2053, %v2049
    %v2250 = vpack.c.b16 %v2054, %v2050
    %v2251 = vpack.c.b16 %v2055, %v2051
    %v2252 = vpack.c.b16 %v2060, %v2056
    %v2253 = vpack.c.b16 %v2061, %v2057
    %v2254 = vpack.c.b16 %v2062, %v2058
    %v2255 = vpack.c.b16 %v2063, %v2059
    %v2256 = vpack.c.b16 %v2068, %v2064
    %v2257 = vpack.c.b16 %v2069, %v2065
    %v2258 = vpack.c.b16 %v2070, %v2066
    %v2259 = vpack.c.b16 %v2071, %v2067
    %v2260 = vpack.c.b16 %v2076, %v2072
    %v2261 = vpack.c.b16 %v2077, %v2073
    %v2262 = vpack.c.b16 %v2078, %v2074
    %v2263 = vpack.c.b16 %v2079, %v2075
    %v2264 = vpack.c.b16 %v2084, %v2080
    %v2265 = vpack.c.b16 %v2085, %v2081
    %v2266 = vpack.c.b16 %v2086, %v2082
    %v2267 = vpack.c.b16 %v2087, %v2083
    %v2268 = vpack.c.b16 %v2092, %v2088
    %v2269 = vpack.c.b16 %v2093, %v2089
    %v2270 = vpack.c.b16 %v2094, %v2090
    %v2271 = vpack.c.b16 %v2095, %v2091
    %v2272 = vpack.c.b16 %v2100, %v2096
    %v2273 = vpack.c.b16 %v2101, %v2097
    %v2274 = vpack.c.b16 %v2102, %v2098
    %v2275 = vpack.c.b16 %v2103, %v2099
    %v2276 = vpack.c.b16 %v2108, %v2104
    %v2277 = vpack.c.b16 %v2109, %v2105
    %v2278 = vpack.c.b16 %v2110, %v2106
    %v2279 = vpack.c.b16 %v2111, %v2107
    %v2280 = vpack.c.b16 %v2116, %v2112
    %v2281 = vpack.c.b16 %v2117, %v2113
    %v2282 = vpack.c.b16 %v2118, %v2114
    %v2283 = vpack.c.b16 %v2119, %v2115
    %v2284 = vpack.c.b16 %v2124, %v2120
    %v2285 = vpack.c.b16 %v2125, %v2121
    %v2286 = vpack.c.b16 %v2126, %v2122
    %v2287 = vpack.c.b16 %v2127, %v2123
    %v2288 = vpack.c.b16 %v2132, %v2128
    %v2289 = vpack.c.b16 %v2133, %v2129
    %v2290 = vpack.c.b16 %v2134, %v2130
    %v2291 = vpack.c.b16 %v2135, %v2131
    %v2292 = vpack.c.b16 %v2140, %v2136
    %v2293 = vpack.c.b16 %v2141, %v2137
    %v2294 = vpack.c.b16 %v2142, %v2138
    %v2295 = vpack.c.b16 %v2143, %v2139
    %v2296 = vpack.c.b16 %v2148, %v2144
    %v2297 = vpack.c.b16 %v2149, %v2145
    %v2298 = vpack.c.b16 %v2150, %v2146
    %v2299 = vpack.c.b16 %v2151, %v2147
    %v2300 = vpack.c.b16 %v2156, %v2152
    %v2301 = vpack.c.b16 %v2157, %v2153
    %v2302 = vpack.c.b16 %v2158, %v2154
    %v2303 = vpack.c.b16 %v2159, %v2155
    %v2304 = vpack.c.b16 %v2164, %v2160
    %v2305 = vpack.c.b16 %v2165, %v2161
    %v2306 = vpack.c.b16 %v2166, %v2162
    %v2307 = vpack.c.b16 %v2167, %v2163
    %v2308 = vpack.c.b16 %v2172, %v2168
    %v2309 = vpack.c.b16 %v2173, %v2169
    %v2310 = vpack.c.b16 %v2174, %v2170
    %v2311 = vpack.c.b16 %v2175, %v2171
    %v2312 = vpack.c.b16 %v2180, %v2176
    %v2313 = vpack.c.b16 %v2181, %v2177
    %v2314 = vpack.c.b16 %v2182, %v2178
    %v2315 = vpack.c.b16 %v2183, %v2179
    %v2316 = vpack.c.b16 %v2188, %v2184
    %v2317 = vpack.c.b16 %v2189, %v2185
    %v2318 = vpack.c.b16 %v2190, %v2186
    %v2319 = vpack.c.b16 %v2191, %v2187
    %2448 = vmatpush.bf16.msra.mxu0 %v2220
    %2449 = vmatpush.bf16.msra.mxu0 %v2216
    %2450 = vmatpush.bf16.msra.mxu0 %v2212
    %2451 = vmatpush.bf16.msra.mxu0 %v2208
    %2452 = vmatpush.bf16.msra.mxu0 %v2204
    %2453 = vmatpush.bf16.msra.mxu0 %v2200
    %2454 = vmatpush.bf16.msra.mxu0 %v2196
    %2455 = vmatpush.bf16.msra.mxu0 %v2192
    %2456 = vmatmul.bf16.gmra.mxu0 %v1662
    %v2457 = vpop.f32.mrf.mxu0
    %v2458 = vadd.f32 %v1804, %v2457
    %v2459 = vpop.f32.mrf.mxu0
    %v2460 = vadd.f32 %v1804, %v2459
    %2461 = vdwg.mxu0
    %2462 = vmatpush.bf16.msra.mxu0 %v2252
    %2463 = vmatpush.bf16.msra.mxu0 %v2248
    %2464 = vmatpush.bf16.msra.mxu0 %v2244
    %2465 = vmatpush.bf16.msra.mxu0 %v2240
    %2466 = vmatpush.bf16.msra.mxu0 %v2236
    %2467 = vmatpush.bf16.msra.mxu0 %v2232
    %2468 = vmatpush.bf16.msra.mxu0 %v2228
    %2469 = vmatpush.bf16.msra.mxu0 %v2224
    %2470 = vmatmul.bf16.gmra.mxu0 %v1663
    %v2471 = vpop.f32.mrf.mxu0
    %v2472 = vadd.f32 %v2458, %v2471
    %v2473 = vpop.f32.mrf.mxu0
    %v2474 = vadd.f32 %v2460, %v2473
    %2475 = vdwg.mxu0
    %2476 = vmatpush.bf16.msra.mxu0 %v2284
    %2477 = vmatpush.bf16.msra.mxu0 %v2280
    %2478 = vmatpush.bf16.msra.mxu0 %v2276
    %2479 = vmatpush.bf16.msra.mxu0 %v2272
    %2480 = vmatpush.bf16.msra.mxu0 %v2268
    %2481 = vmatpush.bf16.msra.mxu0 %v2264
    %2482 = vmatpush.bf16.msra.mxu0 %v2260
    %2483 = vmatpush.bf16.msra.mxu0 %v2256
    %2484 = vmatmul.bf16.gmra.mxu0 %v1664
    %v2485 = vpop.f32.mrf.mxu0
    %v2486 = vadd.f32 %v2472, %v2485
    %v2487 = vpop.f32.mrf.mxu0
    %v2488 = vadd.f32 %v2474, %v2487
    %2489 = vdwg.mxu0
    %2490 = vmatpush.bf16.msra.mxu0 %v2316
    %2491 = vmatpush.bf16.msra.mxu0 %v2312
    %2492 = vmatpush.bf16.msra.mxu0 %v2308
    %2493 = vmatpush.bf16.msra.mxu0 %v2304
    %2494 = vmatpush.bf16.msra.mxu0 %v2300
    %2495 = vmatpush.bf16.msra.mxu0 %v2296
    %2496 = vmatpush.bf16.msra.mxu0 %v2292
    %2497 = vmatpush.bf16.msra.mxu0 %v2288
    %2498 = vmatmul.bf16.gmra.mxu0 %v1665
    %v2499 = vpop.f32.mrf.mxu0
    %v2500 = vadd.f32 %v2486, %v2499
    %v2501 = vpop.f32.mrf.mxu0
    %v2502 = vadd.f32 %v2488, %v2501
    %2503 = vdwg.mxu0
    %2504 = vmatpush.bf16.msra.mxu0 %v2221
    %2505 = vmatpush.bf16.msra.mxu0 %v2217
    %2506 = vmatpush.bf16.msra.mxu0 %v2213
    %2507 = vmatpush.bf16.msra.mxu0 %v2209
    %2508 = vmatpush.bf16.msra.mxu0 %v2205
    %2509 = vmatpush.bf16.msra.mxu0 %v2201
    %2510 = vmatpush.bf16.msra.mxu0 %v2197
    %2511 = vmatpush.bf16.msra.mxu0 %v2193
    %2512 = vmatmul.bf16.gmra.mxu0 %v1662
    %v2513 = vpop.f32.mrf.mxu0
    %v2514 = vadd.f32 %v1805, %v2513
    %v2515 = vpop.f32.mrf.mxu0
    %v2516 = vadd.f32 %v1805, %v2515
    %2517 = vdwg.mxu0
    %2518 = vmatpush.bf16.msra.mxu0 %v2253
    %2519 = vmatpush.bf16.msra.mxu0 %v2249
    %2520 = vmatpush.bf16.msra.mxu0 %v2245
    %2521 = vmatpush.bf16.msra.mxu0 %v2241
    %2522 = vmatpush.bf16.msra.mxu0 %v2237
    %2523 = vmatpush.bf16.msra.mxu0 %v2233
    %2524 = vmatpush.bf16.msra.mxu0 %v2229
    %2525 = vmatpush.bf16.msra.mxu0 %v2225
    %2526 = vmatmul.bf16.gmra.mxu0 %v1663
    %v2527 = vpop.f32.mrf.mxu0
    %v2528 = vadd.f32 %v2514, %v2527
    %v2529 = vpop.f32.mrf.mxu0
    %v2530 = vadd.f32 %v2516, %v2529
    %2531 = vdwg.mxu0
    %2532 = vmatpush.bf16.msra.mxu0 %v2285
    %2533 = vmatpush.bf16.msra.mxu0 %v2281
    %2534 = vmatpush.bf16.msra.mxu0 %v2277
    %2535 = vmatpush.bf16.msra.mxu0 %v2273
    %2536 = vmatpush.bf16.msra.mxu0 %v2269
    %2537 = vmatpush.bf16.msra.mxu0 %v2265
    %2538 = vmatpush.bf16.msra.mxu0 %v2261
    %2539 = vmatpush.bf16.msra.mxu0 %v2257
    %2540 = vmatmul.bf16.gmra.mxu0 %v1664
    %v2541 = vpop.f32.mrf.mxu0
    %v2542 = vadd.f32 %v2528, %v2541
    %v2543 = vpop.f32.mrf.mxu0
    %v2544 = vadd.f32 %v2530, %v2543
    %2545 = vdwg.mxu0
    %2546 = vmatpush.bf16.msra.mxu0 %v2317
    %2547 = vmatpush.bf16.msra.mxu0 %v2313
    %2548 = vmatpush.bf16.msra.mxu0 %v2309
    %2549 = vmatpush.bf16.msra.mxu0 %v2305
    %2550 = vmatpush.bf16.msra.mxu0 %v2301
    %2551 = vmatpush.bf16.msra.mxu0 %v2297
    %2552 = vmatpush.bf16.msra.mxu0 %v2293
    %2553 = vmatpush.bf16.msra.mxu0 %v2289
    %2554 = vmatmul.bf16.gmra.mxu0 %v1665
    %v2555 = vpop.f32.mrf.mxu0
    %v2556 = vadd.f32 %v2542, %v2555
    %v2557 = vpop.f32.mrf.mxu0
    %v2558 = vadd.f32 %v2544, %v2557
    %2559 = vdwg.mxu0
    %2560 = vmatpush.bf16.msra.mxu0 %v2222
    %2561 = vmatpush.bf16.msra.mxu0 %v2218
    %2562 = vmatpush.bf16.msra.mxu0 %v2214
    %2563 = vmatpush.bf16.msra.mxu0 %v2210
    %2564 = vmatpush.bf16.msra.mxu0 %v2206
    %2565 = vmatpush.bf16.msra.mxu0 %v2202
    %2566 = vmatpush.bf16.msra.mxu0 %v2198
    %2567 = vmatpush.bf16.msra.mxu0 %v2194
    %2568 = vmatmul.bf16.gmra.mxu0 %v1662
    %v2569 = vpop.f32.mrf.mxu0
    %v2570 = vadd.f32 %v1806, %v2569
    %v2571 = vpop.f32.mrf.mxu0
    %v2572 = vadd.f32 %v1806, %v2571
    %2573 = vdwg.mxu0
    %2574 = vmatpush.bf16.msra.mxu0 %v2254
    %2575 = vmatpush.bf16.msra.mxu0 %v2250
    %2576 = vmatpush.bf16.msra.mxu0 %v2246
    %2577 = vmatpush.bf16.msra.mxu0 %v2242
    %2578 = vmatpush.bf16.msra.mxu0 %v2238
    %2579 = vmatpush.bf16.msra.mxu0 %v2234
    %2580 = vmatpush.bf16.msra.mxu0 %v2230
    %2581 = vmatpush.bf16.msra.mxu0 %v2226
    %2582 = vmatmul.bf16.gmra.mxu0 %v1663
    %v2583 = vpop.f32.mrf.mxu0
    %v2584 = vadd.f32 %v2570, %v2583
    %v2585 = vpop.f32.mrf.mxu0
    %v2586 = vadd.f32 %v2572, %v2585
    %2587 = vdwg.mxu0
    %2588 = vmatpush.bf16.msra.mxu0 %v2286
    %2589 = vmatpush.bf16.msra.mxu0 %v2282
    %2590 = vmatpush.bf16.msra.mxu0 %v2278
    %2591 = vmatpush.bf16.msra.mxu0 %v2274
    %2592 = vmatpush.bf16.msra.mxu0 %v2270
    %2593 = vmatpush.bf16.msra.mxu0 %v2266
    %2594 = vmatpush.bf16.msra.mxu0 %v2262
    %2595 = vmatpush.bf16.msra.mxu0 %v2258
    %2596 = vmatmul.bf16.gmra.mxu0 %v1664
    %v2597 = vpop.f32.mrf.mxu0
    %v2598 = vadd.f32 %v2584, %v2597
    %v2599 = vpop.f32.mrf.mxu0
    %v2600 = vadd.f32 %v2586, %v2599
    %2601 = vdwg.mxu0
    %2602 = vmatpush.bf16.msra.mxu0 %v2318
    %2603 = vmatpush.bf16.msra.mxu0 %v2314
    %2604 = vmatpush.bf16.msra.mxu0 %v2310
    %2605 = vmatpush.bf16.msra.mxu0 %v2306
    %2606 = vmatpush.bf16.msra.mxu0 %v2302
    %2607 = vmatpush.bf16.msra.mxu0 %v2298
    %2608 = vmatpush.bf16.msra.mxu0 %v2294
    %2609 = vmatpush.bf16.msra.mxu0 %v2290
    %2610 = vmatmul.bf16.gmra.mxu0 %v1665
    %v2611 = vpop.f32.mrf.mxu0
    %v2612 = vadd.f32 %v2598, %v2611
    %v2613 = vpop.f32.mrf.mxu0
    %v2614 = vadd.f32 %v2600, %v2613
    %2615 = vdwg.mxu0
    %2616 = vmatpush.bf16.msra.mxu0 %v2223
    %2617 = vmatpush.bf16.msra.mxu0 %v2219
    %2618 = vmatpush.bf16.msra.mxu0 %v2215
    %2619 = vmatpush.bf16.msra.mxu0 %v2211
    %2620 = vmatpush.bf16.msra.mxu0 %v2207
    %2621 = vmatpush.bf16.msra.mxu0 %v2203
    %2622 = vmatpush.bf16.msra.mxu0 %v2199
    %2623 = vmatpush.bf16.msra.mxu0 %v2195
    %2624 = vmatmul.bf16.gmra.mxu0 %v1662
    %v2625 = vpop.f32.mrf.mxu0
    %v2626 = vadd.f32 %v1807, %v2625
    %v2627 = vpop.f32.mrf.mxu0
    %v2628 = vadd.f32 %v1807, %v2627
    %2629 = vdwg.mxu0
    %2630 = vmatpush.bf16.msra.mxu0 %v2255
    %2631 = vmatpush.bf16.msra.mxu0 %v2251
    %2632 = vmatpush.bf16.msra.mxu0 %v2247
    %2633 = vmatpush.bf16.msra.mxu0 %v2243
    %2634 = vmatpush.bf16.msra.mxu0 %v2239
    %2635 = vmatpush.bf16.msra.mxu0 %v2235
    %2636 = vmatpush.bf16.msra.mxu0 %v2231
    %2637 = vmatpush.bf16.msra.mxu0 %v2227
    %2638 = vmatmul.bf16.gmra.mxu0 %v1663
    %v2639 = vpop.f32.mrf.mxu0
    %v2640 = vadd.f32 %v2626, %v2639
    %v2641 = vpop.f32.mrf.mxu0
    %v2642 = vadd.f32 %v2628, %v2641
    %2643 = vdwg.mxu0
    %2644 = vmatpush.bf16.msra.mxu0 %v2287
    %2645 = vmatpush.bf16.msra.mxu0 %v2283
    %2646 = vmatpush.bf16.msra.mxu0 %v2279
    %2647 = vmatpush.bf16.msra.mxu0 %v2275
    %2648 = vmatpush.bf16.msra.mxu0 %v2271
    %2649 = vmatpush.bf16.msra.mxu0 %v2267
    %2650 = vmatpush.bf16.msra.mxu0 %v2263
    %2651 = vmatpush.bf16.msra.mxu0 %v2259
    %2652 = vmatmul.bf16.gmra.mxu0 %v1664
    %v2653 = vpop.f32.mrf.mxu0
    %v2654 = vadd.f32 %v2640, %v2653
    %v2655 = vpop.f32.mrf.mxu0
    %v2656 = vadd.f32 %v2642, %v2655
    %2657 = vdwg.mxu0
    %2658 = vmatpush.bf16.msra.mxu0 %v2319
    %2659 = vmatpush.bf16.msra.mxu0 %v2315
    %2660 = vmatpush.bf16.msra.mxu0 %v2311
    %2661 = vmatpush.bf16.msra.mxu0 %v2307
    %2662 = vmatpush.bf16.msra.mxu0 %v2303
    %2663 = vmatpush.bf16.msra.mxu0 %v2299
    %2664 = vmatpush.bf16.msra.mxu0 %v2295
    %2665 = vmatpush.bf16.msra.mxu0 %v2291
    %2666 = vmatmul.bf16.gmra.mxu0 %v1665
    %v2667 = vpop.f32.mrf.mxu0
    %v2668 = vadd.f32 %v2654, %v2667
    %v2669 = vpop.f32.mrf.mxu0
    %v2670 = vadd.f32 %v2656, %v2669
    %2671 = vdwg.mxu0
    %v2672 = vmax.f32 %v2500, 0.0
    %v2673 = vmax.f32 %v2556, 0.0
    %v2674 = vmax.f32 %v2612, 0.0
    %v2675 = vmax.f32 %v2668, 0.0
    %v2676 = vmax.f32 %v2502, 0.0
    %v2677 = vmax.f32 %v2558, 0.0
    %v2678 = vmax.f32 %v2614, 0.0
    %v2679 = vmax.f32 %v2670, 0.0
    %v2680 = vpack.c.bf16 %v2676, %v2672
    %v2681 = vpack.c.bf16 %v2677, %v2673
    %v2682 = vpack.c.bf16 %v2678, %v2674
    %v2683 = vpack.c.bf16 %v2679, %v2675
    %s2684 = scalar_lea.vmem [#allocation8], 1024
    %v2685 = vld [vmem:[%s2684] sm:$0xff]
    %v2686 = vld [vmem:[%s2684 + $0x8] sm:$0xff]
    %v2687 = vld [vmem:[%s2684 + $0x10] sm:$0xff]
    %v2688 = vld [vmem:[%s2684 + $0x18] sm:$0xff]
    %v2689 = vld [vmem:[%s2684 + $0x20] sm:$0xff]
    %v2690 = vld [vmem:[%s2684 + $0x28] sm:$0xff]
    %v2691 = vld [vmem:[%s2684 + $0x30] sm:$0xff]
    %v2692 = vld [vmem:[%s2684 + $0x38] sm:$0xff]
    %v2693 = vld [vmem:[%s2684 + $0x40] sm:$0xff]
    %v2694 = vld [vmem:[%s2684 + $0x48] sm:$0xff]
    %v2695 = vld [vmem:[%s2684 + $0x50] sm:$0xff]
    %v2696 = vld [vmem:[%s2684 + $0x58] sm:$0xff]
    %v2697 = vld [vmem:[%s2684 + $0x60] sm:$0xff]
    %v2698 = vld [vmem:[%s2684 + $0x68] sm:$0xff]
    %v2699 = vld [vmem:[%s2684 + $0x70] sm:$0xff]
    %v2700 = vld [vmem:[%s2684 + $0x78] sm:$0xff]
    %v2701 = vld [vmem:[%s2684 + $0x80] sm:$0xff]
    %v2702 = vld [vmem:[%s2684 + $0x88] sm:$0xff]
    %v2703 = vld [vmem:[%s2684 + $0x90] sm:$0xff]
    %v2704 = vld [vmem:[%s2684 + $0x98] sm:$0xff]
    %v2705 = vld [vmem:[%s2684 + $0xa0] sm:$0xff]
    %v2706 = vld [vmem:[%s2684 + $0xa8] sm:$0xff]
    %v2707 = vld [vmem:[%s2684 + $0xb0] sm:$0xff]
    %v2708 = vld [vmem:[%s2684 + $0xb8] sm:$0xff]
    %v2709 = vld [vmem:[%s2684 + $0xc0] sm:$0xff]
    %v2710 = vld [vmem:[%s2684 + $0xc8] sm:$0xff]
    %v2711 = vld [vmem:[%s2684 + $0xd0] sm:$0xff]
    %v2712 = vld [vmem:[%s2684 + $0xd8] sm:$0xff]
    %v2713 = vld [vmem:[%s2684 + $0xe0] sm:$0xff]
    %v2714 = vld [vmem:[%s2684 + $0xe8] sm:$0xff]
    %v2715 = vld [vmem:[%s2684 + $0xf0] sm:$0xff]
    %v2716 = vld [vmem:[%s2684 + $0xf8] sm:$0xff]
    %v2717 = vld [vmem:[%s2684 + $0x100] sm:$0xff]
    %v2718 = vld [vmem:[%s2684 + $0x108] sm:$0xff]
    %v2719 = vld [vmem:[%s2684 + $0x110] sm:$0xff]
    %v2720 = vld [vmem:[%s2684 + $0x118] sm:$0xff]
    %v2721 = vld [vmem:[%s2684 + $0x120] sm:$0xff]
    %v2722 = vld [vmem:[%s2684 + $0x128] sm:$0xff]
    %v2723 = vld [vmem:[%s2684 + $0x130] sm:$0xff]
    %v2724 = vld [vmem:[%s2684 + $0x138] sm:$0xff]
    %v2725 = vld [vmem:[%s2684 + $0x140] sm:$0xff]
    %v2726 = vld [vmem:[%s2684 + $0x148] sm:$0xff]
    %v2727 = vld [vmem:[%s2684 + $0x150] sm:$0xff]
    %v2728 = vld [vmem:[%s2684 + $0x158] sm:$0xff]
    %v2729 = vld [vmem:[%s2684 + $0x160] sm:$0xff]
    %v2730 = vld [vmem:[%s2684 + $0x168] sm:$0xff]
    %v2731 = vld [vmem:[%s2684 + $0x170] sm:$0xff]
    %v2732 = vld [vmem:[%s2684 + $0x178] sm:$0xff]
    %v2733 = vld [vmem:[%s2684 + $0x180] sm:$0xff]
    %v2734 = vld [vmem:[%s2684 + $0x188] sm:$0xff]
    %v2735 = vld [vmem:[%s2684 + $0x190] sm:$0xff]
    %v2736 = vld [vmem:[%s2684 + $0x198] sm:$0xff]
    %v2737 = vld [vmem:[%s2684 + $0x1a0] sm:$0xff]
    %v2738 = vld [vmem:[%s2684 + $0x1a8] sm:$0xff]
    %v2739 = vld [vmem:[%s2684 + $0x1b0] sm:$0xff]
    %v2740 = vld [vmem:[%s2684 + $0x1b8] sm:$0xff]
    %v2741 = vld [vmem:[%s2684 + $0x1c0] sm:$0xff]
    %v2742 = vld [vmem:[%s2684 + $0x1c8] sm:$0xff]
    %v2743 = vld [vmem:[%s2684 + $0x1d0] sm:$0xff]
    %v2744 = vld [vmem:[%s2684 + $0x1d8] sm:$0xff]
    %v2745 = vld [vmem:[%s2684 + $0x1e0] sm:$0xff]
    %v2746 = vld [vmem:[%s2684 + $0x1e8] sm:$0xff]
    %v2747 = vld [vmem:[%s2684 + $0x1f0] sm:$0xff]
    %v2748 = vld [vmem:[%s2684 + $0x1f8] sm:$0xff]
    %v2749 = vld [vmem:[%s2684 + $0x200] sm:$0xff]
    %v2750 = vld [vmem:[%s2684 + $0x208] sm:$0xff]
    %v2751 = vld [vmem:[%s2684 + $0x210] sm:$0xff]
    %v2752 = vld [vmem:[%s2684 + $0x218] sm:$0xff]
    %v2753 = vld [vmem:[%s2684 + $0x220] sm:$0xff]
    %v2754 = vld [vmem:[%s2684 + $0x228] sm:$0xff]
    %v2755 = vld [vmem:[%s2684 + $0x230] sm:$0xff]
    %v2756 = vld [vmem:[%s2684 + $0x238] sm:$0xff]
    %v2757 = vld [vmem:[%s2684 + $0x240] sm:$0xff]
    %v2758 = vld [vmem:[%s2684 + $0x248] sm:$0xff]
    %v2759 = vld [vmem:[%s2684 + $0x250] sm:$0xff]
    %v2760 = vld [vmem:[%s2684 + $0x258] sm:$0xff]
    %v2761 = vld [vmem:[%s2684 + $0x260] sm:$0xff]
    %v2762 = vld [vmem:[%s2684 + $0x268] sm:$0xff]
    %v2763 = vld [vmem:[%s2684 + $0x270] sm:$0xff]
    %v2764 = vld [vmem:[%s2684 + $0x278] sm:$0xff]
    %v2765 = vld [vmem:[%s2684 + $0x280] sm:$0xff]
    %v2766 = vld [vmem:[%s2684 + $0x288] sm:$0xff]
    %v2767 = vld [vmem:[%s2684 + $0x290] sm:$0xff]
    %v2768 = vld [vmem:[%s2684 + $0x298] sm:$0xff]
    %v2769 = vld [vmem:[%s2684 + $0x2a0] sm:$0xff]
    %v2770 = vld [vmem:[%s2684 + $0x2a8] sm:$0xff]
    %v2771 = vld [vmem:[%s2684 + $0x2b0] sm:$0xff]
    %v2772 = vld [vmem:[%s2684 + $0x2b8] sm:$0xff]
    %v2773 = vld [vmem:[%s2684 + $0x2c0] sm:$0xff]
    %v2774 = vld [vmem:[%s2684 + $0x2c8] sm:$0xff]
    %v2775 = vld [vmem:[%s2684 + $0x2d0] sm:$0xff]
    %v2776 = vld [vmem:[%s2684 + $0x2d8] sm:$0xff]
    %v2777 = vld [vmem:[%s2684 + $0x2e0] sm:$0xff]
    %v2778 = vld [vmem:[%s2684 + $0x2e8] sm:$0xff]
    %v2779 = vld [vmem:[%s2684 + $0x2f0] sm:$0xff]
    %v2780 = vld [vmem:[%s2684 + $0x2f8] sm:$0xff]
    %v2781 = vld [vmem:[%s2684 + $0x300] sm:$0xff]
    %v2782 = vld [vmem:[%s2684 + $0x308] sm:$0xff]
    %v2783 = vld [vmem:[%s2684 + $0x310] sm:$0xff]
    %v2784 = vld [vmem:[%s2684 + $0x318] sm:$0xff]
    %v2785 = vld [vmem:[%s2684 + $0x320] sm:$0xff]
    %v2786 = vld [vmem:[%s2684 + $0x328] sm:$0xff]
    %v2787 = vld [vmem:[%s2684 + $0x330] sm:$0xff]
    %v2788 = vld [vmem:[%s2684 + $0x338] sm:$0xff]
    %v2789 = vld [vmem:[%s2684 + $0x340] sm:$0xff]
    %v2790 = vld [vmem:[%s2684 + $0x348] sm:$0xff]
    %v2791 = vld [vmem:[%s2684 + $0x350] sm:$0xff]
    %v2792 = vld [vmem:[%s2684 + $0x358] sm:$0xff]
    %v2793 = vld [vmem:[%s2684 + $0x360] sm:$0xff]
    %v2794 = vld [vmem:[%s2684 + $0x368] sm:$0xff]
    %v2795 = vld [vmem:[%s2684 + $0x370] sm:$0xff]
    %v2796 = vld [vmem:[%s2684 + $0x378] sm:$0xff]
    %v2797 = vld [vmem:[%s2684 + $0x380] sm:$0xff]
    %v2798 = vld [vmem:[%s2684 + $0x388] sm:$0xff]
    %v2799 = vld [vmem:[%s2684 + $0x390] sm:$0xff]
    %v2800 = vld [vmem:[%s2684 + $0x398] sm:$0xff]
    %v2801 = vld [vmem:[%s2684 + $0x3a0] sm:$0xff]
    %v2802 = vld [vmem:[%s2684 + $0x3a8] sm:$0xff]
    %v2803 = vld [vmem:[%s2684 + $0x3b0] sm:$0xff]
    %v2804 = vld [vmem:[%s2684 + $0x3b8] sm:$0xff]
    %v2805 = vld [vmem:[%s2684 + $0x3c0] sm:$0xff]
    %v2806 = vld [vmem:[%s2684 + $0x3c8] sm:$0xff]
    %v2807 = vld [vmem:[%s2684 + $0x3d0] sm:$0xff]
    %v2808 = vld [vmem:[%s2684 + $0x3d8] sm:$0xff]
    %v2809 = vld [vmem:[%s2684 + $0x3e0] sm:$0xff]
    %v2810 = vld [vmem:[%s2684 + $0x3e8] sm:$0xff]
    %v2811 = vld [vmem:[%s2684 + $0x3f0] sm:$0xff]
    %v2812 = vld [vmem:[%s2684 + $0x3f8] sm:$0xff]
    %v2813 = vperm.slane %v116, 1
    %v2814 = vperm.slane %v116, 5
    %v2815 = vperm.slane %v117, 1
    %v2816 = vperm.slane %v117, 5
    %v2821 = vperm.slane %v2813, 1
    %v2822 = vperm.slane %v2814, 1
    %v2823 = vperm.slane %v2815, 1
    %v2824 = vperm.slane %v2816, 1
    %v2953 = vunpack.c.l.b16 %v2685
    %v2954 = vunpack.c.h.b16 %v2685
    %v2955 = vunpack.c.l.b16 %v2686
    %v2956 = vunpack.c.h.b16 %v2686
    %v2957 = vunpack.c.l.b16 %v2687
    %v2958 = vunpack.c.h.b16 %v2687
    %v2959 = vunpack.c.l.b16 %v2688
    %v2960 = vunpack.c.h.b16 %v2688
    %v2961 = vunpack.c.l.b16 %v2689
    %v2962 = vunpack.c.h.b16 %v2689
    %v2963 = vunpack.c.l.b16 %v2690
    %v2964 = vunpack.c.h.b16 %v2690
    %v2965 = vunpack.c.l.b16 %v2691
    %v2966 = vunpack.c.h.b16 %v2691
    %v2967 = vunpack.c.l.b16 %v2692
    %v2968 = vunpack.c.h.b16 %v2692
    %v2969 = vunpack.c.l.b16 %v2693
    %v2970 = vunpack.c.h.b16 %v2693
    %v2971 = vunpack.c.l.b16 %v2694
    %v2972 = vunpack.c.h.b16 %v2694
    %v2973 = vunpack.c.l.b16 %v2695
    %v2974 = vunpack.c.h.b16 %v2695
    %v2975 = vunpack.c.l.b16 %v2696
    %v2976 = vunpack.c.h.b16 %v2696
    %v2977 = vunpack.c.l.b16 %v2697
    %v2978 = vunpack.c.h.b16 %v2697
    %v2979 = vunpack.c.l.b16 %v2698
    %v2980 = vunpack.c.h.b16 %v2698
    %v2981 = vunpack.c.l.b16 %v2699
    %v2982 = vunpack.c.h.b16 %v2699
    %v2983 = vunpack.c.l.b16 %v2700
    %v2984 = vunpack.c.h.b16 %v2700
    %v2985 = vunpack.c.l.b16 %v2701
    %v2986 = vunpack.c.h.b16 %v2701
    %v2987 = vunpack.c.l.b16 %v2702
    %v2988 = vunpack.c.h.b16 %v2702
    %v2989 = vunpack.c.l.b16 %v2703
    %v2990 = vunpack.c.h.b16 %v2703
    %v2991 = vunpack.c.l.b16 %v2704
    %v2992 = vunpack.c.h.b16 %v2704
    %v2993 = vunpack.c.l.b16 %v2705
    %v2994 = vunpack.c.h.b16 %v2705
    %v2995 = vunpack.c.l.b16 %v2706
    %v2996 = vunpack.c.h.b16 %v2706
    %v2997 = vunpack.c.l.b16 %v2707
    %v2998 = vunpack.c.h.b16 %v2707
    %v2999 = vunpack.c.l.b16 %v2708
    %v3000 = vunpack.c.h.b16 %v2708
    %v3001 = vunpack.c.l.b16 %v2709
    %v3002 = vunpack.c.h.b16 %v2709
    %v3003 = vunpack.c.l.b16 %v2710
    %v3004 = vunpack.c.h.b16 %v2710
    %v3005 = vunpack.c.l.b16 %v2711
    %v3006 = vunpack.c.h.b16 %v2711
    %v3007 = vunpack.c.l.b16 %v2712
    %v3008 = vunpack.c.h.b16 %v2712
    %v3009 = vunpack.c.l.b16 %v2713
    %v3010 = vunpack.c.h.b16 %v2713
    %v3011 = vunpack.c.l.b16 %v2714
    %v3012 = vunpack.c.h.b16 %v2714
    %v3013 = vunpack.c.l.b16 %v2715
    %v3014 = vunpack.c.h.b16 %v2715
    %v3015 = vunpack.c.l.b16 %v2716
    %v3016 = vunpack.c.h.b16 %v2716
    %v3017 = vunpack.c.l.b16 %v2717
    %v3018 = vunpack.c.h.b16 %v2717
    %v3019 = vunpack.c.l.b16 %v2718
    %v3020 = vunpack.c.h.b16 %v2718
    %v3021 = vunpack.c.l.b16 %v2719
    %v3022 = vunpack.c.h.b16 %v2719
    %v3023 = vunpack.c.l.b16 %v2720
    %v3024 = vunpack.c.h.b16 %v2720
    %v3025 = vunpack.c.l.b16 %v2721
    %v3026 = vunpack.c.h.b16 %v2721
    %v3027 = vunpack.c.l.b16 %v2722
    %v3028 = vunpack.c.h.b16 %v2722
    %v3029 = vunpack.c.l.b16 %v2723
    %v3030 = vunpack.c.h.b16 %v2723
    %v3031 = vunpack.c.l.b16 %v2724
    %v3032 = vunpack.c.h.b16 %v2724
    %v3033 = vunpack.c.l.b16 %v2725
    %v3034 = vunpack.c.h.b16 %v2725
    %v3035 = vunpack.c.l.b16 %v2726
    %v3036 = vunpack.c.h.b16 %v2726
    %v3037 = vunpack.c.l.b16 %v2727
    %v3038 = vunpack.c.h.b16 %v2727
    %v3039 = vunpack.c.l.b16 %v2728
    %v3040 = vunpack.c.h.b16 %v2728
    %v3041 = vunpack.c.l.b16 %v2729
    %v3042 = vunpack.c.h.b16 %v2729
    %v3043 = vunpack.c.l.b16 %v2730
    %v3044 = vunpack.c.h.b16 %v2730
    %v3045 = vunpack.c.l.b16 %v2731
    %v3046 = vunpack.c.h.b16 %v2731
    %v3047 = vunpack.c.l.b16 %v2732
    %v3048 = vunpack.c.h.b16 %v2732
    %v3049 = vunpack.c.l.b16 %v2733
    %v3050 = vunpack.c.h.b16 %v2733
    %v3051 = vunpack.c.l.b16 %v2734
    %v3052 = vunpack.c.h.b16 %v2734
    %v3053 = vunpack.c.l.b16 %v2735
    %v3054 = vunpack.c.h.b16 %v2735
    %v3055 = vunpack.c.l.b16 %v2736
    %v3056 = vunpack.c.h.b16 %v2736
    %v3057 = vunpack.c.l.b16 %v2737
    %v3058 = vunpack.c.h.b16 %v2737
    %v3059 = vunpack.c.l.b16 %v2738
    %v3060 = vunpack.c.h.b16 %v2738
    %v3061 = vunpack.c.l.b16 %v2739
    %v3062 = vunpack.c.h.b16 %v2739
    %v3063 = vunpack.c.l.b16 %v2740
    %v3064 = vunpack.c.h.b16 %v2740
    %v3065 = vunpack.c.l.b16 %v2741
    %v3066 = vunpack.c.h.b16 %v2741
    %v3067 = vunpack.c.l.b16 %v2742
    %v3068 = vunpack.c.h.b16 %v2742
    %v3069 = vunpack.c.l.b16 %v2743
    %v3070 = vunpack.c.h.b16 %v2743
    %v3071 = vunpack.c.l.b16 %v2744
    %v3072 = vunpack.c.h.b16 %v2744
    %v3073 = vunpack.c.l.b16 %v2745
    %v3074 = vunpack.c.h.b16 %v2745
    %v3075 = vunpack.c.l.b16 %v2746
    %v3076 = vunpack.c.h.b16 %v2746
    %v3077 = vunpack.c.l.b16 %v2747
    %v3078 = vunpack.c.h.b16 %v2747
    %v3079 = vunpack.c.l.b16 %v2748
    %v3080 = vunpack.c.h.b16 %v2748
    %v3081 = vunpack.c.l.b16 %v2749
    %v3082 = vunpack.c.h.b16 %v2749
    %v3083 = vunpack.c.l.b16 %v2750
    %v3084 = vunpack.c.h.b16 %v2750
    %v3085 = vunpack.c.l.b16 %v2751
    %v3086 = vunpack.c.h.b16 %v2751
    %v3087 = vunpack.c.l.b16 %v2752
    %v3088 = vunpack.c.h.b16 %v2752
    %v3089 = vunpack.c.l.b16 %v2753
    %v3090 = vunpack.c.h.b16 %v2753
    %v3091 = vunpack.c.l.b16 %v2754
    %v3092 = vunpack.c.h.b16 %v2754
    %v3093 = vunpack.c.l.b16 %v2755
    %v3094 = vunpack.c.h.b16 %v2755
    %v3095 = vunpack.c.l.b16 %v2756
    %v3096 = vunpack.c.h.b16 %v2756
    %v3097 = vunpack.c.l.b16 %v2757
    %v3098 = vunpack.c.h.b16 %v2757
    %v3099 = vunpack.c.l.b16 %v2758
    %v3100 = vunpack.c.h.b16 %v2758
    %v3101 = vunpack.c.l.b16 %v2759
    %v3102 = vunpack.c.h.b16 %v2759
    %v3103 = vunpack.c.l.b16 %v2760
    %v3104 = vunpack.c.h.b16 %v2760
    %v3105 = vunpack.c.l.b16 %v2761
    %v3106 = vunpack.c.h.b16 %v2761
    %v3107 = vunpack.c.l.b16 %v2762
    %v3108 = vunpack.c.h.b16 %v2762
    %v3109 = vunpack.c.l.b16 %v2763
    %v3110 = vunpack.c.h.b16 %v2763
    %v3111 = vunpack.c.l.b16 %v2764
    %v3112 = vunpack.c.h.b16 %v2764
    %v3113 = vunpack.c.l.b16 %v2765
    %v3114 = vunpack.c.h.b16 %v2765
    %v3115 = vunpack.c.l.b16 %v2766
    %v3116 = vunpack.c.h.b16 %v2766
    %v3117 = vunpack.c.l.b16 %v2767
    %v3118 = vunpack.c.h.b16 %v2767
    %v3119 = vunpack.c.l.b16 %v2768
    %v3120 = vunpack.c.h.b16 %v2768
    %v3121 = vunpack.c.l.b16 %v2769
    %v3122 = vunpack.c.h.b16 %v2769
    %v3123 = vunpack.c.l.b16 %v2770
    %v3124 = vunpack.c.h.b16 %v2770
    %v3125 = vunpack.c.l.b16 %v2771
    %v3126 = vunpack.c.h.b16 %v2771
    %v3127 = vunpack.c.l.b16 %v2772
    %v3128 = vunpack.c.h.b16 %v2772
    %v3129 = vunpack.c.l.b16 %v2773
    %v3130 = vunpack.c.h.b16 %v2773
    %v3131 = vunpack.c.l.b16 %v2774
    %v3132 = vunpack.c.h.b16 %v2774
    %v3133 = vunpack.c.l.b16 %v2775
    %v3134 = vunpack.c.h.b16 %v2775
    %v3135 = vunpack.c.l.b16 %v2776
    %v3136 = vunpack.c.h.b16 %v2776
    %v3137 = vunpack.c.l.b16 %v2777
    %v3138 = vunpack.c.h.b16 %v2777
    %v3139 = vunpack.c.l.b16 %v2778
    %v3140 = vunpack.c.h.b16 %v2778
    %v3141 = vunpack.c.l.b16 %v2779
    %v3142 = vunpack.c.h.b16 %v2779
    %v3143 = vunpack.c.l.b16 %v2780
    %v3144 = vunpack.c.h.b16 %v2780
    %v3145 = vunpack.c.l.b16 %v2781
    %v3146 = vunpack.c.h.b16 %v2781
    %v3147 = vunpack.c.l.b16 %v2782
    %v3148 = vunpack.c.h.b16 %v2782
    %v3149 = vunpack.c.l.b16 %v2783
    %v3150 = vunpack.c.h.b16 %v2783
    %v3151 = vunpack.c.l.b16 %v2784
    %v3152 = vunpack.c.h.b16 %v2784
    %v3153 = vunpack.c.l.b16 %v2785
    %v3154 = vunpack.c.h.b16 %v2785
    %v3155 = vunpack.c.l.b16 %v2786
    %v3156 = vunpack.c.h.b16 %v2786
    %v3157 = vunpack.c.l.b16 %v2787
    %v3158 = vunpack.c.h.b16 %v2787
    %v3159 = vunpack.c.l.b16 %v2788
    %v3160 = vunpack.c.h.b16 %v2788
    %v3161 = vunpack.c.l.b16 %v2789
    %v3162 = vunpack.c.h.b16 %v2789
    %v3163 = vunpack.c.l.b16 %v2790
    %v3164 = vunpack.c.h.b16 %v2790
    %v3165 = vunpack.c.l.b16 %v2791
    %v3166 = vunpack.c.h.b16 %v2791
    %v3167 = vunpack.c.l.b16 %v2792
    %v3168 = vunpack.c.h.b16 %v2792
    %v3169 = vunpack.c.l.b16 %v2793
    %v3170 = vunpack.c.h.b16 %v2793
    %v3171 = vunpack.c.l.b16 %v2794
    %v3172 = vunpack.c.h.b16 %v2794
    %v3173 = vunpack.c.l.b16 %v2795
    %v3174 = vunpack.c.h.b16 %v2795
    %v3175 = vunpack.c.l.b16 %v2796
    %v3176 = vunpack.c.h.b16 %v2796
    %v3177 = vunpack.c.l.b16 %v2797
    %v3178 = vunpack.c.h.b16 %v2797
    %v3179 = vunpack.c.l.b16 %v2798
    %v3180 = vunpack.c.h.b16 %v2798
    %v3181 = vunpack.c.l.b16 %v2799
    %v3182 = vunpack.c.h.b16 %v2799
    %v3183 = vunpack.c.l.b16 %v2800
    %v3184 = vunpack.c.h.b16 %v2800
    %v3185 = vunpack.c.l.b16 %v2801
    %v3186 = vunpack.c.h.b16 %v2801
    %v3187 = vunpack.c.l.b16 %v2802
    %v3188 = vunpack.c.h.b16 %v2802
    %v3189 = vunpack.c.l.b16 %v2803
    %v3190 = vunpack.c.h.b16 %v2803
    %v3191 = vunpack.c.l.b16 %v2804
    %v3192 = vunpack.c.h.b16 %v2804
    %v3193 = vunpack.c.l.b16 %v2805
    %v3194 = vunpack.c.h.b16 %v2805
    %v3195 = vunpack.c.l.b16 %v2806
    %v3196 = vunpack.c.h.b16 %v2806
    %v3197 = vunpack.c.l.b16 %v2807
    %v3198 = vunpack.c.h.b16 %v2807
    %v3199 = vunpack.c.l.b16 %v2808
    %v3200 = vunpack.c.h.b16 %v2808
    %v3201 = vunpack.c.l.b16 %v2809
    %v3202 = vunpack.c.h.b16 %v2809
    %v3203 = vunpack.c.l.b16 %v2810
    %v3204 = vunpack.c.h.b16 %v2810
    %v3205 = vunpack.c.l.b16 %v2811
    %v3206 = vunpack.c.h.b16 %v2811
    %v3207 = vunpack.c.l.b16 %v2812
    %v3208 = vunpack.c.h.b16 %v2812
    %v3209 = vpack.c.b16 %v2957, %v2953
    %v3210 = vpack.c.b16 %v2958, %v2954
    %v3211 = vpack.c.b16 %v2959, %v2955
    %v3212 = vpack.c.b16 %v2960, %v2956
    %v3213 = vpack.c.b16 %v2965, %v2961
    %v3214 = vpack.c.b16 %v2966, %v2962
    %v3215 = vpack.c.b16 %v2967, %v2963
    %v3216 = vpack.c.b16 %v2968, %v2964
    %v3217 = vpack.c.b16 %v2973, %v2969
    %v3218 = vpack.c.b16 %v2974, %v2970
    %v3219 = vpack.c.b16 %v2975, %v2971
    %v3220 = vpack.c.b16 %v2976, %v2972
    %v3221 = vpack.c.b16 %v2981, %v2977
    %v3222 = vpack.c.b16 %v2982, %v2978
    %v3223 = vpack.c.b16 %v2983, %v2979
    %v3224 = vpack.c.b16 %v2984, %v2980
    %v3225 = vpack.c.b16 %v2989, %v2985
    %v3226 = vpack.c.b16 %v2990, %v2986
    %v3227 = vpack.c.b16 %v2991, %v2987
    %v3228 = vpack.c.b16 %v2992, %v2988
    %v3229 = vpack.c.b16 %v2997, %v2993
    %v3230 = vpack.c.b16 %v2998, %v2994
    %v3231 = vpack.c.b16 %v2999, %v2995
    %v3232 = vpack.c.b16 %v3000, %v2996
    %v3233 = vpack.c.b16 %v3005, %v3001
    %v3234 = vpack.c.b16 %v3006, %v3002
    %v3235 = vpack.c.b16 %v3007, %v3003
    %v3236 = vpack.c.b16 %v3008, %v3004
    %v3237 = vpack.c.b16 %v3013, %v3009
    %v3238 = vpack.c.b16 %v3014, %v3010
    %v3239 = vpack.c.b16 %v3015, %v3011
    %v3240 = vpack.c.b16 %v3016, %v3012
    %v3241 = vpack.c.b16 %v3021, %v3017
    %v3242 = vpack.c.b16 %v3022, %v3018
    %v3243 = vpack.c.b16 %v3023, %v3019
    %v3244 = vpack.c.b16 %v3024, %v3020
    %v3245 = vpack.c.b16 %v3029, %v3025
    %v3246 = vpack.c.b16 %v3030, %v3026
    %v3247 = vpack.c.b16 %v3031, %v3027
    %v3248 = vpack.c.b16 %v3032, %v3028
    %v3249 = vpack.c.b16 %v3037, %v3033
    %v3250 = vpack.c.b16 %v3038, %v3034
    %v3251 = vpack.c.b16 %v3039, %v3035
    %v3252 = vpack.c.b16 %v3040, %v3036
    %v3253 = vpack.c.b16 %v3045, %v3041
    %v3254 = vpack.c.b16 %v3046, %v3042
    %v3255 = vpack.c.b16 %v3047, %v3043
    %v3256 = vpack.c.b16 %v3048, %v3044
    %v3257 = vpack.c.b16 %v3053, %v3049
    %v3258 = vpack.c.b16 %v3054, %v3050
    %v3259 = vpack.c.b16 %v3055, %v3051
    %v3260 = vpack.c.b16 %v3056, %v3052
    %v3261 = vpack.c.b16 %v3061, %v3057
    %v3262 = vpack.c.b16 %v3062, %v3058
    %v3263 = vpack.c.b16 %v3063, %v3059
    %v3264 = vpack.c.b16 %v3064, %v3060
    %v3265 = vpack.c.b16 %v3069, %v3065
    %v3266 = vpack.c.b16 %v3070, %v3066
    %v3267 = vpack.c.b16 %v3071, %v3067
    %v3268 = vpack.c.b16 %v3072, %v3068
    %v3269 = vpack.c.b16 %v3077, %v3073
    %v3270 = vpack.c.b16 %v3078, %v3074
    %v3271 = vpack.c.b16 %v3079, %v3075
    %v3272 = vpack.c.b16 %v3080, %v3076
    %v3273 = vpack.c.b16 %v3085, %v3081
    %v3274 = vpack.c.b16 %v3086, %v3082
    %v3275 = vpack.c.b16 %v3087, %v3083
    %v3276 = vpack.c.b16 %v3088, %v3084
    %v3277 = vpack.c.b16 %v3093, %v3089
    %v3278 = vpack.c.b16 %v3094, %v3090
    %v3279 = vpack.c.b16 %v3095, %v3091
    %v3280 = vpack.c.b16 %v3096, %v3092
    %v3281 = vpack.c.b16 %v3101, %v3097
    %v3282 = vpack.c.b16 %v3102, %v3098
    %v3283 = vpack.c.b16 %v3103, %v3099
    %v3284 = vpack.c.b16 %v3104, %v3100
    %v3285 = vpack.c.b16 %v3109, %v3105
    %v3286 = vpack.c.b16 %v3110, %v3106
    %v3287 = vpack.c.b16 %v3111, %v3107
    %v3288 = vpack.c.b16 %v3112, %v3108
    %v3289 = vpack.c.b16 %v3117, %v3113
    %v3290 = vpack.c.b16 %v3118, %v3114
    %v3291 = vpack.c.b16 %v3119, %v3115
    %v3292 = vpack.c.b16 %v3120, %v3116
    %v3293 = vpack.c.b16 %v3125, %v3121
    %v3294 = vpack.c.b16 %v3126, %v3122
    %v3295 = vpack.c.b16 %v3127, %v3123
    %v3296 = vpack.c.b16 %v3128, %v3124
    %v3297 = vpack.c.b16 %v3133, %v3129
    %v3298 = vpack.c.b16 %v3134, %v3130
    %v3299 = vpack.c.b16 %v3135, %v3131
    %v3300 = vpack.c.b16 %v3136, %v3132
    %v3301 = vpack.c.b16 %v3141, %v3137
    %v3302 = vpack.c.b16 %v3142, %v3138
    %v3303 = vpack.c.b16 %v3143, %v3139
    %v3304 = vpack.c.b16 %v3144, %v3140
    %v3305 = vpack.c.b16 %v3149, %v3145
    %v3306 = vpack.c.b16 %v3150, %v3146
    %v3307 = vpack.c.b16 %v3151, %v3147
    %v3308 = vpack.c.b16 %v3152, %v3148
    %v3309 = vpack.c.b16 %v3157, %v3153
    %v3310 = vpack.c.b16 %v3158, %v3154
    %v3311 = vpack.c.b16 %v3159, %v3155
    %v3312 = vpack.c.b16 %v3160, %v3156
    %v3313 = vpack.c.b16 %v3165, %v3161
    %v3314 = vpack.c.b16 %v3166, %v3162
    %v3315 = vpack.c.b16 %v3167, %v3163
    %v3316 = vpack.c.b16 %v3168, %v3164
    %v3317 = vpack.c.b16 %v3173, %v3169
    %v3318 = vpack.c.b16 %v3174, %v3170
    %v3319 = vpack.c.b16 %v3175, %v3171
    %v3320 = vpack.c.b16 %v3176, %v3172
    %v3321 = vpack.c.b16 %v3181, %v3177
    %v3322 = vpack.c.b16 %v3182, %v3178
    %v3323 = vpack.c.b16 %v3183, %v3179
    %v3324 = vpack.c.b16 %v3184, %v3180
    %v3325 = vpack.c.b16 %v3189, %v3185
    %v3326 = vpack.c.b16 %v3190, %v3186
    %v3327 = vpack.c.b16 %v3191, %v3187
    %v3328 = vpack.c.b16 %v3192, %v3188
    %v3329 = vpack.c.b16 %v3197, %v3193
    %v3330 = vpack.c.b16 %v3198, %v3194
    %v3331 = vpack.c.b16 %v3199, %v3195
    %v3332 = vpack.c.b16 %v3200, %v3196
    %v3333 = vpack.c.b16 %v3205, %v3201
    %v3334 = vpack.c.b16 %v3206, %v3202
    %v3335 = vpack.c.b16 %v3207, %v3203
    %v3336 = vpack.c.b16 %v3208, %v3204
    %3465 = vmatpush.bf16.msra.mxu0 %v3237
    %3466 = vmatpush.bf16.msra.mxu0 %v3233
    %3467 = vmatpush.bf16.msra.mxu0 %v3229
    %3468 = vmatpush.bf16.msra.mxu0 %v3225
    %3469 = vmatpush.bf16.msra.mxu0 %v3221
    %3470 = vmatpush.bf16.msra.mxu0 %v3217
    %3471 = vmatpush.bf16.msra.mxu0 %v3213
    %3472 = vmatpush.bf16.msra.mxu0 %v3209
    %3473 = vmatmul.bf16.gmra.mxu0 %v2680
    %v3474 = vpop.f32.mrf.mxu0
    %v3475 = vadd.f32 %v2821, %v3474
    %v3476 = vpop.f32.mrf.mxu0
    %v3477 = vadd.f32 %v2821, %v3476
    %3478 = vdwg.mxu0
    %3479 = vmatpush.bf16.msra.mxu0 %v3269
    %3480 = vmatpush.bf16.msra.mxu0 %v3265
    %3481 = vmatpush.bf16.msra.mxu0 %v3261
    %3482 = vmatpush.bf16.msra.mxu0 %v3257
    %3483 = vmatpush.bf16.msra.mxu0 %v3253
    %3484 = vmatpush.bf16.msra.mxu0 %v3249
    %3485 = vmatpush.bf16.msra.mxu0 %v3245
    %3486 = vmatpush.bf16.msra.mxu0 %v3241
    %3487 = vmatmul.bf16.gmra.mxu0 %v2681
    %v3488 = vpop.f32.mrf.mxu0
    %v3489 = vadd.f32 %v3475, %v3488
    %v3490 = vpop.f32.mrf.mxu0
    %v3491 = vadd.f32 %v3477, %v3490
    %3492 = vdwg.mxu0
    %3493 = vmatpush.bf16.msra.mxu0 %v3301
    %3494 = vmatpush.bf16.msra.mxu0 %v3297
    %3495 = vmatpush.bf16.msra.mxu0 %v3293
    %3496 = vmatpush.bf16.msra.mxu0 %v3289
    %3497 = vmatpush.bf16.msra.mxu0 %v3285
    %3498 = vmatpush.bf16.msra.mxu0 %v3281
    %3499 = vmatpush.bf16.msra.mxu0 %v3277
    %3500 = vmatpush.bf16.msra.mxu0 %v3273
    %3501 = vmatmul.bf16.gmra.mxu0 %v2682
    %v3502 = vpop.f32.mrf.mxu0
    %v3503 = vadd.f32 %v3489, %v3502
    %v3504 = vpop.f32.mrf.mxu0
    %v3505 = vadd.f32 %v3491, %v3504
    %3506 = vdwg.mxu0
    %3507 = vmatpush.bf16.msra.mxu0 %v3333
    %3508 = vmatpush.bf16.msra.mxu0 %v3329
    %3509 = vmatpush.bf16.msra.mxu0 %v3325
    %3510 = vmatpush.bf16.msra.mxu0 %v3321
    %3511 = vmatpush.bf16.msra.mxu0 %v3317
    %3512 = vmatpush.bf16.msra.mxu0 %v3313
    %3513 = vmatpush.bf16.msra.mxu0 %v3309
    %3514 = vmatpush.bf16.msra.mxu0 %v3305
    %3515 = vmatmul.bf16.gmra.mxu0 %v2683
    %v3516 = vpop.f32.mrf.mxu0
    %v3517 = vadd.f32 %v3503, %v3516
    %v3518 = vpop.f32.mrf.mxu0
    %v3519 = vadd.f32 %v3505, %v3518
    %3520 = vdwg.mxu0
    %3521 = vmatpush.bf16.msra.mxu0 %v3238
    %3522 = vmatpush.bf16.msra.mxu0 %v3234
    %3523 = vmatpush.bf16.msra.mxu0 %v3230
    %3524 = vmatpush.bf16.msra.mxu0 %v3226
    %3525 = vmatpush.bf16.msra.mxu0 %v3222
    %3526 = vmatpush.bf16.msra.mxu0 %v3218
    %3527 = vmatpush.bf16.msra.mxu0 %v3214
    %3528 = vmatpush.bf16.msra.mxu0 %v3210
    %3529 = vmatmul.bf16.gmra.mxu0 %v2680
    %v3530 = vpop.f32.mrf.mxu0
    %v3531 = vadd.f32 %v2822, %v3530
    %v3532 = vpop.f32.mrf.mxu0
    %v3533 = vadd.f32 %v2822, %v3532
    %3534 = vdwg.mxu0
    %3535 = vmatpush.bf16.msra.mxu0 %v3270
    %3536 = vmatpush.bf16.msra.mxu0 %v3266
    %3537 = vmatpush.bf16.msra.mxu0 %v3262
    %3538 = vmatpush.bf16.msra.mxu0 %v3258
    %3539 = vmatpush.bf16.msra.mxu0 %v3254
    %3540 = vmatpush.bf16.msra.mxu0 %v3250
    %3541 = vmatpush.bf16.msra.mxu0 %v3246
    %3542 = vmatpush.bf16.msra.mxu0 %v3242
    %3543 = vmatmul.bf16.gmra.mxu0 %v2681
    %v3544 = vpop.f32.mrf.mxu0
    %v3545 = vadd.f32 %v3531, %v3544
    %v3546 = vpop.f32.mrf.mxu0
    %v3547 = vadd.f32 %v3533, %v3546
    %3548 = vdwg.mxu0
    %3549 = vmatpush.bf16.msra.mxu0 %v3302
    %3550 = vmatpush.bf16.msra.mxu0 %v3298
    %3551 = vmatpush.bf16.msra.mxu0 %v3294
    %3552 = vmatpush.bf16.msra.mxu0 %v3290
    %3553 = vmatpush.bf16.msra.mxu0 %v3286
    %3554 = vmatpush.bf16.msra.mxu0 %v3282
    %3555 = vmatpush.bf16.msra.mxu0 %v3278
    %3556 = vmatpush.bf16.msra.mxu0 %v3274
    %3557 = vmatmul.bf16.gmra.mxu0 %v2682
    %v3558 = vpop.f32.mrf.mxu0
    %v3559 = vadd.f32 %v3545, %v3558
    %v3560 = vpop.f32.mrf.mxu0
    %v3561 = vadd.f32 %v3547, %v3560
    %3562 = vdwg.mxu0
    %3563 = vmatpush.bf16.msra.mxu0 %v3334
    %3564 = vmatpush.bf16.msra.mxu0 %v3330
    %3565 = vmatpush.bf16.msra.mxu0 %v3326
    %3566 = vmatpush.bf16.msra.mxu0 %v3322
    %3567 = vmatpush.bf16.msra.mxu0 %v3318
    %3568 = vmatpush.bf16.msra.mxu0 %v3314
    %3569 = vmatpush.bf16.msra.mxu0 %v3310
    %3570 = vmatpush.bf16.msra.mxu0 %v3306
    %3571 = vmatmul.bf16.gmra.mxu0 %v2683
    %v3572 = vpop.f32.mrf.mxu0
    %v3573 = vadd.f32 %v3559, %v3572
    %v3574 = vpop.f32.mrf.mxu0
    %v3575 = vadd.f32 %v3561, %v3574
    %3576 = vdwg.mxu0
    %3577 = vmatpush.bf16.msra.mxu0 %v3239
    %3578 = vmatpush.bf16.msra.mxu0 %v3235
    %3579 = vmatpush.bf16.msra.mxu0 %v3231
    %3580 = vmatpush.bf16.msra.mxu0 %v3227
    %3581 = vmatpush.bf16.msra.mxu0 %v3223
    %3582 = vmatpush.bf16.msra.mxu0 %v3219
    %3583 = vmatpush.bf16.msra.mxu0 %v3215
    %3584 = vmatpush.bf16.msra.mxu0 %v3211
    %3585 = vmatmul.bf16.gmra.mxu0 %v2680
    %v3586 = vpop.f32.mrf.mxu0
    %v3587 = vadd.f32 %v2823, %v3586
    %v3588 = vpop.f32.mrf.mxu0
    %v3589 = vadd.f32 %v2823, %v3588
    %3590 = vdwg.mxu0
    %3591 = vmatpush.bf16.msra.mxu0 %v3271
    %3592 = vmatpush.bf16.msra.mxu0 %v3267
    %3593 = vmatpush.bf16.msra.mxu0 %v3263
    %3594 = vmatpush.bf16.msra.mxu0 %v3259
    %3595 = vmatpush.bf16.msra.mxu0 %v3255
    %3596 = vmatpush.bf16.msra.mxu0 %v3251
    %3597 = vmatpush.bf16.msra.mxu0 %v3247
    %3598 = vmatpush.bf16.msra.mxu0 %v3243
    %3599 = vmatmul.bf16.gmra.mxu0 %v2681
    %v3600 = vpop.f32.mrf.mxu0
    %v3601 = vadd.f32 %v3587, %v3600
    %v3602 = vpop.f32.mrf.mxu0
    %v3603 = vadd.f32 %v3589, %v3602
    %3604 = vdwg.mxu0
    %3605 = vmatpush.bf16.msra.mxu0 %v3303
    %3606 = vmatpush.bf16.msra.mxu0 %v3299
    %3607 = vmatpush.bf16.msra.mxu0 %v3295
    %3608 = vmatpush.bf16.msra.mxu0 %v3291
    %3609 = vmatpush.bf16.msra.mxu0 %v3287
    %3610 = vmatpush.bf16.msra.mxu0 %v3283
    %3611 = vmatpush.bf16.msra.mxu0 %v3279
    %3612 = vmatpush.bf16.msra.mxu0 %v3275
    %3613 = vmatmul.bf16.gmra.mxu0 %v2682
    %v3614 = vpop.f32.mrf.mxu0
    %v3615 = vadd.f32 %v3601, %v3614
    %v3616 = vpop.f32.mrf.mxu0
    %v3617 = vadd.f32 %v3603, %v3616
    %3618 = vdwg.mxu0
    %3619 = vmatpush.bf16.msra.mxu0 %v3335
    %3620 = vmatpush.bf16.msra.mxu0 %v3331
    %3621 = vmatpush.bf16.msra.mxu0 %v3327
    %3622 = vmatpush.bf16.msra.mxu0 %v3323
    %3623 = vmatpush.bf16.msra.mxu0 %v3319
    %3624 = vmatpush.bf16.msra.mxu0 %v3315
    %3625 = vmatpush.bf16.msra.mxu0 %v3311
    %3626 = vmatpush.bf16.msra.mxu0 %v3307
    %3627 = vmatmul.bf16.gmra.mxu0 %v2683
    %v3628 = vpop.f32.mrf.mxu0
    %v3629 = vadd.f32 %v3615, %v3628
    %v3630 = vpop.f32.mrf.mxu0
    %v3631 = vadd.f32 %v3617, %v3630
    %3632 = vdwg.mxu0
    %3633 = vmatpush.bf16.msra.mxu0 %v3240
    %3634 = vmatpush.bf16.msra.mxu0 %v3236
    %3635 = vmatpush.bf16.msra.mxu0 %v3232
    %3636 = vmatpush.bf16.msra.mxu0 %v3228
    %3637 = vmatpush.bf16.msra.mxu0 %v3224
    %3638 = vmatpush.bf16.msra.mxu0 %v3220
    %3639 = vmatpush.bf16.msra.mxu0 %v3216
    %3640 = vmatpush.bf16.msra.mxu0 %v3212
    %3641 = vmatmul.bf16.gmra.mxu0 %v2680
    %v3642 = vpop.f32.mrf.mxu0
    %v3643 = vadd.f32 %v2824, %v3642
    %v3644 = vpop.f32.mrf.mxu0
    %v3645 = vadd.f32 %v2824, %v3644
    %3646 = vdwg.mxu0
    %3647 = vmatpush.bf16.msra.mxu0 %v3272
    %3648 = vmatpush.bf16.msra.mxu0 %v3268
    %3649 = vmatpush.bf16.msra.mxu0 %v3264
    %3650 = vmatpush.bf16.msra.mxu0 %v3260
    %3651 = vmatpush.bf16.msra.mxu0 %v3256
    %3652 = vmatpush.bf16.msra.mxu0 %v3252
    %3653 = vmatpush.bf16.msra.mxu0 %v3248
    %3654 = vmatpush.bf16.msra.mxu0 %v3244
    %3655 = vmatmul.bf16.gmra.mxu0 %v2681
    %v3656 = vpop.f32.mrf.mxu0
    %v3657 = vadd.f32 %v3643, %v3656
    %v3658 = vpop.f32.mrf.mxu0
    %v3659 = vadd.f32 %v3645, %v3658
    %3660 = vdwg.mxu0
    %3661 = vmatpush.bf16.msra.mxu0 %v3304
    %3662 = vmatpush.bf16.msra.mxu0 %v3300
    %3663 = vmatpush.bf16.msra.mxu0 %v3296
    %3664 = vmatpush.bf16.msra.mxu0 %v3292
    %3665 = vmatpush.bf16.msra.mxu0 %v3288
    %3666 = vmatpush.bf16.msra.mxu0 %v3284
    %3667 = vmatpush.bf16.msra.mxu0 %v3280
    %3668 = vmatpush.bf16.msra.mxu0 %v3276
    %3669 = vmatmul.bf16.gmra.mxu0 %v2682
    %v3670 = vpop.f32.mrf.mxu0
    %v3671 = vadd.f32 %v3657, %v3670
    %v3672 = vpop.f32.mrf.mxu0
    %v3673 = vadd.f32 %v3659, %v3672
    %3674 = vdwg.mxu0
    %3675 = vmatpush.bf16.msra.mxu0 %v3336
    %3676 = vmatpush.bf16.msra.mxu0 %v3332
    %3677 = vmatpush.bf16.msra.mxu0 %v3328
    %3678 = vmatpush.bf16.msra.mxu0 %v3324
    %3679 = vmatpush.bf16.msra.mxu0 %v3320
    %3680 = vmatpush.bf16.msra.mxu0 %v3316
    %3681 = vmatpush.bf16.msra.mxu0 %v3312
    %3682 = vmatpush.bf16.msra.mxu0 %v3308
    %3683 = vmatmul.bf16.gmra.mxu0 %v2683
    %v3684 = vpop.f32.mrf.mxu0
    %v3685 = vadd.f32 %v3671, %v3684
    %v3686 = vpop.f32.mrf.mxu0
    %v3687 = vadd.f32 %v3673, %v3686
    %3688 = vdwg.mxu0
    %v3689 = vadd.f32 %v3517, %v1654
    %v3690 = vadd.f32 %v3573, %v1655
    %v3691 = vadd.f32 %v3629, %v1656
    %v3692 = vadd.f32 %v3685, %v1657
    %v3693 = vadd.f32 %v3519, %v1658
    %v3694 = vadd.f32 %v3575, %v1659
    %v3695 = vadd.f32 %v3631, %v1660
    %v3696 = vadd.f32 %v3687, %v1661
    %v3697 = vmax.f32 %v3689, 0.0
    %v3698 = vmax.f32 %v3690, 0.0
    %v3699 = vmax.f32 %v3691, 0.0
    %v3700 = vmax.f32 %v3692, 0.0
    %v3701 = vmax.f32 %v3693, 0.0
    %v3702 = vmax.f32 %v3694, 0.0
    %v3703 = vmax.f32 %v3695, 0.0
    %v3704 = vmax.f32 %v3696, 0.0
    %v3705 = vpack.c.bf16 %v3701, %v3697
    %v3706 = vpack.c.bf16 %v3702, %v3698
    %v3707 = vpack.c.bf16 %v3703, %v3699
    %v3708 = vpack.c.bf16 %v3704, %v3700
    %v3709 = vld [vmem:[#allocation10] sm:$0xff]
    %v3710 = vld [vmem:[#allocation10 + $0x8] sm:$0xff]
    %v3711 = vld [vmem:[#allocation10 + $0x10] sm:$0xff]
    %v3712 = vld [vmem:[#allocation10 + $0x18] sm:$0xff]
    %v3713 = vld [vmem:[#allocation10 + $0x20] sm:$0xff]
    %v3714 = vld [vmem:[#allocation10 + $0x28] sm:$0xff]
    %v3715 = vld [vmem:[#allocation10 + $0x30] sm:$0xff]
    %v3716 = vld [vmem:[#allocation10 + $0x38] sm:$0xff]
    %v3717 = vld [vmem:[#allocation10 + $0x40] sm:$0xff]
    %v3718 = vld [vmem:[#allocation10 + $0x48] sm:$0xff]
    %v3719 = vld [vmem:[#allocation10 + $0x50] sm:$0xff]
    %v3720 = vld [vmem:[#allocation10 + $0x58] sm:$0xff]
    %v3721 = vld [vmem:[#allocation10 + $0x60] sm:$0xff]
    %v3722 = vld [vmem:[#allocation10 + $0x68] sm:$0xff]
    %v3723 = vld [vmem:[#allocation10 + $0x70] sm:$0xff]
    %v3724 = vld [vmem:[#allocation10 + $0x78] sm:$0xff]
    %v3725 = vld [vmem:[#allocation10 + $0x80] sm:$0xff]
    %v3726 = vld [vmem:[#allocation10 + $0x88] sm:$0xff]
    %v3727 = vld [vmem:[#allocation10 + $0x90] sm:$0xff]
    %v3728 = vld [vmem:[#allocation10 + $0x98] sm:$0xff]
    %v3729 = vld [vmem:[#allocation10 + $0xa0] sm:$0xff]
    %v3730 = vld [vmem:[#allocation10 + $0xa8] sm:$0xff]
    %v3731 = vld [vmem:[#allocation10 + $0xb0] sm:$0xff]
    %v3732 = vld [vmem:[#allocation10 + $0xb8] sm:$0xff]
    %v3733 = vld [vmem:[#allocation10 + $0xc0] sm:$0xff]
    %v3734 = vld [vmem:[#allocation10 + $0xc8] sm:$0xff]
    %v3735 = vld [vmem:[#allocation10 + $0xd0] sm:$0xff]
    %v3736 = vld [vmem:[#allocation10 + $0xd8] sm:$0xff]
    %v3737 = vld [vmem:[#allocation10 + $0xe0] sm:$0xff]
    %v3738 = vld [vmem:[#allocation10 + $0xe8] sm:$0xff]
    %v3739 = vld [vmem:[#allocation10 + $0xf0] sm:$0xff]
    %v3740 = vld [vmem:[#allocation10 + $0xf8] sm:$0xff]
    %v3741 = vld [vmem:[#allocation10 + $0x100] sm:$0xff]
    %v3742 = vld [vmem:[#allocation10 + $0x108] sm:$0xff]
    %v3743 = vld [vmem:[#allocation10 + $0x110] sm:$0xff]
    %v3744 = vld [vmem:[#allocation10 + $0x118] sm:$0xff]
    %v3745 = vld [vmem:[#allocation10 + $0x120] sm:$0xff]
    %v3746 = vld [vmem:[#allocation10 + $0x128] sm:$0xff]
    %v3747 = vld [vmem:[#allocation10 + $0x130] sm:$0xff]
    %v3748 = vld [vmem:[#allocation10 + $0x138] sm:$0xff]
    %v3749 = vld [vmem:[#allocation10 + $0x140] sm:$0xff]
    %v3750 = vld [vmem:[#allocation10 + $0x148] sm:$0xff]
    %v3751 = vld [vmem:[#allocation10 + $0x150] sm:$0xff]
    %v3752 = vld [vmem:[#allocation10 + $0x158] sm:$0xff]
    %v3753 = vld [vmem:[#allocation10 + $0x160] sm:$0xff]
    %v3754 = vld [vmem:[#allocation10 + $0x168] sm:$0xff]
    %v3755 = vld [vmem:[#allocation10 + $0x170] sm:$0xff]
    %v3756 = vld [vmem:[#allocation10 + $0x178] sm:$0xff]
    %v3757 = vld [vmem:[#allocation10 + $0x180] sm:$0xff]
    %v3758 = vld [vmem:[#allocation10 + $0x188] sm:$0xff]
    %v3759 = vld [vmem:[#allocation10 + $0x190] sm:$0xff]
    %v3760 = vld [vmem:[#allocation10 + $0x198] sm:$0xff]
    %v3761 = vld [vmem:[#allocation10 + $0x1a0] sm:$0xff]
    %v3762 = vld [vmem:[#allocation10 + $0x1a8] sm:$0xff]
    %v3763 = vld [vmem:[#allocation10 + $0x1b0] sm:$0xff]
    %v3764 = vld [vmem:[#allocation10 + $0x1b8] sm:$0xff]
    %v3765 = vld [vmem:[#allocation10 + $0x1c0] sm:$0xff]
    %v3766 = vld [vmem:[#allocation10 + $0x1c8] sm:$0xff]
    %v3767 = vld [vmem:[#allocation10 + $0x1d0] sm:$0xff]
    %v3768 = vld [vmem:[#allocation10 + $0x1d8] sm:$0xff]
    %v3769 = vld [vmem:[#allocation10 + $0x1e0] sm:$0xff]
    %v3770 = vld [vmem:[#allocation10 + $0x1e8] sm:$0xff]
    %v3771 = vld [vmem:[#allocation10 + $0x1f0] sm:$0xff]
    %v3772 = vld [vmem:[#allocation10 + $0x1f8] sm:$0xff]
    %v3773 = vld [vmem:[#allocation10 + $0x200] sm:$0xff]
    %v3774 = vld [vmem:[#allocation10 + $0x208] sm:$0xff]
    %v3775 = vld [vmem:[#allocation10 + $0x210] sm:$0xff]
    %v3776 = vld [vmem:[#allocation10 + $0x218] sm:$0xff]
    %v3777 = vld [vmem:[#allocation10 + $0x220] sm:$0xff]
    %v3778 = vld [vmem:[#allocation10 + $0x228] sm:$0xff]
    %v3779 = vld [vmem:[#allocation10 + $0x230] sm:$0xff]
    %v3780 = vld [vmem:[#allocation10 + $0x238] sm:$0xff]
    %v3781 = vld [vmem:[#allocation10 + $0x240] sm:$0xff]
    %v3782 = vld [vmem:[#allocation10 + $0x248] sm:$0xff]
    %v3783 = vld [vmem:[#allocation10 + $0x250] sm:$0xff]
    %v3784 = vld [vmem:[#allocation10 + $0x258] sm:$0xff]
    %v3785 = vld [vmem:[#allocation10 + $0x260] sm:$0xff]
    %v3786 = vld [vmem:[#allocation10 + $0x268] sm:$0xff]
    %v3787 = vld [vmem:[#allocation10 + $0x270] sm:$0xff]
    %v3788 = vld [vmem:[#allocation10 + $0x278] sm:$0xff]
    %v3789 = vld [vmem:[#allocation10 + $0x280] sm:$0xff]
    %v3790 = vld [vmem:[#allocation10 + $0x288] sm:$0xff]
    %v3791 = vld [vmem:[#allocation10 + $0x290] sm:$0xff]
    %v3792 = vld [vmem:[#allocation10 + $0x298] sm:$0xff]
    %v3793 = vld [vmem:[#allocation10 + $0x2a0] sm:$0xff]
    %v3794 = vld [vmem:[#allocation10 + $0x2a8] sm:$0xff]
    %v3795 = vld [vmem:[#allocation10 + $0x2b0] sm:$0xff]
    %v3796 = vld [vmem:[#allocation10 + $0x2b8] sm:$0xff]
    %v3797 = vld [vmem:[#allocation10 + $0x2c0] sm:$0xff]
    %v3798 = vld [vmem:[#allocation10 + $0x2c8] sm:$0xff]
    %v3799 = vld [vmem:[#allocation10 + $0x2d0] sm:$0xff]
    %v3800 = vld [vmem:[#allocation10 + $0x2d8] sm:$0xff]
    %v3801 = vld [vmem:[#allocation10 + $0x2e0] sm:$0xff]
    %v3802 = vld [vmem:[#allocation10 + $0x2e8] sm:$0xff]
    %v3803 = vld [vmem:[#allocation10 + $0x2f0] sm:$0xff]
    %v3804 = vld [vmem:[#allocation10 + $0x2f8] sm:$0xff]
    %v3805 = vld [vmem:[#allocation10 + $0x300] sm:$0xff]
    %v3806 = vld [vmem:[#allocation10 + $0x308] sm:$0xff]
    %v3807 = vld [vmem:[#allocation10 + $0x310] sm:$0xff]
    %v3808 = vld [vmem:[#allocation10 + $0x318] sm:$0xff]
    %v3809 = vld [vmem:[#allocation10 + $0x320] sm:$0xff]
    %v3810 = vld [vmem:[#allocation10 + $0x328] sm:$0xff]
    %v3811 = vld [vmem:[#allocation10 + $0x330] sm:$0xff]
    %v3812 = vld [vmem:[#allocation10 + $0x338] sm:$0xff]
    %v3813 = vld [vmem:[#allocation10 + $0x340] sm:$0xff]
    %v3814 = vld [vmem:[#allocation10 + $0x348] sm:$0xff]
    %v3815 = vld [vmem:[#allocation10 + $0x350] sm:$0xff]
    %v3816 = vld [vmem:[#allocation10 + $0x358] sm:$0xff]
    %v3817 = vld [vmem:[#allocation10 + $0x360] sm:$0xff]
    %v3818 = vld [vmem:[#allocation10 + $0x368] sm:$0xff]
    %v3819 = vld [vmem:[#allocation10 + $0x370] sm:$0xff]
    %v3820 = vld [vmem:[#allocation10 + $0x378] sm:$0xff]
    %v3821 = vld [vmem:[#allocation10 + $0x380] sm:$0xff]
    %v3822 = vld [vmem:[#allocation10 + $0x388] sm:$0xff]
    %v3823 = vld [vmem:[#allocation10 + $0x390] sm:$0xff]
    %v3824 = vld [vmem:[#allocation10 + $0x398] sm:$0xff]
    %v3825 = vld [vmem:[#allocation10 + $0x3a0] sm:$0xff]
    %v3826 = vld [vmem:[#allocation10 + $0x3a8] sm:$0xff]
    %v3827 = vld [vmem:[#allocation10 + $0x3b0] sm:$0xff]
    %v3828 = vld [vmem:[#allocation10 + $0x3b8] sm:$0xff]
    %v3829 = vld [vmem:[#allocation10 + $0x3c0] sm:$0xff]
    %v3830 = vld [vmem:[#allocation10 + $0x3c8] sm:$0xff]
    %v3831 = vld [vmem:[#allocation10 + $0x3d0] sm:$0xff]
    %v3832 = vld [vmem:[#allocation10 + $0x3d8] sm:$0xff]
    %v3833 = vld [vmem:[#allocation10 + $0x3e0] sm:$0xff]
    %v3834 = vld [vmem:[#allocation10 + $0x3e8] sm:$0xff]
    %v3835 = vld [vmem:[#allocation10 + $0x3f0] sm:$0xff]
    %v3836 = vld [vmem:[#allocation10 + $0x3f8] sm:$0xff]
    %v3837 = vperm.slane %v116, 2
    %v3838 = vperm.slane %v116, 6
    %v3839 = vperm.slane %v117, 2
    %v3840 = vperm.slane %v117, 6
    %v3845 = vperm.slane %v3837, 2
    %v3846 = vperm.slane %v3838, 2
    %v3847 = vperm.slane %v3839, 2
    %v3848 = vperm.slane %v3840, 2
    %v3977 = vunpack.c.l.b16 %v3709
    %v3978 = vunpack.c.h.b16 %v3709
    %v3979 = vunpack.c.l.b16 %v3710
    %v3980 = vunpack.c.h.b16 %v3710
    %v3981 = vunpack.c.l.b16 %v3711
    %v3982 = vunpack.c.h.b16 %v3711
    %v3983 = vunpack.c.l.b16 %v3712
    %v3984 = vunpack.c.h.b16 %v3712
    %v3985 = vunpack.c.l.b16 %v3713
    %v3986 = vunpack.c.h.b16 %v3713
    %v3987 = vunpack.c.l.b16 %v3714
    %v3988 = vunpack.c.h.b16 %v3714
    %v3989 = vunpack.c.l.b16 %v3715
    %v3990 = vunpack.c.h.b16 %v3715
    %v3991 = vunpack.c.l.b16 %v3716
    %v3992 = vunpack.c.h.b16 %v3716
    %v3993 = vunpack.c.l.b16 %v3717
    %v3994 = vunpack.c.h.b16 %v3717
    %v3995 = vunpack.c.l.b16 %v3718
    %v3996 = vunpack.c.h.b16 %v3718
    %v3997 = vunpack.c.l.b16 %v3719
    %v3998 = vunpack.c.h.b16 %v3719
    %v3999 = vunpack.c.l.b16 %v3720
    %v4000 = vunpack.c.h.b16 %v3720
    %v4001 = vunpack.c.l.b16 %v3721
    %v4002 = vunpack.c.h.b16 %v3721
    %v4003 = vunpack.c.l.b16 %v3722
    %v4004 = vunpack.c.h.b16 %v3722
    %v4005 = vunpack.c.l.b16 %v3723
    %v4006 = vunpack.c.h.b16 %v3723
    %v4007 = vunpack.c.l.b16 %v3724
    %v4008 = vunpack.c.h.b16 %v3724
    %v4009 = vunpack.c.l.b16 %v3725
    %v4010 = vunpack.c.h.b16 %v3725
    %v4011 = vunpack.c.l.b16 %v3726
    %v4012 = vunpack.c.h.b16 %v3726
    %v4013 = vunpack.c.l.b16 %v3727
    %v4014 = vunpack.c.h.b16 %v3727
    %v4015 = vunpack.c.l.b16 %v3728
    %v4016 = vunpack.c.h.b16 %v3728
    %v4017 = vunpack.c.l.b16 %v3729
    %v4018 = vunpack.c.h.b16 %v3729
    %v4019 = vunpack.c.l.b16 %v3730
    %v4020 = vunpack.c.h.b16 %v3730
    %v4021 = vunpack.c.l.b16 %v3731
    %v4022 = vunpack.c.h.b16 %v3731
    %v4023 = vunpack.c.l.b16 %v3732
    %v4024 = vunpack.c.h.b16 %v3732
    %v4025 = vunpack.c.l.b16 %v3733
    %v4026 = vunpack.c.h.b16 %v3733
    %v4027 = vunpack.c.l.b16 %v3734
    %v4028 = vunpack.c.h.b16 %v3734
    %v4029 = vunpack.c.l.b16 %v3735
    %v4030 = vunpack.c.h.b16 %v3735
    %v4031 = vunpack.c.l.b16 %v3736
    %v4032 = vunpack.c.h.b16 %v3736
    %v4033 = vunpack.c.l.b16 %v3737
    %v4034 = vunpack.c.h.b16 %v3737
    %v4035 = vunpack.c.l.b16 %v3738
    %v4036 = vunpack.c.h.b16 %v3738
    %v4037 = vunpack.c.l.b16 %v3739
    %v4038 = vunpack.c.h.b16 %v3739
    %v4039 = vunpack.c.l.b16 %v3740
    %v4040 = vunpack.c.h.b16 %v3740
    %v4041 = vunpack.c.l.b16 %v3741
    %v4042 = vunpack.c.h.b16 %v3741
    %v4043 = vunpack.c.l.b16 %v3742
    %v4044 = vunpack.c.h.b16 %v3742
    %v4045 = vunpack.c.l.b16 %v3743
    %v4046 = vunpack.c.h.b16 %v3743
    %v4047 = vunpack.c.l.b16 %v3744
    %v4048 = vunpack.c.h.b16 %v3744
    %v4049 = vunpack.c.l.b16 %v3745
    %v4050 = vunpack.c.h.b16 %v3745
    %v4051 = vunpack.c.l.b16 %v3746
    %v4052 = vunpack.c.h.b16 %v3746
    %v4053 = vunpack.c.l.b16 %v3747
    %v4054 = vunpack.c.h.b16 %v3747
    %v4055 = vunpack.c.l.b16 %v3748
    %v4056 = vunpack.c.h.b16 %v3748
    %v4057 = vunpack.c.l.b16 %v3749
    %v4058 = vunpack.c.h.b16 %v3749
    %v4059 = vunpack.c.l.b16 %v3750
    %v4060 = vunpack.c.h.b16 %v3750
    %v4061 = vunpack.c.l.b16 %v3751
    %v4062 = vunpack.c.h.b16 %v3751
    %v4063 = vunpack.c.l.b16 %v3752
    %v4064 = vunpack.c.h.b16 %v3752
    %v4065 = vunpack.c.l.b16 %v3753
    %v4066 = vunpack.c.h.b16 %v3753
    %v4067 = vunpack.c.l.b16 %v3754
    %v4068 = vunpack.c.h.b16 %v3754
    %v4069 = vunpack.c.l.b16 %v3755
    %v4070 = vunpack.c.h.b16 %v3755
    %v4071 = vunpack.c.l.b16 %v3756
    %v4072 = vunpack.c.h.b16 %v3756
    %v4073 = vunpack.c.l.b16 %v3757
    %v4074 = vunpack.c.h.b16 %v3757
    %v4075 = vunpack.c.l.b16 %v3758
    %v4076 = vunpack.c.h.b16 %v3758
    %v4077 = vunpack.c.l.b16 %v3759
    %v4078 = vunpack.c.h.b16 %v3759
    %v4079 = vunpack.c.l.b16 %v3760
    %v4080 = vunpack.c.h.b16 %v3760
    %v4081 = vunpack.c.l.b16 %v3761
    %v4082 = vunpack.c.h.b16 %v3761
    %v4083 = vunpack.c.l.b16 %v3762
    %v4084 = vunpack.c.h.b16 %v3762
    %v4085 = vunpack.c.l.b16 %v3763
    %v4086 = vunpack.c.h.b16 %v3763
    %v4087 = vunpack.c.l.b16 %v3764
    %v4088 = vunpack.c.h.b16 %v3764
    %v4089 = vunpack.c.l.b16 %v3765
    %v4090 = vunpack.c.h.b16 %v3765
    %v4091 = vunpack.c.l.b16 %v3766
    %v4092 = vunpack.c.h.b16 %v3766
    %v4093 = vunpack.c.l.b16 %v3767
    %v4094 = vunpack.c.h.b16 %v3767
    %v4095 = vunpack.c.l.b16 %v3768
    %v4096 = vunpack.c.h.b16 %v3768
    %v4097 = vunpack.c.l.b16 %v3769
    %v4098 = vunpack.c.h.b16 %v3769
    %v4099 = vunpack.c.l.b16 %v3770
    %v4100 = vunpack.c.h.b16 %v3770
    %v4101 = vunpack.c.l.b16 %v3771
    %v4102 = vunpack.c.h.b16 %v3771
    %v4103 = vunpack.c.l.b16 %v3772
    %v4104 = vunpack.c.h.b16 %v3772
    %v4105 = vunpack.c.l.b16 %v3773
    %v4106 = vunpack.c.h.b16 %v3773
    %v4107 = vunpack.c.l.b16 %v3774
    %v4108 = vunpack.c.h.b16 %v3774
    %v4109 = vunpack.c.l.b16 %v3775
    %v4110 = vunpack.c.h.b16 %v3775
    %v4111 = vunpack.c.l.b16 %v3776
    %v4112 = vunpack.c.h.b16 %v3776
    %v4113 = vunpack.c.l.b16 %v3777
    %v4114 = vunpack.c.h.b16 %v3777
    %v4115 = vunpack.c.l.b16 %v3778
    %v4116 = vunpack.c.h.b16 %v3778
    %v4117 = vunpack.c.l.b16 %v3779
    %v4118 = vunpack.c.h.b16 %v3779
    %v4119 = vunpack.c.l.b16 %v3780
    %v4120 = vunpack.c.h.b16 %v3780
    %v4121 = vunpack.c.l.b16 %v3781
    %v4122 = vunpack.c.h.b16 %v3781
    %v4123 = vunpack.c.l.b16 %v3782
    %v4124 = vunpack.c.h.b16 %v3782
    %v4125 = vunpack.c.l.b16 %v3783
    %v4126 = vunpack.c.h.b16 %v3783
    %v4127 = vunpack.c.l.b16 %v3784
    %v4128 = vunpack.c.h.b16 %v3784
    %v4129 = vunpack.c.l.b16 %v3785
    %v4130 = vunpack.c.h.b16 %v3785
    %v4131 = vunpack.c.l.b16 %v3786
    %v4132 = vunpack.c.h.b16 %v3786
    %v4133 = vunpack.c.l.b16 %v3787
    %v4134 = vunpack.c.h.b16 %v3787
    %v4135 = vunpack.c.l.b16 %v3788
    %v4136 = vunpack.c.h.b16 %v3788
    %v4137 = vunpack.c.l.b16 %v3789
    %v4138 = vunpack.c.h.b16 %v3789
    %v4139 = vunpack.c.l.b16 %v3790
    %v4140 = vunpack.c.h.b16 %v3790
    %v4141 = vunpack.c.l.b16 %v3791
    %v4142 = vunpack.c.h.b16 %v3791
    %v4143 = vunpack.c.l.b16 %v3792
    %v4144 = vunpack.c.h.b16 %v3792
    %v4145 = vunpack.c.l.b16 %v3793
    %v4146 = vunpack.c.h.b16 %v3793
    %v4147 = vunpack.c.l.b16 %v3794
    %v4148 = vunpack.c.h.b16 %v3794
    %v4149 = vunpack.c.l.b16 %v3795
    %v4150 = vunpack.c.h.b16 %v3795
    %v4151 = vunpack.c.l.b16 %v3796
    %v4152 = vunpack.c.h.b16 %v3796
    %v4153 = vunpack.c.l.b16 %v3797
    %v4154 = vunpack.c.h.b16 %v3797
    %v4155 = vunpack.c.l.b16 %v3798
    %v4156 = vunpack.c.h.b16 %v3798
    %v4157 = vunpack.c.l.b16 %v3799
    %v4158 = vunpack.c.h.b16 %v3799
    %v4159 = vunpack.c.l.b16 %v3800
    %v4160 = vunpack.c.h.b16 %v3800
    %v4161 = vunpack.c.l.b16 %v3801
    %v4162 = vunpack.c.h.b16 %v3801
    %v4163 = vunpack.c.l.b16 %v3802
    %v4164 = vunpack.c.h.b16 %v3802
    %v4165 = vunpack.c.l.b16 %v3803
    %v4166 = vunpack.c.h.b16 %v3803
    %v4167 = vunpack.c.l.b16 %v3804
    %v4168 = vunpack.c.h.b16 %v3804
    %v4169 = vunpack.c.l.b16 %v3805
    %v4170 = vunpack.c.h.b16 %v3805
    %v4171 = vunpack.c.l.b16 %v3806
    %v4172 = vunpack.c.h.b16 %v3806
    %v4173 = vunpack.c.l.b16 %v3807
    %v4174 = vunpack.c.h.b16 %v3807
    %v4175 = vunpack.c.l.b16 %v3808
    %v4176 = vunpack.c.h.b16 %v3808
    %v4177 = vunpack.c.l.b16 %v3809
    %v4178 = vunpack.c.h.b16 %v3809
    %v4179 = vunpack.c.l.b16 %v3810
    %v4180 = vunpack.c.h.b16 %v3810
    %v4181 = vunpack.c.l.b16 %v3811
    %v4182 = vunpack.c.h.b16 %v3811
    %v4183 = vunpack.c.l.b16 %v3812
    %v4184 = vunpack.c.h.b16 %v3812
    %v4185 = vunpack.c.l.b16 %v3813
    %v4186 = vunpack.c.h.b16 %v3813
    %v4187 = vunpack.c.l.b16 %v3814
    %v4188 = vunpack.c.h.b16 %v3814
    %v4189 = vunpack.c.l.b16 %v3815
    %v4190 = vunpack.c.h.b16 %v3815
    %v4191 = vunpack.c.l.b16 %v3816
    %v4192 = vunpack.c.h.b16 %v3816
    %v4193 = vunpack.c.l.b16 %v3817
    %v4194 = vunpack.c.h.b16 %v3817
    %v4195 = vunpack.c.l.b16 %v3818
    %v4196 = vunpack.c.h.b16 %v3818
    %v4197 = vunpack.c.l.b16 %v3819
    %v4198 = vunpack.c.h.b16 %v3819
    %v4199 = vunpack.c.l.b16 %v3820
    %v4200 = vunpack.c.h.b16 %v3820
    %v4201 = vunpack.c.l.b16 %v3821
    %v4202 = vunpack.c.h.b16 %v3821
    %v4203 = vunpack.c.l.b16 %v3822
    %v4204 = vunpack.c.h.b16 %v3822
    %v4205 = vunpack.c.l.b16 %v3823
    %v4206 = vunpack.c.h.b16 %v3823
    %v4207 = vunpack.c.l.b16 %v3824
    %v4208 = vunpack.c.h.b16 %v3824
    %v4209 = vunpack.c.l.b16 %v3825
    %v4210 = vunpack.c.h.b16 %v3825
    %v4211 = vunpack.c.l.b16 %v3826
    %v4212 = vunpack.c.h.b16 %v3826
    %v4213 = vunpack.c.l.b16 %v3827
    %v4214 = vunpack.c.h.b16 %v3827
    %v4215 = vunpack.c.l.b16 %v3828
    %v4216 = vunpack.c.h.b16 %v3828
    %v4217 = vunpack.c.l.b16 %v3829
    %v4218 = vunpack.c.h.b16 %v3829
    %v4219 = vunpack.c.l.b16 %v3830
    %v4220 = vunpack.c.h.b16 %v3830
    %v4221 = vunpack.c.l.b16 %v3831
    %v4222 = vunpack.c.h.b16 %v3831
    %v4223 = vunpack.c.l.b16 %v3832
    %v4224 = vunpack.c.h.b16 %v3832
    %v4225 = vunpack.c.l.b16 %v3833
    %v4226 = vunpack.c.h.b16 %v3833
    %v4227 = vunpack.c.l.b16 %v3834
    %v4228 = vunpack.c.h.b16 %v3834
    %v4229 = vunpack.c.l.b16 %v3835
    %v4230 = vunpack.c.h.b16 %v3835
    %v4231 = vunpack.c.l.b16 %v3836
    %v4232 = vunpack.c.h.b16 %v3836
    %v4233 = vpack.c.b16 %v3981, %v3977
    %v4234 = vpack.c.b16 %v3982, %v3978
    %v4235 = vpack.c.b16 %v3983, %v3979
    %v4236 = vpack.c.b16 %v3984, %v3980
    %v4237 = vpack.c.b16 %v3989, %v3985
    %v4238 = vpack.c.b16 %v3990, %v3986
    %v4239 = vpack.c.b16 %v3991, %v3987
    %v4240 = vpack.c.b16 %v3992, %v3988
    %v4241 = vpack.c.b16 %v3997, %v3993
    %v4242 = vpack.c.b16 %v3998, %v3994
    %v4243 = vpack.c.b16 %v3999, %v3995
    %v4244 = vpack.c.b16 %v4000, %v3996
    %v4245 = vpack.c.b16 %v4005, %v4001
    %v4246 = vpack.c.b16 %v4006, %v4002
    %v4247 = vpack.c.b16 %v4007, %v4003
    %v4248 = vpack.c.b16 %v4008, %v4004
    %v4249 = vpack.c.b16 %v4013, %v4009
    %v4250 = vpack.c.b16 %v4014, %v4010
    %v4251 = vpack.c.b16 %v4015, %v4011
    %v4252 = vpack.c.b16 %v4016, %v4012
    %v4253 = vpack.c.b16 %v4021, %v4017
    %v4254 = vpack.c.b16 %v4022, %v4018
    %v4255 = vpack.c.b16 %v4023, %v4019
    %v4256 = vpack.c.b16 %v4024, %v4020
    %v4257 = vpack.c.b16 %v4029, %v4025
    %v4258 = vpack.c.b16 %v4030, %v4026
    %v4259 = vpack.c.b16 %v4031, %v4027
    %v4260 = vpack.c.b16 %v4032, %v4028
    %v4261 = vpack.c.b16 %v4037, %v4033
    %v4262 = vpack.c.b16 %v4038, %v4034
    %v4263 = vpack.c.b16 %v4039, %v4035
    %v4264 = vpack.c.b16 %v4040, %v4036
    %v4265 = vpack.c.b16 %v4045, %v4041
    %v4266 = vpack.c.b16 %v4046, %v4042
    %v4267 = vpack.c.b16 %v4047, %v4043
    %v4268 = vpack.c.b16 %v4048, %v4044
    %v4269 = vpack.c.b16 %v4053, %v4049
    %v4270 = vpack.c.b16 %v4054, %v4050
    %v4271 = vpack.c.b16 %v4055, %v4051
    %v4272 = vpack.c.b16 %v4056, %v4052
    %v4273 = vpack.c.b16 %v4061, %v4057
    %v4274 = vpack.c.b16 %v4062, %v4058
    %v4275 = vpack.c.b16 %v4063, %v4059
    %v4276 = vpack.c.b16 %v4064, %v4060
    %v4277 = vpack.c.b16 %v4069, %v4065
    %v4278 = vpack.c.b16 %v4070, %v4066
    %v4279 = vpack.c.b16 %v4071, %v4067
    %v4280 = vpack.c.b16 %v4072, %v4068
    %v4281 = vpack.c.b16 %v4077, %v4073
    %v4282 = vpack.c.b16 %v4078, %v4074
    %v4283 = vpack.c.b16 %v4079, %v4075
    %v4284 = vpack.c.b16 %v4080, %v4076
    %v4285 = vpack.c.b16 %v4085, %v4081
    %v4286 = vpack.c.b16 %v4086, %v4082
    %v4287 = vpack.c.b16 %v4087, %v4083
    %v4288 = vpack.c.b16 %v4088, %v4084
    %v4289 = vpack.c.b16 %v4093, %v4089
    %v4290 = vpack.c.b16 %v4094, %v4090
    %v4291 = vpack.c.b16 %v4095, %v4091
    %v4292 = vpack.c.b16 %v4096, %v4092
    %v4293 = vpack.c.b16 %v4101, %v4097
    %v4294 = vpack.c.b16 %v4102, %v4098
    %v4295 = vpack.c.b16 %v4103, %v4099
    %v4296 = vpack.c.b16 %v4104, %v4100
    %v4297 = vpack.c.b16 %v4109, %v4105
    %v4298 = vpack.c.b16 %v4110, %v4106
    %v4299 = vpack.c.b16 %v4111, %v4107
    %v4300 = vpack.c.b16 %v4112, %v4108
    %v4301 = vpack.c.b16 %v4117, %v4113
    %v4302 = vpack.c.b16 %v4118, %v4114
    %v4303 = vpack.c.b16 %v4119, %v4115
    %v4304 = vpack.c.b16 %v4120, %v4116
    %v4305 = vpack.c.b16 %v4125, %v4121
    %v4306 = vpack.c.b16 %v4126, %v4122
    %v4307 = vpack.c.b16 %v4127, %v4123
    %v4308 = vpack.c.b16 %v4128, %v4124
    %v4309 = vpack.c.b16 %v4133, %v4129
    %v4310 = vpack.c.b16 %v4134, %v4130
    %v4311 = vpack.c.b16 %v4135, %v4131
    %v4312 = vpack.c.b16 %v4136, %v4132
    %v4313 = vpack.c.b16 %v4141, %v4137
    %v4314 = vpack.c.b16 %v4142, %v4138
    %v4315 = vpack.c.b16 %v4143, %v4139
    %v4316 = vpack.c.b16 %v4144, %v4140
    %v4317 = vpack.c.b16 %v4149, %v4145
    %v4318 = vpack.c.b16 %v4150, %v4146
    %v4319 = vpack.c.b16 %v4151, %v4147
    %v4320 = vpack.c.b16 %v4152, %v4148
    %v4321 = vpack.c.b16 %v4157, %v4153
    %v4322 = vpack.c.b16 %v4158, %v4154
    %v4323 = vpack.c.b16 %v4159, %v4155
    %v4324 = vpack.c.b16 %v4160, %v4156
    %v4325 = vpack.c.b16 %v4165, %v4161
    %v4326 = vpack.c.b16 %v4166, %v4162
    %v4327 = vpack.c.b16 %v4167, %v4163
    %v4328 = vpack.c.b16 %v4168, %v4164
    %v4329 = vpack.c.b16 %v4173, %v4169
    %v4330 = vpack.c.b16 %v4174, %v4170
    %v4331 = vpack.c.b16 %v4175, %v4171
    %v4332 = vpack.c.b16 %v4176, %v4172
    %v4333 = vpack.c.b16 %v4181, %v4177
    %v4334 = vpack.c.b16 %v4182, %v4178
    %v4335 = vpack.c.b16 %v4183, %v4179
    %v4336 = vpack.c.b16 %v4184, %v4180
    %v4337 = vpack.c.b16 %v4189, %v4185
    %v4338 = vpack.c.b16 %v4190, %v4186
    %v4339 = vpack.c.b16 %v4191, %v4187
    %v4340 = vpack.c.b16 %v4192, %v4188
    %v4341 = vpack.c.b16 %v4197, %v4193
    %v4342 = vpack.c.b16 %v4198, %v4194
    %v4343 = vpack.c.b16 %v4199, %v4195
    %v4344 = vpack.c.b16 %v4200, %v4196
    %v4345 = vpack.c.b16 %v4205, %v4201
    %v4346 = vpack.c.b16 %v4206, %v4202
    %v4347 = vpack.c.b16 %v4207, %v4203
    %v4348 = vpack.c.b16 %v4208, %v4204
    %v4349 = vpack.c.b16 %v4213, %v4209
    %v4350 = vpack.c.b16 %v4214, %v4210
    %v4351 = vpack.c.b16 %v4215, %v4211
    %v4352 = vpack.c.b16 %v4216, %v4212
    %v4353 = vpack.c.b16 %v4221, %v4217
    %v4354 = vpack.c.b16 %v4222, %v4218
    %v4355 = vpack.c.b16 %v4223, %v4219
    %v4356 = vpack.c.b16 %v4224, %v4220
    %v4357 = vpack.c.b16 %v4229, %v4225
    %v4358 = vpack.c.b16 %v4230, %v4226
    %v4359 = vpack.c.b16 %v4231, %v4227
    %v4360 = vpack.c.b16 %v4232, %v4228
    %4489 = vmatpush.bf16.msra.mxu0 %v4261
    %4490 = vmatpush.bf16.msra.mxu0 %v4257
    %4491 = vmatpush.bf16.msra.mxu0 %v4253
    %4492 = vmatpush.bf16.msra.mxu0 %v4249
    %4493 = vmatpush.bf16.msra.mxu0 %v4245
    %4494 = vmatpush.bf16.msra.mxu0 %v4241
    %4495 = vmatpush.bf16.msra.mxu0 %v4237
    %4496 = vmatpush.bf16.msra.mxu0 %v4233
    %4497 = vmatmul.bf16.gmra.mxu0 %v3705
    %v4498 = vpop.f32.mrf.mxu0
    %v4499 = vadd.f32 %v3845, %v4498
    %v4500 = vpop.f32.mrf.mxu0
    %v4501 = vadd.f32 %v3845, %v4500
    %4502 = vdwg.mxu0
    %4503 = vmatpush.bf16.msra.mxu0 %v4293
    %4504 = vmatpush.bf16.msra.mxu0 %v4289
    %4505 = vmatpush.bf16.msra.mxu0 %v4285
    %4506 = vmatpush.bf16.msra.mxu0 %v4281
    %4507 = vmatpush.bf16.msra.mxu0 %v4277
    %4508 = vmatpush.bf16.msra.mxu0 %v4273
    %4509 = vmatpush.bf16.msra.mxu0 %v4269
    %4510 = vmatpush.bf16.msra.mxu0 %v4265
    %4511 = vmatmul.bf16.gmra.mxu0 %v3706
    %v4512 = vpop.f32.mrf.mxu0
    %v4513 = vadd.f32 %v4499, %v4512
    %v4514 = vpop.f32.mrf.mxu0
    %v4515 = vadd.f32 %v4501, %v4514
    %4516 = vdwg.mxu0
    %4517 = vmatpush.bf16.msra.mxu0 %v4325
    %4518 = vmatpush.bf16.msra.mxu0 %v4321
    %4519 = vmatpush.bf16.msra.mxu0 %v4317
    %4520 = vmatpush.bf16.msra.mxu0 %v4313
    %4521 = vmatpush.bf16.msra.mxu0 %v4309
    %4522 = vmatpush.bf16.msra.mxu0 %v4305
    %4523 = vmatpush.bf16.msra.mxu0 %v4301
    %4524 = vmatpush.bf16.msra.mxu0 %v4297
    %4525 = vmatmul.bf16.gmra.mxu0 %v3707
    %v4526 = vpop.f32.mrf.mxu0
    %v4527 = vadd.f32 %v4513, %v4526
    %v4528 = vpop.f32.mrf.mxu0
    %v4529 = vadd.f32 %v4515, %v4528
    %4530 = vdwg.mxu0
    %4531 = vmatpush.bf16.msra.mxu0 %v4357
    %4532 = vmatpush.bf16.msra.mxu0 %v4353
    %4533 = vmatpush.bf16.msra.mxu0 %v4349
    %4534 = vmatpush.bf16.msra.mxu0 %v4345
    %4535 = vmatpush.bf16.msra.mxu0 %v4341
    %4536 = vmatpush.bf16.msra.mxu0 %v4337
    %4537 = vmatpush.bf16.msra.mxu0 %v4333
    %4538 = vmatpush.bf16.msra.mxu0 %v4329
    %4539 = vmatmul.bf16.gmra.mxu0 %v3708
    %v4540 = vpop.f32.mrf.mxu0
    %v4541 = vadd.f32 %v4527, %v4540
    %v4542 = vpop.f32.mrf.mxu0
    %v4543 = vadd.f32 %v4529, %v4542
    %4544 = vdwg.mxu0
    %4545 = vmatpush.bf16.msra.mxu0 %v4262
    %4546 = vmatpush.bf16.msra.mxu0 %v4258
    %4547 = vmatpush.bf16.msra.mxu0 %v4254
    %4548 = vmatpush.bf16.msra.mxu0 %v4250
    %4549 = vmatpush.bf16.msra.mxu0 %v4246
    %4550 = vmatpush.bf16.msra.mxu0 %v4242
    %4551 = vmatpush.bf16.msra.mxu0 %v4238
    %4552 = vmatpush.bf16.msra.mxu0 %v4234
    %4553 = vmatmul.bf16.gmra.mxu0 %v3705
    %v4554 = vpop.f32.mrf.mxu0
    %v4555 = vadd.f32 %v3846, %v4554
    %v4556 = vpop.f32.mrf.mxu0
    %v4557 = vadd.f32 %v3846, %v4556
    %4558 = vdwg.mxu0
    %4559 = vmatpush.bf16.msra.mxu0 %v4294
    %4560 = vmatpush.bf16.msra.mxu0 %v4290
    %4561 = vmatpush.bf16.msra.mxu0 %v4286
    %4562 = vmatpush.bf16.msra.mxu0 %v4282
    %4563 = vmatpush.bf16.msra.mxu0 %v4278
    %4564 = vmatpush.bf16.msra.mxu0 %v4274
    %4565 = vmatpush.bf16.msra.mxu0 %v4270
    %4566 = vmatpush.bf16.msra.mxu0 %v4266
    %4567 = vmatmul.bf16.gmra.mxu0 %v3706
    %v4568 = vpop.f32.mrf.mxu0
    %v4569 = vadd.f32 %v4555, %v4568
    %v4570 = vpop.f32.mrf.mxu0
    %v4571 = vadd.f32 %v4557, %v4570
    %4572 = vdwg.mxu0
    %4573 = vmatpush.bf16.msra.mxu0 %v4326
    %4574 = vmatpush.bf16.msra.mxu0 %v4322
    %4575 = vmatpush.bf16.msra.mxu0 %v4318
    %4576 = vmatpush.bf16.msra.mxu0 %v4314
    %4577 = vmatpush.bf16.msra.mxu0 %v4310
    %4578 = vmatpush.bf16.msra.mxu0 %v4306
    %4579 = vmatpush.bf16.msra.mxu0 %v4302
    %4580 = vmatpush.bf16.msra.mxu0 %v4298
    %4581 = vmatmul.bf16.gmra.mxu0 %v3707
    %v4582 = vpop.f32.mrf.mxu0
    %v4583 = vadd.f32 %v4569, %v4582
    %v4584 = vpop.f32.mrf.mxu0
    %v4585 = vadd.f32 %v4571, %v4584
    %4586 = vdwg.mxu0
    %4587 = vmatpush.bf16.msra.mxu0 %v4358
    %4588 = vmatpush.bf16.msra.mxu0 %v4354
    %4589 = vmatpush.bf16.msra.mxu0 %v4350
    %4590 = vmatpush.bf16.msra.mxu0 %v4346
    %4591 = vmatpush.bf16.msra.mxu0 %v4342
    %4592 = vmatpush.bf16.msra.mxu0 %v4338
    %4593 = vmatpush.bf16.msra.mxu0 %v4334
    %4594 = vmatpush.bf16.msra.mxu0 %v4330
    %4595 = vmatmul.bf16.gmra.mxu0 %v3708
    %v4596 = vpop.f32.mrf.mxu0
    %v4597 = vadd.f32 %v4583, %v4596
    %v4598 = vpop.f32.mrf.mxu0
    %v4599 = vadd.f32 %v4585, %v4598
    %4600 = vdwg.mxu0
    %4601 = vmatpush.bf16.msra.mxu0 %v4263
    %4602 = vmatpush.bf16.msra.mxu0 %v4259
    %4603 = vmatpush.bf16.msra.mxu0 %v4255
    %4604 = vmatpush.bf16.msra.mxu0 %v4251
    %4605 = vmatpush.bf16.msra.mxu0 %v4247
    %4606 = vmatpush.bf16.msra.mxu0 %v4243
    %4607 = vmatpush.bf16.msra.mxu0 %v4239
    %4608 = vmatpush.bf16.msra.mxu0 %v4235
    %4609 = vmatmul.bf16.gmra.mxu0 %v3705
    %v4610 = vpop.f32.mrf.mxu0
    %v4611 = vadd.f32 %v3847, %v4610
    %v4612 = vpop.f32.mrf.mxu0
    %v4613 = vadd.f32 %v3847, %v4612
    %4614 = vdwg.mxu0
    %4615 = vmatpush.bf16.msra.mxu0 %v4295
    %4616 = vmatpush.bf16.msra.mxu0 %v4291
    %4617 = vmatpush.bf16.msra.mxu0 %v4287
    %4618 = vmatpush.bf16.msra.mxu0 %v4283
    %4619 = vmatpush.bf16.msra.mxu0 %v4279
    %4620 = vmatpush.bf16.msra.mxu0 %v4275
    %4621 = vmatpush.bf16.msra.mxu0 %v4271
    %4622 = vmatpush.bf16.msra.mxu0 %v4267
    %4623 = vmatmul.bf16.gmra.mxu0 %v3706
    %v4624 = vpop.f32.mrf.mxu0
    %v4625 = vadd.f32 %v4611, %v4624
    %v4626 = vpop.f32.mrf.mxu0
    %v4627 = vadd.f32 %v4613, %v4626
    %4628 = vdwg.mxu0
    %4629 = vmatpush.bf16.msra.mxu0 %v4327
    %4630 = vmatpush.bf16.msra.mxu0 %v4323
    %4631 = vmatpush.bf16.msra.mxu0 %v4319
    %4632 = vmatpush.bf16.msra.mxu0 %v4315
    %4633 = vmatpush.bf16.msra.mxu0 %v4311
    %4634 = vmatpush.bf16.msra.mxu0 %v4307
    %4635 = vmatpush.bf16.msra.mxu0 %v4303
    %4636 = vmatpush.bf16.msra.mxu0 %v4299
    %4637 = vmatmul.bf16.gmra.mxu0 %v3707
    %v4638 = vpop.f32.mrf.mxu0
    %v4639 = vadd.f32 %v4625, %v4638
    %v4640 = vpop.f32.mrf.mxu0
    %v4641 = vadd.f32 %v4627, %v4640
    %4642 = vdwg.mxu0
    %4643 = vmatpush.bf16.msra.mxu0 %v4359
    %4644 = vmatpush.bf16.msra.mxu0 %v4355
    %4645 = vmatpush.bf16.msra.mxu0 %v4351
    %4646 = vmatpush.bf16.msra.mxu0 %v4347
    %4647 = vmatpush.bf16.msra.mxu0 %v4343
    %4648 = vmatpush.bf16.msra.mxu0 %v4339
    %4649 = vmatpush.bf16.msra.mxu0 %v4335
    %4650 = vmatpush.bf16.msra.mxu0 %v4331
    %4651 = vmatmul.bf16.gmra.mxu0 %v3708
    %v4652 = vpop.f32.mrf.mxu0
    %v4653 = vadd.f32 %v4639, %v4652
    %v4654 = vpop.f32.mrf.mxu0
    %v4655 = vadd.f32 %v4641, %v4654
    %4656 = vdwg.mxu0
    %4657 = vmatpush.bf16.msra.mxu0 %v4264
    %4658 = vmatpush.bf16.msra.mxu0 %v4260
    %4659 = vmatpush.bf16.msra.mxu0 %v4256
    %4660 = vmatpush.bf16.msra.mxu0 %v4252
    %4661 = vmatpush.bf16.msra.mxu0 %v4248
    %4662 = vmatpush.bf16.msra.mxu0 %v4244
    %4663 = vmatpush.bf16.msra.mxu0 %v4240
    %4664 = vmatpush.bf16.msra.mxu0 %v4236
    %4665 = vmatmul.bf16.gmra.mxu0 %v3705
    %v4666 = vpop.f32.mrf.mxu0
    %v4667 = vadd.f32 %v3848, %v4666
    %v4668 = vpop.f32.mrf.mxu0
    %v4669 = vadd.f32 %v3848, %v4668
    %4670 = vdwg.mxu0
    %4671 = vmatpush.bf16.msra.mxu0 %v4296
    %4672 = vmatpush.bf16.msra.mxu0 %v4292
    %4673 = vmatpush.bf16.msra.mxu0 %v4288
    %4674 = vmatpush.bf16.msra.mxu0 %v4284
    %4675 = vmatpush.bf16.msra.mxu0 %v4280
    %4676 = vmatpush.bf16.msra.mxu0 %v4276
    %4677 = vmatpush.bf16.msra.mxu0 %v4272
    %4678 = vmatpush.bf16.msra.mxu0 %v4268
    %4679 = vmatmul.bf16.gmra.mxu0 %v3706
    %v4680 = vpop.f32.mrf.mxu0
    %v4681 = vadd.f32 %v4667, %v4680
    %v4682 = vpop.f32.mrf.mxu0
    %v4683 = vadd.f32 %v4669, %v4682
    %4684 = vdwg.mxu0
    %4685 = vmatpush.bf16.msra.mxu0 %v4328
    %4686 = vmatpush.bf16.msra.mxu0 %v4324
    %4687 = vmatpush.bf16.msra.mxu0 %v4320
    %4688 = vmatpush.bf16.msra.mxu0 %v4316
    %4689 = vmatpush.bf16.msra.mxu0 %v4312
    %4690 = vmatpush.bf16.msra.mxu0 %v4308
    %4691 = vmatpush.bf16.msra.mxu0 %v4304
    %4692 = vmatpush.bf16.msra.mxu0 %v4300
    %4693 = vmatmul.bf16.gmra.mxu0 %v3707
    %v4694 = vpop.f32.mrf.mxu0
    %v4695 = vadd.f32 %v4681, %v4694
    %v4696 = vpop.f32.mrf.mxu0
    %v4697 = vadd.f32 %v4683, %v4696
    %4698 = vdwg.mxu0
    %4699 = vmatpush.bf16.msra.mxu0 %v4360
    %4700 = vmatpush.bf16.msra.mxu0 %v4356
    %4701 = vmatpush.bf16.msra.mxu0 %v4352
    %4702 = vmatpush.bf16.msra.mxu0 %v4348
    %4703 = vmatpush.bf16.msra.mxu0 %v4344
    %4704 = vmatpush.bf16.msra.mxu0 %v4340
    %4705 = vmatpush.bf16.msra.mxu0 %v4336
    %4706 = vmatpush.bf16.msra.mxu0 %v4332
    %4707 = vmatmul.bf16.gmra.mxu0 %v3708
    %v4708 = vpop.f32.mrf.mxu0
    %v4709 = vadd.f32 %v4695, %v4708
    %v4710 = vpop.f32.mrf.mxu0
    %v4711 = vadd.f32 %v4697, %v4710
    %4712 = vdwg.mxu0
    %4713 = vst [vmem:[#allocation13] sm:$0xff] %v4541
    %4714 = vst [vmem:[#allocation13 + $0x8] sm:$0xff] %v4597
    %4715 = vst [vmem:[#allocation13 + $0x10] sm:$0xff] %v4653
    %4716 = vst [vmem:[#allocation13 + $0x18] sm:$0xff] %v4709
    %4717 = vst [vmem:[#allocation13 + $0x20] sm:$0xff] %v4543
    %4718 = vst [vmem:[#allocation13 + $0x28] sm:$0xff] %v4599
    %4719 = vst [vmem:[#allocation13 + $0x30] sm:$0xff] %v4655
    %4720 = vst [vmem:[#allocation13 + $0x38] sm:$0xff] %v4711
    // Predicated region
    $region50: #{tpu_custom_call.1} parent=1 // pred_check
      _
    $region51: #{tpu_custom_call.1} parent=1 // pred_check_branch
      %4722 = sbr.rel (0) target = $region53
    $region52: #{tpu_custom_call.1} parent=1 // pred_region
      %4724 = vsyncadd [#allocation4], 0
      %s4725 = sshll.u32 [#allocation13], 4
      %s4726 = int_to_ptr.vmem [resolvable:$true] %s4725
      %s4727 = sshll.u32 %s6, 4
      %s4728 = int_to_ptr.hbm [resolvable:$true] %s4727
      %4733 = dma.vmem_to_hbm [thread:$0]  %s4726, 1024, %s4728, [#allocation4], 512, 512, 32
    $region53: #{tpu_custom_call.1} parent=1 // pred_fallthru
      _
    // Predicated region
    $region54: #{tpu_custom_call.1} parent=1 // pred_check
      _
    $region55: #{tpu_custom_call.1} parent=1 // pred_check_branch
      %4735 = sbr.rel (0) target = $region57
    $region56: #{tpu_custom_call.1} parent=1 // pred_region
      %4737 = dma.done [#allocation4], 1024
    $region57: #{tpu_custom_call.1} parent=1 // pred_fallthru
      _
    %4738 = vsyncpa [#allocation3], 1
    %4739 = vsyncpa [#allocation6], 1
    %4740 = vsyncpa [#allocation9], 1
    %4741 = vsyncpa [#allocation12], 1
    %4742 = vsyncpa [#allocation4], 1

// kernel: tpu_custom_call.1
$region0: #{tpu_custom_call.1}
  #allocation0 [shape = 'u32[]', space=smem, size = 0x4, offset = 0x4, fixed_abs, tag = 'smem constant byte address 0x4 - core index']
  #allocation1 [shape = 'u32[72,128]{1,0:T(1,128)}', space=vmem, size = 0x9000, scoped, tag = 'internal scratch']
  %s0 = inlined_call_operand.hbm [shape: bf16[16,768], index: 0, kind: input, shape index: {}]
  %s1 = inlined_call_operand.hbm [shape: bf16[16,512], index: 1, kind: input, shape index: {}]
  %s2 = inlined_call_operand.hbm [shape: bf16[768,512], index: 2, kind: input, shape index: {}]
  %s3 = inlined_call_operand.hbm [shape: bf16[2,512,512], index: 3, kind: input, shape index: {}]
  %s4 = inlined_call_operand.hbm [shape: bf16[512,512], index: 4, kind: input, shape index: {}]
  %s5 = inlined_call_operand.hbm [shape: f32[3,512], index: 5, kind: input, shape index: {}]
  %s6 = inlined_call_operand.hbm [shape: f32[16,512], index: 6, kind: output, shape index: {}]
  %s7 = sld [smem:[#allocation0]]
  $region58: #{tpu_custom_call.1} parent=0
    _
  %s9 = ssub.s32 1, %s7
  %s10 = scalar_select 0, %s9, %s7
  $region1: #{tpu_custom_call.1} parent=0
    #allocation2 [shape = 'u8[24576]{0}', space=vmem, size = 0x6000, scoped, tag = 'input window, operand 0, single buffered']
    #allocation3 [shape = 's32[1]{0}', space=sflag, size = 0x4, scoped, tag = 'scoped memory for tpu_custom_call.1']
    #allocation4 [shape = 's32[1]{0}', space=sflag, size = 0x4, scoped, tag = 'scoped memory for tpu_custom_call.1']
    #allocation5 [shape = 'u8[16384]{0}', space=vmem, size = 0x4000, scoped, tag = 'input window, operand 1, single buffered']
    #allocation6 [shape = 's32[1]{0}', space=sflag, size = 0x4, scoped, tag = 'scoped memory for tpu_custom_call.1']
    #allocation7 [shape = 'u8[786432]{0}', space=vmem, size = 0xc0000, scoped, tag = 'input window, operand 2, single buffered']
    #allocation8 [shape = 'u8[1048576]{0}', space=vmem, size = 0x100000, scoped, tag = 'input window, operand 3, single buffered']
    #allocation9 [shape = 's32[1]{0}', space=sflag, size = 0x4, scoped, tag = 'scoped memory for tpu_custom_call.1']
    #allocation10 [shape = 'u8[524288]{0}', space=vmem, size = 0x80000, scoped, tag = 'input window, operand 4, single buffered']
    #allocation11 [shape = 'u8[8192]{0}', space=vmem, size = 0x2000, scoped, tag = 'input window, operand 5, single buffered']
    #allocation12 [shape = 's32[1]{0}', space=sflag, size = 0x4, scoped, tag = 'scoped memory for tpu_custom_call.1']
    #allocation13 [shape = 'u8[32768]{0}', space=vmem, size = 0x8000, scoped, tag = 'output window, operand 0, single buffered']
    %11 = vsyncpa [#allocation3], 0
    %12 = vsyncpa [#allocation6], 0
    %13 = vsyncpa [#allocation9], 0
    %14 = vsyncpa [#allocation12], 0
    %15 = vsyncpa [#allocation4], 0
    // Predicated region
    $region2: #{tpu_custom_call.1} parent=1 // pred_check
      _
    $region3: #{tpu_custom_call.1} parent=1 // pred_check_branch
      %17 = sbr.rel (0) target = $region5
    $region4: #{tpu_custom_call.1} parent=1 // pred_region
      %19 = vsyncadd [#allocation3], 0
      %s20 = sshll.u32 %s0, 4
      %s21 = int_to_ptr.hbm [resolvable:$true] %s20
      %s22 = sshll.u32 [#allocation2], 4
      %s23 = int_to_ptr.vmem [resolvable:$true] %s22
      %28 = dma.hbm_to_vmem [thread:$0]  %s21, 768, %s23, [#allocation3], 384, 384, 24
    $region5: #{tpu_custom_call.1} parent=1 // pred_fallthru
      _
    // Predicated region
    $region6: #{tpu_custom_call.1} parent=1 // pred_check
      _
    $region7: #{tpu_custom_call.1} parent=1 // pred_check_branch
      %30 = sbr.rel (0) target = $region9
    $region8: #{tpu_custom_call.1} parent=1 // pred_region
      %32 = vsyncadd [#allocation6], 0
      %s33 = sshll.u32 %s1, 4
      %s34 = int_to_ptr.hbm [resolvable:$true] %s33
      %s35 = sshll.u32 [#allocation5], 4
      %s36 = int_to_ptr.vmem [resolvable:$true] %s35
      %41 = dma.hbm_to_vmem [thread:$0]  %s34, 512, %s36, [#allocation6], 256, 256, 16
    $region9: #{tpu_custom_call.1} parent=1 // pred_fallthru
      _
    // Predicated region
    $region10: #{tpu_custom_call.1} parent=1 // pred_check
      _
    $region11: #{tpu_custom_call.1} parent=1 // pred_check_branch
      %43 = sbr.rel (0) target = $region13
    $region12: #{tpu_custom_call.1} parent=1 // pred_region
      %45 = vsyncadd [#allocation6], 0
      %s46 = sshll.u32 %s2, 4
      %s47 = int_to_ptr.hbm [resolvable:$true] %s46
      %s48 = sshll.u32 [#allocation7], 4
      %s49 = int_to_ptr.vmem [resolvable:$true] %s48
      %54 = dma.hbm_to_vmem [thread:$0]  %s47, 24576, %s49, [#allocation6], 256, 256, 16
    $region13: #{tpu_custom_call.1} parent=1 // pred_fallthru
      _
    // Predicated region
    $region14: #{tpu_custom_call.1} parent=1 // pred_check
      _
    $region15: #{tpu_custom_call.1} parent=1 // pred_check_branch
      %56 = sbr.rel (0) target = $region17
    $region16: #{tpu_custom_call.1} parent=1 // pred_region
      %58 = vsyncadd [#allocation9], 0
      %s59 = sshll.u32 %s3, 4
      %s60 = int_to_ptr.hbm [resolvable:$true] %s59
      %s61 = sshll.u32 [#allocation8], 4
      %s62 = int_to_ptr.vmem [resolvable:$true] %s61
      %67 = dma.hbm_to_vmem [thread:$0]  %s60, 32768, %s62, [#allocation9], 256, 256, 16
    $region17: #{tpu_custom_call.1} parent=1 // pred_fallthru
      _
    // Predicated region
    $region18: #{tpu_custom_call.1} parent=1 // pred_check
      _
    $region19: #{tpu_custom_call.1} parent=1 // pred_check_branch
      %69 = sbr.rel (0) target = $region21
    $region20: #{tpu_custom_call.1} parent=1 // pred_region
      %71 = vsyncadd [#allocation9], 0
      %s72 = sshll.u32 %s4, 4
      %s73 = int_to_ptr.hbm [resolvable:$true] %s72
      %s74 = sshll.u32 [#allocation10], 4
      %s75 = int_to_ptr.vmem [resolvable:$true] %s74
      %80 = dma.hbm_to_vmem [thread:$0]  %s73, 16384, %s75, [#allocation9], 256, 256, 16
    $region21: #{tpu_custom_call.1} parent=1 // pred_fallthru
      _
    // Predicated region
    $region22: #{tpu_custom_call.1} parent=1 // pred_check
      _
    $region23: #{tpu_custom_call.1} parent=1 // pred_check_branch
      %82 = sbr.rel (0) target = $region25
    $region24: #{tpu_custom_call.1} parent=1 // pred_region
      %84 = vsyncadd [#allocation12], 0
      %s86 = sshll.u32 %s5, 4
      %s87 = int_to_ptr.hbm [resolvable:$true] %s86
      %s88 = sshll.u32 [#allocation11], 4
      %s89 = int_to_ptr.vmem [resolvable:$true] %s88
      %91 = dma.hbm_to_vmem [thread:$0]  %s87, 256, %s89, [#allocation12]
    $region25: #{tpu_custom_call.1} parent=1 // pred_fallthru
      _
    // Predicated region
    $region26: #{tpu_custom_call.1} parent=1 // pred_check
      _
    $region27: #{tpu_custom_call.1} parent=1 // pred_check_branch
      %93 = sbr.rel (0) target = $region29
    $region28: #{tpu_custom_call.1} parent=1 // pred_region
      %95 = dma.done [#allocation3], 768
    $region29: #{tpu_custom_call.1} parent=1 // pred_fallthru
      _
    // Predicated region
    $region30: #{tpu_custom_call.1} parent=1 // pred_check
      _
    $region31: #{tpu_custom_call.1} parent=1 // pred_check_branch
      %97 = sbr.rel (0) target = $region33
    $region32: #{tpu_custom_call.1} parent=1 // pred_region
      %99 = dma.done [#allocation6], 512
    $region33: #{tpu_custom_call.1} parent=1 // pred_fallthru
      _
    // Predicated region
    $region34: #{tpu_custom_call.1} parent=1 // pred_check
      _
    $region35: #{tpu_custom_call.1} parent=1 // pred_check_branch
      %101 = sbr.rel (0) target = $region37
    $region36: #{tpu_custom_call.1} parent=1 // pred_region
      %103 = dma.done [#allocation6], 24576
    $region37: #{tpu_custom_call.1} parent=1 // pred_fallthru
      _
    // Predicated region
    $region38: #{tpu_custom_call.1} parent=1 // pred_check
      _
    $region39: #{tpu_custom_call.1} parent=1 // pred_check_branch
      %105 = sbr.rel (0) target = $region41
    $region40: #{tpu_custom_call.1} parent=1 // pred_region
      %107 = dma.done [#allocation9], 32768
    $region41: #{tpu_custom_call.1} parent=1 // pred_fallthru
      _
    // Predicated region
    $region42: #{tpu_custom_call.1} parent=1 // pred_check
      _
    $region43: #{tpu_custom_call.1} parent=1 // pred_check_branch
      %109 = sbr.rel (0) target = $region45
    $region44: #{tpu_custom_call.1} parent=1 // pred_region
      %111 = dma.done [#allocation9], 16384
    $region45: #{tpu_custom_call.1} parent=1 // pred_fallthru
      _
    // Predicated region
    $region46: #{tpu_custom_call.1} parent=1 // pred_check
      _
    $region47: #{tpu_custom_call.1} parent=1 // pred_check_branch
      %113 = sbr.rel (0) target = $region49
    $region48: #{tpu_custom_call.1} parent=1 // pred_region
      %115 = dma.done [#allocation12], 256
    $region49: #{tpu_custom_call.1} parent=1 // pred_fallthru
      _
    %v116 = vld [vmem:[#allocation11] sm:$0x77]
    %v117 = vld [vmem:[#allocation11 + $0x8] sm:$0x77]
    %v118 = vld [vmem:[#allocation2] sm:$0xff]
    %v119 = vld [vmem:[#allocation2 + $0x8] sm:$0xff]
    %v120 = vld [vmem:[#allocation2 + $0x10] sm:$0xff]
    %v121 = vld [vmem:[#allocation2 + $0x18] sm:$0xff]
    %v122 = vld [vmem:[#allocation2 + $0x20] sm:$0xff]
    %v123 = vld [vmem:[#allocation2 + $0x28] sm:$0xff]
    %v124 = vld [vmem:[#allocation7] sm:$0xff]
    %v125 = vld [vmem:[#allocation7 + $0x8] sm:$0xff]
    %v126 = vld [vmem:[#allocation7 + $0x10] sm:$0xff]
    %v127 = vld [vmem:[#allocation7 + $0x18] sm:$0xff]
    %v128 = vld [vmem:[#allocation7 + $0x20] sm:$0xff]
    %v129 = vld [vmem:[#allocation7 + $0x28] sm:$0xff]
    %v130 = vld [vmem:[#allocation7 + $0x30] sm:$0xff]
    %v131 = vld [vmem:[#allocation7 + $0x38] sm:$0xff]
    %v132 = vld [vmem:[#allocation7 + $0x40] sm:$0xff]
    %v133 = vld [vmem:[#allocation7 + $0x48] sm:$0xff]
    %v134 = vld [vmem:[#allocation7 + $0x50] sm:$0xff]
    %v135 = vld [vmem:[#allocation7 + $0x58] sm:$0xff]
    %v136 = vld [vmem:[#allocation7 + $0x60] sm:$0xff]
    %v137 = vld [vmem:[#allocation7 + $0x68] sm:$0xff]
    %v138 = vld [vmem:[#allocation7 + $0x70] sm:$0xff]
    %v139 = vld [vmem:[#allocation7 + $0x78] sm:$0xff]
    %v140 = vld [vmem:[#allocation7 + $0x80] sm:$0xff]
    %v141 = vld [vmem:[#allocation7 + $0x88] sm:$0xff]
    %v142 = vld [vmem:[#allocation7 + $0x90] sm:$0xff]
    %v143 = vld [vmem:[#allocation7 + $0x98] sm:$0xff]
    %v144 = vld [vmem:[#allocation7 + $0xa0] sm:$0xff]
    %v145 = vld [vmem:[#allocation7 + $0xa8] sm:$0xff]
    %v146 = vld [vmem:[#allocation7 + $0xb0] sm:$0xff]
    %v147 = vld [vmem:[#allocation7 + $0xb8] sm:$0xff]
    %v148 = vld [vmem:[#allocation7 + $0xc0] sm:$0xff]
    %v149 = vld [vmem:[#allocation7 + $0xc8] sm:$0xff]
    %v150 = vld [vmem:[#allocation7 + $0xd0] sm:$0xff]
    %v151 = vld [vmem:[#allocation7 + $0xd8] sm:$0xff]
    %v152 = vld [vmem:[#allocation7 + $0xe0] sm:$0xff]
    %v153 = vld [vmem:[#allocation7 + $0xe8] sm:$0xff]
    %v154 = vld [vmem:[#allocation7 + $0xf0] sm:$0xff]
    %v155 = vld [vmem:[#allocation7 + $0xf8] sm:$0xff]
    %v156 = vld [vmem:[#allocation7 + $0x100] sm:$0xff]
    %v157 = vld [vmem:[#allocation7 + $0x108] sm:$0xff]
    %v158 = vld [vmem:[#allocation7 + $0x110] sm:$0xff]
    %v159 = vld [vmem:[#allocation7 + $0x118] sm:$0xff]
    %v160 = vld [vmem:[#allocation7 + $0x120] sm:$0xff]
    %v161 = vld [vmem:[#allocation7 + $0x128] sm:$0xff]
    %v162 = vld [vmem:[#allocation7 + $0x130] sm:$0xff]
    %v163 = vld [vmem:[#allocation7 + $0x138] sm:$0xff]
    %v164 = vld [vmem:[#allocation7 + $0x140] sm:$0xff]
    %v165 = vld [vmem:[#allocation7 + $0x148] sm:$0xff]
    %v166 = vld [vmem:[#allocation7 + $0x150] sm:$0xff]
    %v167 = vld [vmem:[#allocation7 + $0x158] sm:$0xff]
    %v168 = vld [vmem:[#allocation7 + $0x160] sm:$0xff]
    %v169 = vld [vmem:[#allocation7 + $0x168] sm:$0xff]
    %v170 = vld [vmem:[#allocation7 + $0x170] sm:$0xff]
    %v171 = vld [vmem:[#allocation7 + $0x178] sm:$0xff]
    %v172 = vld [vmem:[#allocation7 + $0x180] sm:$0xff]
    %v173 = vld [vmem:[#allocation7 + $0x188] sm:$0xff]
    %v174 = vld [vmem:[#allocation7 + $0x190] sm:$0xff]
    %v175 = vld [vmem:[#allocation7 + $0x198] sm:$0xff]
    %v176 = vld [vmem:[#allocation7 + $0x1a0] sm:$0xff]
    %v177 = vld [vmem:[#allocation7 + $0x1a8] sm:$0xff]
    %v178 = vld [vmem:[#allocation7 + $0x1b0] sm:$0xff]
    %v179 = vld [vmem:[#allocation7 + $0x1b8] sm:$0xff]
    %v180 = vld [vmem:[#allocation7 + $0x1c0] sm:$0xff]
    %v181 = vld [vmem:[#allocation7 + $0x1c8] sm:$0xff]
    %v182 = vld [vmem:[#allocation7 + $0x1d0] sm:$0xff]
    %v183 = vld [vmem:[#allocation7 + $0x1d8] sm:$0xff]
    %v184 = vld [vmem:[#allocation7 + $0x1e0] sm:$0xff]
    %v185 = vld [vmem:[#allocation7 + $0x1e8] sm:$0xff]
    %v186 = vld [vmem:[#allocation7 + $0x1f0] sm:$0xff]
    %v187 = vld [vmem:[#allocation7 + $0x1f8] sm:$0xff]
    %v188 = vld [vmem:[#allocation7 + $0x200] sm:$0xff]
    %v189 = vld [vmem:[#allocation7 + $0x208] sm:$0xff]
    %v190 = vld [vmem:[#allocation7 + $0x210] sm:$0xff]
    %v191 = vld [vmem:[#allocation7 + $0x218] sm:$0xff]
    %v192 = vld [vmem:[#allocation7 + $0x220] sm:$0xff]
    %v193 = vld [vmem:[#allocation7 + $0x228] sm:$0xff]
    %v194 = vld [vmem:[#allocation7 + $0x230] sm:$0xff]
    %v195 = vld [vmem:[#allocation7 + $0x238] sm:$0xff]
    %v196 = vld [vmem:[#allocation7 + $0x240] sm:$0xff]
    %v197 = vld [vmem:[#allocation7 + $0x248] sm:$0xff]
    %v198 = vld [vmem:[#allocation7 + $0x250] sm:$0xff]
    %v199 = vld [vmem:[#allocation7 + $0x258] sm:$0xff]
    %v200 = vld [vmem:[#allocation7 + $0x260] sm:$0xff]
    %v201 = vld [vmem:[#allocation7 + $0x268] sm:$0xff]
    %v202 = vld [vmem:[#allocation7 + $0x270] sm:$0xff]
    %v203 = vld [vmem:[#allocation7 + $0x278] sm:$0xff]
    %v204 = vld [vmem:[#allocation7 + $0x280] sm:$0xff]
    %v205 = vld [vmem:[#allocation7 + $0x288] sm:$0xff]
    %v206 = vld [vmem:[#allocation7 + $0x290] sm:$0xff]
    %v207 = vld [vmem:[#allocation7 + $0x298] sm:$0xff]
    %v208 = vld [vmem:[#allocation7 + $0x2a0] sm:$0xff]
    %v209 = vld [vmem:[#allocation7 + $0x2a8] sm:$0xff]
    %v210 = vld [vmem:[#allocation7 + $0x2b0] sm:$0xff]
    %v211 = vld [vmem:[#allocation7 + $0x2b8] sm:$0xff]
    %v212 = vld [vmem:[#allocation7 + $0x2c0] sm:$0xff]
    %v213 = vld [vmem:[#allocation7 + $0x2c8] sm:$0xff]
    %v214 = vld [vmem:[#allocation7 + $0x2d0] sm:$0xff]
    %v215 = vld [vmem:[#allocation7 + $0x2d8] sm:$0xff]
    %v216 = vld [vmem:[#allocation7 + $0x2e0] sm:$0xff]
    %v217 = vld [vmem:[#allocation7 + $0x2e8] sm:$0xff]
    %v218 = vld [vmem:[#allocation7 + $0x2f0] sm:$0xff]
    %v219 = vld [vmem:[#allocation7 + $0x2f8] sm:$0xff]
    %v220 = vld [vmem:[#allocation7 + $0x300] sm:$0xff]
    %v221 = vld [vmem:[#allocation7 + $0x308] sm:$0xff]
    %v222 = vld [vmem:[#allocation7 + $0x310] sm:$0xff]
    %v223 = vld [vmem:[#allocation7 + $0x318] sm:$0xff]
    %v224 = vld [vmem:[#allocation7 + $0x320] sm:$0xff]
    %v225 = vld [vmem:[#allocation7 + $0x328] sm:$0xff]
    %v226 = vld [vmem:[#allocation7 + $0x330] sm:$0xff]
    %v227 = vld [vmem:[#allocation7 + $0x338] sm:$0xff]
    %v228 = vld [vmem:[#allocation7 + $0x340] sm:$0xff]
    %v229 = vld [vmem:[#allocation7 + $0x348] sm:$0xff]
    %v230 = vld [vmem:[#allocation7 + $0x350] sm:$0xff]
    %v231 = vld [vmem:[#allocation7 + $0x358] sm:$0xff]
    %v232 = vld [vmem:[#allocation7 + $0x360] sm:$0xff]
    %v233 = vld [vmem:[#allocation7 + $0x368] sm:$0xff]
    %v234 = vld [vmem:[#allocation7 + $0x370] sm:$0xff]
    %v235 = vld [vmem:[#allocation7 + $0x378] sm:$0xff]
    %v236 = vld [vmem:[#allocation7 + $0x380] sm:$0xff]
    %v237 = vld [vmem:[#allocation7 + $0x388] sm:$0xff]
    %v238 = vld [vmem:[#allocation7 + $0x390] sm:$0xff]
    %v239 = vld [vmem:[#allocation7 + $0x398] sm:$0xff]
    %v240 = vld [vmem:[#allocation7 + $0x3a0] sm:$0xff]
    %v241 = vld [vmem:[#allocation7 + $0x3a8] sm:$0xff]
    %v242 = vld [vmem:[#allocation7 + $0x3b0] sm:$0xff]
    %v243 = vld [vmem:[#allocation7 + $0x3b8] sm:$0xff]
    %v244 = vld [vmem:[#allocation7 + $0x3c0] sm:$0xff]
    %v245 = vld [vmem:[#allocation7 + $0x3c8] sm:$0xff]
    %v246 = vld [vmem:[#allocation7 + $0x3d0] sm:$0xff]
    %v247 = vld [vmem:[#allocation7 + $0x3d8] sm:$0xff]
    %v248 = vld [vmem:[#allocation7 + $0x3e0] sm:$0xff]
    %v249 = vld [vmem:[#allocation7 + $0x3e8] sm:$0xff]
    %v250 = vld [vmem:[#allocation7 + $0x3f0] sm:$0xff]
    %v251 = vld [vmem:[#allocation7 + $0x3f8] sm:$0xff]
    %v252 = vld [vmem:[#allocation7 + $0x400] sm:$0xff]
    %v253 = vld [vmem:[#allocation7 + $0x408] sm:$0xff]
    %v254 = vld [vmem:[#allocation7 + $0x410] sm:$0xff]
    %v255 = vld [vmem:[#allocation7 + $0x418] sm:$0xff]
    %v256 = vld [vmem:[#allocation7 + $0x420] sm:$0xff]
    %v257 = vld [vmem:[#allocation7 + $0x428] sm:$0xff]
    %v258 = vld [vmem:[#allocation7 + $0x430] sm:$0xff]
    %v259 = vld [vmem:[#allocation7 + $0x438] sm:$0xff]
    %v260 = vld [vmem:[#allocation7 + $0x440] sm:$0xff]
    %v261 = vld [vmem:[#allocation7 + $0x448] sm:$0xff]
    %v262 = vld [vmem:[#allocation7 + $0x450] sm:$0xff]
    %v263 = vld [vmem:[#allocation7 + $0x458] sm:$0xff]
    %v264 = vld [vmem:[#allocation7 + $0x460] sm:$0xff]
    %v265 = vld [vmem:[#allocation7 + $0x468] sm:$0xff]
    %v266 = vld [vmem:[#allocation7 + $0x470] sm:$0xff]
    %v267 = vld [vmem:[#allocation7 + $0x478] sm:$0xff]
    %v268 = vld [vmem:[#allocation7 + $0x480] sm:$0xff]
    %v269 = vld [vmem:[#allocation7 + $0x488] sm:$0xff]
    %v270 = vld [vmem:[#allocation7 + $0x490] sm:$0xff]
    %v271 = vld [vmem:[#allocation7 + $0x498] sm:$0xff]
    %v272 = vld [vmem:[#allocation7 + $0x4a0] sm:$0xff]
    %v273 = vld [vmem:[#allocation7 + $0x4a8] sm:$0xff]
    %v274 = vld [vmem:[#allocation7 + $0x4b0] sm:$0xff]
    %v275 = vld [vmem:[#allocation7 + $0x4b8] sm:$0xff]
    %v276 = vld [vmem:[#allocation7 + $0x4c0] sm:$0xff]
    %v277 = vld [vmem:[#allocation7 + $0x4c8] sm:$0xff]
    %v278 = vld [vmem:[#allocation7 + $0x4d0] sm:$0xff]
    %v279 = vld [vmem:[#allocation7 + $0x4d8] sm:$0xff]
    %v280 = vld [vmem:[#allocation7 + $0x4e0] sm:$0xff]
    %v281 = vld [vmem:[#allocation7 + $0x4e8] sm:$0xff]
    %v282 = vld [vmem:[#allocation7 + $0x4f0] sm:$0xff]
    %v283 = vld [vmem:[#allocation7 + $0x4f8] sm:$0xff]
    %v284 = vld [vmem:[#allocation7 + $0x500] sm:$0xff]
    %v285 = vld [vmem:[#allocation7 + $0x508] sm:$0xff]
    %v286 = vld [vmem:[#allocation7 + $0x510] sm:$0xff]
    %v287 = vld [vmem:[#allocation7 + $0x518] sm:$0xff]
    %v288 = vld [vmem:[#allocation7 + $0x520] sm:$0xff]
    %v289 = vld [vmem:[#allocation7 + $0x528] sm:$0xff]
    %v290 = vld [vmem:[#allocation7 + $0x530] sm:$0xff]
    %v291 = vld [vmem:[#allocation7 + $0x538] sm:$0xff]
    %v292 = vld [vmem:[#allocation7 + $0x540] sm:$0xff]
    %v293 = vld [vmem:[#allocation7 + $0x548] sm:$0xff]
    %v294 = vld [vmem:[#allocation7 + $0x550] sm:$0xff]
    %v295 = vld [vmem:[#allocation7 + $0x558] sm:$0xff]
    %v296 = vld [vmem:[#allocation7 + $0x560] sm:$0xff]
    %v297 = vld [vmem:[#allocation7 + $0x568] sm:$0xff]
    %v298 = vld [vmem:[#allocation7 + $0x570] sm:$0xff]
    %v299 = vld [vmem:[#allocation7 + $0x578] sm:$0xff]
    %v300 = vld [vmem:[#allocation7 + $0x580] sm:$0xff]
    %v301 = vld [vmem:[#allocation7 + $0x588] sm:$0xff]
    %v302 = vld [vmem:[#allocation7 + $0x590] sm:$0xff]
    %v303 = vld [vmem:[#allocation7 + $0x598] sm:$0xff]
    %v304 = vld [vmem:[#allocation7 + $0x5a0] sm:$0xff]
    %v305 = vld [vmem:[#allocation7 + $0x5a8] sm:$0xff]
    %v306 = vld [vmem:[#allocation7 + $0x5b0] sm:$0xff]
    %v307 = vld [vmem:[#allocation7 + $0x5b8] sm:$0xff]
    %v308 = vld [vmem:[#allocation7 + $0x5c0] sm:$0xff]
    %v309 = vld [vmem:[#allocation7 + $0x5c8] sm:$0xff]
    %v310 = vld [vmem:[#allocation7 + $0x5d0] sm:$0xff]
    %v311 = vld [vmem:[#allocation7 + $0x5d8] sm:$0xff]
    %v312 = vld [vmem:[#allocation7 + $0x5e0] sm:$0xff]
    %v313 = vld [vmem:[#allocation7 + $0x5e8] sm:$0xff]
    %v314 = vld [vmem:[#allocation7 + $0x5f0] sm:$0xff]
    %v315 = vld [vmem:[#allocation7 + $0x5f8] sm:$0xff]
    %v316 = vld [vmem:[#allocation5] sm:$0xff]
    %v317 = vld [vmem:[#allocation5 + $0x8] sm:$0xff]
    %v318 = vld [vmem:[#allocation5 + $0x10] sm:$0xff]
    %v319 = vld [vmem:[#allocation5 + $0x18] sm:$0xff]
    %v320 = vunpack.c.l.bf16 %v316
    %v321 = vunpack.c.h.bf16 %v316
    %v322 = vunpack.c.l.bf16 %v317
    %v323 = vunpack.c.h.bf16 %v317
    %v324 = vunpack.c.l.bf16 %v318
    %v325 = vunpack.c.h.bf16 %v318
    %v326 = vunpack.c.l.bf16 %v319
    %v327 = vunpack.c.h.bf16 %v319
    %v334 = vunpack.c.l.b16 %v118
    %v335 = vunpack.c.h.b16 %v118
    %v336 = vunpack.c.l.b16 %v119
    %v337 = vunpack.c.h.b16 %v119
    %v338 = vunpack.c.l.b16 %v120
    %v339 = vunpack.c.h.b16 %v120
    %v340 = vunpack.c.l.b16 %v121
    %v341 = vunpack.c.h.b16 %v121
    %v342 = vunpack.c.l.b16 %v122
    %v343 = vunpack.c.h.b16 %v122
    %v344 = vunpack.c.l.b16 %v123
    %v345 = vunpack.c.h.b16 %v123
    %v346 = vpack.c.b16 %v340, %v334
    %v347 = vpack.c.b16 %v341, %v335
    %v348 = vpack.c.b16 %v342, %v336
    %v349 = vpack.c.b16 %v343, %v337
    %v350 = vpack.c.b16 %v344, %v338
    %v351 = vpack.c.b16 %v345, %v339
    %v550 = vunpack.c.l.b16 %v124
    %v551 = vunpack.c.h.b16 %v124
    %v552 = vunpack.c.l.b16 %v125
    %v553 = vunpack.c.h.b16 %v125
    %v554 = vunpack.c.l.b16 %v126
    %v555 = vunpack.c.h.b16 %v126
    %v556 = vunpack.c.l.b16 %v127
    %v557 = vunpack.c.h.b16 %v127
    %v558 = vunpack.c.l.b16 %v128
    %v559 = vunpack.c.h.b16 %v128
    %v560 = vunpack.c.l.b16 %v129
    %v561 = vunpack.c.h.b16 %v129
    %v562 = vunpack.c.l.b16 %v130
    %v563 = vunpack.c.h.b16 %v130
    %v564 = vunpack.c.l.b16 %v131
    %v565 = vunpack.c.h.b16 %v131
    %v566 = vunpack.c.l.b16 %v132
    %v567 = vunpack.c.h.b16 %v132
    %v568 = vunpack.c.l.b16 %v133
    %v569 = vunpack.c.h.b16 %v133
    %v570 = vunpack.c.l.b16 %v134
    %v571 = vunpack.c.h.b16 %v134
    %v572 = vunpack.c.l.b16 %v135
    %v573 = vunpack.c.h.b16 %v135
    %v574 = vunpack.c.l.b16 %v136
    %v575 = vunpack.c.h.b16 %v136
    %v576 = vunpack.c.l.b16 %v137
    %v577 = vunpack.c.h.b16 %v137
    %v578 = vunpack.c.l.b16 %v138
    %v579 = vunpack.c.h.b16 %v138
    %v580 = vunpack.c.l.b16 %v139
    %v581 = vunpack.c.h.b16 %v139
    %v582 = vunpack.c.l.b16 %v140
    %v583 = vunpack.c.h.b16 %v140
    %v584 = vunpack.c.l.b16 %v141
    %v585 = vunpack.c.h.b16 %v141
    %v586 = vunpack.c.l.b16 %v142
    %v587 = vunpack.c.h.b16 %v142
    %v588 = vunpack.c.l.b16 %v143
    %v589 = vunpack.c.h.b16 %v143
    %v590 = vunpack.c.l.b16 %v144
    %v591 = vunpack.c.h.b16 %v144
    %v592 = vunpack.c.l.b16 %v145
    %v593 = vunpack.c.h.b16 %v145
    %v594 = vunpack.c.l.b16 %v146
    %v595 = vunpack.c.h.b16 %v146
    %v596 = vunpack.c.l.b16 %v147
    %v597 = vunpack.c.h.b16 %v147
    %v598 = vunpack.c.l.b16 %v148
    %v599 = vunpack.c.h.b16 %v148
    %v600 = vunpack.c.l.b16 %v149
    %v601 = vunpack.c.h.b16 %v149
    %v602 = vunpack.c.l.b16 %v150
    %v603 = vunpack.c.h.b16 %v150
    %v604 = vunpack.c.l.b16 %v151
    %v605 = vunpack.c.h.b16 %v151
    %v606 = vunpack.c.l.b16 %v152
    %v607 = vunpack.c.h.b16 %v152
    %v608 = vunpack.c.l.b16 %v153
    %v609 = vunpack.c.h.b16 %v153
    %v610 = vunpack.c.l.b16 %v154
    %v611 = vunpack.c.h.b16 %v154
    %v612 = vunpack.c.l.b16 %v155
    %v613 = vunpack.c.h.b16 %v155
    %v614 = vunpack.c.l.b16 %v156
    %v615 = vunpack.c.h.b16 %v156
    %v616 = vunpack.c.l.b16 %v157
    %v617 = vunpack.c.h.b16 %v157
    %v618 = vunpack.c.l.b16 %v158
    %v619 = vunpack.c.h.b16 %v158
    %v620 = vunpack.c.l.b16 %v159
    %v621 = vunpack.c.h.b16 %v159
    %v622 = vunpack.c.l.b16 %v160
    %v623 = vunpack.c.h.b16 %v160
    %v624 = vunpack.c.l.b16 %v161
    %v625 = vunpack.c.h.b16 %v161
    %v626 = vunpack.c.l.b16 %v162
    %v627 = vunpack.c.h.b16 %v162
    %v628 = vunpack.c.l.b16 %v163
    %v629 = vunpack.c.h.b16 %v163
    %v630 = vunpack.c.l.b16 %v164
    %v631 = vunpack.c.h.b16 %v164
    %v632 = vunpack.c.l.b16 %v165
    %v633 = vunpack.c.h.b16 %v165
    %v634 = vunpack.c.l.b16 %v166
    %v635 = vunpack.c.h.b16 %v166
    %v636 = vunpack.c.l.b16 %v167
    %v637 = vunpack.c.h.b16 %v167
    %v638 = vunpack.c.l.b16 %v168
    %v639 = vunpack.c.h.b16 %v168
    %v640 = vunpack.c.l.b16 %v169
    %v641 = vunpack.c.h.b16 %v169
    %v642 = vunpack.c.l.b16 %v170
    %v643 = vunpack.c.h.b16 %v170
    %v644 = vunpack.c.l.b16 %v171
    %v645 = vunpack.c.h.b16 %v171
    %v646 = vunpack.c.l.b16 %v172
    %v647 = vunpack.c.h.b16 %v172
    %v648 = vunpack.c.l.b16 %v173
    %v649 = vunpack.c.h.b16 %v173
    %v650 = vunpack.c.l.b16 %v174
    %v651 = vunpack.c.h.b16 %v174
    %v652 = vunpack.c.l.b16 %v175
    %v653 = vunpack.c.h.b16 %v175
    %v654 = vunpack.c.l.b16 %v176
    %v655 = vunpack.c.h.b16 %v176
    %v656 = vunpack.c.l.b16 %v177
    %v657 = vunpack.c.h.b16 %v177
    %v658 = vunpack.c.l.b16 %v178
    %v659 = vunpack.c.h.b16 %v178
    %v660 = vunpack.c.l.b16 %v179
    %v661 = vunpack.c.h.b16 %v179
    %v662 = vunpack.c.l.b16 %v180
    %v663 = vunpack.c.h.b16 %v180
    %v664 = vunpack.c.l.b16 %v181
    %v665 = vunpack.c.h.b16 %v181
    %v666 = vunpack.c.l.b16 %v182
    %v667 = vunpack.c.h.b16 %v182
    %v668 = vunpack.c.l.b16 %v183
    %v669 = vunpack.c.h.b16 %v183
    %v670 = vunpack.c.l.b16 %v184
    %v671 = vunpack.c.h.b16 %v184
    %v672 = vunpack.c.l.b16 %v185
    %v673 = vunpack.c.h.b16 %v185
    %v674 = vunpack.c.l.b16 %v186
    %v675 = vunpack.c.h.b16 %v186
    %v676 = vunpack.c.l.b16 %v187
    %v677 = vunpack.c.h.b16 %v187
    %v678 = vunpack.c.l.b16 %v188
    %v679 = vunpack.c.h.b16 %v188
    %v680 = vunpack.c.l.b16 %v189
    %v681 = vunpack.c.h.b16 %v189
    %v682 = vunpack.c.l.b16 %v190
    %v683 = vunpack.c.h.b16 %v190
    %v684 = vunpack.c.l.b16 %v191
    %v685 = vunpack.c.h.b16 %v191
    %v686 = vunpack.c.l.b16 %v192
    %v687 = vunpack.c.h.b16 %v192
    %v688 = vunpack.c.l.b16 %v193
    %v689 = vunpack.c.h.b16 %v193
    %v690 = vunpack.c.l.b16 %v194
    %v691 = vunpack.c.h.b16 %v194
    %v692 = vunpack.c.l.b16 %v195
    %v693 = vunpack.c.h.b16 %v195
    %v694 = vunpack.c.l.b16 %v196
    %v695 = vunpack.c.h.b16 %v196
    %v696 = vunpack.c.l.b16 %v197
    %v697 = vunpack.c.h.b16 %v197
    %v698 = vunpack.c.l.b16 %v198
    %v699 = vunpack.c.h.b16 %v198
    %v700 = vunpack.c.l.b16 %v199
    %v701 = vunpack.c.h.b16 %v199
    %v702 = vunpack.c.l.b16 %v200
    %v703 = vunpack.c.h.b16 %v200
    %v704 = vunpack.c.l.b16 %v201
    %v705 = vunpack.c.h.b16 %v201
    %v706 = vunpack.c.l.b16 %v202
    %v707 = vunpack.c.h.b16 %v202
    %v708 = vunpack.c.l.b16 %v203
    %v709 = vunpack.c.h.b16 %v203
    %v710 = vunpack.c.l.b16 %v204
    %v711 = vunpack.c.h.b16 %v204
    %v712 = vunpack.c.l.b16 %v205
    %v713 = vunpack.c.h.b16 %v205
    %v714 = vunpack.c.l.b16 %v206
    %v715 = vunpack.c.h.b16 %v206
    %v716 = vunpack.c.l.b16 %v207
    %v717 = vunpack.c.h.b16 %v207
    %v718 = vunpack.c.l.b16 %v208
    %v719 = vunpack.c.h.b16 %v208
    %v720 = vunpack.c.l.b16 %v209
    %v721 = vunpack.c.h.b16 %v209
    %v722 = vunpack.c.l.b16 %v210
    %v723 = vunpack.c.h.b16 %v210
    %v724 = vunpack.c.l.b16 %v211
    %v725 = vunpack.c.h.b16 %v211
    %v726 = vunpack.c.l.b16 %v212
    %v727 = vunpack.c.h.b16 %v212
    %v728 = vunpack.c.l.b16 %v213
    %v729 = vunpack.c.h.b16 %v213
    %v730 = vunpack.c.l.b16 %v214
    %v731 = vunpack.c.h.b16 %v214
    %v732 = vunpack.c.l.b16 %v215
    %v733 = vunpack.c.h.b16 %v215
    %v734 = vunpack.c.l.b16 %v216
    %v735 = vunpack.c.h.b16 %v216
    %v736 = vunpack.c.l.b16 %v217
    %v737 = vunpack.c.h.b16 %v217
    %v738 = vunpack.c.l.b16 %v218
    %v739 = vunpack.c.h.b16 %v218
    %v740 = vunpack.c.l.b16 %v219
    %v741 = vunpack.c.h.b16 %v219
    %v742 = vunpack.c.l.b16 %v220
    %v743 = vunpack.c.h.b16 %v220
    %v744 = vunpack.c.l.b16 %v221
    %v745 = vunpack.c.h.b16 %v221
    %v746 = vunpack.c.l.b16 %v222
    %v747 = vunpack.c.h.b16 %v222
    %v748 = vunpack.c.l.b16 %v223
    %v749 = vunpack.c.h.b16 %v223
    %v750 = vunpack.c.l.b16 %v224
    %v751 = vunpack.c.h.b16 %v224
    %v752 = vunpack.c.l.b16 %v225
    %v753 = vunpack.c.h.b16 %v225
    %v754 = vunpack.c.l.b16 %v226
    %v755 = vunpack.c.h.b16 %v226
    %v756 = vunpack.c.l.b16 %v227
    %v757 = vunpack.c.h.b16 %v227
    %v758 = vunpack.c.l.b16 %v228
    %v759 = vunpack.c.h.b16 %v228
    %v760 = vunpack.c.l.b16 %v229
    %v761 = vunpack.c.h.b16 %v229
    %v762 = vunpack.c.l.b16 %v230
    %v763 = vunpack.c.h.b16 %v230
    %v764 = vunpack.c.l.b16 %v231
    %v765 = vunpack.c.h.b16 %v231
    %v766 = vunpack.c.l.b16 %v232
    %v767 = vunpack.c.h.b16 %v232
    %v768 = vunpack.c.l.b16 %v233
    %v769 = vunpack.c.h.b16 %v233
    %v770 = vunpack.c.l.b16 %v234
    %v771 = vunpack.c.h.b16 %v234
    %v772 = vunpack.c.l.b16 %v235
    %v773 = vunpack.c.h.b16 %v235
    %v774 = vunpack.c.l.b16 %v236
    %v775 = vunpack.c.h.b16 %v236
    %v776 = vunpack.c.l.b16 %v237
    %v777 = vunpack.c.h.b16 %v237
    %v778 = vunpack.c.l.b16 %v238
    %v779 = vunpack.c.h.b16 %v238
    %v780 = vunpack.c.l.b16 %v239
    %v781 = vunpack.c.h.b16 %v239
    %v782 = vunpack.c.l.b16 %v240
    %v783 = vunpack.c.h.b16 %v240
    %v784 = vunpack.c.l.b16 %v241
    %v785 = vunpack.c.h.b16 %v241
    %v786 = vunpack.c.l.b16 %v242
    %v787 = vunpack.c.h.b16 %v242
    %v788 = vunpack.c.l.b16 %v243
    %v789 = vunpack.c.h.b16 %v243
    %v790 = vunpack.c.l.b16 %v244
    %v791 = vunpack.c.h.b16 %v244
    %v792 = vunpack.c.l.b16 %v245
    %v793 = vunpack.c.h.b16 %v245
    %v794 = vunpack.c.l.b16 %v246
    %v795 = vunpack.c.h.b16 %v246
    %v796 = vunpack.c.l.b16 %v247
    %v797 = vunpack.c.h.b16 %v247
    %v798 = vunpack.c.l.b16 %v248
    %v799 = vunpack.c.h.b16 %v248
    %v800 = vunpack.c.l.b16 %v249
    %v801 = vunpack.c.h.b16 %v249
    %v802 = vunpack.c.l.b16 %v250
    %v803 = vunpack.c.h.b16 %v250
    %v804 = vunpack.c.l.b16 %v251
    %v805 = vunpack.c.h.b16 %v251
    %v806 = vunpack.c.l.b16 %v252
    %v807 = vunpack.c.h.b16 %v252
    %v808 = vunpack.c.l.b16 %v253
    %v809 = vunpack.c.h.b16 %v253
    %v810 = vunpack.c.l.b16 %v254
    %v811 = vunpack.c.h.b16 %v254
    %v812 = vunpack.c.l.b16 %v255
    %v813 = vunpack.c.h.b16 %v255
    %v814 = vunpack.c.l.b16 %v256
    %v815 = vunpack.c.h.b16 %v256
    %v816 = vunpack.c.l.b16 %v257
    %v817 = vunpack.c.h.b16 %v257
    %v818 = vunpack.c.l.b16 %v258
    %v819 = vunpack.c.h.b16 %v258
    %v820 = vunpack.c.l.b16 %v259
    %v821 = vunpack.c.h.b16 %v259
    %v822 = vunpack.c.l.b16 %v260
    %v823 = vunpack.c.h.b16 %v260
    %v824 = vunpack.c.l.b16 %v261
    %v825 = vunpack.c.h.b16 %v261
    %v826 = vunpack.c.l.b16 %v262
    %v827 = vunpack.c.h.b16 %v262
    %v828 = vunpack.c.l.b16 %v263
    %v829 = vunpack.c.h.b16 %v263
    %v830 = vunpack.c.l.b16 %v264
    %v831 = vunpack.c.h.b16 %v264
    %v832 = vunpack.c.l.b16 %v265
    %v833 = vunpack.c.h.b16 %v265
    %v834 = vunpack.c.l.b16 %v266
    %v835 = vunpack.c.h.b16 %v266
    %v836 = vunpack.c.l.b16 %v267
    %v837 = vunpack.c.h.b16 %v267
    %v838 = vunpack.c.l.b16 %v268
    %v839 = vunpack.c.h.b16 %v268
    %v840 = vunpack.c.l.b16 %v269
    %v841 = vunpack.c.h.b16 %v269
    %v842 = vunpack.c.l.b16 %v270
    %v843 = vunpack.c.h.b16 %v270
    %v844 = vunpack.c.l.b16 %v271
    %v845 = vunpack.c.h.b16 %v271
    %v846 = vunpack.c.l.b16 %v272
    %v847 = vunpack.c.h.b16 %v272
    %v848 = vunpack.c.l.b16 %v273
    %v849 = vunpack.c.h.b16 %v273
    %v850 = vunpack.c.l.b16 %v274
    %v851 = vunpack.c.h.b16 %v274
    %v852 = vunpack.c.l.b16 %v275
    %v853 = vunpack.c.h.b16 %v275
    %v854 = vunpack.c.l.b16 %v276
    %v855 = vunpack.c.h.b16 %v276
    %v856 = vunpack.c.l.b16 %v277
    %v857 = vunpack.c.h.b16 %v277
    %v858 = vunpack.c.l.b16 %v278
    %v859 = vunpack.c.h.b16 %v278
    %v860 = vunpack.c.l.b16 %v279
    %v861 = vunpack.c.h.b16 %v279
    %v862 = vunpack.c.l.b16 %v280
    %v863 = vunpack.c.h.b16 %v280
    %v864 = vunpack.c.l.b16 %v281
    %v865 = vunpack.c.h.b16 %v281
    %v866 = vunpack.c.l.b16 %v282
    %v867 = vunpack.c.h.b16 %v282
    %v868 = vunpack.c.l.b16 %v283
    %v869 = vunpack.c.h.b16 %v283
    %v870 = vunpack.c.l.b16 %v284
    %v871 = vunpack.c.h.b16 %v284
    %v872 = vunpack.c.l.b16 %v285
    %v873 = vunpack.c.h.b16 %v285
    %v874 = vunpack.c.l.b16 %v286
    %v875 = vunpack.c.h.b16 %v286
    %v876 = vunpack.c.l.b16 %v287
    %v877 = vunpack.c.h.b16 %v287
    %v878 = vunpack.c.l.b16 %v288
    %v879 = vunpack.c.h.b16 %v288
    %v880 = vunpack.c.l.b16 %v289
    %v881 = vunpack.c.h.b16 %v289
    %v882 = vunpack.c.l.b16 %v290
    %v883 = vunpack.c.h.b16 %v290
    %v884 = vunpack.c.l.b16 %v291
    %v885 = vunpack.c.h.b16 %v291
    %v886 = vunpack.c.l.b16 %v292
    %v887 = vunpack.c.h.b16 %v292
    %v888 = vunpack.c.l.b16 %v293
    %v889 = vunpack.c.h.b16 %v293
    %v890 = vunpack.c.l.b16 %v294
    %v891 = vunpack.c.h.b16 %v294
    %v892 = vunpack.c.l.b16 %v295
    %v893 = vunpack.c.h.b16 %v295
    %v894 = vunpack.c.l.b16 %v296
    %v895 = vunpack.c.h.b16 %v296
    %v896 = vunpack.c.l.b16 %v297
    %v897 = vunpack.c.h.b16 %v297
    %v898 = vunpack.c.l.b16 %v298
    %v899 = vunpack.c.h.b16 %v298
    %v900 = vunpack.c.l.b16 %v299
    %v901 = vunpack.c.h.b16 %v299
    %v902 = vunpack.c.l.b16 %v300
    %v903 = vunpack.c.h.b16 %v300
    %v904 = vunpack.c.l.b16 %v301
    %v905 = vunpack.c.h.b16 %v301
    %v906 = vunpack.c.l.b16 %v302
    %v907 = vunpack.c.h.b16 %v302
    %v908 = vunpack.c.l.b16 %v303
    %v909 = vunpack.c.h.b16 %v303
    %v910 = vunpack.c.l.b16 %v304
    %v911 = vunpack.c.h.b16 %v304
    %v912 = vunpack.c.l.b16 %v305
    %v913 = vunpack.c.h.b16 %v305
    %v914 = vunpack.c.l.b16 %v306
    %v915 = vunpack.c.h.b16 %v306
    %v916 = vunpack.c.l.b16 %v307
    %v917 = vunpack.c.h.b16 %v307
    %v918 = vunpack.c.l.b16 %v308
    %v919 = vunpack.c.h.b16 %v308
    %v920 = vunpack.c.l.b16 %v309
    %v921 = vunpack.c.h.b16 %v309
    %v922 = vunpack.c.l.b16 %v310
    %v923 = vunpack.c.h.b16 %v310
    %v924 = vunpack.c.l.b16 %v311
    %v925 = vunpack.c.h.b16 %v311
    %v926 = vunpack.c.l.b16 %v312
    %v927 = vunpack.c.h.b16 %v312
    %v928 = vunpack.c.l.b16 %v313
    %v929 = vunpack.c.h.b16 %v313
    %v930 = vunpack.c.l.b16 %v314
    %v931 = vunpack.c.h.b16 %v314
    %v932 = vunpack.c.l.b16 %v315
    %v933 = vunpack.c.h.b16 %v315
    %v934 = vpack.c.b16 %v554, %v550
    %v935 = vpack.c.b16 %v555, %v551
    %v936 = vpack.c.b16 %v556, %v552
    %v937 = vpack.c.b16 %v557, %v553
    %v938 = vpack.c.b16 %v562, %v558
    %v939 = vpack.c.b16 %v563, %v559
    %v940 = vpack.c.b16 %v564, %v560
    %v941 = vpack.c.b16 %v565, %v561
    %v942 = vpack.c.b16 %v570, %v566
    %v943 = vpack.c.b16 %v571, %v567
    %v944 = vpack.c.b16 %v572, %v568
    %v945 = vpack.c.b16 %v573, %v569
    %v946 = vpack.c.b16 %v578, %v574
    %v947 = vpack.c.b16 %v579, %v575
    %v948 = vpack.c.b16 %v580, %v576
    %v949 = vpack.c.b16 %v581, %v577
    %v950 = vpack.c.b16 %v586, %v582
    %v951 = vpack.c.b16 %v587, %v583
    %v952 = vpack.c.b16 %v588, %v584
    %v953 = vpack.c.b16 %v589, %v585
    %v954 = vpack.c.b16 %v594, %v590
    %v955 = vpack.c.b16 %v595, %v591
    %v956 = vpack.c.b16 %v596, %v592
    %v957 = vpack.c.b16 %v597, %v593
    %v958 = vpack.c.b16 %v602, %v598
    %v959 = vpack.c.b16 %v603, %v599
    %v960 = vpack.c.b16 %v604, %v600
    %v961 = vpack.c.b16 %v605, %v601
    %v962 = vpack.c.b16 %v610, %v606
    %v963 = vpack.c.b16 %v611, %v607
    %v964 = vpack.c.b16 %v612, %v608
    %v965 = vpack.c.b16 %v613, %v609
    %v966 = vpack.c.b16 %v618, %v614
    %v967 = vpack.c.b16 %v619, %v615
    %v968 = vpack.c.b16 %v620, %v616
    %v969 = vpack.c.b16 %v621, %v617
    %v970 = vpack.c.b16 %v626, %v622
    %v971 = vpack.c.b16 %v627, %v623
    %v972 = vpack.c.b16 %v628, %v624
    %v973 = vpack.c.b16 %v629, %v625
    %v974 = vpack.c.b16 %v634, %v630
    %v975 = vpack.c.b16 %v635, %v631
    %v976 = vpack.c.b16 %v636, %v632
    %v977 = vpack.c.b16 %v637, %v633
    %v978 = vpack.c.b16 %v642, %v638
    %v979 = vpack.c.b16 %v643, %v639
    %v980 = vpack.c.b16 %v644, %v640
    %v981 = vpack.c.b16 %v645, %v641
    %v982 = vpack.c.b16 %v650, %v646
    %v983 = vpack.c.b16 %v651, %v647
    %v984 = vpack.c.b16 %v652, %v648
    %v985 = vpack.c.b16 %v653, %v649
    %v986 = vpack.c.b16 %v658, %v654
    %v987 = vpack.c.b16 %v659, %v655
    %v988 = vpack.c.b16 %v660, %v656
    %v989 = vpack.c.b16 %v661, %v657
    %v990 = vpack.c.b16 %v666, %v662
    %v991 = vpack.c.b16 %v667, %v663
    %v992 = vpack.c.b16 %v668, %v664
    %v993 = vpack.c.b16 %v669, %v665
    %v994 = vpack.c.b16 %v674, %v670
    %v995 = vpack.c.b16 %v675, %v671
    %v996 = vpack.c.b16 %v676, %v672
    %v997 = vpack.c.b16 %v677, %v673
    %v998 = vpack.c.b16 %v682, %v678
    %v999 = vpack.c.b16 %v683, %v679
    %v1000 = vpack.c.b16 %v684, %v680
    %v1001 = vpack.c.b16 %v685, %v681
    %v1002 = vpack.c.b16 %v690, %v686
    %v1003 = vpack.c.b16 %v691, %v687
    %v1004 = vpack.c.b16 %v692, %v688
    %v1005 = vpack.c.b16 %v693, %v689
    %v1006 = vpack.c.b16 %v698, %v694
    %v1007 = vpack.c.b16 %v699, %v695
    %v1008 = vpack.c.b16 %v700, %v696
    %v1009 = vpack.c.b16 %v701, %v697
    %v1010 = vpack.c.b16 %v706, %v702
    %v1011 = vpack.c.b16 %v707, %v703
    %v1012 = vpack.c.b16 %v708, %v704
    %v1013 = vpack.c.b16 %v709, %v705
    %v1014 = vpack.c.b16 %v714, %v710
    %v1015 = vpack.c.b16 %v715, %v711
    %v1016 = vpack.c.b16 %v716, %v712
    %v1017 = vpack.c.b16 %v717, %v713
    %v1018 = vpack.c.b16 %v722, %v718
    %v1019 = vpack.c.b16 %v723, %v719
    %v1020 = vpack.c.b16 %v724, %v720
    %v1021 = vpack.c.b16 %v725, %v721
    %v1022 = vpack.c.b16 %v730, %v726
    %v1023 = vpack.c.b16 %v731, %v727
    %v1024 = vpack.c.b16 %v732, %v728
    %v1025 = vpack.c.b16 %v733, %v729
    %v1026 = vpack.c.b16 %v738, %v734
    %v1027 = vpack.c.b16 %v739, %v735
    %v1028 = vpack.c.b16 %v740, %v736
    %v1029 = vpack.c.b16 %v741, %v737
    %v1030 = vpack.c.b16 %v746, %v742
    %v1031 = vpack.c.b16 %v747, %v743
    %v1032 = vpack.c.b16 %v748, %v744
    %v1033 = vpack.c.b16 %v749, %v745
    %v1034 = vpack.c.b16 %v754, %v750
    %v1035 = vpack.c.b16 %v755, %v751
    %v1036 = vpack.c.b16 %v756, %v752
    %v1037 = vpack.c.b16 %v757, %v753
    %v1038 = vpack.c.b16 %v762, %v758
    %v1039 = vpack.c.b16 %v763, %v759
    %v1040 = vpack.c.b16 %v764, %v760
    %v1041 = vpack.c.b16 %v765, %v761
    %v1042 = vpack.c.b16 %v770, %v766
    %v1043 = vpack.c.b16 %v771, %v767
    %v1044 = vpack.c.b16 %v772, %v768
    %v1045 = vpack.c.b16 %v773, %v769
    %v1046 = vpack.c.b16 %v778, %v774
    %v1047 = vpack.c.b16 %v779, %v775
    %v1048 = vpack.c.b16 %v780, %v776
    %v1049 = vpack.c.b16 %v781, %v777
    %v1050 = vpack.c.b16 %v786, %v782
    %v1051 = vpack.c.b16 %v787, %v783
    %v1052 = vpack.c.b16 %v788, %v784
    %v1053 = vpack.c.b16 %v789, %v785
    %v1054 = vpack.c.b16 %v794, %v790
    %v1055 = vpack.c.b16 %v795, %v791
    %v1056 = vpack.c.b16 %v796, %v792
    %v1057 = vpack.c.b16 %v797, %v793
    %v1058 = vpack.c.b16 %v802, %v798
    %v1059 = vpack.c.b16 %v803, %v799
    %v1060 = vpack.c.b16 %v804, %v800
    %v1061 = vpack.c.b16 %v805, %v801
    %v1062 = vpack.c.b16 %v810, %v806
    %v1063 = vpack.c.b16 %v811, %v807
    %v1064 = vpack.c.b16 %v812, %v808
    %v1065 = vpack.c.b16 %v813, %v809
    %v1066 = vpack.c.b16 %v818, %v814
    %v1067 = vpack.c.b16 %v819, %v815
    %v1068 = vpack.c.b16 %v820, %v816
    %v1069 = vpack.c.b16 %v821, %v817
    %v1070 = vpack.c.b16 %v826, %v822
    %v1071 = vpack.c.b16 %v827, %v823
    %v1072 = vpack.c.b16 %v828, %v824
    %v1073 = vpack.c.b16 %v829, %v825
    %v1074 = vpack.c.b16 %v834, %v830
    %v1075 = vpack.c.b16 %v835, %v831
    %v1076 = vpack.c.b16 %v836, %v832
    %v1077 = vpack.c.b16 %v837, %v833
    %v1078 = vpack.c.b16 %v842, %v838
    %v1079 = vpack.c.b16 %v843, %v839
    %v1080 = vpack.c.b16 %v844, %v840
    %v1081 = vpack.c.b16 %v845, %v841
    %v1082 = vpack.c.b16 %v850, %v846
    %v1083 = vpack.c.b16 %v851, %v847
    %v1084 = vpack.c.b16 %v852, %v848
    %v1085 = vpack.c.b16 %v853, %v849
    %v1086 = vpack.c.b16 %v858, %v854
    %v1087 = vpack.c.b16 %v859, %v855
    %v1088 = vpack.c.b16 %v860, %v856
    %v1089 = vpack.c.b16 %v861, %v857
    %v1090 = vpack.c.b16 %v866, %v862
    %v1091 = vpack.c.b16 %v867, %v863
    %v1092 = vpack.c.b16 %v868, %v864
    %v1093 = vpack.c.b16 %v869, %v865
    %v1094 = vpack.c.b16 %v874, %v870
    %v1095 = vpack.c.b16 %v875, %v871
    %v1096 = vpack.c.b16 %v876, %v872
    %v1097 = vpack.c.b16 %v877, %v873
    %v1098 = vpack.c.b16 %v882, %v878
    %v1099 = vpack.c.b16 %v883, %v879
    %v1100 = vpack.c.b16 %v884, %v880
    %v1101 = vpack.c.b16 %v885, %v881
    %v1102 = vpack.c.b16 %v890, %v886
    %v1103 = vpack.c.b16 %v891, %v887
    %v1104 = vpack.c.b16 %v892, %v888
    %v1105 = vpack.c.b16 %v893, %v889
    %v1106 = vpack.c.b16 %v898, %v894
    %v1107 = vpack.c.b16 %v899, %v895
    %v1108 = vpack.c.b16 %v900, %v896
    %v1109 = vpack.c.b16 %v901, %v897
    %v1110 = vpack.c.b16 %v906, %v902
    %v1111 = vpack.c.b16 %v907, %v903
    %v1112 = vpack.c.b16 %v908, %v904
    %v1113 = vpack.c.b16 %v909, %v905
    %v1114 = vpack.c.b16 %v914, %v910
    %v1115 = vpack.c.b16 %v915, %v911
    %v1116 = vpack.c.b16 %v916, %v912
    %v1117 = vpack.c.b16 %v917, %v913
    %v1118 = vpack.c.b16 %v922, %v918
    %v1119 = vpack.c.b16 %v923, %v919
    %v1120 = vpack.c.b16 %v924, %v920
    %v1121 = vpack.c.b16 %v925, %v921
    %v1122 = vpack.c.b16 %v930, %v926
    %v1123 = vpack.c.b16 %v931, %v927
    %v1124 = vpack.c.b16 %v932, %v928
    %v1125 = vpack.c.b16 %v933, %v929
    %1318 = vmatpush.bf16.msra.mxu0 %v962
    %1319 = vmatpush.bf16.msra.mxu0 %v958
    %1320 = vmatpush.bf16.msra.mxu0 %v954
    %1321 = vmatpush.bf16.msra.mxu0 %v950
    %1322 = vmatpush.bf16.msra.mxu0 %v946
    %1323 = vmatpush.bf16.msra.mxu0 %v942
    %1324 = vmatpush.bf16.msra.mxu0 %v938
    %1325 = vmatpush.bf16.msra.mxu0 %v934
    %1326 = vmatmul.bf16.gmra.mxu0 %v346
    %v1327 = vpop.f32.mrf.mxu0
    %v1328 = vadd.f32 %v320, %v1327
    %v1329 = vpop.f32.mrf.mxu0
    %v1330 = vadd.f32 %v324, %v1329
    %1331 = vdwg.mxu0
    %1332 = vmatpush.bf16.msra.mxu0 %v994
    %1333 = vmatpush.bf16.msra.mxu0 %v990
    %1334 = vmatpush.bf16.msra.mxu0 %v986
    %1335 = vmatpush.bf16.msra.mxu0 %v982
    %1336 = vmatpush.bf16.msra.mxu0 %v978
    %1337 = vmatpush.bf16.msra.mxu0 %v974
    %1338 = vmatpush.bf16.msra.mxu0 %v970
    %1339 = vmatpush.bf16.msra.mxu0 %v966
    %1340 = vmatmul.bf16.gmra.mxu0 %v347
    %v1341 = vpop.f32.mrf.mxu0
    %v1342 = vadd.f32 %v1328, %v1341
    %v1343 = vpop.f32.mrf.mxu0
    %v1344 = vadd.f32 %v1330, %v1343
    %1345 = vdwg.mxu0
    %1346 = vmatpush.bf16.msra.mxu0 %v1026
    %1347 = vmatpush.bf16.msra.mxu0 %v1022
    %1348 = vmatpush.bf16.msra.mxu0 %v1018
    %1349 = vmatpush.bf16.msra.mxu0 %v1014
    %1350 = vmatpush.bf16.msra.mxu0 %v1010
    %1351 = vmatpush.bf16.msra.mxu0 %v1006
    %1352 = vmatpush.bf16.msra.mxu0 %v1002
    %1353 = vmatpush.bf16.msra.mxu0 %v998
    %1354 = vmatmul.bf16.gmra.mxu0 %v348
    %v1355 = vpop.f32.mrf.mxu0
    %v1356 = vadd.f32 %v1342, %v1355
    %v1357 = vpop.f32.mrf.mxu0
    %v1358 = vadd.f32 %v1344, %v1357
    %1359 = vdwg.mxu0
    %1360 = vmatpush.bf16.msra.mxu0 %v1058
    %1361 = vmatpush.bf16.msra.mxu0 %v1054
    %1362 = vmatpush.bf16.msra.mxu0 %v1050
    %1363 = vmatpush.bf16.msra.mxu0 %v1046
    %1364 = vmatpush.bf16.msra.mxu0 %v1042
    %1365 = vmatpush.bf16.msra.mxu0 %v1038
    %1366 = vmatpush.bf16.msra.mxu0 %v1034
    %1367 = vmatpush.bf16.msra.mxu0 %v1030
    %1368 = vmatmul.bf16.gmra.mxu0 %v349
    %v1369 = vpop.f32.mrf.mxu0
    %v1370 = vadd.f32 %v1356, %v1369
    %v1371 = vpop.f32.mrf.mxu0
    %v1372 = vadd.f32 %v1358, %v1371
    %1373 = vdwg.mxu0
    %1374 = vmatpush.bf16.msra.mxu0 %v1090
    %1375 = vmatpush.bf16.msra.mxu0 %v1086
    %1376 = vmatpush.bf16.msra.mxu0 %v1082
    %1377 = vmatpush.bf16.msra.mxu0 %v1078
    %1378 = vmatpush.bf16.msra.mxu0 %v1074
    %1379 = vmatpush.bf16.msra.mxu0 %v1070
    %1380 = vmatpush.bf16.msra.mxu0 %v1066
    %1381 = vmatpush.bf16.msra.mxu0 %v1062
    %1382 = vmatmul.bf16.gmra.mxu0 %v350
    %v1383 = vpop.f32.mrf.mxu0
    %v1384 = vadd.f32 %v1370, %v1383
    %v1385 = vpop.f32.mrf.mxu0
    %v1386 = vadd.f32 %v1372, %v1385
    %1387 = vdwg.mxu0
    %1388 = vmatpush.bf16.msra.mxu0 %v1122
    %1389 = vmatpush.bf16.msra.mxu0 %v1118
    %1390 = vmatpush.bf16.msra.mxu0 %v1114
    %1391 = vmatpush.bf16.msra.mxu0 %v1110
    %1392 = vmatpush.bf16.msra.mxu0 %v1106
    %1393 = vmatpush.bf16.msra.mxu0 %v1102
    %1394 = vmatpush.bf16.msra.mxu0 %v1098
    %1395 = vmatpush.bf16.msra.mxu0 %v1094
    %1396 = vmatmul.bf16.gmra.mxu0 %v351
    %v1397 = vpop.f32.mrf.mxu0
    %v1398 = vadd.f32 %v1384, %v1397
    %v1399 = vpop.f32.mrf.mxu0
    %v1400 = vadd.f32 %v1386, %v1399
    %1401 = vdwg.mxu0
    %1402 = vmatpush.bf16.msra.mxu0 %v963
    %1403 = vmatpush.bf16.msra.mxu0 %v959
    %1404 = vmatpush.bf16.msra.mxu0 %v955
    %1405 = vmatpush.bf16.msra.mxu0 %v951
    %1406 = vmatpush.bf16.msra.mxu0 %v947
    %1407 = vmatpush.bf16.msra.mxu0 %v943
    %1408 = vmatpush.bf16.msra.mxu0 %v939
    %1409 = vmatpush.bf16.msra.mxu0 %v935
    %1410 = vmatmul.bf16.gmra.mxu0 %v346
    %v1411 = vpop.f32.mrf.mxu0
    %v1412 = vadd.f32 %v321, %v1411
    %v1413 = vpop.f32.mrf.mxu0
    %v1414 = vadd.f32 %v325, %v1413
    %1415 = vdwg.mxu0
    %1416 = vmatpush.bf16.msra.mxu0 %v995
    %1417 = vmatpush.bf16.msra.mxu0 %v991
    %1418 = vmatpush.bf16.msra.mxu0 %v987
    %1419 = vmatpush.bf16.msra.mxu0 %v983
    %1420 = vmatpush.bf16.msra.mxu0 %v979
    %1421 = vmatpush.bf16.msra.mxu0 %v975
    %1422 = vmatpush.bf16.msra.mxu0 %v971
    %1423 = vmatpush.bf16.msra.mxu0 %v967
    %1424 = vmatmul.bf16.gmra.mxu0 %v347
    %v1425 = vpop.f32.mrf.mxu0
    %v1426 = vadd.f32 %v1412, %v1425
    %v1427 = vpop.f32.mrf.mxu0
    %v1428 = vadd.f32 %v1414, %v1427
    %1429 = vdwg.mxu0
    %1430 = vmatpush.bf16.msra.mxu0 %v1027
    %1431 = vmatpush.bf16.msra.mxu0 %v1023
    %1432 = vmatpush.bf16.msra.mxu0 %v1019
    %1433 = vmatpush.bf16.msra.mxu0 %v1015
    %1434 = vmatpush.bf16.msra.mxu0 %v1011
    %1435 = vmatpush.bf16.msra.mxu0 %v1007
    %1436 = vmatpush.bf16.msra.mxu0 %v1003
    %1437 = vmatpush.bf16.msra.mxu0 %v999
    %1438 = vmatmul.bf16.gmra.mxu0 %v348
    %v1439 = vpop.f32.mrf.mxu0
    %v1440 = vadd.f32 %v1426, %v1439
    %v1441 = vpop.f32.mrf.mxu0
    %v1442 = vadd.f32 %v1428, %v1441
    %1443 = vdwg.mxu0
    %1444 = vmatpush.bf16.msra.mxu0 %v1059
    %1445 = vmatpush.bf16.msra.mxu0 %v1055
    %1446 = vmatpush.bf16.msra.mxu0 %v1051
    %1447 = vmatpush.bf16.msra.mxu0 %v1047
    %1448 = vmatpush.bf16.msra.mxu0 %v1043
    %1449 = vmatpush.bf16.msra.mxu0 %v1039
    %1450 = vmatpush.bf16.msra.mxu0 %v1035
    %1451 = vmatpush.bf16.msra.mxu0 %v1031
    %1452 = vmatmul.bf16.gmra.mxu0 %v349
    %v1453 = vpop.f32.mrf.mxu0
    %v1454 = vadd.f32 %v1440, %v1453
    %v1455 = vpop.f32.mrf.mxu0
    %v1456 = vadd.f32 %v1442, %v1455
    %1457 = vdwg.mxu0
    %1458 = vmatpush.bf16.msra.mxu0 %v1091
    %1459 = vmatpush.bf16.msra.mxu0 %v1087
    %1460 = vmatpush.bf16.msra.mxu0 %v1083
    %1461 = vmatpush.bf16.msra.mxu0 %v1079
    %1462 = vmatpush.bf16.msra.mxu0 %v1075
    %1463 = vmatpush.bf16.msra.mxu0 %v1071
    %1464 = vmatpush.bf16.msra.mxu0 %v1067
    %1465 = vmatpush.bf16.msra.mxu0 %v1063
    %1466 = vmatmul.bf16.gmra.mxu0 %v350
    %v1467 = vpop.f32.mrf.mxu0
    %v1468 = vadd.f32 %v1454, %v1467
    %v1469 = vpop.f32.mrf.mxu0
    %v1470 = vadd.f32 %v1456, %v1469
    %1471 = vdwg.mxu0
    %1472 = vmatpush.bf16.msra.mxu0 %v1123
    %1473 = vmatpush.bf16.msra.mxu0 %v1119
    %1474 = vmatpush.bf16.msra.mxu0 %v1115
    %1475 = vmatpush.bf16.msra.mxu0 %v1111
    %1476 = vmatpush.bf16.msra.mxu0 %v1107
    %1477 = vmatpush.bf16.msra.mxu0 %v1103
    %1478 = vmatpush.bf16.msra.mxu0 %v1099
    %1479 = vmatpush.bf16.msra.mxu0 %v1095
    %1480 = vmatmul.bf16.gmra.mxu0 %v351
    %v1481 = vpop.f32.mrf.mxu0
    %v1482 = vadd.f32 %v1468, %v1481
    %v1483 = vpop.f32.mrf.mxu0
    %v1484 = vadd.f32 %v1470, %v1483
    %1485 = vdwg.mxu0
    %1486 = vmatpush.bf16.msra.mxu0 %v964
    %1487 = vmatpush.bf16.msra.mxu0 %v960
    %1488 = vmatpush.bf16.msra.mxu0 %v956
    %1489 = vmatpush.bf16.msra.mxu0 %v952
    %1490 = vmatpush.bf16.msra.mxu0 %v948
    %1491 = vmatpush.bf16.msra.mxu0 %v944
    %1492 = vmatpush.bf16.msra.mxu0 %v940
    %1493 = vmatpush.bf16.msra.mxu0 %v936
    %1494 = vmatmul.bf16.gmra.mxu0 %v346
    %v1495 = vpop.f32.mrf.mxu0
    %v1496 = vadd.f32 %v322, %v1495
    %v1497 = vpop.f32.mrf.mxu0
    %v1498 = vadd.f32 %v326, %v1497
    %1499 = vdwg.mxu0
    %1500 = vmatpush.bf16.msra.mxu0 %v996
    %1501 = vmatpush.bf16.msra.mxu0 %v992
    %1502 = vmatpush.bf16.msra.mxu0 %v988
    %1503 = vmatpush.bf16.msra.mxu0 %v984
    %1504 = vmatpush.bf16.msra.mxu0 %v980
    %1505 = vmatpush.bf16.msra.mxu0 %v976
    %1506 = vmatpush.bf16.msra.mxu0 %v972
    %1507 = vmatpush.bf16.msra.mxu0 %v968
    %1508 = vmatmul.bf16.gmra.mxu0 %v347
    %v1509 = vpop.f32.mrf.mxu0
    %v1510 = vadd.f32 %v1496, %v1509
    %v1511 = vpop.f32.mrf.mxu0
    %v1512 = vadd.f32 %v1498, %v1511
    %1513 = vdwg.mxu0
    %1514 = vmatpush.bf16.msra.mxu0 %v1028
    %1515 = vmatpush.bf16.msra.mxu0 %v1024
    %1516 = vmatpush.bf16.msra.mxu0 %v1020
    %1517 = vmatpush.bf16.msra.mxu0 %v1016
    %1518 = vmatpush.bf16.msra.mxu0 %v1012
    %1519 = vmatpush.bf16.msra.mxu0 %v1008
    %1520 = vmatpush.bf16.msra.mxu0 %v1004
    %1521 = vmatpush.bf16.msra.mxu0 %v1000
    %1522 = vmatmul.bf16.gmra.mxu0 %v348
    %v1523 = vpop.f32.mrf.mxu0
    %v1524 = vadd.f32 %v1510, %v1523
    %v1525 = vpop.f32.mrf.mxu0
    %v1526 = vadd.f32 %v1512, %v1525
    %1527 = vdwg.mxu0
    %1528 = vmatpush.bf16.msra.mxu0 %v1060
    %1529 = vmatpush.bf16.msra.mxu0 %v1056
    %1530 = vmatpush.bf16.msra.mxu0 %v1052
    %1531 = vmatpush.bf16.msra.mxu0 %v1048
    %1532 = vmatpush.bf16.msra.mxu0 %v1044
    %1533 = vmatpush.bf16.msra.mxu0 %v1040
    %1534 = vmatpush.bf16.msra.mxu0 %v1036
    %1535 = vmatpush.bf16.msra.mxu0 %v1032
    %1536 = vmatmul.bf16.gmra.mxu0 %v349
    %v1537 = vpop.f32.mrf.mxu0
    %v1538 = vadd.f32 %v1524, %v1537
    %v1539 = vpop.f32.mrf.mxu0
    %v1540 = vadd.f32 %v1526, %v1539
    %1541 = vdwg.mxu0
    %1542 = vmatpush.bf16.msra.mxu0 %v1092
    %1543 = vmatpush.bf16.msra.mxu0 %v1088
    %1544 = vmatpush.bf16.msra.mxu0 %v1084
    %1545 = vmatpush.bf16.msra.mxu0 %v1080
    %1546 = vmatpush.bf16.msra.mxu0 %v1076
    %1547 = vmatpush.bf16.msra.mxu0 %v1072
    %1548 = vmatpush.bf16.msra.mxu0 %v1068
    %1549 = vmatpush.bf16.msra.mxu0 %v1064
    %1550 = vmatmul.bf16.gmra.mxu0 %v350
    %v1551 = vpop.f32.mrf.mxu0
    %v1552 = vadd.f32 %v1538, %v1551
    %v1553 = vpop.f32.mrf.mxu0
    %v1554 = vadd.f32 %v1540, %v1553
    %1555 = vdwg.mxu0
    %1556 = vmatpush.bf16.msra.mxu0 %v1124
    %1557 = vmatpush.bf16.msra.mxu0 %v1120
    %1558 = vmatpush.bf16.msra.mxu0 %v1116
    %1559 = vmatpush.bf16.msra.mxu0 %v1112
    %1560 = vmatpush.bf16.msra.mxu0 %v1108
    %1561 = vmatpush.bf16.msra.mxu0 %v1104
    %1562 = vmatpush.bf16.msra.mxu0 %v1100
    %1563 = vmatpush.bf16.msra.mxu0 %v1096
    %1564 = vmatmul.bf16.gmra.mxu0 %v351
    %v1565 = vpop.f32.mrf.mxu0
    %v1566 = vadd.f32 %v1552, %v1565
    %v1567 = vpop.f32.mrf.mxu0
    %v1568 = vadd.f32 %v1554, %v1567
    %1569 = vdwg.mxu0
    %1570 = vmatpush.bf16.msra.mxu0 %v965
    %1571 = vmatpush.bf16.msra.mxu0 %v961
    %1572 = vmatpush.bf16.msra.mxu0 %v957
    %1573 = vmatpush.bf16.msra.mxu0 %v953
    %1574 = vmatpush.bf16.msra.mxu0 %v949
    %1575 = vmatpush.bf16.msra.mxu0 %v945
    %1576 = vmatpush.bf16.msra.mxu0 %v941
    %1577 = vmatpush.bf16.msra.mxu0 %v937
    %1578 = vmatmul.bf16.gmra.mxu0 %v346
    %v1579 = vpop.f32.mrf.mxu0
    %v1580 = vadd.f32 %v323, %v1579
    %v1581 = vpop.f32.mrf.mxu0
    %v1582 = vadd.f32 %v327, %v1581
    %1583 = vdwg.mxu0
    %1584 = vmatpush.bf16.msra.mxu0 %v997
    %1585 = vmatpush.bf16.msra.mxu0 %v993
    %1586 = vmatpush.bf16.msra.mxu0 %v989
    %1587 = vmatpush.bf16.msra.mxu0 %v985
    %1588 = vmatpush.bf16.msra.mxu0 %v981
    %1589 = vmatpush.bf16.msra.mxu0 %v977
    %1590 = vmatpush.bf16.msra.mxu0 %v973
    %1591 = vmatpush.bf16.msra.mxu0 %v969
    %1592 = vmatmul.bf16.gmra.mxu0 %v347
    %v1593 = vpop.f32.mrf.mxu0
    %v1594 = vadd.f32 %v1580, %v1593
    %v1595 = vpop.f32.mrf.mxu0
    %v1596 = vadd.f32 %v1582, %v1595
    %1597 = vdwg.mxu0
    %1598 = vmatpush.bf16.msra.mxu0 %v1029
    %1599 = vmatpush.bf16.msra.mxu0 %v1025
    %1600 = vmatpush.bf16.msra.mxu0 %v1021
    %1601 = vmatpush.bf16.msra.mxu0 %v1017
    %1602 = vmatpush.bf16.msra.mxu0 %v1013
    %1603 = vmatpush.bf16.msra.mxu0 %v1009
    %1604 = vmatpush.bf16.msra.mxu0 %v1005
    %1605 = vmatpush.bf16.msra.mxu0 %v1001
    %1606 = vmatmul.bf16.gmra.mxu0 %v348
    %v1607 = vpop.f32.mrf.mxu0
    %v1608 = vadd.f32 %v1594, %v1607
    %v1609 = vpop.f32.mrf.mxu0
    %v1610 = vadd.f32 %v1596, %v1609
    %1611 = vdwg.mxu0
    %1612 = vmatpush.bf16.msra.mxu0 %v1061
    %1613 = vmatpush.bf16.msra.mxu0 %v1057
    %1614 = vmatpush.bf16.msra.mxu0 %v1053
    %1615 = vmatpush.bf16.msra.mxu0 %v1049
    %1616 = vmatpush.bf16.msra.mxu0 %v1045
    %1617 = vmatpush.bf16.msra.mxu0 %v1041
    %1618 = vmatpush.bf16.msra.mxu0 %v1037
    %1619 = vmatpush.bf16.msra.mxu0 %v1033
    %1620 = vmatmul.bf16.gmra.mxu0 %v349
    %v1621 = vpop.f32.mrf.mxu0
    %v1622 = vadd.f32 %v1608, %v1621
    %v1623 = vpop.f32.mrf.mxu0
    %v1624 = vadd.f32 %v1610, %v1623
    %1625 = vdwg.mxu0
    %1626 = vmatpush.bf16.msra.mxu0 %v1093
    %1627 = vmatpush.bf16.msra.mxu0 %v1089
    %1628 = vmatpush.bf16.msra.mxu0 %v1085
    %1629 = vmatpush.bf16.msra.mxu0 %v1081
    %1630 = vmatpush.bf16.msra.mxu0 %v1077
    %1631 = vmatpush.bf16.msra.mxu0 %v1073
    %1632 = vmatpush.bf16.msra.mxu0 %v1069
    %1633 = vmatpush.bf16.msra.mxu0 %v1065
    %1634 = vmatmul.bf16.gmra.mxu0 %v350
    %v1635 = vpop.f32.mrf.mxu0
    %v1636 = vadd.f32 %v1622, %v1635
    %v1637 = vpop.f32.mrf.mxu0
    %v1638 = vadd.f32 %v1624, %v1637
    %1639 = vdwg.mxu0
    %1640 = vmatpush.bf16.msra.mxu0 %v1125
    %1641 = vmatpush.bf16.msra.mxu0 %v1121
    %1642 = vmatpush.bf16.msra.mxu0 %v1117
    %1643 = vmatpush.bf16.msra.mxu0 %v1113
    %1644 = vmatpush.bf16.msra.mxu0 %v1109
    %1645 = vmatpush.bf16.msra.mxu0 %v1105
    %1646 = vmatpush.bf16.msra.mxu0 %v1101
    %1647 = vmatpush.bf16.msra.mxu0 %v1097
    %1648 = vmatmul.bf16.gmra.mxu0 %v351
    %v1649 = vpop.f32.mrf.mxu0
    %v1650 = vadd.f32 %v1636, %v1649
    %v1651 = vpop.f32.mrf.mxu0
    %v1652 = vadd.f32 %v1638, %v1651
    %1653 = vdwg.mxu0
    %v1654 = vmax.f32 %v1398, 0.0
    %v1655 = vmax.f32 %v1482, 0.0
    %v1656 = vmax.f32 %v1566, 0.0
    %v1657 = vmax.f32 %v1650, 0.0
    %v1658 = vmax.f32 %v1400, 0.0
    %v1659 = vmax.f32 %v1484, 0.0
    %v1660 = vmax.f32 %v1568, 0.0
    %v1661 = vmax.f32 %v1652, 0.0
    %v1662 = vpack.c.bf16 %v1658, %v1654
    %v1663 = vpack.c.bf16 %v1659, %v1655
    %v1664 = vpack.c.bf16 %v1660, %v1656
    %v1665 = vpack.c.bf16 %v1661, %v1657
    %v1666 = vld [vmem:[#allocation8] sm:$0xff]
    %v1667 = vld [vmem:[#allocation8 + $0x8] sm:$0xff]
    %v1668 = vld [vmem:[#allocation8 + $0x10] sm:$0xff]
    %v1669 = vld [vmem:[#allocation8 + $0x18] sm:$0xff]
    %v1670 = vld [vmem:[#allocation8 + $0x20] sm:$0xff]
    %v1671 = vld [vmem:[#allocation8 + $0x28] sm:$0xff]
    %v1672 = vld [vmem:[#allocation8 + $0x30] sm:$0xff]
    %v1673 = vld [vmem:[#allocation8 + $0x38] sm:$0xff]
    %v1674 = vld [vmem:[#allocation8 + $0x40] sm:$0xff]
    %v1675 = vld [vmem:[#allocation8 + $0x48] sm:$0xff]
    %v1676 = vld [vmem:[#allocation8 + $0x50] sm:$0xff]
    %v1677 = vld [vmem:[#allocation8 + $0x58] sm:$0xff]
    %v1678 = vld [vmem:[#allocation8 + $0x60] sm:$0xff]
    %v1679 = vld [vmem:[#allocation8 + $0x68] sm:$0xff]
    %v1680 = vld [vmem:[#allocation8 + $0x70] sm:$0xff]
    %v1681 = vld [vmem:[#allocation8 + $0x78] sm:$0xff]
    %v1682 = vld [vmem:[#allocation8 + $0x80] sm:$0xff]
    %v1683 = vld [vmem:[#allocation8 + $0x88] sm:$0xff]
    %v1684 = vld [vmem:[#allocation8 + $0x90] sm:$0xff]
    %v1685 = vld [vmem:[#allocation8 + $0x98] sm:$0xff]
    %v1686 = vld [vmem:[#allocation8 + $0xa0] sm:$0xff]
    %v1687 = vld [vmem:[#allocation8 + $0xa8] sm:$0xff]
    %v1688 = vld [vmem:[#allocation8 + $0xb0] sm:$0xff]
    %v1689 = vld [vmem:[#allocation8 + $0xb8] sm:$0xff]
    %v1690 = vld [vmem:[#allocation8 + $0xc0] sm:$0xff]
    %v1691 = vld [vmem:[#allocation8 + $0xc8] sm:$0xff]
    %v1692 = vld [vmem:[#allocation8 + $0xd0] sm:$0xff]
    %v1693 = vld [vmem:[#allocation8 + $0xd8] sm:$0xff]
    %v1694 = vld [vmem:[#allocation8 + $0xe0] sm:$0xff]
    %v1695 = vld [vmem:[#allocation8 + $0xe8] sm:$0xff]
    %v1696 = vld [vmem:[#allocation8 + $0xf0] sm:$0xff]
    %v1697 = vld [vmem:[#allocation8 + $0xf8] sm:$0xff]
    %v1698 = vld [vmem:[#allocation8 + $0x100] sm:$0xff]
    %v1699 = vld [vmem:[#allocation8 + $0x108] sm:$0xff]
    %v1700 = vld [vmem:[#allocation8 + $0x110] sm:$0xff]
    %v1701 = vld [vmem:[#allocation8 + $0x118] sm:$0xff]
    %v1702 = vld [vmem:[#allocation8 + $0x120] sm:$0xff]
    %v1703 = vld [vmem:[#allocation8 + $0x128] sm:$0xff]
    %v1704 = vld [vmem:[#allocation8 + $0x130] sm:$0xff]
    %v1705 = vld [vmem:[#allocation8 + $0x138] sm:$0xff]
    %v1706 = vld [vmem:[#allocation8 + $0x140] sm:$0xff]
    %v1707 = vld [vmem:[#allocation8 + $0x148] sm:$0xff]
    %v1708 = vld [vmem:[#allocation8 + $0x150] sm:$0xff]
    %v1709 = vld [vmem:[#allocation8 + $0x158] sm:$0xff]
    %v1710 = vld [vmem:[#allocation8 + $0x160] sm:$0xff]
    %v1711 = vld [vmem:[#allocation8 + $0x168] sm:$0xff]
    %v1712 = vld [vmem:[#allocation8 + $0x170] sm:$0xff]
    %v1713 = vld [vmem:[#allocation8 + $0x178] sm:$0xff]
    %v1714 = vld [vmem:[#allocation8 + $0x180] sm:$0xff]
    %v1715 = vld [vmem:[#allocation8 + $0x188] sm:$0xff]
    %v1716 = vld [vmem:[#allocation8 + $0x190] sm:$0xff]
    %v1717 = vld [vmem:[#allocation8 + $0x198] sm:$0xff]
    %v1718 = vld [vmem:[#allocation8 + $0x1a0] sm:$0xff]
    %v1719 = vld [vmem:[#allocation8 + $0x1a8] sm:$0xff]
    %v1720 = vld [vmem:[#allocation8 + $0x1b0] sm:$0xff]
    %v1721 = vld [vmem:[#allocation8 + $0x1b8] sm:$0xff]
    %v1722 = vld [vmem:[#allocation8 + $0x1c0] sm:$0xff]
    %v1723 = vld [vmem:[#allocation8 + $0x1c8] sm:$0xff]
    %v1724 = vld [vmem:[#allocation8 + $0x1d0] sm:$0xff]
    %v1725 = vld [vmem:[#allocation8 + $0x1d8] sm:$0xff]
    %v1726 = vld [vmem:[#allocation8 + $0x1e0] sm:$0xff]
    %v1727 = vld [vmem:[#allocation8 + $0x1e8] sm:$0xff]
    %v1728 = vld [vmem:[#allocation8 + $0x1f0] sm:$0xff]
    %v1729 = vld [vmem:[#allocation8 + $0x1f8] sm:$0xff]
    %v1730 = vld [vmem:[#allocation8 + $0x200] sm:$0xff]
    %v1731 = vld [vmem:[#allocation8 + $0x208] sm:$0xff]
    %v1732 = vld [vmem:[#allocation8 + $0x210] sm:$0xff]
    %v1733 = vld [vmem:[#allocation8 + $0x218] sm:$0xff]
    %v1734 = vld [vmem:[#allocation8 + $0x220] sm:$0xff]
    %v1735 = vld [vmem:[#allocation8 + $0x228] sm:$0xff]
    %v1736 = vld [vmem:[#allocation8 + $0x230] sm:$0xff]
    %v1737 = vld [vmem:[#allocation8 + $0x238] sm:$0xff]
    %v1738 = vld [vmem:[#allocation8 + $0x240] sm:$0xff]
    %v1739 = vld [vmem:[#allocation8 + $0x248] sm:$0xff]
    %v1740 = vld [vmem:[#allocation8 + $0x250] sm:$0xff]
    %v1741 = vld [vmem:[#allocation8 + $0x258] sm:$0xff]
    %v1742 = vld [vmem:[#allocation8 + $0x260] sm:$0xff]
    %v1743 = vld [vmem:[#allocation8 + $0x268] sm:$0xff]
    %v1744 = vld [vmem:[#allocation8 + $0x270] sm:$0xff]
    %v1745 = vld [vmem:[#allocation8 + $0x278] sm:$0xff]
    %v1746 = vld [vmem:[#allocation8 + $0x280] sm:$0xff]
    %v1747 = vld [vmem:[#allocation8 + $0x288] sm:$0xff]
    %v1748 = vld [vmem:[#allocation8 + $0x290] sm:$0xff]
    %v1749 = vld [vmem:[#allocation8 + $0x298] sm:$0xff]
    %v1750 = vld [vmem:[#allocation8 + $0x2a0] sm:$0xff]
    %v1751 = vld [vmem:[#allocation8 + $0x2a8] sm:$0xff]
    %v1752 = vld [vmem:[#allocation8 + $0x2b0] sm:$0xff]
    %v1753 = vld [vmem:[#allocation8 + $0x2b8] sm:$0xff]
    %v1754 = vld [vmem:[#allocation8 + $0x2c0] sm:$0xff]
    %v1755 = vld [vmem:[#allocation8 + $0x2c8] sm:$0xff]
    %v1756 = vld [vmem:[#allocation8 + $0x2d0] sm:$0xff]
    %v1757 = vld [vmem:[#allocation8 + $0x2d8] sm:$0xff]
    %v1758 = vld [vmem:[#allocation8 + $0x2e0] sm:$0xff]
    %v1759 = vld [vmem:[#allocation8 + $0x2e8] sm:$0xff]
    %v1760 = vld [vmem:[#allocation8 + $0x2f0] sm:$0xff]
    %v1761 = vld [vmem:[#allocation8 + $0x2f8] sm:$0xff]
    %v1762 = vld [vmem:[#allocation8 + $0x300] sm:$0xff]
    %v1763 = vld [vmem:[#allocation8 + $0x308] sm:$0xff]
    %v1764 = vld [vmem:[#allocation8 + $0x310] sm:$0xff]
    %v1765 = vld [vmem:[#allocation8 + $0x318] sm:$0xff]
    %v1766 = vld [vmem:[#allocation8 + $0x320] sm:$0xff]
    %v1767 = vld [vmem:[#allocation8 + $0x328] sm:$0xff]
    %v1768 = vld [vmem:[#allocation8 + $0x330] sm:$0xff]
    %v1769 = vld [vmem:[#allocation8 + $0x338] sm:$0xff]
    %v1770 = vld [vmem:[#allocation8 + $0x340] sm:$0xff]
    %v1771 = vld [vmem:[#allocation8 + $0x348] sm:$0xff]
    %v1772 = vld [vmem:[#allocation8 + $0x350] sm:$0xff]
    %v1773 = vld [vmem:[#allocation8 + $0x358] sm:$0xff]
    %v1774 = vld [vmem:[#allocation8 + $0x360] sm:$0xff]
    %v1775 = vld [vmem:[#allocation8 + $0x368] sm:$0xff]
    %v1776 = vld [vmem:[#allocation8 + $0x370] sm:$0xff]
    %v1777 = vld [vmem:[#allocation8 + $0x378] sm:$0xff]
    %v1778 = vld [vmem:[#allocation8 + $0x380] sm:$0xff]
    %v1779 = vld [vmem:[#allocation8 + $0x388] sm:$0xff]
    %v1780 = vld [vmem:[#allocation8 + $0x390] sm:$0xff]
    %v1781 = vld [vmem:[#allocation8 + $0x398] sm:$0xff]
    %v1782 = vld [vmem:[#allocation8 + $0x3a0] sm:$0xff]
    %v1783 = vld [vmem:[#allocation8 + $0x3a8] sm:$0xff]
    %v1784 = vld [vmem:[#allocation8 + $0x3b0] sm:$0xff]
    %v1785 = vld [vmem:[#allocation8 + $0x3b8] sm:$0xff]
    %v1786 = vld [vmem:[#allocation8 + $0x3c0] sm:$0xff]
    %v1787 = vld [vmem:[#allocation8 + $0x3c8] sm:$0xff]
    %v1788 = vld [vmem:[#allocation8 + $0x3d0] sm:$0xff]
    %v1789 = vld [vmem:[#allocation8 + $0x3d8] sm:$0xff]
    %v1790 = vld [vmem:[#allocation8 + $0x3e0] sm:$0xff]
    %v1791 = vld [vmem:[#allocation8 + $0x3e8] sm:$0xff]
    %v1792 = vld [vmem:[#allocation8 + $0x3f0] sm:$0xff]
    %v1793 = vld [vmem:[#allocation8 + $0x3f8] sm:$0xff]
    %v1796 = vperm.slane %v116, 0
    %v1797 = vperm.slane %v116, 4
    %v1798 = vperm.slane %v117, 0
    %v1799 = vperm.slane %v117, 4
    %v1804 = vperm.slane %v1796, 0
    %v1805 = vperm.slane %v1797, 0
    %v1806 = vperm.slane %v1798, 0
    %v1807 = vperm.slane %v1799, 0
    %v1936 = vunpack.c.l.b16 %v1666
    %v1937 = vunpack.c.h.b16 %v1666
    %v1938 = vunpack.c.l.b16 %v1667
    %v1939 = vunpack.c.h.b16 %v1667
    %v1940 = vunpack.c.l.b16 %v1668
    %v1941 = vunpack.c.h.b16 %v1668
    %v1942 = vunpack.c.l.b16 %v1669
    %v1943 = vunpack.c.h.b16 %v1669
    %v1944 = vunpack.c.l.b16 %v1670
    %v1945 = vunpack.c.h.b16 %v1670
    %v1946 = vunpack.c.l.b16 %v1671
    %v1947 = vunpack.c.h.b16 %v1671
    %v1948 = vunpack.c.l.b16 %v1672
    %v1949 = vunpack.c.h.b16 %v1672
    %v1950 = vunpack.c.l.b16 %v1673
    %v1951 = vunpack.c.h.b16 %v1673
    %v1952 = vunpack.c.l.b16 %v1674
    %v1953 = vunpack.c.h.b16 %v1674
    %v1954 = vunpack.c.l.b16 %v1675
    %v1955 = vunpack.c.h.b16 %v1675
    %v1956 = vunpack.c.l.b16 %v1676
    %v1957 = vunpack.c.h.b16 %v1676
    %v1958 = vunpack.c.l.b16 %v1677
    %v1959 = vunpack.c.h.b16 %v1677
    %v1960 = vunpack.c.l.b16 %v1678
    %v1961 = vunpack.c.h.b16 %v1678
    %v1962 = vunpack.c.l.b16 %v1679
    %v1963 = vunpack.c.h.b16 %v1679
    %v1964 = vunpack.c.l.b16 %v1680
    %v1965 = vunpack.c.h.b16 %v1680
    %v1966 = vunpack.c.l.b16 %v1681
    %v1967 = vunpack.c.h.b16 %v1681
    %v1968 = vunpack.c.l.b16 %v1682
    %v1969 = vunpack.c.h.b16 %v1682
    %v1970 = vunpack.c.l.b16 %v1683
    %v1971 = vunpack.c.h.b16 %v1683
    %v1972 = vunpack.c.l.b16 %v1684
    %v1973 = vunpack.c.h.b16 %v1684
    %v1974 = vunpack.c.l.b16 %v1685
    %v1975 = vunpack.c.h.b16 %v1685
    %v1976 = vunpack.c.l.b16 %v1686
    %v1977 = vunpack.c.h.b16 %v1686
    %v1978 = vunpack.c.l.b16 %v1687
    %v1979 = vunpack.c.h.b16 %v1687
    %v1980 = vunpack.c.l.b16 %v1688
    %v1981 = vunpack.c.h.b16 %v1688
    %v1982 = vunpack.c.l.b16 %v1689
    %v1983 = vunpack.c.h.b16 %v1689
    %v1984 = vunpack.c.l.b16 %v1690
    %v1985 = vunpack.c.h.b16 %v1690
    %v1986 = vunpack.c.l.b16 %v1691
    %v1987 = vunpack.c.h.b16 %v1691
    %v1988 = vunpack.c.l.b16 %v1692
    %v1989 = vunpack.c.h.b16 %v1692
    %v1990 = vunpack.c.l.b16 %v1693
    %v1991 = vunpack.c.h.b16 %v1693
    %v1992 = vunpack.c.l.b16 %v1694
    %v1993 = vunpack.c.h.b16 %v1694
    %v1994 = vunpack.c.l.b16 %v1695
    %v1995 = vunpack.c.h.b16 %v1695
    %v1996 = vunpack.c.l.b16 %v1696
    %v1997 = vunpack.c.h.b16 %v1696
    %v1998 = vunpack.c.l.b16 %v1697
    %v1999 = vunpack.c.h.b16 %v1697
    %v2000 = vunpack.c.l.b16 %v1698
    %v2001 = vunpack.c.h.b16 %v1698
    %v2002 = vunpack.c.l.b16 %v1699
    %v2003 = vunpack.c.h.b16 %v1699
    %v2004 = vunpack.c.l.b16 %v1700
    %v2005 = vunpack.c.h.b16 %v1700
    %v2006 = vunpack.c.l.b16 %v1701
    %v2007 = vunpack.c.h.b16 %v1701
    %v2008 = vunpack.c.l.b16 %v1702
    %v2009 = vunpack.c.h.b16 %v1702
    %v2010 = vunpack.c.l.b16 %v1703
    %v2011 = vunpack.c.h.b16 %v1703
    %v2012 = vunpack.c.l.b16 %v1704
    %v2013 = vunpack.c.h.b16 %v1704
    %v2014 = vunpack.c.l.b16 %v1705
    %v2015 = vunpack.c.h.b16 %v1705
    %v2016 = vunpack.c.l.b16 %v1706
    %v2017 = vunpack.c.h.b16 %v1706
    %v2018 = vunpack.c.l.b16 %v1707
    %v2019 = vunpack.c.h.b16 %v1707
    %v2020 = vunpack.c.l.b16 %v1708
    %v2021 = vunpack.c.h.b16 %v1708
    %v2022 = vunpack.c.l.b16 %v1709
    %v2023 = vunpack.c.h.b16 %v1709
    %v2024 = vunpack.c.l.b16 %v1710
    %v2025 = vunpack.c.h.b16 %v1710
    %v2026 = vunpack.c.l.b16 %v1711
    %v2027 = vunpack.c.h.b16 %v1711
    %v2028 = vunpack.c.l.b16 %v1712
    %v2029 = vunpack.c.h.b16 %v1712
    %v2030 = vunpack.c.l.b16 %v1713
    %v2031 = vunpack.c.h.b16 %v1713
    %v2032 = vunpack.c.l.b16 %v1714
    %v2033 = vunpack.c.h.b16 %v1714
    %v2034 = vunpack.c.l.b16 %v1715
    %v2035 = vunpack.c.h.b16 %v1715
    %v2036 = vunpack.c.l.b16 %v1716
    %v2037 = vunpack.c.h.b16 %v1716
    %v2038 = vunpack.c.l.b16 %v1717
    %v2039 = vunpack.c.h.b16 %v1717
    %v2040 = vunpack.c.l.b16 %v1718
    %v2041 = vunpack.c.h.b16 %v1718
    %v2042 = vunpack.c.l.b16 %v1719
    %v2043 = vunpack.c.h.b16 %v1719
    %v2044 = vunpack.c.l.b16 %v1720
    %v2045 = vunpack.c.h.b16 %v1720
    %v2046 = vunpack.c.l.b16 %v1721
    %v2047 = vunpack.c.h.b16 %v1721
    %v2048 = vunpack.c.l.b16 %v1722
    %v2049 = vunpack.c.h.b16 %v1722
    %v2050 = vunpack.c.l.b16 %v1723
    %v2051 = vunpack.c.h.b16 %v1723
    %v2052 = vunpack.c.l.b16 %v1724
    %v2053 = vunpack.c.h.b16 %v1724
    %v2054 = vunpack.c.l.b16 %v1725
    %v2055 = vunpack.c.h.b16 %v1725
    %v2056 = vunpack.c.l.b16 %v1726
    %v2057 = vunpack.c.h.b16 %v1726
    %v2058 = vunpack.c.l.b16 %v1727
    %v2059 = vunpack.c.h.b16 %v1727
    %v2060 = vunpack.c.l.b16 %v1728
    %v2061 = vunpack.c.h.b16 %v1728
    %v2062 = vunpack.c.l.b16 %v1729
    %v2063 = vunpack.c.h.b16 %v1729
    %v2064 = vunpack.c.l.b16 %v1730
    %v2065 = vunpack.c.h.b16 %v1730
    %v2066 = vunpack.c.l.b16 %v1731
    %v2067 = vunpack.c.h.b16 %v1731
    %v2068 = vunpack.c.l.b16 %v1732
    %v2069 = vunpack.c.h.b16 %v1732
    %v2070 = vunpack.c.l.b16 %v1733
    %v2071 = vunpack.c.h.b16 %v1733
    %v2072 = vunpack.c.l.b16 %v1734
    %v2073 = vunpack.c.h.b16 %v1734
    %v2074 = vunpack.c.l.b16 %v1735
    %v2075 = vunpack.c.h.b16 %v1735
    %v2076 = vunpack.c.l.b16 %v1736
    %v2077 = vunpack.c.h.b16 %v1736
    %v2078 = vunpack.c.l.b16 %v1737
    %v2079 = vunpack.c.h.b16 %v1737
    %v2080 = vunpack.c.l.b16 %v1738
    %v2081 = vunpack.c.h.b16 %v1738
    %v2082 = vunpack.c.l.b16 %v1739
    %v2083 = vunpack.c.h.b16 %v1739
    %v2084 = vunpack.c.l.b16 %v1740
    %v2085 = vunpack.c.h.b16 %v1740
    %v2086 = vunpack.c.l.b16 %v1741
    %v2087 = vunpack.c.h.b16 %v1741
    %v2088 = vunpack.c.l.b16 %v1742
    %v2089 = vunpack.c.h.b16 %v1742
    %v2090 = vunpack.c.l.b16 %v1743
    %v2091 = vunpack.c.h.b16 %v1743
    %v2092 = vunpack.c.l.b16 %v1744
    %v2093 = vunpack.c.h.b16 %v1744
    %v2094 = vunpack.c.l.b16 %v1745
    %v2095 = vunpack.c.h.b16 %v1745
    %v2096 = vunpack.c.l.b16 %v1746
    %v2097 = vunpack.c.h.b16 %v1746
    %v2098 = vunpack.c.l.b16 %v1747
    %v2099 = vunpack.c.h.b16 %v1747
    %v2100 = vunpack.c.l.b16 %v1748
    %v2101 = vunpack.c.h.b16 %v1748
    %v2102 = vunpack.c.l.b16 %v1749
    %v2103 = vunpack.c.h.b16 %v1749
    %v2104 = vunpack.c.l.b16 %v1750
    %v2105 = vunpack.c.h.b16 %v1750
    %v2106 = vunpack.c.l.b16 %v1751
    %v2107 = vunpack.c.h.b16 %v1751
    %v2108 = vunpack.c.l.b16 %v1752
    %v2109 = vunpack.c.h.b16 %v1752
    %v2110 = vunpack.c.l.b16 %v1753
    %v2111 = vunpack.c.h.b16 %v1753
    %v2112 = vunpack.c.l.b16 %v1754
    %v2113 = vunpack.c.h.b16 %v1754
    %v2114 = vunpack.c.l.b16 %v1755
    %v2115 = vunpack.c.h.b16 %v1755
    %v2116 = vunpack.c.l.b16 %v1756
    %v2117 = vunpack.c.h.b16 %v1756
    %v2118 = vunpack.c.l.b16 %v1757
    %v2119 = vunpack.c.h.b16 %v1757
    %v2120 = vunpack.c.l.b16 %v1758
    %v2121 = vunpack.c.h.b16 %v1758
    %v2122 = vunpack.c.l.b16 %v1759
    %v2123 = vunpack.c.h.b16 %v1759
    %v2124 = vunpack.c.l.b16 %v1760
    %v2125 = vunpack.c.h.b16 %v1760
    %v2126 = vunpack.c.l.b16 %v1761
    %v2127 = vunpack.c.h.b16 %v1761
    %v2128 = vunpack.c.l.b16 %v1762
    %v2129 = vunpack.c.h.b16 %v1762
    %v2130 = vunpack.c.l.b16 %v1763
    %v2131 = vunpack.c.h.b16 %v1763
    %v2132 = vunpack.c.l.b16 %v1764
    %v2133 = vunpack.c.h.b16 %v1764
    %v2134 = vunpack.c.l.b16 %v1765
    %v2135 = vunpack.c.h.b16 %v1765
    %v2136 = vunpack.c.l.b16 %v1766
    %v2137 = vunpack.c.h.b16 %v1766
    %v2138 = vunpack.c.l.b16 %v1767
    %v2139 = vunpack.c.h.b16 %v1767
    %v2140 = vunpack.c.l.b16 %v1768
    %v2141 = vunpack.c.h.b16 %v1768
    %v2142 = vunpack.c.l.b16 %v1769
    %v2143 = vunpack.c.h.b16 %v1769
    %v2144 = vunpack.c.l.b16 %v1770
    %v2145 = vunpack.c.h.b16 %v1770
    %v2146 = vunpack.c.l.b16 %v1771
    %v2147 = vunpack.c.h.b16 %v1771
    %v2148 = vunpack.c.l.b16 %v1772
    %v2149 = vunpack.c.h.b16 %v1772
    %v2150 = vunpack.c.l.b16 %v1773
    %v2151 = vunpack.c.h.b16 %v1773
    %v2152 = vunpack.c.l.b16 %v1774
    %v2153 = vunpack.c.h.b16 %v1774
    %v2154 = vunpack.c.l.b16 %v1775
    %v2155 = vunpack.c.h.b16 %v1775
    %v2156 = vunpack.c.l.b16 %v1776
    %v2157 = vunpack.c.h.b16 %v1776
    %v2158 = vunpack.c.l.b16 %v1777
    %v2159 = vunpack.c.h.b16 %v1777
    %v2160 = vunpack.c.l.b16 %v1778
    %v2161 = vunpack.c.h.b16 %v1778
    %v2162 = vunpack.c.l.b16 %v1779
    %v2163 = vunpack.c.h.b16 %v1779
    %v2164 = vunpack.c.l.b16 %v1780
    %v2165 = vunpack.c.h.b16 %v1780
    %v2166 = vunpack.c.l.b16 %v1781
    %v2167 = vunpack.c.h.b16 %v1781
    %v2168 = vunpack.c.l.b16 %v1782
    %v2169 = vunpack.c.h.b16 %v1782
    %v2170 = vunpack.c.l.b16 %v1783
    %v2171 = vunpack.c.h.b16 %v1783
    %v2172 = vunpack.c.l.b16 %v1784
    %v2173 = vunpack.c.h.b16 %v1784
    %v2174 = vunpack.c.l.b16 %v1785
    %v2175 = vunpack.c.h.b16 %v1785
    %v2176 = vunpack.c.l.b16 %v1786
    %v2177 = vunpack.c.h.b16 %v1786
    %v2178 = vunpack.c.l.b16 %v1787
    %v2179 = vunpack.c.h.b16 %v1787
    %v2180 = vunpack.c.l.b16 %v1788
    %v2181 = vunpack.c.h.b16 %v1788
    %v2182 = vunpack.c.l.b16 %v1789
    %v2183 = vunpack.c.h.b16 %v1789
    %v2184 = vunpack.c.l.b16 %v1790
    %v2185 = vunpack.c.h.b16 %v1790
    %v2186 = vunpack.c.l.b16 %v1791
    %v2187 = vunpack.c.h.b16 %v1791
    %v2188 = vunpack.c.l.b16 %v1792
    %v2189 = vunpack.c.h.b16 %v1792
    %v2190 = vunpack.c.l.b16 %v1793
    %v2191 = vunpack.c.h.b16 %v1793
    %v2192 = vpack.c.b16 %v1940, %v1936
    %v2193 = vpack.c.b16 %v1941, %v1937
    %v2194 = vpack.c.b16 %v1942, %v1938
    %v2195 = vpack.c.b16 %v1943, %v1939
    %v2196 = vpack.c.b16 %v1948, %v1944
    %v2197 = vpack.c.b16 %v1949, %v1945
    %v2198 = vpack.c.b16 %v1950, %v1946
    %v2199 = vpack.c.b16 %v1951, %v1947
    %v2200 = vpack.c.b16 %v1956, %v1952
    %v2201 = vpack.c.b16 %v1957, %v1953
    %v2202 = vpack.c.b16 %v1958, %v1954
    %v2203 = vpack.c.b16 %v1959, %v1955
    %v2204 = vpack.c.b16 %v1964, %v1960
    %v2205 = vpack.c.b16 %v1965, %v1961
    %v2206 = vpack.c.b16 %v1966, %v1962
    %v2207 = vpack.c.b16 %v1967, %v1963
    %v2208 = vpack.c.b16 %v1972, %v1968
    %v2209 = vpack.c.b16 %v1973, %v1969
    %v2210 = vpack.c.b16 %v1974, %v1970
    %v2211 = vpack.c.b16 %v1975, %v1971
    %v2212 = vpack.c.b16 %v1980, %v1976
    %v2213 = vpack.c.b16 %v1981, %v1977
    %v2214 = vpack.c.b16 %v1982, %v1978
    %v2215 = vpack.c.b16 %v1983, %v1979
    %v2216 = vpack.c.b16 %v1988, %v1984
    %v2217 = vpack.c.b16 %v1989, %v1985
    %v2218 = vpack.c.b16 %v1990, %v1986
    %v2219 = vpack.c.b16 %v1991, %v1987
    %v2220 = vpack.c.b16 %v1996, %v1992
    %v2221 = vpack.c.b16 %v1997, %v1993
    %v2222 = vpack.c.b16 %v1998, %v1994
    %v2223 = vpack.c.b16 %v1999, %v1995
    %v2224 = vpack.c.b16 %v2004, %v2000
    %v2225 = vpack.c.b16 %v2005, %v2001
    %v2226 = vpack.c.b16 %v2006, %v2002
    %v2227 = vpack.c.b16 %v2007, %v2003
    %v2228 = vpack.c.b16 %v2012, %v2008
    %v2229 = vpack.c.b16 %v2013, %v2009
    %v2230 = vpack.c.b16 %v2014, %v2010
    %v2231 = vpack.c.b16 %v2015, %v2011
    %v2232 = vpack.c.b16 %v2020, %v2016
    %v2233 = vpack.c.b16 %v2021, %v2017
    %v2234 = vpack.c.b16 %v2022, %v2018
    %v2235 = vpack.c.b16 %v2023, %v2019
    %v2236 = vpack.c.b16 %v2028, %v2024
    %v2237 = vpack.c.b16 %v2029, %v2025
    %v2238 = vpack.c.b16 %v2030, %v2026
    %v2239 = vpack.c.b16 %v2031, %v2027
    %v2240 = vpack.c.b16 %v2036, %v2032
    %v2241 = vpack.c.b16 %v2037, %v2033
    %v2242 = vpack.c.b16 %v2038, %v2034
    %v2243 = vpack.c.b16 %v2039, %v2035
    %v2244 = vpack.c.b16 %v2044, %v2040
    %v2245 = vpack.c.b16 %v2045, %v2041
    %v2246 = vpack.c.b16 %v2046, %v2042
    %v2247 = vpack.c.b16 %v2047, %v2043
    %v2248 = vpack.c.b16 %v2052, %v2048
    %v2249 = vpack.c.b16 %v2053, %v2049
    %v2250 = vpack.c.b16 %v2054, %v2050
    %v2251 = vpack.c.b16 %v2055, %v2051
    %v2252 = vpack.c.b16 %v2060, %v2056
    %v2253 = vpack.c.b16 %v2061, %v2057
    %v2254 = vpack.c.b16 %v2062, %v2058
    %v2255 = vpack.c.b16 %v2063, %v2059
    %v2256 = vpack.c.b16 %v2068, %v2064
    %v2257 = vpack.c.b16 %v2069, %v2065
    %v2258 = vpack.c.b16 %v2070, %v2066
    %v2259 = vpack.c.b16 %v2071, %v2067
    %v2260 = vpack.c.b16 %v2076, %v2072
    %v2261 = vpack.c.b16 %v2077, %v2073
    %v2262 = vpack.c.b16 %v2078, %v2074
    %v2263 = vpack.c.b16 %v2079, %v2075
    %v2264 = vpack.c.b16 %v2084, %v2080
    %v2265 = vpack.c.b16 %v2085, %v2081
    %v2266 = vpack.c.b16 %v2086, %v2082
    %v2267 = vpack.c.b16 %v2087, %v2083
    %v2268 = vpack.c.b16 %v2092, %v2088
    %v2269 = vpack.c.b16 %v2093, %v2089
    %v2270 = vpack.c.b16 %v2094, %v2090
    %v2271 = vpack.c.b16 %v2095, %v2091
    %v2272 = vpack.c.b16 %v2100, %v2096
    %v2273 = vpack.c.b16 %v2101, %v2097
    %v2274 = vpack.c.b16 %v2102, %v2098
    %v2275 = vpack.c.b16 %v2103, %v2099
    %v2276 = vpack.c.b16 %v2108, %v2104
    %v2277 = vpack.c.b16 %v2109, %v2105
    %v2278 = vpack.c.b16 %v2110, %v2106
    %v2279 = vpack.c.b16 %v2111, %v2107
    %v2280 = vpack.c.b16 %v2116, %v2112
    %v2281 = vpack.c.b16 %v2117, %v2113
    %v2282 = vpack.c.b16 %v2118, %v2114
    %v2283 = vpack.c.b16 %v2119, %v2115
    %v2284 = vpack.c.b16 %v2124, %v2120
    %v2285 = vpack.c.b16 %v2125, %v2121
    %v2286 = vpack.c.b16 %v2126, %v2122
    %v2287 = vpack.c.b16 %v2127, %v2123
    %v2288 = vpack.c.b16 %v2132, %v2128
    %v2289 = vpack.c.b16 %v2133, %v2129
    %v2290 = vpack.c.b16 %v2134, %v2130
    %v2291 = vpack.c.b16 %v2135, %v2131
    %v2292 = vpack.c.b16 %v2140, %v2136
    %v2293 = vpack.c.b16 %v2141, %v2137
    %v2294 = vpack.c.b16 %v2142, %v2138
    %v2295 = vpack.c.b16 %v2143, %v2139
    %v2296 = vpack.c.b16 %v2148, %v2144
    %v2297 = vpack.c.b16 %v2149, %v2145
    %v2298 = vpack.c.b16 %v2150, %v2146
    %v2299 = vpack.c.b16 %v2151, %v2147
    %v2300 = vpack.c.b16 %v2156, %v2152
    %v2301 = vpack.c.b16 %v2157, %v2153
    %v2302 = vpack.c.b16 %v2158, %v2154
    %v2303 = vpack.c.b16 %v2159, %v2155
    %v2304 = vpack.c.b16 %v2164, %v2160
    %v2305 = vpack.c.b16 %v2165, %v2161
    %v2306 = vpack.c.b16 %v2166, %v2162
    %v2307 = vpack.c.b16 %v2167, %v2163
    %v2308 = vpack.c.b16 %v2172, %v2168
    %v2309 = vpack.c.b16 %v2173, %v2169
    %v2310 = vpack.c.b16 %v2174, %v2170
    %v2311 = vpack.c.b16 %v2175, %v2171
    %v2312 = vpack.c.b16 %v2180, %v2176
    %v2313 = vpack.c.b16 %v2181, %v2177
    %v2314 = vpack.c.b16 %v2182, %v2178
    %v2315 = vpack.c.b16 %v2183, %v2179
    %v2316 = vpack.c.b16 %v2188, %v2184
    %v2317 = vpack.c.b16 %v2189, %v2185
    %v2318 = vpack.c.b16 %v2190, %v2186
    %v2319 = vpack.c.b16 %v2191, %v2187
    %2448 = vmatpush.bf16.msra.mxu0 %v2220
    %2449 = vmatpush.bf16.msra.mxu0 %v2216
    %2450 = vmatpush.bf16.msra.mxu0 %v2212
    %2451 = vmatpush.bf16.msra.mxu0 %v2208
    %2452 = vmatpush.bf16.msra.mxu0 %v2204
    %2453 = vmatpush.bf16.msra.mxu0 %v2200
    %2454 = vmatpush.bf16.msra.mxu0 %v2196
    %2455 = vmatpush.bf16.msra.mxu0 %v2192
    %2456 = vmatmul.bf16.gmra.mxu0 %v1662
    %v2457 = vpop.f32.mrf.mxu0
    %v2458 = vadd.f32 %v1804, %v2457
    %v2459 = vpop.f32.mrf.mxu0
    %v2460 = vadd.f32 %v1804, %v2459
    %2461 = vdwg.mxu0
    %2462 = vmatpush.bf16.msra.mxu0 %v2252
    %2463 = vmatpush.bf16.msra.mxu0 %v2248
    %2464 = vmatpush.bf16.msra.mxu0 %v2244
    %2465 = vmatpush.bf16.msra.mxu0 %v2240
    %2466 = vmatpush.bf16.msra.mxu0 %v2236
    %2467 = vmatpush.bf16.msra.mxu0 %v2232
    %2468 = vmatpush.bf16.msra.mxu0 %v2228
    %2469 = vmatpush.bf16.msra.mxu0 %v2224
    %2470 = vmatmul.bf16.gmra.mxu0 %v1663
    %v2471 = vpop.f32.mrf.mxu0
    %v2472 = vadd.f32 %v2458, %v2471
    %v2473 = vpop.f32.mrf.mxu0
    %v2474 = vadd.f32 %v2460, %v2473
    %2475 = vdwg.mxu0
    %2476 = vmatpush.bf16.msra.mxu0 %v2284
    %2477 = vmatpush.bf16.msra.mxu0 %v2280
    %2478 = vmatpush.bf16.msra.mxu0 %v2276
    %2479 = vmatpush.bf16.msra.mxu0 %v2272
    %2480 = vmatpush.bf16.msra.mxu0 %v2268
    %2481 = vmatpush.bf16.msra.mxu0 %v2264
    %2482 = vmatpush.bf16.msra.mxu0 %v2260
    %2483 = vmatpush.bf16.msra.mxu0 %v2256
    %2484 = vmatmul.bf16.gmra.mxu0 %v1664
    %v2485 = vpop.f32.mrf.mxu0
    %v2486 = vadd.f32 %v2472, %v2485
    %v2487 = vpop.f32.mrf.mxu0
    %v2488 = vadd.f32 %v2474, %v2487
    %2489 = vdwg.mxu0
    %2490 = vmatpush.bf16.msra.mxu0 %v2316
    %2491 = vmatpush.bf16.msra.mxu0 %v2312
    %2492 = vmatpush.bf16.msra.mxu0 %v2308
    %2493 = vmatpush.bf16.msra.mxu0 %v2304
    %2494 = vmatpush.bf16.msra.mxu0 %v2300
    %2495 = vmatpush.bf16.msra.mxu0 %v2296
    %2496 = vmatpush.bf16.msra.mxu0 %v2292
    %2497 = vmatpush.bf16.msra.mxu0 %v2288
    %2498 = vmatmul.bf16.gmra.mxu0 %v1665
    %v2499 = vpop.f32.mrf.mxu0
    %v2500 = vadd.f32 %v2486, %v2499
    %v2501 = vpop.f32.mrf.mxu0
    %v2502 = vadd.f32 %v2488, %v2501
    %2503 = vdwg.mxu0
    %2504 = vmatpush.bf16.msra.mxu0 %v2221
    %2505 = vmatpush.bf16.msra.mxu0 %v2217
    %2506 = vmatpush.bf16.msra.mxu0 %v2213
    %2507 = vmatpush.bf16.msra.mxu0 %v2209
    %2508 = vmatpush.bf16.msra.mxu0 %v2205
    %2509 = vmatpush.bf16.msra.mxu0 %v2201
    %2510 = vmatpush.bf16.msra.mxu0 %v2197
    %2511 = vmatpush.bf16.msra.mxu0 %v2193
    %2512 = vmatmul.bf16.gmra.mxu0 %v1662
    %v2513 = vpop.f32.mrf.mxu0
    %v2514 = vadd.f32 %v1805, %v2513
    %v2515 = vpop.f32.mrf.mxu0
    %v2516 = vadd.f32 %v1805, %v2515
    %2517 = vdwg.mxu0
    %2518 = vmatpush.bf16.msra.mxu0 %v2253
    %2519 = vmatpush.bf16.msra.mxu0 %v2249
    %2520 = vmatpush.bf16.msra.mxu0 %v2245
    %2521 = vmatpush.bf16.msra.mxu0 %v2241
    %2522 = vmatpush.bf16.msra.mxu0 %v2237
    %2523 = vmatpush.bf16.msra.mxu0 %v2233
    %2524 = vmatpush.bf16.msra.mxu0 %v2229
    %2525 = vmatpush.bf16.msra.mxu0 %v2225
    %2526 = vmatmul.bf16.gmra.mxu0 %v1663
    %v2527 = vpop.f32.mrf.mxu0
    %v2528 = vadd.f32 %v2514, %v2527
    %v2529 = vpop.f32.mrf.mxu0
    %v2530 = vadd.f32 %v2516, %v2529
    %2531 = vdwg.mxu0
    %2532 = vmatpush.bf16.msra.mxu0 %v2285
    %2533 = vmatpush.bf16.msra.mxu0 %v2281
    %2534 = vmatpush.bf16.msra.mxu0 %v2277
    %2535 = vmatpush.bf16.msra.mxu0 %v2273
    %2536 = vmatpush.bf16.msra.mxu0 %v2269
    %2537 = vmatpush.bf16.msra.mxu0 %v2265
    %2538 = vmatpush.bf16.msra.mxu0 %v2261
    %2539 = vmatpush.bf16.msra.mxu0 %v2257
    %2540 = vmatmul.bf16.gmra.mxu0 %v1664
    %v2541 = vpop.f32.mrf.mxu0
    %v2542 = vadd.f32 %v2528, %v2541
    %v2543 = vpop.f32.mrf.mxu0
    %v2544 = vadd.f32 %v2530, %v2543
    %2545 = vdwg.mxu0
    %2546 = vmatpush.bf16.msra.mxu0 %v2317
    %2547 = vmatpush.bf16.msra.mxu0 %v2313
    %2548 = vmatpush.bf16.msra.mxu0 %v2309
    %2549 = vmatpush.bf16.msra.mxu0 %v2305
    %2550 = vmatpush.bf16.msra.mxu0 %v2301
    %2551 = vmatpush.bf16.msra.mxu0 %v2297
    %2552 = vmatpush.bf16.msra.mxu0 %v2293
    %2553 = vmatpush.bf16.msra.mxu0 %v2289
    %2554 = vmatmul.bf16.gmra.mxu0 %v1665
    %v2555 = vpop.f32.mrf.mxu0
    %v2556 = vadd.f32 %v2542, %v2555
    %v2557 = vpop.f32.mrf.mxu0
    %v2558 = vadd.f32 %v2544, %v2557
    %2559 = vdwg.mxu0
    %2560 = vmatpush.bf16.msra.mxu0 %v2222
    %2561 = vmatpush.bf16.msra.mxu0 %v2218
    %2562 = vmatpush.bf16.msra.mxu0 %v2214
    %2563 = vmatpush.bf16.msra.mxu0 %v2210
    %2564 = vmatpush.bf16.msra.mxu0 %v2206
    %2565 = vmatpush.bf16.msra.mxu0 %v2202
    %2566 = vmatpush.bf16.msra.mxu0 %v2198
    %2567 = vmatpush.bf16.msra.mxu0 %v2194
    %2568 = vmatmul.bf16.gmra.mxu0 %v1662
    %v2569 = vpop.f32.mrf.mxu0
    %v2570 = vadd.f32 %v1806, %v2569
    %v2571 = vpop.f32.mrf.mxu0
    %v2572 = vadd.f32 %v1806, %v2571
    %2573 = vdwg.mxu0
    %2574 = vmatpush.bf16.msra.mxu0 %v2254
    %2575 = vmatpush.bf16.msra.mxu0 %v2250
    %2576 = vmatpush.bf16.msra.mxu0 %v2246
    %2577 = vmatpush.bf16.msra.mxu0 %v2242
    %2578 = vmatpush.bf16.msra.mxu0 %v2238
    %2579 = vmatpush.bf16.msra.mxu0 %v2234
    %2580 = vmatpush.bf16.msra.mxu0 %v2230
    %2581 = vmatpush.bf16.msra.mxu0 %v2226
    %2582 = vmatmul.bf16.gmra.mxu0 %v1663
    %v2583 = vpop.f32.mrf.mxu0
    %v2584 = vadd.f32 %v2570, %v2583
    %v2585 = vpop.f32.mrf.mxu0
    %v2586 = vadd.f32 %v2572, %v2585
    %2587 = vdwg.mxu0
    %2588 = vmatpush.bf16.msra.mxu0 %v2286
    %2589 = vmatpush.bf16.msra.mxu0 %v2282
    %2590 = vmatpush.bf16.msra.mxu0 %v2278
    %2591 = vmatpush.bf16.msra.mxu0 %v2274
    %2592 = vmatpush.bf16.msra.mxu0 %v2270
    %2593 = vmatpush.bf16.msra.mxu0 %v2266
    %2594 = vmatpush.bf16.msra.mxu0 %v2262
    %2595 = vmatpush.bf16.msra.mxu0 %v2258
    %2596 = vmatmul.bf16.gmra.mxu0 %v1664
    %v2597 = vpop.f32.mrf.mxu0
    %v2598 = vadd.f32 %v2584, %v2597
    %v2599 = vpop.f32.mrf.mxu0
    %v2600 = vadd.f32 %v2586, %v2599
    %2601 = vdwg.mxu0
    %2602 = vmatpush.bf16.msra.mxu0 %v2318
    %2603 = vmatpush.bf16.msra.mxu0 %v2314
    %2604 = vmatpush.bf16.msra.mxu0 %v2310
    %2605 = vmatpush.bf16.msra.mxu0 %v2306
    %2606 = vmatpush.bf16.msra.mxu0 %v2302
    %2607 = vmatpush.bf16.msra.mxu0 %v2298
    %2608 = vmatpush.bf16.msra.mxu0 %v2294
    %2609 = vmatpush.bf16.msra.mxu0 %v2290
    %2610 = vmatmul.bf16.gmra.mxu0 %v1665
    %v2611 = vpop.f32.mrf.mxu0
    %v2612 = vadd.f32 %v2598, %v2611
    %v2613 = vpop.f32.mrf.mxu0
    %v2614 = vadd.f32 %v2600, %v2613
    %2615 = vdwg.mxu0
    %2616 = vmatpush.bf16.msra.mxu0 %v2223
    %2617 = vmatpush.bf16.msra.mxu0 %v2219
    %2618 = vmatpush.bf16.msra.mxu0 %v2215
    %2619 = vmatpush.bf16.msra.mxu0 %v2211
    %2620 = vmatpush.bf16.msra.mxu0 %v2207
    %2621 = vmatpush.bf16.msra.mxu0 %v2203
    %2622 = vmatpush.bf16.msra.mxu0 %v2199
    %2623 = vmatpush.bf16.msra.mxu0 %v2195
    %2624 = vmatmul.bf16.gmra.mxu0 %v1662
    %v2625 = vpop.f32.mrf.mxu0
    %v2626 = vadd.f32 %v1807, %v2625
    %v2627 = vpop.f32.mrf.mxu0
    %v2628 = vadd.f32 %v1807, %v2627
    %2629 = vdwg.mxu0
    %2630 = vmatpush.bf16.msra.mxu0 %v2255
    %2631 = vmatpush.bf16.msra.mxu0 %v2251
    %2632 = vmatpush.bf16.msra.mxu0 %v2247
    %2633 = vmatpush.bf16.msra.mxu0 %v2243
    %2634 = vmatpush.bf16.msra.mxu0 %v2239
    %2635 = vmatpush.bf16.msra.mxu0 %v2235
    %2636 = vmatpush.bf16.msra.mxu0 %v2231
    %2637 = vmatpush.bf16.msra.mxu0 %v2227
    %2638 = vmatmul.bf16.gmra.mxu0 %v1663
    %v2639 = vpop.f32.mrf.mxu0
    %v2640 = vadd.f32 %v2626, %v2639
    %v2641 = vpop.f32.mrf.mxu0
    %v2642 = vadd.f32 %v2628, %v2641
    %2643 = vdwg.mxu0
    %2644 = vmatpush.bf16.msra.mxu0 %v2287
    %2645 = vmatpush.bf16.msra.mxu0 %v2283
    %2646 = vmatpush.bf16.msra.mxu0 %v2279
    %2647 = vmatpush.bf16.msra.mxu0 %v2275
    %2648 = vmatpush.bf16.msra.mxu0 %v2271
    %2649 = vmatpush.bf16.msra.mxu0 %v2267
    %2650 = vmatpush.bf16.msra.mxu0 %v2263
    %2651 = vmatpush.bf16.msra.mxu0 %v2259
    %2652 = vmatmul.bf16.gmra.mxu0 %v1664
    %v2653 = vpop.f32.mrf.mxu0
    %v2654 = vadd.f32 %v2640, %v2653
    %v2655 = vpop.f32.mrf.mxu0
    %v2656 = vadd.f32 %v2642, %v2655
    %2657 = vdwg.mxu0
    %2658 = vmatpush.bf16.msra.mxu0 %v2319
    %2659 = vmatpush.bf16.msra.mxu0 %v2315
    %2660 = vmatpush.bf16.msra.mxu0 %v2311
    %2661 = vmatpush.bf16.msra.mxu0 %v2307
    %2662 = vmatpush.bf16.msra.mxu0 %v2303
    %2663 = vmatpush.bf16.msra.mxu0 %v2299
    %2664 = vmatpush.bf16.msra.mxu0 %v2295
    %2665 = vmatpush.bf16.msra.mxu0 %v2291
    %2666 = vmatmul.bf16.gmra.mxu0 %v1665
    %v2667 = vpop.f32.mrf.mxu0
    %v2668 = vadd.f32 %v2654, %v2667
    %v2669 = vpop.f32.mrf.mxu0
    %v2670 = vadd.f32 %v2656, %v2669
    %2671 = vdwg.mxu0
    %v2672 = vmax.f32 %v2500, 0.0
    %v2673 = vmax.f32 %v2556, 0.0
    %v2674 = vmax.f32 %v2612, 0.0
    %v2675 = vmax.f32 %v2668, 0.0
    %v2676 = vmax.f32 %v2502, 0.0
    %v2677 = vmax.f32 %v2558, 0.0
    %v2678 = vmax.f32 %v2614, 0.0
    %v2679 = vmax.f32 %v2670, 0.0
    %v2680 = vpack.c.bf16 %v2676, %v2672
    %v2681 = vpack.c.bf16 %v2677, %v2673
    %v2682 = vpack.c.bf16 %v2678, %v2674
    %v2683 = vpack.c.bf16 %v2679, %v2675
    %s2684 = scalar_lea.vmem [#allocation8], 1024
    %v2685 = vld [vmem:[%s2684] sm:$0xff]
    %v2686 = vld [vmem:[%s2684 + $0x8] sm:$0xff]
    %v2687 = vld [vmem:[%s2684 + $0x10] sm:$0xff]
    %v2688 = vld [vmem:[%s2684 + $0x18] sm:$0xff]
    %v2689 = vld [vmem:[%s2684 + $0x20] sm:$0xff]
    %v2690 = vld [vmem:[%s2684 + $0x28] sm:$0xff]
    %v2691 = vld [vmem:[%s2684 + $0x30] sm:$0xff]
    %v2692 = vld [vmem:[%s2684 + $0x38] sm:$0xff]
    %v2693 = vld [vmem:[%s2684 + $0x40] sm:$0xff]
    %v2694 = vld [vmem:[%s2684 + $0x48] sm:$0xff]
    %v2695 = vld [vmem:[%s2684 + $0x50] sm:$0xff]
    %v2696 = vld [vmem:[%s2684 + $0x58] sm:$0xff]
    %v2697 = vld [vmem:[%s2684 + $0x60] sm:$0xff]
    %v2698 = vld [vmem:[%s2684 + $0x68] sm:$0xff]
    %v2699 = vld [vmem:[%s2684 + $0x70] sm:$0xff]
    %v2700 = vld [vmem:[%s2684 + $0x78] sm:$0xff]
    %v2701 = vld [vmem:[%s2684 + $0x80] sm:$0xff]
    %v2702 = vld [vmem:[%s2684 + $0x88] sm:$0xff]
    %v2703 = vld [vmem:[%s2684 + $0x90] sm:$0xff]
    %v2704 = vld [vmem:[%s2684 + $0x98] sm:$0xff]
    %v2705 = vld [vmem:[%s2684 + $0xa0] sm:$0xff]
    %v2706 = vld [vmem:[%s2684 + $0xa8] sm:$0xff]
    %v2707 = vld [vmem:[%s2684 + $0xb0] sm:$0xff]
    %v2708 = vld [vmem:[%s2684 + $0xb8] sm:$0xff]
    %v2709 = vld [vmem:[%s2684 + $0xc0] sm:$0xff]
    %v2710 = vld [vmem:[%s2684 + $0xc8] sm:$0xff]
    %v2711 = vld [vmem:[%s2684 + $0xd0] sm:$0xff]
    %v2712 = vld [vmem:[%s2684 + $0xd8] sm:$0xff]
    %v2713 = vld [vmem:[%s2684 + $0xe0] sm:$0xff]
    %v2714 = vld [vmem:[%s2684 + $0xe8] sm:$0xff]
    %v2715 = vld [vmem:[%s2684 + $0xf0] sm:$0xff]
    %v2716 = vld [vmem:[%s2684 + $0xf8] sm:$0xff]
    %v2717 = vld [vmem:[%s2684 + $0x100] sm:$0xff]
    %v2718 = vld [vmem:[%s2684 + $0x108] sm:$0xff]
    %v2719 = vld [vmem:[%s2684 + $0x110] sm:$0xff]
    %v2720 = vld [vmem:[%s2684 + $0x118] sm:$0xff]
    %v2721 = vld [vmem:[%s2684 + $0x120] sm:$0xff]
    %v2722 = vld [vmem:[%s2684 + $0x128] sm:$0xff]
    %v2723 = vld [vmem:[%s2684 + $0x130] sm:$0xff]
    %v2724 = vld [vmem:[%s2684 + $0x138] sm:$0xff]
    %v2725 = vld [vmem:[%s2684 + $0x140] sm:$0xff]
    %v2726 = vld [vmem:[%s2684 + $0x148] sm:$0xff]
    %v2727 = vld [vmem:[%s2684 + $0x150] sm:$0xff]
    %v2728 = vld [vmem:[%s2684 + $0x158] sm:$0xff]
    %v2729 = vld [vmem:[%s2684 + $0x160] sm:$0xff]
    %v2730 = vld [vmem:[%s2684 + $0x168] sm:$0xff]
    %v2731 = vld [vmem:[%s2684 + $0x170] sm:$0xff]
    %v2732 = vld [vmem:[%s2684 + $0x178] sm:$0xff]
    %v2733 = vld [vmem:[%s2684 + $0x180] sm:$0xff]
    %v2734 = vld [vmem:[%s2684 + $0x188] sm:$0xff]
    %v2735 = vld [vmem:[%s2684 + $0x190] sm:$0xff]
    %v2736 = vld [vmem:[%s2684 + $0x198] sm:$0xff]
    %v2737 = vld [vmem:[%s2684 + $0x1a0] sm:$0xff]
    %v2738 = vld [vmem:[%s2684 + $0x1a8] sm:$0xff]
    %v2739 = vld [vmem:[%s2684 + $0x1b0] sm:$0xff]
    %v2740 = vld [vmem:[%s2684 + $0x1b8] sm:$0xff]
    %v2741 = vld [vmem:[%s2684 + $0x1c0] sm:$0xff]
    %v2742 = vld [vmem:[%s2684 + $0x1c8] sm:$0xff]
    %v2743 = vld [vmem:[%s2684 + $0x1d0] sm:$0xff]
    %v2744 = vld [vmem:[%s2684 + $0x1d8] sm:$0xff]
    %v2745 = vld [vmem:[%s2684 + $0x1e0] sm:$0xff]
    %v2746 = vld [vmem:[%s2684 + $0x1e8] sm:$0xff]
    %v2747 = vld [vmem:[%s2684 + $0x1f0] sm:$0xff]
    %v2748 = vld [vmem:[%s2684 + $0x1f8] sm:$0xff]
    %v2749 = vld [vmem:[%s2684 + $0x200] sm:$0xff]
    %v2750 = vld [vmem:[%s2684 + $0x208] sm:$0xff]
    %v2751 = vld [vmem:[%s2684 + $0x210] sm:$0xff]
    %v2752 = vld [vmem:[%s2684 + $0x218] sm:$0xff]
    %v2753 = vld [vmem:[%s2684 + $0x220] sm:$0xff]
    %v2754 = vld [vmem:[%s2684 + $0x228] sm:$0xff]
    %v2755 = vld [vmem:[%s2684 + $0x230] sm:$0xff]
    %v2756 = vld [vmem:[%s2684 + $0x238] sm:$0xff]
    %v2757 = vld [vmem:[%s2684 + $0x240] sm:$0xff]
    %v2758 = vld [vmem:[%s2684 + $0x248] sm:$0xff]
    %v2759 = vld [vmem:[%s2684 + $0x250] sm:$0xff]
    %v2760 = vld [vmem:[%s2684 + $0x258] sm:$0xff]
    %v2761 = vld [vmem:[%s2684 + $0x260] sm:$0xff]
    %v2762 = vld [vmem:[%s2684 + $0x268] sm:$0xff]
    %v2763 = vld [vmem:[%s2684 + $0x270] sm:$0xff]
    %v2764 = vld [vmem:[%s2684 + $0x278] sm:$0xff]
    %v2765 = vld [vmem:[%s2684 + $0x280] sm:$0xff]
    %v2766 = vld [vmem:[%s2684 + $0x288] sm:$0xff]
    %v2767 = vld [vmem:[%s2684 + $0x290] sm:$0xff]
    %v2768 = vld [vmem:[%s2684 + $0x298] sm:$0xff]
    %v2769 = vld [vmem:[%s2684 + $0x2a0] sm:$0xff]
    %v2770 = vld [vmem:[%s2684 + $0x2a8] sm:$0xff]
    %v2771 = vld [vmem:[%s2684 + $0x2b0] sm:$0xff]
    %v2772 = vld [vmem:[%s2684 + $0x2b8] sm:$0xff]
    %v2773 = vld [vmem:[%s2684 + $0x2c0] sm:$0xff]
    %v2774 = vld [vmem:[%s2684 + $0x2c8] sm:$0xff]
    %v2775 = vld [vmem:[%s2684 + $0x2d0] sm:$0xff]
    %v2776 = vld [vmem:[%s2684 + $0x2d8] sm:$0xff]
    %v2777 = vld [vmem:[%s2684 + $0x2e0] sm:$0xff]
    %v2778 = vld [vmem:[%s2684 + $0x2e8] sm:$0xff]
    %v2779 = vld [vmem:[%s2684 + $0x2f0] sm:$0xff]
    %v2780 = vld [vmem:[%s2684 + $0x2f8] sm:$0xff]
    %v2781 = vld [vmem:[%s2684 + $0x300] sm:$0xff]
    %v2782 = vld [vmem:[%s2684 + $0x308] sm:$0xff]
    %v2783 = vld [vmem:[%s2684 + $0x310] sm:$0xff]
    %v2784 = vld [vmem:[%s2684 + $0x318] sm:$0xff]
    %v2785 = vld [vmem:[%s2684 + $0x320] sm:$0xff]
    %v2786 = vld [vmem:[%s2684 + $0x328] sm:$0xff]
    %v2787 = vld [vmem:[%s2684 + $0x330] sm:$0xff]
    %v2788 = vld [vmem:[%s2684 + $0x338] sm:$0xff]
    %v2789 = vld [vmem:[%s2684 + $0x340] sm:$0xff]
    %v2790 = vld [vmem:[%s2684 + $0x348] sm:$0xff]
    %v2791 = vld [vmem:[%s2684 + $0x350] sm:$0xff]
    %v2792 = vld [vmem:[%s2684 + $0x358] sm:$0xff]
    %v2793 = vld [vmem:[%s2684 + $0x360] sm:$0xff]
    %v2794 = vld [vmem:[%s2684 + $0x368] sm:$0xff]
    %v2795 = vld [vmem:[%s2684 + $0x370] sm:$0xff]
    %v2796 = vld [vmem:[%s2684 + $0x378] sm:$0xff]
    %v2797 = vld [vmem:[%s2684 + $0x380] sm:$0xff]
    %v2798 = vld [vmem:[%s2684 + $0x388] sm:$0xff]
    %v2799 = vld [vmem:[%s2684 + $0x390] sm:$0xff]
    %v2800 = vld [vmem:[%s2684 + $0x398] sm:$0xff]
    %v2801 = vld [vmem:[%s2684 + $0x3a0] sm:$0xff]
    %v2802 = vld [vmem:[%s2684 + $0x3a8] sm:$0xff]
    %v2803 = vld [vmem:[%s2684 + $0x3b0] sm:$0xff]
    %v2804 = vld [vmem:[%s2684 + $0x3b8] sm:$0xff]
    %v2805 = vld [vmem:[%s2684 + $0x3c0] sm:$0xff]
    %v2806 = vld [vmem:[%s2684 + $0x3c8] sm:$0xff]
    %v2807 = vld [vmem:[%s2684 + $0x3d0] sm:$0xff]
    %v2808 = vld [vmem:[%s2684 + $0x3d8] sm:$0xff]
    %v2809 = vld [vmem:[%s2684 + $0x3e0] sm:$0xff]
    %v2810 = vld [vmem:[%s2684 + $0x3e8] sm:$0xff]
    %v2811 = vld [vmem:[%s2684 + $0x3f0] sm:$0xff]
    %v2812 = vld [vmem:[%s2684 + $0x3f8] sm:$0xff]
    %v2813 = vperm.slane %v116, 1
    %v2814 = vperm.slane %v116, 5
    %v2815 = vperm.slane %v117, 1
    %v2816 = vperm.slane %v117, 5
    %v2821 = vperm.slane %v2813, 1
    %v2822 = vperm.slane %v2814, 1
    %v2823 = vperm.slane %v2815, 1
    %v2824 = vperm.slane %v2816, 1
    %v2953 = vunpack.c.l.b16 %v2685
    %v2954 = vunpack.c.h.b16 %v2685
    %v2955 = vunpack.c.l.b16 %v2686
    %v2956 = vunpack.c.h.b16 %v2686
    %v2957 = vunpack.c.l.b16 %v2687
    %v2958 = vunpack.c.h.b16 %v2687
    %v2959 = vunpack.c.l.b16 %v2688
    %v2960 = vunpack.c.h.b16 %v2688
    %v2961 = vunpack.c.l.b16 %v2689
    %v2962 = vunpack.c.h.b16 %v2689
    %v2963 = vunpack.c.l.b16 %v2690
    %v2964 = vunpack.c.h.b16 %v2690
    %v2965 = vunpack.c.l.b16 %v2691
    %v2966 = vunpack.c.h.b16 %v2691
    %v2967 = vunpack.c.l.b16 %v2692
    %v2968 = vunpack.c.h.b16 %v2692
    %v2969 = vunpack.c.l.b16 %v2693
    %v2970 = vunpack.c.h.b16 %v2693
    %v2971 = vunpack.c.l.b16 %v2694
    %v2972 = vunpack.c.h.b16 %v2694
    %v2973 = vunpack.c.l.b16 %v2695
    %v2974 = vunpack.c.h.b16 %v2695
    %v2975 = vunpack.c.l.b16 %v2696
    %v2976 = vunpack.c.h.b16 %v2696
    %v2977 = vunpack.c.l.b16 %v2697
    %v2978 = vunpack.c.h.b16 %v2697
    %v2979 = vunpack.c.l.b16 %v2698
    %v2980 = vunpack.c.h.b16 %v2698
    %v2981 = vunpack.c.l.b16 %v2699
    %v2982 = vunpack.c.h.b16 %v2699
    %v2983 = vunpack.c.l.b16 %v2700
    %v2984 = vunpack.c.h.b16 %v2700
    %v2985 = vunpack.c.l.b16 %v2701
    %v2986 = vunpack.c.h.b16 %v2701
    %v2987 = vunpack.c.l.b16 %v2702
    %v2988 = vunpack.c.h.b16 %v2702
    %v2989 = vunpack.c.l.b16 %v2703
    %v2990 = vunpack.c.h.b16 %v2703
    %v2991 = vunpack.c.l.b16 %v2704
    %v2992 = vunpack.c.h.b16 %v2704
    %v2993 = vunpack.c.l.b16 %v2705
    %v2994 = vunpack.c.h.b16 %v2705
    %v2995 = vunpack.c.l.b16 %v2706
    %v2996 = vunpack.c.h.b16 %v2706
    %v2997 = vunpack.c.l.b16 %v2707
    %v2998 = vunpack.c.h.b16 %v2707
    %v2999 = vunpack.c.l.b16 %v2708
    %v3000 = vunpack.c.h.b16 %v2708
    %v3001 = vunpack.c.l.b16 %v2709
    %v3002 = vunpack.c.h.b16 %v2709
    %v3003 = vunpack.c.l.b16 %v2710
    %v3004 = vunpack.c.h.b16 %v2710
    %v3005 = vunpack.c.l.b16 %v2711
    %v3006 = vunpack.c.h.b16 %v2711
    %v3007 = vunpack.c.l.b16 %v2712
    %v3008 = vunpack.c.h.b16 %v2712
    %v3009 = vunpack.c.l.b16 %v2713
    %v3010 = vunpack.c.h.b16 %v2713
    %v3011 = vunpack.c.l.b16 %v2714
    %v3012 = vunpack.c.h.b16 %v2714
    %v3013 = vunpack.c.l.b16 %v2715
    %v3014 = vunpack.c.h.b16 %v2715
    %v3015 = vunpack.c.l.b16 %v2716
    %v3016 = vunpack.c.h.b16 %v2716
    %v3017 = vunpack.c.l.b16 %v2717
    %v3018 = vunpack.c.h.b16 %v2717
    %v3019 = vunpack.c.l.b16 %v2718
    %v3020 = vunpack.c.h.b16 %v2718
    %v3021 = vunpack.c.l.b16 %v2719
    %v3022 = vunpack.c.h.b16 %v2719
    %v3023 = vunpack.c.l.b16 %v2720
    %v3024 = vunpack.c.h.b16 %v2720
    %v3025 = vunpack.c.l.b16 %v2721
    %v3026 = vunpack.c.h.b16 %v2721
    %v3027 = vunpack.c.l.b16 %v2722
    %v3028 = vunpack.c.h.b16 %v2722
    %v3029 = vunpack.c.l.b16 %v2723
    %v3030 = vunpack.c.h.b16 %v2723
    %v3031 = vunpack.c.l.b16 %v2724
    %v3032 = vunpack.c.h.b16 %v2724
    %v3033 = vunpack.c.l.b16 %v2725
    %v3034 = vunpack.c.h.b16 %v2725
    %v3035 = vunpack.c.l.b16 %v2726
    %v3036 = vunpack.c.h.b16 %v2726
    %v3037 = vunpack.c.l.b16 %v2727
    %v3038 = vunpack.c.h.b16 %v2727
    %v3039 = vunpack.c.l.b16 %v2728
    %v3040 = vunpack.c.h.b16 %v2728
    %v3041 = vunpack.c.l.b16 %v2729
    %v3042 = vunpack.c.h.b16 %v2729
    %v3043 = vunpack.c.l.b16 %v2730
    %v3044 = vunpack.c.h.b16 %v2730
    %v3045 = vunpack.c.l.b16 %v2731
    %v3046 = vunpack.c.h.b16 %v2731
    %v3047 = vunpack.c.l.b16 %v2732
    %v3048 = vunpack.c.h.b16 %v2732
    %v3049 = vunpack.c.l.b16 %v2733
    %v3050 = vunpack.c.h.b16 %v2733
    %v3051 = vunpack.c.l.b16 %v2734
    %v3052 = vunpack.c.h.b16 %v2734
    %v3053 = vunpack.c.l.b16 %v2735
    %v3054 = vunpack.c.h.b16 %v2735
    %v3055 = vunpack.c.l.b16 %v2736
    %v3056 = vunpack.c.h.b16 %v2736
    %v3057 = vunpack.c.l.b16 %v2737
    %v3058 = vunpack.c.h.b16 %v2737
    %v3059 = vunpack.c.l.b16 %v2738
    %v3060 = vunpack.c.h.b16 %v2738
    %v3061 = vunpack.c.l.b16 %v2739
    %v3062 = vunpack.c.h.b16 %v2739
    %v3063 = vunpack.c.l.b16 %v2740
    %v3064 = vunpack.c.h.b16 %v2740
    %v3065 = vunpack.c.l.b16 %v2741
    %v3066 = vunpack.c.h.b16 %v2741
    %v3067 = vunpack.c.l.b16 %v2742
    %v3068 = vunpack.c.h.b16 %v2742
    %v3069 = vunpack.c.l.b16 %v2743
    %v3070 = vunpack.c.h.b16 %v2743
    %v3071 = vunpack.c.l.b16 %v2744
    %v3072 = vunpack.c.h.b16 %v2744
    %v3073 = vunpack.c.l.b16 %v2745
    %v3074 = vunpack.c.h.b16 %v2745
    %v3075 = vunpack.c.l.b16 %v2746
    %v3076 = vunpack.c.h.b16 %v2746
    %v3077 = vunpack.c.l.b16 %v2747
    %v3078 = vunpack.c.h.b16 %v2747
    %v3079 = vunpack.c.l.b16 %v2748
    %v3080 = vunpack.c.h.b16 %v2748
    %v3081 = vunpack.c.l.b16 %v2749
    %v3082 = vunpack.c.h.b16 %v2749
    %v3083 = vunpack.c.l.b16 %v2750
    %v3084 = vunpack.c.h.b16 %v2750
    %v3085 = vunpack.c.l.b16 %v2751
    %v3086 = vunpack.c.h.b16 %v2751
    %v3087 = vunpack.c.l.b16 %v2752
    %v3088 = vunpack.c.h.b16 %v2752
    %v3089 = vunpack.c.l.b16 %v2753
    %v3090 = vunpack.c.h.b16 %v2753
    %v3091 = vunpack.c.l.b16 %v2754
    %v3092 = vunpack.c.h.b16 %v2754
    %v3093 = vunpack.c.l.b16 %v2755
    %v3094 = vunpack.c.h.b16 %v2755
    %v3095 = vunpack.c.l.b16 %v2756
    %v3096 = vunpack.c.h.b16 %v2756
    %v3097 = vunpack.c.l.b16 %v2757
    %v3098 = vunpack.c.h.b16 %v2757
    %v3099 = vunpack.c.l.b16 %v2758
    %v3100 = vunpack.c.h.b16 %v2758
    %v3101 = vunpack.c.l.b16 %v2759
    %v3102 = vunpack.c.h.b16 %v2759
    %v3103 = vunpack.c.l.b16 %v2760
    %v3104 = vunpack.c.h.b16 %v2760
    %v3105 = vunpack.c.l.b16 %v2761
    %v3106 = vunpack.c.h.b16 %v2761
    %v3107 = vunpack.c.l.b16 %v2762
    %v3108 = vunpack.c.h.b16 %v2762
    %v3109 = vunpack.c.l.b16 %v2763
    %v3110 = vunpack.c.h.b16 %v2763
    %v3111 = vunpack.c.l.b16 %v2764
    %v3112 = vunpack.c.h.b16 %v2764
    %v3113 = vunpack.c.l.b16 %v2765
    %v3114 = vunpack.c.h.b16 %v2765
    %v3115 = vunpack.c.l.b16 %v2766
    %v3116 = vunpack.c.h.b16 %v2766
    %v3117 = vunpack.c.l.b16 %v2767
    %v3118 = vunpack.c.h.b16 %v2767
    %v3119 = vunpack.c.l.b16 %v2768
    %v3120 = vunpack.c.h.b16 %v2768
    %v3121 = vunpack.c.l.b16 %v2769
    %v3122 = vunpack.c.h.b16 %v2769
    %v3123 = vunpack.c.l.b16 %v2770
    %v3124 = vunpack.c.h.b16 %v2770
    %v3125 = vunpack.c.l.b16 %v2771
    %v3126 = vunpack.c.h.b16 %v2771
    %v3127 = vunpack.c.l.b16 %v2772
    %v3128 = vunpack.c.h.b16 %v2772
    %v3129 = vunpack.c.l.b16 %v2773
    %v3130 = vunpack.c.h.b16 %v2773
    %v3131 = vunpack.c.l.b16 %v2774
    %v3132 = vunpack.c.h.b16 %v2774
    %v3133 = vunpack.c.l.b16 %v2775
    %v3134 = vunpack.c.h.b16 %v2775
    %v3135 = vunpack.c.l.b16 %v2776
    %v3136 = vunpack.c.h.b16 %v2776
    %v3137 = vunpack.c.l.b16 %v2777
    %v3138 = vunpack.c.h.b16 %v2777
    %v3139 = vunpack.c.l.b16 %v2778
    %v3140 = vunpack.c.h.b16 %v2778
    %v3141 = vunpack.c.l.b16 %v2779
    %v3142 = vunpack.c.h.b16 %v2779
    %v3143 = vunpack.c.l.b16 %v2780
    %v3144 = vunpack.c.h.b16 %v2780
    %v3145 = vunpack.c.l.b16 %v2781
    %v3146 = vunpack.c.h.b16 %v2781
    %v3147 = vunpack.c.l.b16 %v2782
    %v3148 = vunpack.c.h.b16 %v2782
    %v3149 = vunpack.c.l.b16 %v2783
    %v3150 = vunpack.c.h.b16 %v2783
    %v3151 = vunpack.c.l.b16 %v2784
    %v3152 = vunpack.c.h.b16 %v2784
    %v3153 = vunpack.c.l.b16 %v2785
    %v3154 = vunpack.c.h.b16 %v2785
    %v3155 = vunpack.c.l.b16 %v2786
    %v3156 = vunpack.c.h.b16 %v2786
    %v3157 = vunpack.c.l.b16 %v2787
    %v3158 = vunpack.c.h.b16 %v2787
    %v3159 = vunpack.c.l.b16 %v2788
    %v3160 = vunpack.c.h.b16 %v2788
    %v3161 = vunpack.c.l.b16 %v2789
    %v3162 = vunpack.c.h.b16 %v2789
    %v3163 = vunpack.c.l.b16 %v2790
    %v3164 = vunpack.c.h.b16 %v2790
    %v3165 = vunpack.c.l.b16 %v2791
    %v3166 = vunpack.c.h.b16 %v2791
    %v3167 = vunpack.c.l.b16 %v2792
    %v3168 = vunpack.c.h.b16 %v2792
    %v3169 = vunpack.c.l.b16 %v2793
    %v3170 = vunpack.c.h.b16 %v2793
    %v3171 = vunpack.c.l.b16 %v2794
    %v3172 = vunpack.c.h.b16 %v2794
    %v3173 = vunpack.c.l.b16 %v2795
    %v3174 = vunpack.c.h.b16 %v2795
    %v3175 = vunpack.c.l.b16 %v2796
    %v3176 = vunpack.c.h.b16 %v2796
    %v3177 = vunpack.c.l.b16 %v2797
    %v3178 = vunpack.c.h.b16 %v2797
    %v3179 = vunpack.c.l.b16 %v2798
    %v3180 = vunpack.c.h.b16 %v2798
    %v3181 = vunpack.c.l.b16 %v2799
    %v3182 = vunpack.c.h.b16 %v2799
    %v3183 = vunpack.c.l.b16 %v2800
    %v3184 = vunpack.c.h.b16 %v2800
    %v3185 = vunpack.c.l.b16 %v2801
    %v3186 = vunpack.c.h.b16 %v2801
    %v3187 = vunpack.c.l.b16 %v2802
    %v3188 = vunpack.c.h.b16 %v2802
    %v3189 = vunpack.c.l.b16 %v2803
    %v3190 = vunpack.c.h.b16 %v2803
    %v3191 = vunpack.c.l.b16 %v2804
    %v3192 = vunpack.c.h.b16 %v2804
    %v3193 = vunpack.c.l.b16 %v2805
    %v3194 = vunpack.c.h.b16 %v2805
    %v3195 = vunpack.c.l.b16 %v2806
    %v3196 = vunpack.c.h.b16 %v2806
    %v3197 = vunpack.c.l.b16 %v2807
    %v3198 = vunpack.c.h.b16 %v2807
    %v3199 = vunpack.c.l.b16 %v2808
    %v3200 = vunpack.c.h.b16 %v2808
    %v3201 = vunpack.c.l.b16 %v2809
    %v3202 = vunpack.c.h.b16 %v2809
    %v3203 = vunpack.c.l.b16 %v2810
    %v3204 = vunpack.c.h.b16 %v2810
    %v3205 = vunpack.c.l.b16 %v2811
    %v3206 = vunpack.c.h.b16 %v2811
    %v3207 = vunpack.c.l.b16 %v2812
    %v3208 = vunpack.c.h.b16 %v2812
    %v3209 = vpack.c.b16 %v2957, %v2953
    %v3210 = vpack.c.b16 %v2958, %v2954
    %v3211 = vpack.c.b16 %v2959, %v2955
    %v3212 = vpack.c.b16 %v2960, %v2956
    %v3213 = vpack.c.b16 %v2965, %v2961
    %v3214 = vpack.c.b16 %v2966, %v2962
    %v3215 = vpack.c.b16 %v2967, %v2963
    %v3216 = vpack.c.b16 %v2968, %v2964
    %v3217 = vpack.c.b16 %v2973, %v2969
    %v3218 = vpack.c.b16 %v2974, %v2970
    %v3219 = vpack.c.b16 %v2975, %v2971
    %v3220 = vpack.c.b16 %v2976, %v2972
    %v3221 = vpack.c.b16 %v2981, %v2977
    %v3222 = vpack.c.b16 %v2982, %v2978
    %v3223 = vpack.c.b16 %v2983, %v2979
    %v3224 = vpack.c.b16 %v2984, %v2980
    %v3225 = vpack.c.b16 %v2989, %v2985
    %v3226 = vpack.c.b16 %v2990, %v2986
    %v3227 = vpack.c.b16 %v2991, %v2987
    %v3228 = vpack.c.b16 %v2992, %v2988
    %v3229 = vpack.c.b16 %v2997, %v2993
    %v3230 = vpack.c.b16 %v2998, %v2994
    %v3231 = vpack.c.b16 %v2999, %v2995
    %v3232 = vpack.c.b16 %v3000, %v2996
    %v3233 = vpack.c.b16 %v3005, %v3001
    %v3234 = vpack.c.b16 %v3006, %v3002
    %v3235 = vpack.c.b16 %v3007, %v3003
    %v3236 = vpack.c.b16 %v3008, %v3004
    %v3237 = vpack.c.b16 %v3013, %v3009
    %v3238 = vpack.c.b16 %v3014, %v3010
    %v3239 = vpack.c.b16 %v3015, %v3011
    %v3240 = vpack.c.b16 %v3016, %v3012
    %v3241 = vpack.c.b16 %v3021, %v3017
    %v3242 = vpack.c.b16 %v3022, %v3018
    %v3243 = vpack.c.b16 %v3023, %v3019
    %v3244 = vpack.c.b16 %v3024, %v3020
    %v3245 = vpack.c.b16 %v3029, %v3025
    %v3246 = vpack.c.b16 %v3030, %v3026
    %v3247 = vpack.c.b16 %v3031, %v3027
    %v3248 = vpack.c.b16 %v3032, %v3028
    %v3249 = vpack.c.b16 %v3037, %v3033
    %v3250 = vpack.c.b16 %v3038, %v3034
    %v3251 = vpack.c.b16 %v3039, %v3035
    %v3252 = vpack.c.b16 %v3040, %v3036
    %v3253 = vpack.c.b16 %v3045, %v3041
    %v3254 = vpack.c.b16 %v3046, %v3042
    %v3255 = vpack.c.b16 %v3047, %v3043
    %v3256 = vpack.c.b16 %v3048, %v3044
    %v3257 = vpack.c.b16 %v3053, %v3049
    %v3258 = vpack.c.b16 %v3054, %v3050
    %v3259 = vpack.c.b16 %v3055, %v3051
    %v3260 = vpack.c.b16 %v3056, %v3052
    %v3261 = vpack.c.b16 %v3061, %v3057
    %v3262 = vpack.c.b16 %v3062, %v3058
    %v3263 = vpack.c.b16 %v3063, %v3059
    %v3264 = vpack.c.b16 %v3064, %v3060
    %v3265 = vpack.c.b16 %v3069, %v3065
    %v3266 = vpack.c.b16 %v3070, %v3066
    %v3267 = vpack.c.b16 %v3071, %v3067
    %v3268 = vpack.c.b16 %v3072, %v3068
    %v3269 = vpack.c.b16 %v3077, %v3073
    %v3270 = vpack.c.b16 %v3078, %v3074
    %v3271 = vpack.c.b16 %v3079, %v3075
    %v3272 = vpack.c.b16 %v3080, %v3076
    %v3273 = vpack.c.b16 %v3085, %v3081
    %v3274 = vpack.c.b16 %v3086, %v3082
    %v3275 = vpack.c.b16 %v3087, %v3083
    %v3276 = vpack.c.b16 %v3088, %v3084
    %v3277 = vpack.c.b16 %v3093, %v3089
    %v3278 = vpack.c.b16 %v3094, %v3090
    %v3279 = vpack.c.b16 %v3095, %v3091
    %v3280 = vpack.c.b16 %v3096, %v3092
    %v3281 = vpack.c.b16 %v3101, %v3097
    %v3282 = vpack.c.b16 %v3102, %v3098
    %v3283 = vpack.c.b16 %v3103, %v3099
    %v3284 = vpack.c.b16 %v3104, %v3100
    %v3285 = vpack.c.b16 %v3109, %v3105
    %v3286 = vpack.c.b16 %v3110, %v3106
    %v3287 = vpack.c.b16 %v3111, %v3107
    %v3288 = vpack.c.b16 %v3112, %v3108
    %v3289 = vpack.c.b16 %v3117, %v3113
    %v3290 = vpack.c.b16 %v3118, %v3114
    %v3291 = vpack.c.b16 %v3119, %v3115
    %v3292 = vpack.c.b16 %v3120, %v3116
    %v3293 = vpack.c.b16 %v3125, %v3121
    %v3294 = vpack.c.b16 %v3126, %v3122
    %v3295 = vpack.c.b16 %v3127, %v3123
    %v3296 = vpack.c.b16 %v3128, %v3124
    %v3297 = vpack.c.b16 %v3133, %v3129
    %v3298 = vpack.c.b16 %v3134, %v3130
    %v3299 = vpack.c.b16 %v3135, %v3131
    %v3300 = vpack.c.b16 %v3136, %v3132
    %v3301 = vpack.c.b16 %v3141, %v3137
    %v3302 = vpack.c.b16 %v3142, %v3138
    %v3303 = vpack.c.b16 %v3143, %v3139
    %v3304 = vpack.c.b16 %v3144, %v3140
    %v3305 = vpack.c.b16 %v3149, %v3145
    %v3306 = vpack.c.b16 %v3150, %v3146
    %v3307 = vpack.c.b16 %v3151, %v3147
    %v3308 = vpack.c.b16 %v3152, %v3148
    %v3309 = vpack.c.b16 %v3157, %v3153
    %v3310 = vpack.c.b16 %v3158, %v3154
    %v3311 = vpack.c.b16 %v3159, %v3155
    %v3312 = vpack.c.b16 %v3160, %v3156
    %v3313 = vpack.c.b16 %v3165, %v3161
    %v3314 = vpack.c.b16 %v3166, %v3162
    %v3315 = vpack.c.b16 %v3167, %v3163
    %v3316 = vpack.c.b16 %v3168, %v3164
    %v3317 = vpack.c.b16 %v3173, %v3169
    %v3318 = vpack.c.b16 %v3174, %v3170
    %v3319 = vpack.c.b16 %v3175, %v3171
    %v3320 = vpack.c.b16 %v3176, %v3172
    %v3321 = vpack.c.b16 %v3181, %v3177
    %v3322 = vpack.c.b16 %v3182, %v3178
    %v3323 = vpack.c.b16 %v3183, %v3179
    %v3324 = vpack.c.b16 %v3184, %v3180
    %v3325 = vpack.c.b16 %v3189, %v3185
    %v3326 = vpack.c.b16 %v3190, %v3186
    %v3327 = vpack.c.b16 %v3191, %v3187
    %v3328 = vpack.c.b16 %v3192, %v3188
    %v3329 = vpack.c.b16 %v3197, %v3193
    %v3330 = vpack.c.b16 %v3198, %v3194
    %v3331 = vpack.c.b16 %v3199, %v3195
    %v3332 = vpack.c.b16 %v3200, %v3196
    %v3333 = vpack.c.b16 %v3205, %v3201
    %v3334 = vpack.c.b16 %v3206, %v3202
    %v3335 = vpack.c.b16 %v3207, %v3203
    %v3336 = vpack.c.b16 %v3208, %v3204
    %3465 = vmatpush.bf16.msra.mxu0 %v3237
    %3466 = vmatpush.bf16.msra.mxu0 %v3233
    %3467 = vmatpush.bf16.msra.mxu0 %v3229
    %3468 = vmatpush.bf16.msra.mxu0 %v3225
    %3469 = vmatpush.bf16.msra.mxu0 %v3221
    %3470 = vmatpush.bf16.msra.mxu0 %v3217
    %3471 = vmatpush.bf16.msra.mxu0 %v3213
    %3472 = vmatpush.bf16.msra.mxu0 %v3209
    %3473 = vmatmul.bf16.gmra.mxu0 %v2680
    %v3474 = vpop.f32.mrf.mxu0
    %v3475 = vadd.f32 %v2821, %v3474
    %v3476 = vpop.f32.mrf.mxu0
    %v3477 = vadd.f32 %v2821, %v3476
    %3478 = vdwg.mxu0
    %3479 = vmatpush.bf16.msra.mxu0 %v3269
    %3480 = vmatpush.bf16.msra.mxu0 %v3265
    %3481 = vmatpush.bf16.msra.mxu0 %v3261
    %3482 = vmatpush.bf16.msra.mxu0 %v3257
    %3483 = vmatpush.bf16.msra.mxu0 %v3253
    %3484 = vmatpush.bf16.msra.mxu0 %v3249
    %3485 = vmatpush.bf16.msra.mxu0 %v3245
    %3486 = vmatpush.bf16.msra.mxu0 %v3241
    %3487 = vmatmul.bf16.gmra.mxu0 %v2681
    %v3488 = vpop.f32.mrf.mxu0
    %v3489 = vadd.f32 %v3475, %v3488
    %v3490 = vpop.f32.mrf.mxu0
    %v3491 = vadd.f32 %v3477, %v3490
    %3492 = vdwg.mxu0
    %3493 = vmatpush.bf16.msra.mxu0 %v3301
    %3494 = vmatpush.bf16.msra.mxu0 %v3297
    %3495 = vmatpush.bf16.msra.mxu0 %v3293
    %3496 = vmatpush.bf16.msra.mxu0 %v3289
    %3497 = vmatpush.bf16.msra.mxu0 %v3285
    %3498 = vmatpush.bf16.msra.mxu0 %v3281
    %3499 = vmatpush.bf16.msra.mxu0 %v3277
    %3500 = vmatpush.bf16.msra.mxu0 %v3273
    %3501 = vmatmul.bf16.gmra.mxu0 %v2682
    %v3502 = vpop.f32.mrf.mxu0
    %v3503 = vadd.f32 %v3489, %v3502
    %v3504 = vpop.f32.mrf.mxu0
    %v3505 = vadd.f32 %v3491, %v3504
    %3506 = vdwg.mxu0
    %3507 = vmatpush.bf16.msra.mxu0 %v3333
    %3508 = vmatpush.bf16.msra.mxu0 %v3329
    %3509 = vmatpush.bf16.msra.mxu0 %v3325
    %3510 = vmatpush.bf16.msra.mxu0 %v3321
    %3511 = vmatpush.bf16.msra.mxu0 %v3317
    %3512 = vmatpush.bf16.msra.mxu0 %v3313
    %3513 = vmatpush.bf16.msra.mxu0 %v3309
    %3514 = vmatpush.bf16.msra.mxu0 %v3305
    %3515 = vmatmul.bf16.gmra.mxu0 %v2683
    %v3516 = vpop.f32.mrf.mxu0
    %v3517 = vadd.f32 %v3503, %v3516
    %v3518 = vpop.f32.mrf.mxu0
    %v3519 = vadd.f32 %v3505, %v3518
    %3520 = vdwg.mxu0
    %3521 = vmatpush.bf16.msra.mxu0 %v3238
    %3522 = vmatpush.bf16.msra.mxu0 %v3234
    %3523 = vmatpush.bf16.msra.mxu0 %v3230
    %3524 = vmatpush.bf16.msra.mxu0 %v3226
    %3525 = vmatpush.bf16.msra.mxu0 %v3222
    %3526 = vmatpush.bf16.msra.mxu0 %v3218
    %3527 = vmatpush.bf16.msra.mxu0 %v3214
    %3528 = vmatpush.bf16.msra.mxu0 %v3210
    %3529 = vmatmul.bf16.gmra.mxu0 %v2680
    %v3530 = vpop.f32.mrf.mxu0
    %v3531 = vadd.f32 %v2822, %v3530
    %v3532 = vpop.f32.mrf.mxu0
    %v3533 = vadd.f32 %v2822, %v3532
    %3534 = vdwg.mxu0
    %3535 = vmatpush.bf16.msra.mxu0 %v3270
    %3536 = vmatpush.bf16.msra.mxu0 %v3266
    %3537 = vmatpush.bf16.msra.mxu0 %v3262
    %3538 = vmatpush.bf16.msra.mxu0 %v3258
    %3539 = vmatpush.bf16.msra.mxu0 %v3254
    %3540 = vmatpush.bf16.msra.mxu0 %v3250
    %3541 = vmatpush.bf16.msra.mxu0 %v3246
    %3542 = vmatpush.bf16.msra.mxu0 %v3242
    %3543 = vmatmul.bf16.gmra.mxu0 %v2681
    %v3544 = vpop.f32.mrf.mxu0
    %v3545 = vadd.f32 %v3531, %v3544
    %v3546 = vpop.f32.mrf.mxu0
    %v3547 = vadd.f32 %v3533, %v3546
    %3548 = vdwg.mxu0
    %3549 = vmatpush.bf16.msra.mxu0 %v3302
    %3550 = vmatpush.bf16.msra.mxu0 %v3298
    %3551 = vmatpush.bf16.msra.mxu0 %v3294
    %3552 = vmatpush.bf16.msra.mxu0 %v3290
    %3553 = vmatpush.bf16.msra.mxu0 %v3286
    %3554 = vmatpush.bf16.msra.mxu0 %v3282
    %3555 = vmatpush.bf16.msra.mxu0 %v3278
    %3556 = vmatpush.bf16.msra.mxu0 %v3274
    %3557 = vmatmul.bf16.gmra.mxu0 %v2682
    %v3558 = vpop.f32.mrf.mxu0
    %v3559 = vadd.f32 %v3545, %v3558
    %v3560 = vpop.f32.mrf.mxu0
    %v3561 = vadd.f32 %v3547, %v3560
    %3562 = vdwg.mxu0
    %3563 = vmatpush.bf16.msra.mxu0 %v3334
    %3564 = vmatpush.bf16.msra.mxu0 %v3330
    %3565 = vmatpush.bf16.msra.mxu0 %v3326
    %3566 = vmatpush.bf16.msra.mxu0 %v3322
    %3567 = vmatpush.bf16.msra.mxu0 %v3318
    %3568 = vmatpush.bf16.msra.mxu0 %v3314
    %3569 = vmatpush.bf16.msra.mxu0 %v3310
    %3570 = vmatpush.bf16.msra.mxu0 %v3306
    %3571 = vmatmul.bf16.gmra.mxu0 %v2683
    %v3572 = vpop.f32.mrf.mxu0
    %v3573 = vadd.f32 %v3559, %v3572
    %v3574 = vpop.f32.mrf.mxu0
    %v3575 = vadd.f32 %v3561, %v3574
    %3576 = vdwg.mxu0
    %3577 = vmatpush.bf16.msra.mxu0 %v3239
    %3578 = vmatpush.bf16.msra.mxu0 %v3235
    %3579 = vmatpush.bf16.msra.mxu0 %v3231
    %3580 = vmatpush.bf16.msra.mxu0 %v3227
    %3581 = vmatpush.bf16.msra.mxu0 %v3223
    %3582 = vmatpush.bf16.msra.mxu0 %v3219
    %3583 = vmatpush.bf16.msra.mxu0 %v3215
    %3584 = vmatpush.bf16.msra.mxu0 %v3211
    %3585 = vmatmul.bf16.gmra.mxu0 %v2680
    %v3586 = vpop.f32.mrf.mxu0
    %v3587 = vadd.f32 %v2823, %v3586
    %v3588 = vpop.f32.mrf.mxu0
    %v3589 = vadd.f32 %v2823, %v3588
    %3590 = vdwg.mxu0
    %3591 = vmatpush.bf16.msra.mxu0 %v3271
    %3592 = vmatpush.bf16.msra.mxu0 %v3267
    %3593 = vmatpush.bf16.msra.mxu0 %v3263
    %3594 = vmatpush.bf16.msra.mxu0 %v3259
    %3595 = vmatpush.bf16.msra.mxu0 %v3255
    %3596 = vmatpush.bf16.msra.mxu0 %v3251
    %3597 = vmatpush.bf16.msra.mxu0 %v3247
    %3598 = vmatpush.bf16.msra.mxu0 %v3243
    %3599 = vmatmul.bf16.gmra.mxu0 %v2681
    %v3600 = vpop.f32.mrf.mxu0
    %v3601 = vadd.f32 %v3587, %v3600
    %v3602 = vpop.f32.mrf.mxu0
    %v3603 = vadd.f32 %v3589, %v3602
    %3604 = vdwg.mxu0
    %3605 = vmatpush.bf16.msra.mxu0 %v3303
    %3606 = vmatpush.bf16.msra.mxu0 %v3299
    %3607 = vmatpush.bf16.msra.mxu0 %v3295
    %3608 = vmatpush.bf16.msra.mxu0 %v3291
    %3609 = vmatpush.bf16.msra.mxu0 %v3287
    %3610 = vmatpush.bf16.msra.mxu0 %v3283
    %3611 = vmatpush.bf16.msra.mxu0 %v3279
    %3612 = vmatpush.bf16.msra.mxu0 %v3275
    %3613 = vmatmul.bf16.gmra.mxu0 %v2682
    %v3614 = vpop.f32.mrf.mxu0
    %v3615 = vadd.f32 %v3601, %v3614
    %v3616 = vpop.f32.mrf.mxu0
    %v3617 = vadd.f32 %v3603, %v3616
    %3618 = vdwg.mxu0
    %3619 = vmatpush.bf16.msra.mxu0 %v3335
    %3620 = vmatpush.bf16.msra.mxu0 %v3331
    %3621 = vmatpush.bf16.msra.mxu0 %v3327
    %3622 = vmatpush.bf16.msra.mxu0 %v3323
    %3623 = vmatpush.bf16.msra.mxu0 %v3319
    %3624 = vmatpush.bf16.msra.mxu0 %v3315
    %3625 = vmatpush.bf16.msra.mxu0 %v3311
    %3626 = vmatpush.bf16.msra.mxu0 %v3307
    %3627 = vmatmul.bf16.gmra.mxu0 %v2683
    %v3628 = vpop.f32.mrf.mxu0
    %v3629 = vadd.f32 %v3615, %v3628
    %v3630 = vpop.f32.mrf.mxu0
    %v3631 = vadd.f32 %v3617, %v3630
    %3632 = vdwg.mxu0
    %3633 = vmatpush.bf16.msra.mxu0 %v3240
    %3634 = vmatpush.bf16.msra.mxu0 %v3236
    %3635 = vmatpush.bf16.msra.mxu0 %v3232
    %3636 = vmatpush.bf16.msra.mxu0 %v3228
    %3637 = vmatpush.bf16.msra.mxu0 %v3224
    %3638 = vmatpush.bf16.msra.mxu0 %v3220
    %3639 = vmatpush.bf16.msra.mxu0 %v3216
    %3640 = vmatpush.bf16.msra.mxu0 %v3212
    %3641 = vmatmul.bf16.gmra.mxu0 %v2680
    %v3642 = vpop.f32.mrf.mxu0
    %v3643 = vadd.f32 %v2824, %v3642
    %v3644 = vpop.f32.mrf.mxu0
    %v3645 = vadd.f32 %v2824, %v3644
    %3646 = vdwg.mxu0
    %3647 = vmatpush.bf16.msra.mxu0 %v3272
    %3648 = vmatpush.bf16.msra.mxu0 %v3268
    %3649 = vmatpush.bf16.msra.mxu0 %v3264
    %3650 = vmatpush.bf16.msra.mxu0 %v3260
    %3651 = vmatpush.bf16.msra.mxu0 %v3256
    %3652 = vmatpush.bf16.msra.mxu0 %v3252
    %3653 = vmatpush.bf16.msra.mxu0 %v3248
    %3654 = vmatpush.bf16.msra.mxu0 %v3244
    %3655 = vmatmul.bf16.gmra.mxu0 %v2681
    %v3656 = vpop.f32.mrf.mxu0
    %v3657 = vadd.f32 %v3643, %v3656
    %v3658 = vpop.f32.mrf.mxu0
    %v3659 = vadd.f32 %v3645, %v3658
    %3660 = vdwg.mxu0
    %3661 = vmatpush.bf16.msra.mxu0 %v3304
    %3662 = vmatpush.bf16.msra.mxu0 %v3300
    %3663 = vmatpush.bf16.msra.mxu0 %v3296
    %3664 = vmatpush.bf16.msra.mxu0 %v3292
    %3665 = vmatpush.bf16.msra.mxu0 %v3288
    %3666 = vmatpush.bf16.msra.mxu0 %v3284
    %3667 = vmatpush.bf16.msra.mxu0 %v3280
    %3668 = vmatpush.bf16.msra.mxu0 %v3276
    %3669 = vmatmul.bf16.gmra.mxu0 %v2682
    %v3670 = vpop.f32.mrf.mxu0
    %v3671 = vadd.f32 %v3657, %v3670
    %v3672 = vpop.f32.mrf.mxu0
    %v3673 = vadd.f32 %v3659, %v3672
    %3674 = vdwg.mxu0
    %3675 = vmatpush.bf16.msra.mxu0 %v3336
    %3676 = vmatpush.bf16.msra.mxu0 %v3332
    %3677 = vmatpush.bf16.msra.mxu0 %v3328
    %3678 = vmatpush.bf16.msra.mxu0 %v3324
    %3679 = vmatpush.bf16.msra.mxu0 %v3320
    %3680 = vmatpush.bf16.msra.mxu0 %v3316
    %3681 = vmatpush.bf16.msra.mxu0 %v3312
    %3682 = vmatpush.bf16.msra.mxu0 %v3308
    %3683 = vmatmul.bf16.gmra.mxu0 %v2683
    %v3684 = vpop.f32.mrf.mxu0
    %v3685 = vadd.f32 %v3671, %v3684
    %v3686 = vpop.f32.mrf.mxu0
    %v3687 = vadd.f32 %v3673, %v3686
    %3688 = vdwg.mxu0
    %v3689 = vadd.f32 %v3517, %v1654
    %v3690 = vadd.f32 %v3573, %v1655
    %v3691 = vadd.f32 %v3629, %v1656
    %v3692 = vadd.f32 %v3685, %v1657
    %v3693 = vadd.f32 %v3519, %v1658
    %v3694 = vadd.f32 %v3575, %v1659
    %v3695 = vadd.f32 %v3631, %v1660
    %v3696 = vadd.f32 %v3687, %v1661
    %v3697 = vmax.f32 %v3689, 0.0
    %v3698 = vmax.f32 %v3690, 0.0
    %v3699 = vmax.f32 %v3691, 0.0
    %v3700 = vmax.f32 %v3692, 0.0
    %v3701 = vmax.f32 %v3693, 0.0
    %v3702 = vmax.f32 %v3694, 0.0
    %v3703 = vmax.f32 %v3695, 0.0
    %v3704 = vmax.f32 %v3696, 0.0
    %v3705 = vpack.c.bf16 %v3701, %v3697
    %v3706 = vpack.c.bf16 %v3702, %v3698
    %v3707 = vpack.c.bf16 %v3703, %v3699
    %v3708 = vpack.c.bf16 %v3704, %v3700
    %v3709 = vld [vmem:[#allocation10] sm:$0xff]
    %v3710 = vld [vmem:[#allocation10 + $0x8] sm:$0xff]
    %v3711 = vld [vmem:[#allocation10 + $0x10] sm:$0xff]
    %v3712 = vld [vmem:[#allocation10 + $0x18] sm:$0xff]
    %v3713 = vld [vmem:[#allocation10 + $0x20] sm:$0xff]
    %v3714 = vld [vmem:[#allocation10 + $0x28] sm:$0xff]
    %v3715 = vld [vmem:[#allocation10 + $0x30] sm:$0xff]
    %v3716 = vld [vmem:[#allocation10 + $0x38] sm:$0xff]
    %v3717 = vld [vmem:[#allocation10 + $0x40] sm:$0xff]
    %v3718 = vld [vmem:[#allocation10 + $0x48] sm:$0xff]
    %v3719 = vld [vmem:[#allocation10 + $0x50] sm:$0xff]
    %v3720 = vld [vmem:[#allocation10 + $0x58] sm:$0xff]
    %v3721 = vld [vmem:[#allocation10 + $0x60] sm:$0xff]
    %v3722 = vld [vmem:[#allocation10 + $0x68] sm:$0xff]
    %v3723 = vld [vmem:[#allocation10 + $0x70] sm:$0xff]
    %v3724 = vld [vmem:[#allocation10 + $0x78] sm:$0xff]
    %v3725 = vld [vmem:[#allocation10 + $0x80] sm:$0xff]
    %v3726 = vld [vmem:[#allocation10 + $0x88] sm:$0xff]
    %v3727 = vld [vmem:[#allocation10 + $0x90] sm:$0xff]
    %v3728 = vld [vmem:[#allocation10 + $0x98] sm:$0xff]
    %v3729 = vld [vmem:[#allocation10 + $0xa0] sm:$0xff]
    %v3730 = vld [vmem:[#allocation10 + $0xa8] sm:$0xff]
    %v3731 = vld [vmem:[#allocation10 + $0xb0] sm:$0xff]
    %v3732 = vld [vmem:[#allocation10 + $0xb8] sm:$0xff]
    %v3733 = vld [vmem:[#allocation10 + $0xc0] sm:$0xff]
    %v3734 = vld [vmem:[#allocation10 + $0xc8] sm:$0xff]
    %v3735 = vld [vmem:[#allocation10 + $0xd0] sm:$0xff]
    %v3736 = vld [vmem:[#allocation10 + $0xd8] sm:$0xff]
    %v3737 = vld [vmem:[#allocation10 + $0xe0] sm:$0xff]
    %v3738 = vld [vmem:[#allocation10 + $0xe8] sm:$0xff]
    %v3739 = vld [vmem:[#allocation10 + $0xf0] sm:$0xff]
    %v3740 = vld [vmem:[#allocation10 + $0xf8] sm:$0xff]
    %v3741 = vld [vmem:[#allocation10 + $0x100] sm:$0xff]
    %v3742 = vld [vmem:[#allocation10 + $0x108] sm:$0xff]
    %v3743 = vld [vmem:[#allocation10 + $0x110] sm:$0xff]
    %v3744 = vld [vmem:[#allocation10 + $0x118] sm:$0xff]
    %v3745 = vld [vmem:[#allocation10 + $0x120] sm:$0xff]
    %v3746 = vld [vmem:[#allocation10 + $0x128] sm:$0xff]
    %v3747 = vld [vmem:[#allocation10 + $0x130] sm:$0xff]
    %v3748 = vld [vmem:[#allocation10 + $0x138] sm:$0xff]
    %v3749 = vld [vmem:[#allocation10 + $0x140] sm:$0xff]
    %v3750 = vld [vmem:[#allocation10 + $0x148] sm:$0xff]
    %v3751 = vld [vmem:[#allocation10 + $0x150] sm:$0xff]
    %v3752 = vld [vmem:[#allocation10 + $0x158] sm:$0xff]
    %v3753 = vld [vmem:[#allocation10 + $0x160] sm:$0xff]
    %v3754 = vld [vmem:[#allocation10 + $0x168] sm:$0xff]
    %v3755 = vld [vmem:[#allocation10 + $0x170] sm:$0xff]
    %v3756 = vld [vmem:[#allocation10 + $0x178] sm:$0xff]
    %v3757 = vld [vmem:[#allocation10 + $0x180] sm:$0xff]
    %v3758 = vld [vmem:[#allocation10 + $0x188] sm:$0xff]
    %v3759 = vld [vmem:[#allocation10 + $0x190] sm:$0xff]
    %v3760 = vld [vmem:[#allocation10 + $0x198] sm:$0xff]
    %v3761 = vld [vmem:[#allocation10 + $0x1a0] sm:$0xff]
    %v3762 = vld [vmem:[#allocation10 + $0x1a8] sm:$0xff]
    %v3763 = vld [vmem:[#allocation10 + $0x1b0] sm:$0xff]
    %v3764 = vld [vmem:[#allocation10 + $0x1b8] sm:$0xff]
    %v3765 = vld [vmem:[#allocation10 + $0x1c0] sm:$0xff]
    %v3766 = vld [vmem:[#allocation10 + $0x1c8] sm:$0xff]
    %v3767 = vld [vmem:[#allocation10 + $0x1d0] sm:$0xff]
    %v3768 = vld [vmem:[#allocation10 + $0x1d8] sm:$0xff]
    %v3769 = vld [vmem:[#allocation10 + $0x1e0] sm:$0xff]
    %v3770 = vld [vmem:[#allocation10 + $0x1e8] sm:$0xff]
    %v3771 = vld [vmem:[#allocation10 + $0x1f0] sm:$0xff]
    %v3772 = vld [vmem:[#allocation10 + $0x1f8] sm:$0xff]
    %v3773 = vld [vmem:[#allocation10 + $0x200] sm:$0xff]
    %v3774 = vld [vmem:[#allocation10 + $0x208] sm:$0xff]
    %v3775 = vld [vmem:[#allocation10 + $0x210] sm:$0xff]
    %v3776 = vld [vmem:[#allocation10 + $0x218] sm:$0xff]
    %v3777 = vld [vmem:[#allocation10 + $0x220] sm:$0xff]
    %v3778 = vld [vmem:[#allocation10 + $0x228] sm:$0xff]
    %v3779 = vld [vmem:[#allocation10 + $0x230] sm:$0xff]
    %v3780 = vld [vmem:[#allocation10 + $0x238] sm:$0xff]
    %v3781 = vld [vmem:[#allocation10 + $0x240] sm:$0xff]
    %v3782 = vld [vmem:[#allocation10 + $0x248] sm:$0xff]
    %v3783 = vld [vmem:[#allocation10 + $0x250] sm:$0xff]
    %v3784 = vld [vmem:[#allocation10 + $0x258] sm:$0xff]
    %v3785 = vld [vmem:[#allocation10 + $0x260] sm:$0xff]
    %v3786 = vld [vmem:[#allocation10 + $0x268] sm:$0xff]
    %v3787 = vld [vmem:[#allocation10 + $0x270] sm:$0xff]
    %v3788 = vld [vmem:[#allocation10 + $0x278] sm:$0xff]
    %v3789 = vld [vmem:[#allocation10 + $0x280] sm:$0xff]
    %v3790 = vld [vmem:[#allocation10 + $0x288] sm:$0xff]
    %v3791 = vld [vmem:[#allocation10 + $0x290] sm:$0xff]
    %v3792 = vld [vmem:[#allocation10 + $0x298] sm:$0xff]
    %v3793 = vld [vmem:[#allocation10 + $0x2a0] sm:$0xff]
    %v3794 = vld [vmem:[#allocation10 + $0x2a8] sm:$0xff]
    %v3795 = vld [vmem:[#allocation10 + $0x2b0] sm:$0xff]
    %v3796 = vld [vmem:[#allocation10 + $0x2b8] sm:$0xff]
    %v3797 = vld [vmem:[#allocation10 + $0x2c0] sm:$0xff]
    %v3798 = vld [vmem:[#allocation10 + $0x2c8] sm:$0xff]
    %v3799 = vld [vmem:[#allocation10 + $0x2d0] sm:$0xff]
    %v3800 = vld [vmem:[#allocation10 + $0x2d8] sm:$0xff]
    %v3801 = vld [vmem:[#allocation10 + $0x2e0] sm:$0xff]
    %v3802 = vld [vmem:[#allocation10 + $0x2e8] sm:$0xff]
    %v3803 = vld [vmem:[#allocation10 + $0x2f0] sm:$0xff]
    %v3804 = vld [vmem:[#allocation10 + $0x2f8] sm:$0xff]
    %v3805 = vld [vmem:[#allocation10 + $0x300] sm:$0xff]
    %v3806 = vld [vmem:[#allocation10 + $0x308] sm:$0xff]
    %v3807 = vld [vmem:[#allocation10 + $0x310] sm:$0xff]
    %v3808 = vld [vmem:[#allocation10 + $0x318] sm:$0xff]
    %v3809 = vld [vmem:[#allocation10 + $0x320] sm:$0xff]
    %v3810 = vld [vmem:[#allocation10 + $0x328] sm:$0xff]
    %v3811 = vld [vmem:[#allocation10 + $0x330] sm:$0xff]
    %v3812 = vld [vmem:[#allocation10 + $0x338] sm:$0xff]
    %v3813 = vld [vmem:[#allocation10 + $0x340] sm:$0xff]
    %v3814 = vld [vmem:[#allocation10 + $0x348] sm:$0xff]
    %v3815 = vld [vmem:[#allocation10 + $0x350] sm:$0xff]
    %v3816 = vld [vmem:[#allocation10 + $0x358] sm:$0xff]
    %v3817 = vld [vmem:[#allocation10 + $0x360] sm:$0xff]
    %v3818 = vld [vmem:[#allocation10 + $0x368] sm:$0xff]
    %v3819 = vld [vmem:[#allocation10 + $0x370] sm:$0xff]
    %v3820 = vld [vmem:[#allocation10 + $0x378] sm:$0xff]
    %v3821 = vld [vmem:[#allocation10 + $0x380] sm:$0xff]
    %v3822 = vld [vmem:[#allocation10 + $0x388] sm:$0xff]
    %v3823 = vld [vmem:[#allocation10 + $0x390] sm:$0xff]
    %v3824 = vld [vmem:[#allocation10 + $0x398] sm:$0xff]
    %v3825 = vld [vmem:[#allocation10 + $0x3a0] sm:$0xff]
    %v3826 = vld [vmem:[#allocation10 + $0x3a8] sm:$0xff]
    %v3827 = vld [vmem:[#allocation10 + $0x3b0] sm:$0xff]
    %v3828 = vld [vmem:[#allocation10 + $0x3b8] sm:$0xff]
    %v3829 = vld [vmem:[#allocation10 + $0x3c0] sm:$0xff]
    %v3830 = vld [vmem:[#allocation10 + $0x3c8] sm:$0xff]
    %v3831 = vld [vmem:[#allocation10 + $0x3d0] sm:$0xff]
    %v3832 = vld [vmem:[#allocation10 + $0x3d8] sm:$0xff]
    %v3833 = vld [vmem:[#allocation10 + $0x3e0] sm:$0xff]
    %v3834 = vld [vmem:[#allocation10 + $0x3e8] sm:$0xff]
    %v3835 = vld [vmem:[#allocation10 + $0x3f0] sm:$0xff]
    %v3836 = vld [vmem:[#allocation10 + $0x3f8] sm:$0xff]
    %v3837 = vperm.slane %v116, 2
    %v3838 = vperm.slane %v116, 6
    %v3839 = vperm.slane %v117, 2
    %v3840 = vperm.slane %v117, 6
    %v3845 = vperm.slane %v3837, 2
    %v3846 = vperm.slane %v3838, 2
    %v3847 = vperm.slane %v3839, 2
    %v3848 = vperm.slane %v3840, 2
    %v3977 = vunpack.c.l.b16 %v3709
    %v3978 = vunpack.c.h.b16 %v3709
    %v3979 = vunpack.c.l.b16 %v3710
    %v3980 = vunpack.c.h.b16 %v3710
    %v3981 = vunpack.c.l.b16 %v3711
    %v3982 = vunpack.c.h.b16 %v3711
    %v3983 = vunpack.c.l.b16 %v3712
    %v3984 = vunpack.c.h.b16 %v3712
    %v3985 = vunpack.c.l.b16 %v3713
    %v3986 = vunpack.c.h.b16 %v3713
    %v3987 = vunpack.c.l.b16 %v3714
    %v3988 = vunpack.c.h.b16 %v3714
    %v3989 = vunpack.c.l.b16 %v3715
    %v3990 = vunpack.c.h.b16 %v3715
    %v3991 = vunpack.c.l.b16 %v3716
    %v3992 = vunpack.c.h.b16 %v3716
    %v3993 = vunpack.c.l.b16 %v3717
    %v3994 = vunpack.c.h.b16 %v3717
    %v3995 = vunpack.c.l.b16 %v3718
    %v3996 = vunpack.c.h.b16 %v3718
    %v3997 = vunpack.c.l.b16 %v3719
    %v3998 = vunpack.c.h.b16 %v3719
    %v3999 = vunpack.c.l.b16 %v3720
    %v4000 = vunpack.c.h.b16 %v3720
    %v4001 = vunpack.c.l.b16 %v3721
    %v4002 = vunpack.c.h.b16 %v3721
    %v4003 = vunpack.c.l.b16 %v3722
    %v4004 = vunpack.c.h.b16 %v3722
    %v4005 = vunpack.c.l.b16 %v3723
    %v4006 = vunpack.c.h.b16 %v3723
    %v4007 = vunpack.c.l.b16 %v3724
    %v4008 = vunpack.c.h.b16 %v3724
    %v4009 = vunpack.c.l.b16 %v3725
    %v4010 = vunpack.c.h.b16 %v3725
    %v4011 = vunpack.c.l.b16 %v3726
    %v4012 = vunpack.c.h.b16 %v3726
    %v4013 = vunpack.c.l.b16 %v3727
    %v4014 = vunpack.c.h.b16 %v3727
    %v4015 = vunpack.c.l.b16 %v3728
    %v4016 = vunpack.c.h.b16 %v3728
    %v4017 = vunpack.c.l.b16 %v3729
    %v4018 = vunpack.c.h.b16 %v3729
    %v4019 = vunpack.c.l.b16 %v3730
    %v4020 = vunpack.c.h.b16 %v3730
    %v4021 = vunpack.c.l.b16 %v3731
    %v4022 = vunpack.c.h.b16 %v3731
    %v4023 = vunpack.c.l.b16 %v3732
    %v4024 = vunpack.c.h.b16 %v3732
    %v4025 = vunpack.c.l.b16 %v3733
    %v4026 = vunpack.c.h.b16 %v3733
    %v4027 = vunpack.c.l.b16 %v3734
    %v4028 = vunpack.c.h.b16 %v3734
    %v4029 = vunpack.c.l.b16 %v3735
    %v4030 = vunpack.c.h.b16 %v3735
    %v4031 = vunpack.c.l.b16 %v3736
    %v4032 = vunpack.c.h.b16 %v3736
    %v4033 = vunpack.c.l.b16 %v3737
    %v4034 = vunpack.c.h.b16 %v3737
    %v4035 = vunpack.c.l.b16 %v3738
    %v4036 = vunpack.c.h.b16 %v3738
    %v4037 = vunpack.c.l.b16 %v3739
    %v4038 = vunpack.c.h.b16 %v3739
    %v4039 = vunpack.c.l.b16 %v3740
    %v4040 = vunpack.c.h.b16 %v3740
    %v4041 = vunpack.c.l.b16 %v3741
    %v4042 = vunpack.c.h.b16 %v3741
    %v4043 = vunpack.c.l.b16 %v3742
    %v4044 = vunpack.c.h.b16 %v3742
    %v4045 = vunpack.c.l.b16 %v3743
    %v4046 = vunpack.c.h.b16 %v3743
    %v4047 = vunpack.c.l.b16 %v3744
    %v4048 = vunpack.c.h.b16 %v3744
    %v4049 = vunpack.c.l.b16 %v3745
    %v4050 = vunpack.c.h.b16 %v3745
    %v4051 = vunpack.c.l.b16 %v3746
    %v4052 = vunpack.c.h.b16 %v3746
    %v4053 = vunpack.c.l.b16 %v3747
    %v4054 = vunpack.c.h.b16 %v3747
    %v4055 = vunpack.c.l.b16 %v3748
    %v4056 = vunpack.c.h.b16 %v3748
    %v4057 = vunpack.c.l.b16 %v3749
    %v4058 = vunpack.c.h.b16 %v3749
    %v4059 = vunpack.c.l.b16 %v3750
    %v4060 = vunpack.c.h.b16 %v3750
    %v4061 = vunpack.c.l.b16 %v3751
    %v4062 = vunpack.c.h.b16 %v3751
    %v4063 = vunpack.c.l.b16 %v3752
    %v4064 = vunpack.c.h.b16 %v3752
    %v4065 = vunpack.c.l.b16 %v3753
    %v4066 = vunpack.c.h.b16 %v3753
    %v4067 = vunpack.c.l.b16 %v3754
    %v4068 = vunpack.c.h.b16 %v3754
    %v4069 = vunpack.c.l.b16 %v3755
    %v4070 = vunpack.c.h.b16 %v3755
    %v4071 = vunpack.c.l.b16 %v3756
    %v4072 = vunpack.c.h.b16 %v3756
    %v4073 = vunpack.c.l.b16 %v3757
    %v4074 = vunpack.c.h.b16 %v3757
    %v4075 = vunpack.c.l.b16 %v3758
    %v4076 = vunpack.c.h.b16 %v3758
    %v4077 = vunpack.c.l.b16 %v3759
    %v4078 = vunpack.c.h.b16 %v3759
    %v4079 = vunpack.c.l.b16 %v3760
    %v4080 = vunpack.c.h.b16 %v3760
    %v4081 = vunpack.c.l.b16 %v3761
    %v4082 = vunpack.c.h.b16 %v3761
    %v4083 = vunpack.c.l.b16 %v3762
    %v4084 = vunpack.c.h.b16 %v3762
    %v4085 = vunpack.c.l.b16 %v3763
    %v4086 = vunpack.c.h.b16 %v3763
    %v4087 = vunpack.c.l.b16 %v3764
    %v4088 = vunpack.c.h.b16 %v3764
    %v4089 = vunpack.c.l.b16 %v3765
    %v4090 = vunpack.c.h.b16 %v3765
    %v4091 = vunpack.c.l.b16 %v3766
    %v4092 = vunpack.c.h.b16 %v3766
    %v4093 = vunpack.c.l.b16 %v3767
    %v4094 = vunpack.c.h.b16 %v3767
    %v4095 = vunpack.c.l.b16 %v3768
    %v4096 = vunpack.c.h.b16 %v3768
    %v4097 = vunpack.c.l.b16 %v3769
    %v4098 = vunpack.c.h.b16 %v3769
    %v4099 = vunpack.c.l.b16 %v3770
    %v4100 = vunpack.c.h.b16 %v3770
    %v4101 = vunpack.c.l.b16 %v3771
    %v4102 = vunpack.c.h.b16 %v3771
    %v4103 = vunpack.c.l.b16 %v3772
    %v4104 = vunpack.c.h.b16 %v3772
    %v4105 = vunpack.c.l.b16 %v3773
    %v4106 = vunpack.c.h.b16 %v3773
    %v4107 = vunpack.c.l.b16 %v3774
    %v4108 = vunpack.c.h.b16 %v3774
    %v4109 = vunpack.c.l.b16 %v3775
    %v4110 = vunpack.c.h.b16 %v3775
    %v4111 = vunpack.c.l.b16 %v3776
    %v4112 = vunpack.c.h.b16 %v3776
    %v4113 = vunpack.c.l.b16 %v3777
    %v4114 = vunpack.c.h.b16 %v3777
    %v4115 = vunpack.c.l.b16 %v3778
    %v4116 = vunpack.c.h.b16 %v3778
    %v4117 = vunpack.c.l.b16 %v3779
    %v4118 = vunpack.c.h.b16 %v3779
    %v4119 = vunpack.c.l.b16 %v3780
    %v4120 = vunpack.c.h.b16 %v3780
    %v4121 = vunpack.c.l.b16 %v3781
    %v4122 = vunpack.c.h.b16 %v3781
    %v4123 = vunpack.c.l.b16 %v3782
    %v4124 = vunpack.c.h.b16 %v3782
    %v4125 = vunpack.c.l.b16 %v3783
    %v4126 = vunpack.c.h.b16 %v3783
    %v4127 = vunpack.c.l.b16 %v3784
    %v4128 = vunpack.c.h.b16 %v3784
    %v4129 = vunpack.c.l.b16 %v3785
    %v4130 = vunpack.c.h.b16 %v3785
    %v4131 = vunpack.c.l.b16 %v3786
    %v4132 = vunpack.c.h.b16 %v3786
    %v4133 = vunpack.c.l.b16 %v3787
    %v4134 = vunpack.c.h.b16 %v3787
    %v4135 = vunpack.c.l.b16 %v3788
    %v4136 = vunpack.c.h.b16 %v3788
    %v4137 = vunpack.c.l.b16 %v3789
    %v4138 = vunpack.c.h.b16 %v3789
    %v4139 = vunpack.c.l.b16 %v3790
    %v4140 = vunpack.c.h.b16 %v3790
    %v4141 = vunpack.c.l.b16 %v3791
    %v4142 = vunpack.c.h.b16 %v3791
    %v4143 = vunpack.c.l.b16 %v3792
    %v4144 = vunpack.c.h.b16 %v3792
    %v4145 = vunpack.c.l.b16 %v3793
    %v4146 = vunpack.c.h.b16 %v3793
    %v4147 = vunpack.c.l.b16 %v3794
    %v4148 = vunpack.c.h.b16 %v3794
    %v4149 = vunpack.c.l.b16 %v3795
    %v4150 = vunpack.c.h.b16 %v3795
    %v4151 = vunpack.c.l.b16 %v3796
    %v4152 = vunpack.c.h.b16 %v3796
    %v4153 = vunpack.c.l.b16 %v3797
    %v4154 = vunpack.c.h.b16 %v3797
    %v4155 = vunpack.c.l.b16 %v3798
    %v4156 = vunpack.c.h.b16 %v3798
    %v4157 = vunpack.c.l.b16 %v3799
    %v4158 = vunpack.c.h.b16 %v3799
    %v4159 = vunpack.c.l.b16 %v3800
    %v4160 = vunpack.c.h.b16 %v3800
    %v4161 = vunpack.c.l.b16 %v3801
    %v4162 = vunpack.c.h.b16 %v3801
    %v4163 = vunpack.c.l.b16 %v3802
    %v4164 = vunpack.c.h.b16 %v3802
    %v4165 = vunpack.c.l.b16 %v3803
    %v4166 = vunpack.c.h.b16 %v3803
    %v4167 = vunpack.c.l.b16 %v3804
    %v4168 = vunpack.c.h.b16 %v3804
    %v4169 = vunpack.c.l.b16 %v3805
    %v4170 = vunpack.c.h.b16 %v3805
    %v4171 = vunpack.c.l.b16 %v3806
    %v4172 = vunpack.c.h.b16 %v3806
    %v4173 = vunpack.c.l.b16 %v3807
    %v4174 = vunpack.c.h.b16 %v3807
    %v4175 = vunpack.c.l.b16 %v3808
    %v4176 = vunpack.c.h.b16 %v3808
    %v4177 = vunpack.c.l.b16 %v3809
    %v4178 = vunpack.c.h.b16 %v3809
    %v4179 = vunpack.c.l.b16 %v3810
    %v4180 = vunpack.c.h.b16 %v3810
    %v4181 = vunpack.c.l.b16 %v3811
    %v4182 = vunpack.c.h.b16 %v3811
    %v4183 = vunpack.c.l.b16 %v3812
    %v4184 = vunpack.c.h.b16 %v3812
    %v4185 = vunpack.c.l.b16 %v3813
    %v4186 = vunpack.c.h.b16 %v3813
    %v4187 = vunpack.c.l.b16 %v3814
    %v4188 = vunpack.c.h.b16 %v3814
    %v4189 = vunpack.c.l.b16 %v3815
    %v4190 = vunpack.c.h.b16 %v3815
    %v4191 = vunpack.c.l.b16 %v3816
    %v4192 = vunpack.c.h.b16 %v3816
    %v4193 = vunpack.c.l.b16 %v3817
    %v4194 = vunpack.c.h.b16 %v3817
    %v4195 = vunpack.c.l.b16 %v3818
    %v4196 = vunpack.c.h.b16 %v3818
    %v4197 = vunpack.c.l.b16 %v3819
    %v4198 = vunpack.c.h.b16 %v3819
    %v4199 = vunpack.c.l.b16 %v3820
    %v4200 = vunpack.c.h.b16 %v3820
    %v4201 = vunpack.c.l.b16 %v3821
    %v4202 = vunpack.c.h.b16 %v3821
    %v4203 = vunpack.c.l.b16 %v3822
    %v4204 = vunpack.c.h.b16 %v3822
    %v4205 = vunpack.c.l.b16 %v3823
    %v4206 = vunpack.c.h.b16 %v3823
    %v4207 = vunpack.c.l.b16 %v3824
    %v4208 = vunpack.c.h.b16 %v3824
    %v4209 = vunpack.c.l.b16 %v3825
    %v4210 = vunpack.c.h.b16 %v3825
    %v4211 = vunpack.c.l.b16 %v3826
    %v4212 = vunpack.c.h.b16 %v3826
    %v4213 = vunpack.c.l.b16 %v3827
    %v4214 = vunpack.c.h.b16 %v3827
    %v4215 = vunpack.c.l.b16 %v3828
    %v4216 = vunpack.c.h.b16 %v3828
    %v4217 = vunpack.c.l.b16 %v3829
    %v4218 = vunpack.c.h.b16 %v3829
    %v4219 = vunpack.c.l.b16 %v3830
    %v4220 = vunpack.c.h.b16 %v3830
    %v4221 = vunpack.c.l.b16 %v3831
    %v4222 = vunpack.c.h.b16 %v3831
    %v4223 = vunpack.c.l.b16 %v3832
    %v4224 = vunpack.c.h.b16 %v3832
    %v4225 = vunpack.c.l.b16 %v3833
    %v4226 = vunpack.c.h.b16 %v3833
    %v4227 = vunpack.c.l.b16 %v3834
    %v4228 = vunpack.c.h.b16 %v3834
    %v4229 = vunpack.c.l.b16 %v3835
    %v4230 = vunpack.c.h.b16 %v3835
    %v4231 = vunpack.c.l.b16 %v3836
    %v4232 = vunpack.c.h.b16 %v3836
    %v4233 = vpack.c.b16 %v3981, %v3977
    %v4234 = vpack.c.b16 %v3982, %v3978
    %v4235 = vpack.c.b16 %v3983, %v3979
    %v4236 = vpack.c.b16 %v3984, %v3980
    %v4237 = vpack.c.b16 %v3989, %v3985
    %v4238 = vpack.c.b16 %v3990, %v3986
    %v4239 = vpack.c.b16 %v3991, %v3987
    %v4240 = vpack.c.b16 %v3992, %v3988
    %v4241 = vpack.c.b16 %v3997, %v3993
    %v4242 = vpack.c.b16 %v3998, %v3994
    %v4243 = vpack.c.b16 %v3999, %v3995
    %v4244 = vpack.c.b16 %v4000, %v3996
    %v4245 = vpack.c.b16 %v4005, %v4001
    %v4246 = vpack.c.b16 %v4006, %v4002
    %v4247 = vpack.c.b16 %v4007, %v4003
    %v4248 = vpack.c.b16 %v4008, %v4004
    %v4249 = vpack.c.b16 %v4013, %v4009
    %v4250 = vpack.c.b16 %v4014, %v4010
    %v4251 = vpack.c.b16 %v4015, %v4011
    %v4252 = vpack.c.b16 %v4016, %v4012
    %v4253 = vpack.c.b16 %v4021, %v4017
    %v4254 = vpack.c.b16 %v4022, %v4018
    %v4255 = vpack.c.b16 %v4023, %v4019
    %v4256 = vpack.c.b16 %v4024, %v4020
    %v4257 = vpack.c.b16 %v4029, %v4025
    %v4258 = vpack.c.b16 %v4030, %v4026
    %v4259 = vpack.c.b16 %v4031, %v4027
    %v4260 = vpack.c.b16 %v4032, %v4028
    %v4261 = vpack.c.b16 %v4037, %v4033
    %v4262 = vpack.c.b16 %v4038, %v4034
    %v4263 = vpack.c.b16 %v4039, %v4035
    %v4264 = vpack.c.b16 %v4040, %v4036
    %v4265 = vpack.c.b16 %v4045, %v4041
    %v4266 = vpack.c.b16 %v4046, %v4042
    %v4267 = vpack.c.b16 %v4047, %v4043
    %v4268 = vpack.c.b16 %v4048, %v4044
    %v4269 = vpack.c.b16 %v4053, %v4049
    %v4270 = vpack.c.b16 %v4054, %v4050
    %v4271 = vpack.c.b16 %v4055, %v4051
    %v4272 = vpack.c.b16 %v4056, %v4052
    %v4273 = vpack.c.b16 %v4061, %v4057
    %v4274 = vpack.c.b16 %v4062, %v4058
    %v4275 = vpack.c.b16 %v4063, %v4059
    %v4276 = vpack.c.b16 %v4064, %v4060
    %v4277 = vpack.c.b16 %v4069, %v4065
    %v4278 = vpack.c.b16 %v4070, %v4066
    %v4279 = vpack.c.b16 %v4071, %v4067
    %v4280 = vpack.c.b16 %v4072, %v4068
    %v4281 = vpack.c.b16 %v4077, %v4073
    %v4282 = vpack.c.b16 %v4078, %v4074
    %v4283 = vpack.c.b16 %v4079, %v4075
    %v4284 = vpack.c.b16 %v4080, %v4076
    %v4285 = vpack.c.b16 %v4085, %v4081
    %v4286 = vpack.c.b16 %v4086, %v4082
    %v4287 = vpack.c.b16 %v4087, %v4083
    %v4288 = vpack.c.b16 %v4088, %v4084
    %v4289 = vpack.c.b16 %v4093, %v4089
    %v4290 = vpack.c.b16 %v4094, %v4090
    %v4291 = vpack.c.b16 %v4095, %v4091
    %v4292 = vpack.c.b16 %v4096, %v4092
    %v4293 = vpack.c.b16 %v4101, %v4097
    %v4294 = vpack.c.b16 %v4102, %v4098
    %v4295 = vpack.c.b16 %v4103, %v4099
    %v4296 = vpack.c.b16 %v4104, %v4100
    %v4297 = vpack.c.b16 %v4109, %v4105
    %v4298 = vpack.c.b16 %v4110, %v4106
    %v4299 = vpack.c.b16 %v4111, %v4107
    %v4300 = vpack.c.b16 %v4112, %v4108
    %v4301 = vpack.c.b16 %v4117, %v4113
    %v4302 = vpack.c.b16 %v4118, %v4114
    %v4303 = vpack.c.b16 %v4119, %v4115
    %v4304 = vpack.c.b16 %v4120, %v4116
    %v4305 = vpack.c.b16 %v4125, %v4121
    %v4306 = vpack.c.b16 %v4126, %v4122
    %v4307 = vpack.c.b16 %v4127, %v4123
    %v4308 = vpack.c.b16 %v4128, %v4124
    %v4309 = vpack.c.b16 %v4133, %v4129
    %v4310 = vpack.c.b16 %v4134, %v4130
    %v4311 = vpack.c.b16 %v4135, %v4131
    %v4312 = vpack.c.b16 %v4136, %v4132
    %v4313 = vpack.c.b16 %v4141, %v4137
    %v4314 = vpack.c.b16 %v4142, %v4138
    %v4315 = vpack.c.b16 %v4143, %v4139
    %v4316 = vpack.c.b16 %v4144, %v4140
    %v4317 = vpack.c.b16 %v4149, %v4145
    %v4318 = vpack.c.b16 %v4150, %v4146
    %v4319 = vpack.c.b16 %v4151, %v4147
    %v4320 = vpack.c.b16 %v4152, %v4148
    %v4321 = vpack.c.b16 %v4157, %v4153
    %v4322 = vpack.c.b16 %v4158, %v4154
    %v4323 = vpack.c.b16 %v4159, %v4155
    %v4324 = vpack.c.b16 %v4160, %v4156
    %v4325 = vpack.c.b16 %v4165, %v4161
    %v4326 = vpack.c.b16 %v4166, %v4162
    %v4327 = vpack.c.b16 %v4167, %v4163
    %v4328 = vpack.c.b16 %v4168, %v4164
    %v4329 = vpack.c.b16 %v4173, %v4169
    %v4330 = vpack.c.b16 %v4174, %v4170
    %v4331 = vpack.c.b16 %v4175, %v4171
    %v4332 = vpack.c.b16 %v4176, %v4172
    %v4333 = vpack.c.b16 %v4181, %v4177
    %v4334 = vpack.c.b16 %v4182, %v4178
    %v4335 = vpack.c.b16 %v4183, %v4179
    %v4336 = vpack.c.b16 %v4184, %v4180
    %v4337 = vpack.c.b16 %v4189, %v4185
    %v4338 = vpack.c.b16 %v4190, %v4186
    %v4339 = vpack.c.b16 %v4191, %v4187
    %v4340 = vpack.c.b16 %v4192, %v4188
    %v4341 = vpack.c.b16 %v4197, %v4193
    %v4342 = vpack.c.b16 %v4198, %v4194
    %v4343 = vpack.c.b16 %v4199, %v4195
    %v4344 = vpack.c.b16 %v4200, %v4196
    %v4345 = vpack.c.b16 %v4205, %v4201
    %v4346 = vpack.c.b16 %v4206, %v4202
    %v4347 = vpack.c.b16 %v4207, %v4203
    %v4348 = vpack.c.b16 %v4208, %v4204
    %v4349 = vpack.c.b16 %v4213, %v4209
    %v4350 = vpack.c.b16 %v4214, %v4210
    %v4351 = vpack.c.b16 %v4215, %v4211
    %v4352 = vpack.c.b16 %v4216, %v4212
    %v4353 = vpack.c.b16 %v4221, %v4217
    %v4354 = vpack.c.b16 %v4222, %v4218
    %v4355 = vpack.c.b16 %v4223, %v4219
    %v4356 = vpack.c.b16 %v4224, %v4220
    %v4357 = vpack.c.b16 %v4229, %v4225
    %v4358 = vpack.c.b16 %v4230, %v4226
    %v4359 = vpack.c.b16 %v4231, %v4227
    %v4360 = vpack.c.b16 %v4232, %v4228
    %4489 = vmatpush.bf16.msra.mxu0 %v4261
    %4490 = vmatpush.bf16.msra.mxu0 %v4257
    %4491 = vmatpush.bf16.msra.mxu0 %v4253
    %4492 = vmatpush.bf16.msra.mxu0 %v4249
    %4493 = vmatpush.bf16.msra.mxu0 %v4245
    %4494 = vmatpush.bf16.msra.mxu0 %v4241
    %4495 = vmatpush.bf16.msra.mxu0 %v4237
    %4496 = vmatpush.bf16.msra.mxu0 %v4233
    %4497 = vmatmul.bf16.gmra.mxu0 %v3705
    %v4498 = vpop.f32.mrf.mxu0
    %v4499 = vadd.f32 %v3845, %v4498
    %v4500 = vpop.f32.mrf.mxu0
    %v4501 = vadd.f32 %v3845, %v4500
    %4502 = vdwg.mxu0
    %4503 = vmatpush.bf16.msra.mxu0 %v4293
    %4504 = vmatpush.bf16.msra.mxu0 %v4289
    %4505 = vmatpush.bf16.msra.mxu0 %v4285
    %4506 = vmatpush.bf16.msra.mxu0 %v4281
    %4507 = vmatpush.bf16.msra.mxu0 %v4277
    %4508 = vmatpush.bf16.msra.mxu0 %v4273
    %4509 = vmatpush.bf16.msra.mxu0 %v4269
    %4510 = vmatpush.bf16.msra.mxu0 %v4265
    %4511 = vmatmul.bf16.gmra.mxu0 %v3706
    %v4512 = vpop.f32.mrf.mxu0
    %v4513 = vadd.f32 %v4499, %v4512
    %v4514 = vpop.f32.mrf.mxu0
    %v4515 = vadd.f32 %v4501, %v4514
    %4516 = vdwg.mxu0
    %4517 = vmatpush.bf16.msra.mxu0 %v4325
    %4518 = vmatpush.bf16.msra.mxu0 %v4321
    %4519 = vmatpush.bf16.msra.mxu0 %v4317
    %4520 = vmatpush.bf16.msra.mxu0 %v4313
    %4521 = vmatpush.bf16.msra.mxu0 %v4309
    %4522 = vmatpush.bf16.msra.mxu0 %v4305
    %4523 = vmatpush.bf16.msra.mxu0 %v4301
    %4524 = vmatpush.bf16.msra.mxu0 %v4297
    %4525 = vmatmul.bf16.gmra.mxu0 %v3707
    %v4526 = vpop.f32.mrf.mxu0
    %v4527 = vadd.f32 %v4513, %v4526
    %v4528 = vpop.f32.mrf.mxu0
    %v4529 = vadd.f32 %v4515, %v4528
    %4530 = vdwg.mxu0
    %4531 = vmatpush.bf16.msra.mxu0 %v4357
    %4532 = vmatpush.bf16.msra.mxu0 %v4353
    %4533 = vmatpush.bf16.msra.mxu0 %v4349
    %4534 = vmatpush.bf16.msra.mxu0 %v4345
    %4535 = vmatpush.bf16.msra.mxu0 %v4341
    %4536 = vmatpush.bf16.msra.mxu0 %v4337
    %4537 = vmatpush.bf16.msra.mxu0 %v4333
    %4538 = vmatpush.bf16.msra.mxu0 %v4329
    %4539 = vmatmul.bf16.gmra.mxu0 %v3708
    %v4540 = vpop.f32.mrf.mxu0
    %v4541 = vadd.f32 %v4527, %v4540
    %v4542 = vpop.f32.mrf.mxu0
    %v4543 = vadd.f32 %v4529, %v4542
    %4544 = vdwg.mxu0
    %4545 = vmatpush.bf16.msra.mxu0 %v4262
    %4546 = vmatpush.bf16.msra.mxu0 %v4258
    %4547 = vmatpush.bf16.msra.mxu0 %v4254
    %4548 = vmatpush.bf16.msra.mxu0 %v4250
    %4549 = vmatpush.bf16.msra.mxu0 %v4246
    %4550 = vmatpush.bf16.msra.mxu0 %v4242
    %4551 = vmatpush.bf16.msra.mxu0 %v4238
    %4552 = vmatpush.bf16.msra.mxu0 %v4234
    %4553 = vmatmul.bf16.gmra.mxu0 %v3705
    %v4554 = vpop.f32.mrf.mxu0
    %v4555 = vadd.f32 %v3846, %v4554
    %v4556 = vpop.f32.mrf.mxu0
    %v4557 = vadd.f32 %v3846, %v4556
    %4558 = vdwg.mxu0
    %4559 = vmatpush.bf16.msra.mxu0 %v4294
    %4560 = vmatpush.bf16.msra.mxu0 %v4290
    %4561 = vmatpush.bf16.msra.mxu0 %v4286
    %4562 = vmatpush.bf16.msra.mxu0 %v4282
    %4563 = vmatpush.bf16.msra.mxu0 %v4278
    %4564 = vmatpush.bf16.msra.mxu0 %v4274
    %4565 = vmatpush.bf16.msra.mxu0 %v4270
    %4566 = vmatpush.bf16.msra.mxu0 %v4266
    %4567 = vmatmul.bf16.gmra.mxu0 %v3706
    %v4568 = vpop.f32.mrf.mxu0
    %v4569 = vadd.f32 %v4555, %v4568
    %v4570 = vpop.f32.mrf.mxu0
    %v4571 = vadd.f32 %v4557, %v4570
    %4572 = vdwg.mxu0
    %4573 = vmatpush.bf16.msra.mxu0 %v4326
    %4574 = vmatpush.bf16.msra.mxu0 %v4322
    %4575 = vmatpush.bf16.msra.mxu0 %v4318
    %4576 = vmatpush.bf16.msra.mxu0 %v4314
    %4577 = vmatpush.bf16.msra.mxu0 %v4310
    %4578 = vmatpush.bf16.msra.mxu0 %v4306
    %4579 = vmatpush.bf16.msra.mxu0 %v4302
    %4580 = vmatpush.bf16.msra.mxu0 %v4298
    %4581 = vmatmul.bf16.gmra.mxu0 %v3707
    %v4582 = vpop.f32.mrf.mxu0
    %v4583 = vadd.f32 %v4569, %v4582
    %v4584 = vpop.f32.mrf.mxu0
    %v4585 = vadd.f32 %v4571, %v4584
    %4586 = vdwg.mxu0
    %4587 = vmatpush.bf16.msra.mxu0 %v4358
    %4588 = vmatpush.bf16.msra.mxu0 %v4354
    %4589 = vmatpush.bf16.msra.mxu0 %v4350
    %4590 = vmatpush.bf16.msra.mxu0 %v4346
    %4591 = vmatpush.bf16.msra.mxu0 %v4342
    %4592 = vmatpush.bf16.msra.mxu0 %v4338
    %4593 = vmatpush.bf16.msra.mxu0 %v4334
    %4594 = vmatpush.bf16.msra.mxu0 %v4330
    %4595 = vmatmul.bf16.gmra.mxu0 %v3708
    %v4596 = vpop.f32.mrf.mxu0
    %v4597 = vadd.f32 %v4583, %v4596
    %v4598 = vpop.f32.mrf.mxu0
    %v4599 = vadd.f32 %v4585, %v4598
    %4600 = vdwg.mxu0
    %4601 = vmatpush.bf16.msra.mxu0 %v4263
    %4602 = vmatpush.bf16.msra.mxu0 %v4259
    %4603 = vmatpush.bf16.msra.mxu0 %v4255
    %4604 = vmatpush.bf16.msra.mxu0 %v4251
    %4605 = vmatpush.bf16.msra.mxu0 %v4247
    %4606 = vmatpush.bf16.msra.mxu0 %v4243
    %4607 = vmatpush.bf16.msra.mxu0 %v4239
    %4608 = vmatpush.bf16.msra.mxu0 %v4235
    %4609 = vmatmul.bf16.gmra.mxu0 %v3705
    %v4610 = vpop.f32.mrf.mxu0
    %v4611 = vadd.f32 %v3847, %v4610
    %v4612 = vpop.f32.mrf.mxu0
    %v4613 = vadd.f32 %v3847, %v4612
    %4614 = vdwg.mxu0
    %4615 = vmatpush.bf16.msra.mxu0 %v4295
    %4616 = vmatpush.bf16.msra.mxu0 %v4291
    %4617 = vmatpush.bf16.msra.mxu0 %v4287
    %4618 = vmatpush.bf16.msra.mxu0 %v4283
    %4619 = vmatpush.bf16.msra.mxu0 %v4279
    %4620 = vmatpush.bf16.msra.mxu0 %v4275
    %4621 = vmatpush.bf16.msra.mxu0 %v4271
    %4622 = vmatpush.bf16.msra.mxu0 %v4267
    %4623 = vmatmul.bf16.gmra.mxu0 %v3706
    %v4624 = vpop.f32.mrf.mxu0
    %v4625 = vadd.f32 %v4611, %v4624
    %v4626 = vpop.f32.mrf.mxu0
    %v4627 = vadd.f32 %v4613, %v4626
    %4628 = vdwg.mxu0
    %4629 = vmatpush.bf16.msra.mxu0 %v4327
    %4630 = vmatpush.bf16.msra.mxu0 %v4323
    %4631 = vmatpush.bf16.msra.mxu0 %v4319
    %4632 = vmatpush.bf16.msra.mxu0 %v4315
    %4633 = vmatpush.bf16.msra.mxu0 %v4311
    %4634 = vmatpush.bf16.msra.mxu0 %v4307
    %4635 = vmatpush.bf16.msra.mxu0 %v4303
    %4636 = vmatpush.bf16.msra.mxu0 %v4299
    %4637 = vmatmul.bf16.gmra.mxu0 %v3707
    %v4638 = vpop.f32.mrf.mxu0
    %v4639 = vadd.f32 %v4625, %v4638
    %v4640 = vpop.f32.mrf.mxu0
    %v4641 = vadd.f32 %v4627, %v4640
    %4642 = vdwg.mxu0
    %4643 = vmatpush.bf16.msra.mxu0 %v4359
    %4644 = vmatpush.bf16.msra.mxu0 %v4355
    %4645 = vmatpush.bf16.msra.mxu0 %v4351
    %4646 = vmatpush.bf16.msra.mxu0 %v4347
    %4647 = vmatpush.bf16.msra.mxu0 %v4343
    %4648 = vmatpush.bf16.msra.mxu0 %v4339
    %4649 = vmatpush.bf16.msra.mxu0 %v4335
    %4650 = vmatpush.bf16.msra.mxu0 %v4331
    %4651 = vmatmul.bf16.gmra.mxu0 %v3708
    %v4652 = vpop.f32.mrf.mxu0
    %v4653 = vadd.f32 %v4639, %v4652
    %v4654 = vpop.f32.mrf.mxu0
    %v4655 = vadd.f32 %v4641, %v4654
    %4656 = vdwg.mxu0
    %4657 = vmatpush.bf16.msra.mxu0 %v4264
    %4658 = vmatpush.bf16.msra.mxu0 %v4260
    %4659 = vmatpush.bf16.msra.mxu0 %v4256
    %4660 = vmatpush.bf16.msra.mxu0 %v4252
    %4661 = vmatpush.bf16.msra.mxu0 %v4248
    %4662 = vmatpush.bf16.msra.mxu0 %v4244
    %4663 = vmatpush.bf16.msra.mxu0 %v4240
    %4664 = vmatpush.bf16.msra.mxu0 %v4236
    %4665 = vmatmul.bf16.gmra.mxu0 %v3705
    %v4666 = vpop.f32.mrf.mxu0
    %v4667 = vadd.f32 %v3848, %v4666
    %v4668 = vpop.f32.mrf.mxu0
    %v4669 = vadd.f32 %v3848, %v4668
    %4670 = vdwg.mxu0
    %4671 = vmatpush.bf16.msra.mxu0 %v4296
    %4672 = vmatpush.bf16.msra.mxu0 %v4292
    %4673 = vmatpush.bf16.msra.mxu0 %v4288
    %4674 = vmatpush.bf16.msra.mxu0 %v4284
    %4675 = vmatpush.bf16.msra.mxu0 %v4280
    %4676 = vmatpush.bf16.msra.mxu0 %v4276
    %4677 = vmatpush.bf16.msra.mxu0 %v4272
    %4678 = vmatpush.bf16.msra.mxu0 %v4268
    %4679 = vmatmul.bf16.gmra.mxu0 %v3706
    %v4680 = vpop.f32.mrf.mxu0
    %v4681 = vadd.f32 %v4667, %v4680
    %v4682 = vpop.f32.mrf.mxu0
    %v4683 = vadd.f32 %v4669, %v4682
    %4684 = vdwg.mxu0
    %4685 = vmatpush.bf16.msra.mxu0 %v4328
    %4686 = vmatpush.bf16.msra.mxu0 %v4324
    %4687 = vmatpush.bf16.msra.mxu0 %v4320
    %4688 = vmatpush.bf16.msra.mxu0 %v4316
    %4689 = vmatpush.bf16.msra.mxu0 %v4312
    %4690 = vmatpush.bf16.msra.mxu0 %v4308
    %4691 = vmatpush.bf16.msra.mxu0 %v4304
    %4692 = vmatpush.bf16.msra.mxu0 %v4300
    %4693 = vmatmul.bf16.gmra.mxu0 %v3707
    %v4694 = vpop.f32.mrf.mxu0
    %v4695 = vadd.f32 %v4681, %v4694
    %v4696 = vpop.f32.mrf.mxu0
    %v4697 = vadd.f32 %v4683, %v4696
    %4698 = vdwg.mxu0
    %4699 = vmatpush.bf16.msra.mxu0 %v4360
    %4700 = vmatpush.bf16.msra.mxu0 %v4356
    %4701 = vmatpush.bf16.msra.mxu0 %v4352
    %4702 = vmatpush.bf16.msra.mxu0 %v4348
    %4703 = vmatpush.bf16.msra.mxu0 %v4344
    %4704 = vmatpush.bf16.msra.mxu0 %v4340
    %4705 = vmatpush.bf16.msra.mxu0 %v4336
    %4706 = vmatpush.bf16.msra.mxu0 %v4332
    %4707 = vmatmul.bf16.gmra.mxu0 %v3708
    %v4708 = vpop.f32.mrf.mxu0
    %v4709 = vadd.f32 %v4695, %v4708
    %v4710 = vpop.f32.mrf.mxu0
    %v4711 = vadd.f32 %v4697, %v4710
    %4712 = vdwg.mxu0
    %4713 = vst [vmem:[#allocation13] sm:$0xff] %v4541
    %4714 = vst [vmem:[#allocation13 + $0x8] sm:$0xff] %v4597
    %4715 = vst [vmem:[#allocation13 + $0x10] sm:$0xff] %v4653
    %4716 = vst [vmem:[#allocation13 + $0x18] sm:$0xff] %v4709
    %4717 = vst [vmem:[#allocation13 + $0x20] sm:$0xff] %v4543
    %4718 = vst [vmem:[#allocation13 + $0x28] sm:$0xff] %v4599
    %4719 = vst [vmem:[#allocation13 + $0x30] sm:$0xff] %v4655
    %4720 = vst [vmem:[#allocation13 + $0x38] sm:$0xff] %v4711
    // Predicated region
    $region50: #{tpu_custom_call.1} parent=1 // pred_check
      _
    $region51: #{tpu_custom_call.1} parent=1 // pred_check_branch
      %4722 = sbr.rel (0) target = $region53
    $region52: #{tpu_custom_call.1} parent=1 // pred_region
      %4724 = vsyncadd [#allocation4], 0
      %s4725 = sshll.u32 [#allocation13], 4
      %s4726 = int_to_ptr.vmem [resolvable:$true] %s4725
      %s4727 = sshll.u32 %s6, 4
      %s4728 = int_to_ptr.hbm [resolvable:$true] %s4727
      %4733 = dma.vmem_to_hbm [thread:$0]  %s4726, 1024, %s4728, [#allocation4], 512, 512, 32
    $region53: #{tpu_custom_call.1} parent=1 // pred_fallthru
      _
    // Predicated region
    $region54: #{tpu_custom_call.1} parent=1 // pred_check
      _
    $region55: #{tpu_custom_call.1} parent=1 // pred_check_branch
      %4735 = sbr.rel (0) target = $region57
    $region56: #{tpu_custom_call.1} parent=1 // pred_region
      %4737 = dma.done [#allocation4], 1024
    $region57: #{tpu_custom_call.1} parent=1 // pred_fallthru
      _
    %4738 = vsyncpa [#allocation3], 1
    %4739 = vsyncpa [#allocation6], 1
    %4740 = vsyncpa [#allocation9], 1
    %4741 = vsyncpa [#allocation12], 1
    %4742 = vsyncpa [#allocation4], 1

</llo_original>
